<compile_context>
chip_gen: v7x
topology: tpu7x:2x2x1
jax: 0.10.0
libtpu: 0.0.40
codegen_flags: <defaults>
</compile_context>

<pallas_src>
import numpy as np

import jax
import jax.numpy as jnp
from jax import lax
from jax.experimental import pallas as pl
from jax.experimental.pallas import tpu as pltpu

SR_FACTOR = 4
BOUNDARY_IGNORE = None          # module default -> no cropping anywhere


# ----------------------------------------------------------------------------
# Static Gaussian window (sca_utils.get_gaussian_kernel(sd=1.5) -> ksz = 7)
# ----------------------------------------------------------------------------
def _gauss_1d(ksz, sd):
    x = np.arange(ksz, dtype=np.float64) - (ksz - 1) / 2.0
    g = np.exp(-(x ** 2) / (2.0 * sd ** 2))
    return (g / g.sum()).astype(np.float32)


_GAUSS_KSZ = 7
_GAUSS_1D_7 = _gauss_1d(_GAUSS_KSZ, 1.5)


# ----------------------------------------------------------------------------
# Pallas kernel: fused bilinear warp (grid_sample, zeros padding,
# align_corners=False) + 3x3 color-matrix application.  Grid = (batch, stripe).
# ----------------------------------------------------------------------------
# TODO(synk): a real (PWC-Net) alignment flow is unbounded; this kernel assumes
# |flow| <= _MAX_FLOW (exact for the tanh-bounded stand-in below) and clamps.
# TODO(synk): the warp assumes the flow is in pixel units (sx = x + fx); verify
# the upstream flow convention before trusting parity with F.grid_sample.
_MAX_FLOW = 3
_SHIFTS = tuple(range(-_MAX_FLOW, _MAX_FLOW + 1))   # 7 taps (the +4 tap had 0 weight)
_NSHIFT = len(_SHIFTS)
_PAD = _MAX_FLOW                                    # tap reach beyond the stripe rows
_YPAD = 8                                           # zero-pad rows, sublane aligned
_STRIPE_H = 32                                      # rows per grid step (>=4 steps/sample)
assert _SHIFTS[0] == -_MAX_FLOW and _SHIFTS[-1] == _MAX_FLOW   # clamp/tap invariant
assert _YPAD >= _PAD


def _warp_color_kernel(cmat_ref, flow_ref, img_ref, out_ref,
                       wy_ref, wx_ref, pad_ref, roll_ref):
    b = pl.program_id(0)
    s = pl.program_id(1)
    H, W = img_ref.shape[2], img_ref.shape[3]
    SH = flow_ref.shape[2]
    row0 = pl.multiple_of(s * SH, 8)

    # ---- once per sample: zero-padded (in y) copy of the resident image ------
    @pl.when(s == 0)
    def _():
        zrows = jnp.zeros((_YPAD, W), jnp.float32)
        for c in range(3):
            pad_ref[c, 0:_YPAD, :] = zrows
            pad_ref[c, _YPAD + H:_YPAD + H + _YPAD, :] = zrows
            pad_ref[c, _YPAD:_YPAD + H, :] = img_ref[0, c, :, :]

    # ---- separable hat weights: depend only on the (clamped) flow ------------
    fx = jnp.clip(flow_ref[0, 0, :, :], -float(_MAX_FLOW), float(_MAX_FLOW))
    fy = jnp.clip(flow_ref[0, 1, :, :], -float(_MAX_FLOW), float(_MAX_FLOW))
    for t, d in enumerate(_SHIFTS):
        wy_ref[t, :, :] = jnp.maximum(1.0 - jnp.abs(fy - float(d)), 0.0)
        wx_ref[t, :, :] = jnp.maximum(1.0 - jnp.abs(fx - float(d)), 0.0)
    # grid_sample zeros-padding along x: the |d| border columns whose source
    # column wraps around under pltpu.roll get an exactly-zero weight.  The
    # zeroed region is flow-independent, so narrow column stores replace the
    # old full-tile compare/select masks.
    for t, d in enumerate(_SHIFTS):
        if d < 0:
            wx_ref[t, :, 0:-d] = jnp.zeros((SH, -d), jnp.float32)
        elif d > 0:
            wx_ref[t, :, W - d:W] = jnp.zeros((SH, d), jnp.float32)
    # zeros-padding along y comes for free from pad_ref's zero rows.

    # ---- 7x7 tap accumulation -------------------------------------------------
    # dx outer : one lane roll per (dx != 0, channel) of the padded stripe (XLU)
    # dy middle: one combined weight per (dx, dy)                        (VALU)
    # c  inner : tap FMAs reuse w2; warped channels accumulate in registers
    acc = [jnp.zeros((SH, W), jnp.float32) for _ in range(3)]
    for tx, dx in enumerate(_SHIFTS):
        if dx != 0:
            for c in range(3):
                roll_ref[c, :, :] = pltpu.roll(
                    pad_ref[c, pl.ds(row0 + (_YPAD - _PAD), SH + 2 * _PAD), :],
                    (-dx) % W, axis=1)
        wx = wx_ref[tx, :, :]
        for ty, dy in enumerate(_SHIFTS):
            w2 = wy_ref[ty, :, :] * wx
            for c in range(3):
                if dx != 0:
                    src = roll_ref[c, dy + _PAD:dy + _PAD + SH, :]
                else:
                    src = pad_ref[c, pl.ds(row0 + (dy + _YPAD), SH), :]
                acc[c] = acc[c] + w2 * src

    # ---- fused 3x3 color transform (match_colors) + bf16 store ----------------
    # out channel j = sum_i c_mat[i, j] * warped_i
    for j in range(3):
        mixed = (cmat_ref[b, 0 * 3 + j] * acc[0]
                 + cmat_ref[b, 1 * 3 + j] * acc[1]
                 + cmat_ref[b, 2 * 3 + j] * acc[2])
        out_ref[0, j, :, :] = mixed.astype(out_ref.dtype)


def warp_color_pallas(pred, flow, c_mat, out_dtype=jnp.bfloat16):
    """pred: (B,3,H,W), flow: (B,2,H,W), c_mat: (B,3,3) -> pred_warped_m (B,3,H,W).

    Output defaults to bf16 (the LPIPS trunk casts to bf16 anyway); pass
    out_dtype=jnp.float32 for bit-closer parity with an f32 reference.  Internal
    warp/color math stays f32 on every chip (v5e has no bf16 VPU).
    """
    B, C, H, W = pred.shape
    assert C == 3 and W % 128 == 0
    stripe_h = _STRIPE_H if H % _STRIPE_H == 0 else H
    n_stripes = H // stripe_h
    # VMEM footprint ~0.5 MiB scratch + ~0.5 MiB pipelined blocks at 128x128:
    # fits every generation.  Re-budget against v7x's 64 MiB scoped VMEM (and set
    # vmem_limit_bytes) before reusing at >=512x512 resolutions.
    return pl.pallas_call(
        _warp_color_kernel,
        out_shape=jax.ShapeDtypeStruct((B, C, H, W), out_dtype),
        grid=(B, n_stripes),
        in_specs=[pl.BlockSpec(memory_space=pltpu.MemorySpace.SMEM),           # c_mat
                  pl.BlockSpec((1, 2, stripe_h, W), lambda b, s: (b, 0, s, 0)),  # flow
                  pl.BlockSpec((1, C, H, W), lambda b, s: (b, 0, 0, 0))],        # pred (resident per sample)
        out_specs=pl.BlockSpec((1, C, stripe_h, W), lambda b, s: (b, 0, s, 0)),
        scratch_shapes=[pltpu.VMEM((_NSHIFT, stripe_h, W), jnp.float32),         # wy planes
                        pltpu.VMEM((_NSHIFT, stripe_h, W), jnp.float32),         # wx planes
                        pltpu.VMEM((C, H + 2 * _YPAD, W), jnp.float32),          # y-padded image
                        pltpu.VMEM((C, stripe_h + 2 * _PAD, W), jnp.float32)],   # lane-rolled stripe
        compiler_params=pltpu.CompilerParams(
            # batch across v7x's two TensorCores; stripes stay sequential per
            # sample so the stripe-0 padded-image fill precedes its readers.
            dimension_semantics=("parallel", "arbitrary")),
    )(c_mat.reshape(B, 9).astype(jnp.float32),
      flow.astype(jnp.float32), pred.astype(jnp.float32))


# ----------------------------------------------------------------------------
# Plain JAX: bilinear F.interpolate (align_corners=False) as two static GEMMs
# ----------------------------------------------------------------------------
def _interp_matrix(out_size, in_size):
    s = (np.arange(out_size, dtype=np.float64) + 0.5) * (in_size / out_size) - 0.5
    s = np.maximum(s, 0.0)
    i0 = np.clip(np.floor(s).astype(np.int64), 0, in_size - 1)
    i1 = np.minimum(i0 + 1, in_size - 1)
    w1 = s - i0
    m = np.zeros((out_size, in_size), np.float64)
    m[np.arange(out_size), i0] += 1.0 - w1
    m[np.arange(out_size), i1] += w1
    return m.astype(np.float32)


def bilinear_resize_mm(x, out_h, out_w):
    """x: (B,C,H,W) -> (B,C,out_h,out_w); gather-free, MXU-friendly."""
    _, _, H, W = x.shape
    ry = jnp.asarray(_interp_matrix(out_h, H))
    rx = jnp.asarray(_interp_matrix(out_w, W))
    t = jnp.einsum('oh,bchw->bcow', ry, x)
    return jnp.einsum('pw,bcow->bcop', rx, t)


# ----------------------------------------------------------------------------
# Plain JAX: tiny low-res helpers (16x16) -- per review these stay out of Pallas
# ----------------------------------------------------------------------------
def _band_matrix(n_out, w1d):
    k = len(w1d)
    m = np.zeros((n_out, n_out + k - 1), np.float32)
    rng = np.arange(n_out)
    for t in range(k):
        m[rng, rng + t] = w1d[t]
    return m


def gaussian_blur_reflect(x, w1d):
    """Depthwise separable Gaussian with reflect padding (sca_utils.apply_kernel),
    expressed as two small banded-matrix GEMMs. x: (B,C,h,w)."""
    _, _, h, w = x.shape
    p = (len(w1d) - 1) // 2
    xp = jnp.pad(x, ((0, 0), (0, 0), (p, p), (p, p)), mode='reflect')
    gv = jnp.asarray(_band_matrix(h, w1d))
    gh = jnp.asarray(_band_matrix(w, w1d))
    t = jnp.einsum('oi,bcij->bcoj', gv, xp)
    return jnp.einsum('pj,bcoj->bcop', gh, t)


def match_colors_cmat(im_ref, im_q):
    """Per-sample 3x3 color-transform fit (sca_utils.match_colors).
    TODO(synk): the `valid` mask match_colors also returns is skipped — safe only
    because boundary_ignore is None and LPIPS never consumes it."""
    bi = 5
    ref_mean = gaussian_blur_reflect(im_ref, _GAUSS_1D_7)[..., bi:-bi, bi:-bi]
    q_mean = gaussian_blur_reflect(im_q, _GAUSS_1D_7)[..., bi:-bi, bi:-bi]
    b = im_ref.shape[0]
    a_mat = q_mean.reshape(b, 3, -1).transpose(0, 2, 1)       # (B, Npix, 3)
    y_mat = ref_mean.reshape(b, 3, -1).transpose(0, 2, 1)     # (B, Npix, 3)
    q, r = jnp.linalg.qr(a_mat)                               # stable lstsq
    return jnp.linalg.solve(r, jnp.einsum('bij,bik->bjk', q, y_mat))   # (B, 3, 3)


def warp_gather(img, flow):
    """Plain-JAX bilinear grid_sample (zeros padding, align_corners=False) for the
    tiny low-res burst frame. img: (C,h,w), flow: (2,h,w)."""
    _, h, w = img.shape
    ys, xs = jnp.meshgrid(jnp.arange(h, dtype=jnp.float32),
                          jnp.arange(w, dtype=jnp.float32), indexing='ij')
    sx = xs + flow[0]
    sy = ys + flow[1]
    x0 = jnp.floor(sx)
    y0 = jnp.floor(sy)
    x1 = x0 + 1.0
    y1 = y0 + 1.0
    wx1 = sx - x0
    wx0 = 1.0 - wx1
    wy1 = sy - y0
    wy0 = 1.0 - wy1

    def gather(yi, xi):
        valid = (xi >= 0) & (xi <= w - 1) & (yi >= 0) & (yi <= h - 1)
        xc = jnp.clip(xi, 0, w - 1).astype(jnp.int32)
        yc = jnp.clip(yi, 0, h - 1).astype(jnp.int32)
        vals = img[:, yc, xc]
        return jnp.where(valid[None], vals, 0.0)

    return (gather(y0, x0) * (wy0 * wx0)[None] + gather(y0, x1) * (wy0 * wx1)[None]
            + gather(y1, x0) * (wy1 * wx0)[None] + gather(y1, x1) * (wy1 * wx1)[None])


# ----------------------------------------------------------------------------
# Deterministic stand-in for the injected `alignment_net` dependency (NHWC conv)
# ----------------------------------------------------------------------------
def alignment_net(a, b, w_hwio):
    x = jnp.concatenate([a, b], axis=1)                       # (B, 6, H, W)
    x = jnp.transpose(x, (0, 2, 3, 1))                        # channel-last conv
    f = lax.conv_general_dilated(x, w_hwio, (1, 1), [(1, 1), (1, 1)],
                                 dimension_numbers=('NHWC', 'HWIO', 'NHWC'))
    f = float(_MAX_FLOW) * jnp.tanh(f)                        # |flow| < _MAX_FLOW
    return jnp.transpose(f, (0, 3, 1, 2))                     # (B, 2, H, W)


# ----------------------------------------------------------------------------
# LPIPS (net='alex'), batched, channel-last bf16 MXU trunk with f32 accumulation
# TODO(synk): lpips.LPIPS(net='alex') uses pretrained AlexNet + learned linear
# heads; the identical graph runs here with deterministic random weights (no
# checkpoint), and [0,1] inputs are fed as-is (normalize=False), exactly as the
# PyTorch module does.
# ----------------------------------------------------------------------------
_LPIPS_SHIFT = np.array([-0.030, -0.088, -0.188], np.float32).reshape(1, 1, 1, 3)
_LPIPS_SCALE = np.array([0.458, 0.448, 0.450], np.float32).reshape(1, 1, 1, 3)


def _conv2d_nhwc_bf16(x, w, b, stride, pad):
    # bf16 inputs/weights with f32 accumulation, channel-last: lane-dense MXU path.
    y = lax.conv_general_dilated(
        x.astype(jnp.bfloat16), w.astype(jnp.bfloat16), (stride, stride),
        [(pad, pad), (pad, pad)], dimension_numbers=('NHWC', 'HWIO', 'NHWC'),
        preferred_element_type=jnp.float32)
    return y + b.reshape(1, 1, 1, -1)


def _maxpool_nhwc(x):
    return lax.reduce_window(x, jnp.array(-jnp.inf, x.dtype), lax.max,
                             (1, 3, 3, 1), (1, 2, 2, 1), 'VALID')


def _alex_feats_nhwc(x, p):
    h = (x - _LPIPS_SHIFT) / _LPIPS_SCALE
    outs = []
    h = jax.nn.relu(_conv2d_nhwc_bf16(h, p['alex_w0'], p['alex_b0'], 4, 2)); outs.append(h)
    h = _maxpool_nhwc(h)
    h = jax.nn.relu(_conv2d_nhwc_bf16(h, p['alex_w1'], p['alex_b1'], 1, 2)); outs.append(h)
    h = _maxpool_nhwc(h)
    h = jax.nn.relu(_conv2d_nhwc_bf16(h, p['alex_w2'], p['alex_b2'], 1, 1)); outs.append(h)
    h = jax.nn.relu(_conv2d_nhwc_bf16(h, p['alex_w3'], p['alex_b3'], 1, 1)); outs.append(h)
    h = jax.nn.relu(_conv2d_nhwc_bf16(h, p['alex_w4'], p['alex_b4'], 1, 1)); outs.append(h)
    return outs


def lpips_batched(x, y, p):
    """Per-sample LPIPS(alex); ONE trunk pass on the stacked (2B,H,W,3) batch."""
    b = x.shape[0]
    xy = jnp.concatenate([x.astype(jnp.float32), y.astype(jnp.float32)], axis=0)
    xy = jnp.transpose(xy, (0, 2, 3, 1))            # NCHW -> NHWC once
    feats = _alex_feats_nhwc(xy, p)
    val = jnp.zeros((b,), jnp.float32)
    for i in range(5):
        f = feats[i]
        n = f / (jnp.sqrt(jnp.sum(f * f, axis=-1, keepdims=True)) + 1e-10)
        d = (n[:b] - n[b:]) ** 2
        v = jnp.tensordot(d, p[f'lpips_lin{i}'], axes=[[3], [0]])   # 1x1 head, no bias
        val = val + jnp.mean(v, axis=(1, 2))
    return val


def init_params(key):
    ks = jax.random.split(key, 16)
    p = {'align_w': 0.05 * jax.random.normal(ks[0], (3, 3, 6, 2), jnp.float32)}   # HWIO
    conv_defs = [(64, 3, 11), (192, 64, 5), (384, 192, 3), (256, 384, 3), (256, 256, 3)]
    for i, (co, ci, k) in enumerate(conv_defs):
        fan_in = ci * k * k
        p[f'alex_w{i}'] = jax.random.normal(ks[1 + i], (k, k, ci, co), jnp.float32) \
            * (2.0 / fan_in) ** 0.5
        p[f'alex_b{i}'] = jnp.zeros((co,), jnp.float32)
    chans = [64, 192, 384, 256, 256]
    for i, c in enumerate(chans):
        p[f'lpips_lin{i}'] = jnp.abs(jax.random.normal(ks[6 + i], (c,), jnp.float32)) / c
    return p


# ----------------------------------------------------------------------------
# AlignedLPIPS.forward (fully batched: no per-sample Python loop)
# ----------------------------------------------------------------------------
def aligned_lpips_forward(pred, gt, burst_input, params):
    _b, _c, h, w = pred.shape
    pmax = jnp.max(pred, axis=(1, 2, 3), keepdims=True)
    gmax = jnp.max(gt, axis=(1, 2, 3), keepdims=True)
    flow = alignment_net(pred / (pmax + 1e-6), gt / (gmax + 1e-6), params['align_w'])

    ds_factor = 1.0 / (2.0 * SR_FACTOR)
    lr_h, lr_w = int(h * ds_factor), int(w * ds_factor)    # recompute_scale_factor=True
    flow_ds = bilinear_resize_mm(flow, lr_h, lr_w) * ds_factor
    frame_gt_ds = bilinear_resize_mm(gt, lr_h, lr_w)

    burst_0 = jnp.take(burst_input[:, 0], jnp.array([0, 1, 3]), axis=1)   # (B,3,h',w')
    burst_0_warped = jax.vmap(warp_gather)(burst_0, flow_ds)

    c_mat = match_colors_cmat(frame_gt_ds, burst_0_warped)                # (B,3,3)

    # Fused Pallas kernel: bilinear warp of pred by flow + 3x3 color transform.
    pred_warped_m = warp_color_pallas(pred, flow, c_mat)

    # boundary_ignore is None -> no cropping.
    return jnp.mean(lpips_batched(pred_warped_m, gt, params))


# ----------------------------------------------------------------------------
if __name__ == "__main__":
    key = jax.random.PRNGKey(0)
    kp, kg, kb, kparam = jax.random.split(key, 4)

    B, C, H, W = 2, 3, 128, 128
    N_FRAMES = 4
    lr = H // (2 * SR_FACTOR)                 # 16

    gt = jax.random.uniform(kg, (B, C, H, W), jnp.float32)
    pred = jnp.clip(gt + 0.05 * jax.random.normal(kp, (B, C, H, W), jnp.float32),
                    0.0, 1.0)
    gt_lr = bilinear_resize_mm(gt, lr, lr)                                 # (B,3,lr,lr)
    burst0 = jnp.stack([gt_lr[:, 0], gt_lr[:, 1], gt_lr.mean(axis=1), gt_lr[:, 2]],
                       axis=1)                                             # (B,4,lr,lr)
    burst_input = jnp.tile(burst0[:, None], (1, N_FRAMES, 1, 1, 1))
    burst_input = burst_input + 0.01 * jax.random.normal(kb, burst_input.shape,
                                                         jnp.float32)

    params = init_params(kparam)

    fwd = jax.jit(aligned_lpips_forward)
    lpips_val = fwd(pred, gt, burst_input, params)
    jax.block_until_ready(lpips_val)
    print("KERNEL_OK")
</pallas_src>

<mosaic_0001>
module attributes {stable_mosaic.version = 11 : i64} {
  func.func @_warp_color_kernel(%arg0: i32, %arg1: i32, %arg2: memref<2x9xf32, #tpu.memory_space<smem>>, %arg3: memref<1x2x32x128xf32, #tpu.memory_space<vmem>>, %arg4: memref<1x3x128x128xf32, #tpu.memory_space<vmem>>, %arg5: memref<1x3x32x128xbf16, #tpu.memory_space<vmem>>, %arg6: memref<7x32x128xf32, #tpu.memory_space<vmem>>, %arg7: memref<7x32x128xf32, #tpu.memory_space<vmem>>, %arg8: memref<3x144x128xf32, #tpu.memory_space<vmem>>, %arg9: memref<3x38x128xf32, #tpu.memory_space<vmem>>) attributes {dimension_semantics = [#tpu.dimension_semantics<parallel>, #tpu.dimension_semantics<arbitrary>], iteration_bounds = array<i64: 2, 4>, scalar_prefetch = 0 : i64, scratch_operands = 4 : i64, tpu.core_type = #tpu.core_type<tc>, window_params = [{transform_indices = @transform_0, window_bounds = array<i64: 2, 9>}, {transform_indices = @transform_1, window_bounds = array<i64: 1, 2, 32, 128>}, {transform_indices = @transform_2, window_bounds = array<i64: 1, 3, 128, 128>}, {transform_indices = @transform_3, window_bounds = array<i64: 1, 3, 32, 128>}]} {
    %c32_i32 = arith.constant 32 : i32
    %0 = arith.muli %arg1, %c32_i32 : i32
    %1 = tpu.assume_multiple %0, 8 : i32
    %c0_i32 = arith.constant 0 : i32
    %2 = arith.cmpi eq, %arg1, %c0_i32 : i32
    %3 = arith.extui %2 : i1 to i32
    %c0_i32_0 = arith.constant 0 : i32
    %4 = arith.cmpi ne, %3, %c0_i32_0 : i32
    scf.if %4 {
      %cst_854 = arith.constant 0.000000e+00 : f32
      %1173 = vector.broadcast %cst_854 : f32 to vector<8x128xf32>
      %c0_855 = arith.constant 0 : index
      %c0_856 = arith.constant 0 : index
      %c0_857 = arith.constant 0 : index
      %1174 = vector.load %arg8[%c0_855, %c0_856, %c0_857] : memref<3x144x128xf32, #tpu.memory_space<vmem>>, vector<1x8x128xf32>
      %1175 = vector.shape_cast %1174 : vector<1x8x128xf32> to vector<8x128xf32>
      %1176 = vector.shape_cast %1173 : vector<8x128xf32> to vector<1x8x128xf32>
      tpu.vector_store %arg8[%c0_855, %c0_856, %c0_857], %1176 {strides = array<i32>} : memref<3x144x128xf32, #tpu.memory_space<vmem>>, vector<1x8x128xf32>,
      %c0_858 = arith.constant 0 : index
      %c136 = arith.constant 136 : index
      %c0_859 = arith.constant 0 : index
      %1177 = vector.load %arg8[%c0_858, %c136, %c0_859] : memref<3x144x128xf32, #tpu.memory_space<vmem>>, vector<1x8x128xf32>
      %1178 = vector.shape_cast %1177 : vector<1x8x128xf32> to vector<8x128xf32>
      %1179 = vector.shape_cast %1173 : vector<8x128xf32> to vector<1x8x128xf32>
      tpu.vector_store %arg8[%c0_858, %c136, %c0_859], %1179 {strides = array<i32>} : memref<3x144x128xf32, #tpu.memory_space<vmem>>, vector<1x8x128xf32>,
      %c0_860 = arith.constant 0 : index
      %c0_861 = arith.constant 0 : index
      %c0_862 = arith.constant 0 : index
      %c0_863 = arith.constant 0 : index
      %1180 = vector.load %arg4[%c0_860, %c0_861, %c0_862, %c0_863] : memref<1x3x128x128xf32, #tpu.memory_space<vmem>>, vector<1x1x128x128xf32>
      %1181 = vector.shape_cast %1180 : vector<1x1x128x128xf32> to vector<128x128xf32>
      %c0_864 = arith.constant 0 : index
      %c8_865 = arith.constant 8 : index
      %c0_866 = arith.constant 0 : index
      %1182 = vector.load %arg8[%c0_864, %c8_865, %c0_866] : memref<3x144x128xf32, #tpu.memory_space<vmem>>, vector<1x128x128xf32>
      %1183 = vector.shape_cast %1182 : vector<1x128x128xf32> to vector<128x128xf32>
      %1184 = vector.shape_cast %1181 : vector<128x128xf32> to vector<1x128x128xf32>
      tpu.vector_store %arg8[%c0_864, %c8_865, %c0_866], %1184 {strides = array<i32>} : memref<3x144x128xf32, #tpu.memory_space<vmem>>, vector<1x128x128xf32>,
      %c1_867 = arith.constant 1 : index
      %c0_868 = arith.constant 0 : index
      %c0_869 = arith.constant 0 : index
      %1185 = vector.load %arg8[%c1_867, %c0_868, %c0_869] : memref<3x144x128xf32, #tpu.memory_space<vmem>>, vector<1x8x128xf32>
      %1186 = vector.shape_cast %1185 : vector<1x8x128xf32> to vector<8x128xf32>
      %1187 = vector.shape_cast %1173 : vector<8x128xf32> to vector<1x8x128xf32>
      tpu.vector_store %arg8[%c1_867, %c0_868, %c0_869], %1187 {strides = array<i32>} : memref<3x144x128xf32, #tpu.memory_space<vmem>>, vector<1x8x128xf32>,
      %c1_870 = arith.constant 1 : index
      %c136_871 = arith.constant 136 : index
      %c0_872 = arith.constant 0 : index
      %1188 = vector.load %arg8[%c1_870, %c136_871, %c0_872] : memref<3x144x128xf32, #tpu.memory_space<vmem>>, vector<1x8x128xf32>
      %1189 = vector.shape_cast %1188 : vector<1x8x128xf32> to vector<8x128xf32>
      %1190 = vector.shape_cast %1173 : vector<8x128xf32> to vector<1x8x128xf32>
      tpu.vector_store %arg8[%c1_870, %c136_871, %c0_872], %1190 {strides = array<i32>} : memref<3x144x128xf32, #tpu.memory_space<vmem>>, vector<1x8x128xf32>,
      %c0_873 = arith.constant 0 : index
      %c1_874 = arith.constant 1 : index
      %c0_875 = arith.constant 0 : index
      %c0_876 = arith.constant 0 : index
      %1191 = vector.load %arg4[%c0_873, %c1_874, %c0_875, %c0_876] : memref<1x3x128x128xf32, #tpu.memory_space<vmem>>, vector<1x1x128x128xf32>
      %1192 = vector.shape_cast %1191 : vector<1x1x128x128xf32> to vector<128x128xf32>
      %c1_877 = arith.constant 1 : index
      %c8_878 = arith.constant 8 : index
      %c0_879 = arith.constant 0 : index
      %1193 = vector.load %arg8[%c1_877, %c8_878, %c0_879] : memref<3x144x128xf32, #tpu.memory_space<vmem>>, vector<1x128x128xf32>
      %1194 = vector.shape_cast %1193 : vector<1x128x128xf32> to vector<128x128xf32>
      %1195 = vector.shape_cast %1192 : vector<128x128xf32> to vector<1x128x128xf32>
      tpu.vector_store %arg8[%c1_877, %c8_878, %c0_879], %1195 {strides = array<i32>} : memref<3x144x128xf32, #tpu.memory_space<vmem>>, vector<1x128x128xf32>,
      %c2_880 = arith.constant 2 : index
      %c0_881 = arith.constant 0 : index
      %c0_882 = arith.constant 0 : index
      %1196 = vector.load %arg8[%c2_880, %c0_881, %c0_882] : memref<3x144x128xf32, #tpu.memory_space<vmem>>, vector<1x8x128xf32>
      %1197 = vector.shape_cast %1196 : vector<1x8x128xf32> to vector<8x128xf32>
      %1198 = vector.shape_cast %1173 : vector<8x128xf32> to vector<1x8x128xf32>
      tpu.vector_store %arg8[%c2_880, %c0_881, %c0_882], %1198 {strides = array<i32>} : memref<3x144x128xf32, #tpu.memory_space<vmem>>, vector<1x8x128xf32>,
      %c2_883 = arith.constant 2 : index
      %c136_884 = arith.constant 136 : index
      %c0_885 = arith.constant 0 : index
      %1199 = vector.load %arg8[%c2_883, %c136_884, %c0_885] : memref<3x144x128xf32, #tpu.memory_space<vmem>>, vector<1x8x128xf32>
      %1200 = vector.shape_cast %1199 : vector<1x8x128xf32> to vector<8x128xf32>
      %1201 = vector.shape_cast %1173 : vector<8x128xf32> to vector<1x8x128xf32>
      tpu.vector_store %arg8[%c2_883, %c136_884, %c0_885], %1201 {strides = array<i32>} : memref<3x144x128xf32, #tpu.memory_space<vmem>>, vector<1x8x128xf32>,
      %c0_886 = arith.constant 0 : index
      %c2_887 = arith.constant 2 : index
      %c0_888 = arith.constant 0 : index
      %c0_889 = arith.constant 0 : index
      %1202 = vector.load %arg4[%c0_886, %c2_887, %c0_888, %c0_889] : memref<1x3x128x128xf32, #tpu.memory_space<vmem>>, vector<1x1x128x128xf32>
      %1203 = vector.shape_cast %1202 : vector<1x1x128x128xf32> to vector<128x128xf32>
      %c2_890 = arith.constant 2 : index
      %c8_891 = arith.constant 8 : index
      %c0_892 = arith.constant 0 : index
      %1204 = vector.load %arg8[%c2_890, %c8_891, %c0_892] : memref<3x144x128xf32, #tpu.memory_space<vmem>>, vector<1x128x128xf32>
      %1205 = vector.shape_cast %1204 : vector<1x128x128xf32> to vector<128x128xf32>
      %1206 = vector.shape_cast %1203 : vector<128x128xf32> to vector<1x128x128xf32>
      tpu.vector_store %arg8[%c2_890, %c8_891, %c0_892], %1206 {strides = array<i32>} : memref<3x144x128xf32, #tpu.memory_space<vmem>>, vector<1x128x128xf32>,
    } else {
    }
    %c0 = arith.constant 0 : index
    %c0_1 = arith.constant 0 : index
    %c0_2 = arith.constant 0 : index
    %c0_3 = arith.constant 0 : index
    %5 = vector.load %arg3[%c0, %c0_1, %c0_2, %c0_3] : memref<1x2x32x128xf32, #tpu.memory_space<vmem>>, vector<1x1x32x128xf32>
    %6 = vector.shape_cast %5 : vector<1x1x32x128xf32> to vector<32x128xf32>
    %cst = arith.constant -3.000000e+00 : f32
    %cst_4 = arith.constant 3.000000e+00 : f32
    %7 = vector.broadcast %cst : f32 to vector<32x128xf32>
    %8 = arith.maximumf %7, %6 : vector<32x128xf32>
    %9 = vector.broadcast %cst_4 : f32 to vector<32x128xf32>
    %10 = arith.minimumf %9, %8 : vector<32x128xf32>
    %c0_5 = arith.constant 0 : index
    %c1 = arith.constant 1 : index
    %c0_6 = arith.constant 0 : index
    %c0_7 = arith.constant 0 : index
    %11 = vector.load %arg3[%c0_5, %c1, %c0_6, %c0_7] : memref<1x2x32x128xf32, #tpu.memory_space<vmem>>, vector<1x1x32x128xf32>
    %12 = vector.shape_cast %11 : vector<1x1x32x128xf32> to vector<32x128xf32>
    %cst_8 = arith.constant -3.000000e+00 : f32
    %cst_9 = arith.constant 3.000000e+00 : f32
    %13 = vector.broadcast %cst_8 : f32 to vector<32x128xf32>
    %14 = arith.maximumf %13, %12 : vector<32x128xf32>
    %15 = vector.broadcast %cst_9 : f32 to vector<32x128xf32>
    %16 = arith.minimumf %15, %14 : vector<32x128xf32>
    %cst_10 = arith.constant -3.000000e+00 : f32
    %17 = vector.broadcast %cst_10 : f32 to vector<32x128xf32>
    %18 = arith.subf %16, %17 : vector<32x128xf32>
    %19 = math.absf %18 : vector<32x128xf32>
    %cst_11 = arith.constant 1.000000e+00 : f32
    %20 = vector.broadcast %cst_11 : f32 to vector<32x128xf32>
    %21 = arith.subf %20, %19 : vector<32x128xf32>
    %cst_12 = arith.constant 0.000000e+00 : f32
    %22 = vector.broadcast %cst_12 : f32 to vector<32x128xf32>
    %23 = arith.maximumf %21, %22 : vector<32x128xf32>
    %c0_13 = arith.constant 0 : index
    %c0_14 = arith.constant 0 : index
    %c0_15 = arith.constant 0 : index
    %24 = vector.load %arg6[%c0_13, %c0_14, %c0_15] : memref<7x32x128xf32, #tpu.memory_space<vmem>>, vector<1x32x128xf32>
    %25 = vector.shape_cast %24 : vector<1x32x128xf32> to vector<32x128xf32>
    %26 = vector.shape_cast %23 : vector<32x128xf32> to vector<1x32x128xf32>
    tpu.vector_store %arg6[%c0_13, %c0_14, %c0_15], %26 {strides = array<i32>} : memref<7x32x128xf32, #tpu.memory_space<vmem>>, vector<1x32x128xf32>,
    %cst_16 = arith.constant -3.000000e+00 : f32
    %27 = vector.broadcast %cst_16 : f32 to vector<32x128xf32>
    %28 = arith.subf %10, %27 : vector<32x128xf32>
    %29 = math.absf %28 : vector<32x128xf32>
    %cst_17 = arith.constant 1.000000e+00 : f32
    %30 = vector.broadcast %cst_17 : f32 to vector<32x128xf32>
    %31 = arith.subf %30, %29 : vector<32x128xf32>
    %cst_18 = arith.constant 0.000000e+00 : f32
    %32 = vector.broadcast %cst_18 : f32 to vector<32x128xf32>
    %33 = arith.maximumf %31, %32 : vector<32x128xf32>
    %c0_19 = arith.constant 0 : index
    %c0_20 = arith.constant 0 : index
    %c0_21 = arith.constant 0 : index
    %34 = vector.load %arg7[%c0_19, %c0_20, %c0_21] : memref<7x32x128xf32, #tpu.memory_space<vmem>>, vector<1x32x128xf32>
    %35 = vector.shape_cast %34 : vector<1x32x128xf32> to vector<32x128xf32>
    %36 = vector.shape_cast %33 : vector<32x128xf32> to vector<1x32x128xf32>
    tpu.vector_store %arg7[%c0_19, %c0_20, %c0_21], %36 {strides = array<i32>} : memref<7x32x128xf32, #tpu.memory_space<vmem>>, vector<1x32x128xf32>,
    %cst_22 = arith.constant -2.000000e+00 : f32
    %37 = vector.broadcast %cst_22 : f32 to vector<32x128xf32>
    %38 = arith.subf %16, %37 : vector<32x128xf32>
    %39 = math.absf %38 : vector<32x128xf32>
    %cst_23 = arith.constant 1.000000e+00 : f32
    %40 = vector.broadcast %cst_23 : f32 to vector<32x128xf32>
    %41 = arith.subf %40, %39 : vector<32x128xf32>
    %cst_24 = arith.constant 0.000000e+00 : f32
    %42 = vector.broadcast %cst_24 : f32 to vector<32x128xf32>
    %43 = arith.maximumf %41, %42 : vector<32x128xf32>
    %c1_25 = arith.constant 1 : index
    %c0_26 = arith.constant 0 : index
    %c0_27 = arith.constant 0 : index
    %44 = vector.load %arg6[%c1_25, %c0_26, %c0_27] : memref<7x32x128xf32, #tpu.memory_space<vmem>>, vector<1x32x128xf32>
    %45 = vector.shape_cast %44 : vector<1x32x128xf32> to vector<32x128xf32>
    %46 = vector.shape_cast %43 : vector<32x128xf32> to vector<1x32x128xf32>
    tpu.vector_store %arg6[%c1_25, %c0_26, %c0_27], %46 {strides = array<i32>} : memref<7x32x128xf32, #tpu.memory_space<vmem>>, vector<1x32x128xf32>,
    %cst_28 = arith.constant -2.000000e+00 : f32
    %47 = vector.broadcast %cst_28 : f32 to vector<32x128xf32>
    %48 = arith.subf %10, %47 : vector<32x128xf32>
    %49 = math.absf %48 : vector<32x128xf32>
    %cst_29 = arith.constant 1.000000e+00 : f32
    %50 = vector.broadcast %cst_29 : f32 to vector<32x128xf32>
    %51 = arith.subf %50, %49 : vector<32x128xf32>
    %cst_30 = arith.constant 0.000000e+00 : f32
    %52 = vector.broadcast %cst_30 : f32 to vector<32x128xf32>
    %53 = arith.maximumf %51, %52 : vector<32x128xf32>
    %c1_31 = arith.constant 1 : index
    %c0_32 = arith.constant 0 : index
    %c0_33 = arith.constant 0 : index
    %54 = vector.load %arg7[%c1_31, %c0_32, %c0_33] : memref<7x32x128xf32, #tpu.memory_space<vmem>>, vector<1x32x128xf32>
    %55 = vector.shape_cast %54 : vector<1x32x128xf32> to vector<32x128xf32>
    %56 = vector.shape_cast %53 : vector<32x128xf32> to vector<1x32x128xf32>
    tpu.vector_store %arg7[%c1_31, %c0_32, %c0_33], %56 {strides = array<i32>} : memref<7x32x128xf32, #tpu.memory_space<vmem>>, vector<1x32x128xf32>,
    %cst_34 = arith.constant -1.000000e+00 : f32
    %57 = vector.broadcast %cst_34 : f32 to vector<32x128xf32>
    %58 = arith.subf %16, %57 : vector<32x128xf32>
    %59 = math.absf %58 : vector<32x128xf32>
    %cst_35 = arith.constant 1.000000e+00 : f32
    %60 = vector.broadcast %cst_35 : f32 to vector<32x128xf32>
    %61 = arith.subf %60, %59 : vector<32x128xf32>
    %cst_36 = arith.constant 0.000000e+00 : f32
    %62 = vector.broadcast %cst_36 : f32 to vector<32x128xf32>
    %63 = arith.maximumf %61, %62 : vector<32x128xf32>
    %c2 = arith.constant 2 : index
    %c0_37 = arith.constant 0 : index
    %c0_38 = arith.constant 0 : index
    %64 = vector.load %arg6[%c2, %c0_37, %c0_38] : memref<7x32x128xf32, #tpu.memory_space<vmem>>, vector<1x32x128xf32>
    %65 = vector.shape_cast %64 : vector<1x32x128xf32> to vector<32x128xf32>
    %66 = vector.shape_cast %63 : vector<32x128xf32> to vector<1x32x128xf32>
    tpu.vector_store %arg6[%c2, %c0_37, %c0_38], %66 {strides = array<i32>} : memref<7x32x128xf32, #tpu.memory_space<vmem>>, vector<1x32x128xf32>,
    %cst_39 = arith.constant -1.000000e+00 : f32
    %67 = vector.broadcast %cst_39 : f32 to vector<32x128xf32>
    %68 = arith.subf %10, %67 : vector<32x128xf32>
    %69 = math.absf %68 : vector<32x128xf32>
    %cst_40 = arith.constant 1.000000e+00 : f32
    %70 = vector.broadcast %cst_40 : f32 to vector<32x128xf32>
    %71 = arith.subf %70, %69 : vector<32x128xf32>
    %cst_41 = arith.constant 0.000000e+00 : f32
    %72 = vector.broadcast %cst_41 : f32 to vector<32x128xf32>
    %73 = arith.maximumf %71, %72 : vector<32x128xf32>
    %c2_42 = arith.constant 2 : index
    %c0_43 = arith.constant 0 : index
    %c0_44 = arith.constant 0 : index
    %74 = vector.load %arg7[%c2_42, %c0_43, %c0_44] : memref<7x32x128xf32, #tpu.memory_space<vmem>>, vector<1x32x128xf32>
    %75 = vector.shape_cast %74 : vector<1x32x128xf32> to vector<32x128xf32>
    %76 = vector.shape_cast %73 : vector<32x128xf32> to vector<1x32x128xf32>
    tpu.vector_store %arg7[%c2_42, %c0_43, %c0_44], %76 {strides = array<i32>} : memref<7x32x128xf32, #tpu.memory_space<vmem>>, vector<1x32x128xf32>,
    %cst_45 = arith.constant 0.000000e+00 : f32
    %77 = vector.broadcast %cst_45 : f32 to vector<32x128xf32>
    %78 = arith.subf %16, %77 : vector<32x128xf32>
    %79 = math.absf %78 : vector<32x128xf32>
    %cst_46 = arith.constant 1.000000e+00 : f32
    %80 = vector.broadcast %cst_46 : f32 to vector<32x128xf32>
    %81 = arith.subf %80, %79 : vector<32x128xf32>
    %cst_47 = arith.constant 0.000000e+00 : f32
    %82 = vector.broadcast %cst_47 : f32 to vector<32x128xf32>
    %83 = arith.maximumf %81, %82 : vector<32x128xf32>
    %c3 = arith.constant 3 : index
    %c0_48 = arith.constant 0 : index
    %c0_49 = arith.constant 0 : index
    %84 = vector.load %arg6[%c3, %c0_48, %c0_49] : memref<7x32x128xf32, #tpu.memory_space<vmem>>, vector<1x32x128xf32>
    %85 = vector.shape_cast %84 : vector<1x32x128xf32> to vector<32x128xf32>
    %86 = vector.shape_cast %83 : vector<32x128xf32> to vector<1x32x128xf32>
    tpu.vector_store %arg6[%c3, %c0_48, %c0_49], %86 {strides = array<i32>} : memref<7x32x128xf32, #tpu.memory_space<vmem>>, vector<1x32x128xf32>,
    %cst_50 = arith.constant 0.000000e+00 : f32
    %87 = vector.broadcast %cst_50 : f32 to vector<32x128xf32>
    %88 = arith.subf %10, %87 : vector<32x128xf32>
    %89 = math.absf %88 : vector<32x128xf32>
    %cst_51 = arith.constant 1.000000e+00 : f32
    %90 = vector.broadcast %cst_51 : f32 to vector<32x128xf32>
    %91 = arith.subf %90, %89 : vector<32x128xf32>
    %cst_52 = arith.constant 0.000000e+00 : f32
    %92 = vector.broadcast %cst_52 : f32 to vector<32x128xf32>
    %93 = arith.maximumf %91, %92 : vector<32x128xf32>
    %c3_53 = arith.constant 3 : index
    %c0_54 = arith.constant 0 : index
    %c0_55 = arith.constant 0 : index
    %94 = vector.load %arg7[%c3_53, %c0_54, %c0_55] : memref<7x32x128xf32, #tpu.memory_space<vmem>>, vector<1x32x128xf32>
    %95 = vector.shape_cast %94 : vector<1x32x128xf32> to vector<32x128xf32>
    %96 = vector.shape_cast %93 : vector<32x128xf32> to vector<1x32x128xf32>
    tpu.vector_store %arg7[%c3_53, %c0_54, %c0_55], %96 {strides = array<i32>} : memref<7x32x128xf32, #tpu.memory_space<vmem>>, vector<1x32x128xf32>,
    %cst_56 = arith.constant 1.000000e+00 : f32
    %97 = vector.broadcast %cst_56 : f32 to vector<32x128xf32>
    %98 = arith.subf %16, %97 : vector<32x128xf32>
    %99 = math.absf %98 : vector<32x128xf32>
    %cst_57 = arith.constant 1.000000e+00 : f32
    %100 = vector.broadcast %cst_57 : f32 to vector<32x128xf32>
    %101 = arith.subf %100, %99 : vector<32x128xf32>
    %cst_58 = arith.constant 0.000000e+00 : f32
    %102 = vector.broadcast %cst_58 : f32 to vector<32x128xf32>
    %103 = arith.maximumf %101, %102 : vector<32x128xf32>
    %c4 = arith.constant 4 : index
    %c0_59 = arith.constant 0 : index
    %c0_60 = arith.constant 0 : index
    %104 = vector.load %arg6[%c4, %c0_59, %c0_60] : memref<7x32x128xf32, #tpu.memory_space<vmem>>, vector<1x32x128xf32>
    %105 = vector.shape_cast %104 : vector<1x32x128xf32> to vector<32x128xf32>
    %106 = vector.shape_cast %103 : vector<32x128xf32> to vector<1x32x128xf32>
    tpu.vector_store %arg6[%c4, %c0_59, %c0_60], %106 {strides = array<i32>} : memref<7x32x128xf32, #tpu.memory_space<vmem>>, vector<1x32x128xf32>,
    %cst_61 = arith.constant 1.000000e+00 : f32
    %107 = vector.broadcast %cst_61 : f32 to vector<32x128xf32>
    %108 = arith.subf %10, %107 : vector<32x128xf32>
    %109 = math.absf %108 : vector<32x128xf32>
    %cst_62 = arith.constant 1.000000e+00 : f32
    %110 = vector.broadcast %cst_62 : f32 to vector<32x128xf32>
    %111 = arith.subf %110, %109 : vector<32x128xf32>
    %cst_63 = arith.constant 0.000000e+00 : f32
    %112 = vector.broadcast %cst_63 : f32 to vector<32x128xf32>
    %113 = arith.maximumf %111, %112 : vector<32x128xf32>
    %c4_64 = arith.constant 4 : index
    %c0_65 = arith.constant 0 : index
    %c0_66 = arith.constant 0 : index
    %114 = vector.load %arg7[%c4_64, %c0_65, %c0_66] : memref<7x32x128xf32, #tpu.memory_space<vmem>>, vector<1x32x128xf32>
    %115 = vector.shape_cast %114 : vector<1x32x128xf32> to vector<32x128xf32>
    %116 = vector.shape_cast %113 : vector<32x128xf32> to vector<1x32x128xf32>
    tpu.vector_store %arg7[%c4_64, %c0_65, %c0_66], %116 {strides = array<i32>} : memref<7x32x128xf32, #tpu.memory_space<vmem>>, vector<1x32x128xf32>,
    %cst_67 = arith.constant 2.000000e+00 : f32
    %117 = vector.broadcast %cst_67 : f32 to vector<32x128xf32>
    %118 = arith.subf %16, %117 : vector<32x128xf32>
    %119 = math.absf %118 : vector<32x128xf32>
    %cst_68 = arith.constant 1.000000e+00 : f32
    %120 = vector.broadcast %cst_68 : f32 to vector<32x128xf32>
    %121 = arith.subf %120, %119 : vector<32x128xf32>
    %cst_69 = arith.constant 0.000000e+00 : f32
    %122 = vector.broadcast %cst_69 : f32 to vector<32x128xf32>
    %123 = arith.maximumf %121, %122 : vector<32x128xf32>
    %c5 = arith.constant 5 : index
    %c0_70 = arith.constant 0 : index
    %c0_71 = arith.constant 0 : index
    %124 = vector.load %arg6[%c5, %c0_70, %c0_71] : memref<7x32x128xf32, #tpu.memory_space<vmem>>, vector<1x32x128xf32>
    %125 = vector.shape_cast %124 : vector<1x32x128xf32> to vector<32x128xf32>
    %126 = vector.shape_cast %123 : vector<32x128xf32> to vector<1x32x128xf32>
    tpu.vector_store %arg6[%c5, %c0_70, %c0_71], %126 {strides = array<i32>} : memref<7x32x128xf32, #tpu.memory_space<vmem>>, vector<1x32x128xf32>,
    %cst_72 = arith.constant 2.000000e+00 : f32
    %127 = vector.broadcast %cst_72 : f32 to vector<32x128xf32>
    %128 = arith.subf %10, %127 : vector<32x128xf32>
    %129 = math.absf %128 : vector<32x128xf32>
    %cst_73 = arith.constant 1.000000e+00 : f32
    %130 = vector.broadcast %cst_73 : f32 to vector<32x128xf32>
    %131 = arith.subf %130, %129 : vector<32x128xf32>
    %cst_74 = arith.constant 0.000000e+00 : f32
    %132 = vector.broadcast %cst_74 : f32 to vector<32x128xf32>
    %133 = arith.maximumf %131, %132 : vector<32x128xf32>
    %c5_75 = arith.constant 5 : index
    %c0_76 = arith.constant 0 : index
    %c0_77 = arith.constant 0 : index
    %134 = vector.load %arg7[%c5_75, %c0_76, %c0_77] : memref<7x32x128xf32, #tpu.memory_space<vmem>>, vector<1x32x128xf32>
    %135 = vector.shape_cast %134 : vector<1x32x128xf32> to vector<32x128xf32>
    %136 = vector.shape_cast %133 : vector<32x128xf32> to vector<1x32x128xf32>
    tpu.vector_store %arg7[%c5_75, %c0_76, %c0_77], %136 {strides = array<i32>} : memref<7x32x128xf32, #tpu.memory_space<vmem>>, vector<1x32x128xf32>,
    %cst_78 = arith.constant 3.000000e+00 : f32
    %137 = vector.broadcast %cst_78 : f32 to vector<32x128xf32>
    %138 = arith.subf %16, %137 : vector<32x128xf32>
    %139 = math.absf %138 : vector<32x128xf32>
    %cst_79 = arith.constant 1.000000e+00 : f32
    %140 = vector.broadcast %cst_79 : f32 to vector<32x128xf32>
    %141 = arith.subf %140, %139 : vector<32x128xf32>
    %cst_80 = arith.constant 0.000000e+00 : f32
    %142 = vector.broadcast %cst_80 : f32 to vector<32x128xf32>
    %143 = arith.maximumf %141, %142 : vector<32x128xf32>
    %c6 = arith.constant 6 : index
    %c0_81 = arith.constant 0 : index
    %c0_82 = arith.constant 0 : index
    %144 = vector.load %arg6[%c6, %c0_81, %c0_82] : memref<7x32x128xf32, #tpu.memory_space<vmem>>, vector<1x32x128xf32>
    %145 = vector.shape_cast %144 : vector<1x32x128xf32> to vector<32x128xf32>
    %146 = vector.shape_cast %143 : vector<32x128xf32> to vector<1x32x128xf32>
    tpu.vector_store %arg6[%c6, %c0_81, %c0_82], %146 {strides = array<i32>} : memref<7x32x128xf32, #tpu.memory_space<vmem>>, vector<1x32x128xf32>,
    %cst_83 = arith.constant 3.000000e+00 : f32
    %147 = vector.broadcast %cst_83 : f32 to vector<32x128xf32>
    %148 = arith.subf %10, %147 : vector<32x128xf32>
    %149 = math.absf %148 : vector<32x128xf32>
    %cst_84 = arith.constant 1.000000e+00 : f32
    %150 = vector.broadcast %cst_84 : f32 to vector<32x128xf32>
    %151 = arith.subf %150, %149 : vector<32x128xf32>
    %cst_85 = arith.constant 0.000000e+00 : f32
    %152 = vector.broadcast %cst_85 : f32 to vector<32x128xf32>
    %153 = arith.maximumf %151, %152 : vector<32x128xf32>
    %c6_86 = arith.constant 6 : index
    %c0_87 = arith.constant 0 : index
    %c0_88 = arith.constant 0 : index
    %154 = vector.load %arg7[%c6_86, %c0_87, %c0_88] : memref<7x32x128xf32, #tpu.memory_space<vmem>>, vector<1x32x128xf32>
    %155 = vector.shape_cast %154 : vector<1x32x128xf32> to vector<32x128xf32>
    %156 = vector.shape_cast %153 : vector<32x128xf32> to vector<1x32x128xf32>
    tpu.vector_store %arg7[%c6_86, %c0_87, %c0_88], %156 {strides = array<i32>} : memref<7x32x128xf32, #tpu.memory_space<vmem>>, vector<1x32x128xf32>,
    %cst_89 = arith.constant 0.000000e+00 : f32
    %157 = vector.broadcast %cst_89 : f32 to vector<32x3xf32>
    %c0_90 = arith.constant 0 : index
    %c0_91 = arith.constant 0 : index
    %c0_92 = arith.constant 0 : index
    %158 = vector.load %arg7[%c0_90, %c0_91, %c0_92] : memref<7x32x128xf32, #tpu.memory_space<vmem>>, vector<1x32x3xf32>
    %159 = vector.shape_cast %158 : vector<1x32x3xf32> to vector<32x3xf32>
    %160 = vector.shape_cast %157 : vector<32x3xf32> to vector<1x32x3xf32>
    tpu.vector_store %arg7[%c0_90, %c0_91, %c0_92], %160 {strides = array<i32>} : memref<7x32x128xf32, #tpu.memory_space<vmem>>, vector<1x32x3xf32>,
    %cst_93 = arith.constant 0.000000e+00 : f32
    %161 = vector.broadcast %cst_93 : f32 to vector<32x2xf32>
    %c1_94 = arith.constant 1 : index
    %c0_95 = arith.constant 0 : index
    %c0_96 = arith.constant 0 : index
    %162 = vector.load %arg7[%c1_94, %c0_95, %c0_96] : memref<7x32x128xf32, #tpu.memory_space<vmem>>, vector<1x32x2xf32>
    %163 = vector.shape_cast %162 : vector<1x32x2xf32> to vector<32x2xf32>
    %164 = vector.shape_cast %161 : vector<32x2xf32> to vector<1x32x2xf32>
    tpu.vector_store %arg7[%c1_94, %c0_95, %c0_96], %164 {strides = array<i32>} : memref<7x32x128xf32, #tpu.memory_space<vmem>>, vector<1x32x2xf32>,
    %cst_97 = arith.constant 0.000000e+00 : f32
    %165 = vector.broadcast %cst_97 : f32 to vector<32x1xf32>
    %c2_98 = arith.constant 2 : index
    %c0_99 = arith.constant 0 : index
    %c0_100 = arith.constant 0 : index
    %166 = vector.load %arg7[%c2_98, %c0_99, %c0_100] : memref<7x32x128xf32, #tpu.memory_space<vmem>>, vector<1x32x1xf32>
    %167 = vector.shape_cast %166 : vector<1x32x1xf32> to vector<32x1xf32>
    %168 = vector.shape_cast %165 : vector<32x1xf32> to vector<1x32x1xf32>
    tpu.vector_store %arg7[%c2_98, %c0_99, %c0_100], %168 {strides = array<i32>} : memref<7x32x128xf32, #tpu.memory_space<vmem>>, vector<1x32x1xf32>,
    %cst_101 = arith.constant 0.000000e+00 : f32
    %169 = vector.broadcast %cst_101 : f32 to vector<32x1xf32>
    %c4_102 = arith.constant 4 : index
    %c0_103 = arith.constant 0 : index
    %c127 = arith.constant 127 : index
    %170 = vector.load %arg7[%c4_102, %c0_103, %c127] : memref<7x32x128xf32, #tpu.memory_space<vmem>>, vector<1x32x1xf32>
    %171 = vector.shape_cast %170 : vector<1x32x1xf32> to vector<32x1xf32>
    %172 = vector.shape_cast %169 : vector<32x1xf32> to vector<1x32x1xf32>
    tpu.vector_store %arg7[%c4_102, %c0_103, %c127], %172 {strides = array<i32>} : memref<7x32x128xf32, #tpu.memory_space<vmem>>, vector<1x32x1xf32>,
    %cst_104 = arith.constant 0.000000e+00 : f32
    %173 = vector.broadcast %cst_104 : f32 to vector<32x2xf32>
    %c5_105 = arith.constant 5 : index
    %c0_106 = arith.constant 0 : index
    %c126 = arith.constant 126 : index
    %174 = vector.load %arg7[%c5_105, %c0_106, %c126] : memref<7x32x128xf32, #tpu.memory_space<vmem>>, vector<1x32x2xf32>
    %175 = vector.shape_cast %174 : vector<1x32x2xf32> to vector<32x2xf32>
    %176 = vector.shape_cast %173 : vector<32x2xf32> to vector<1x32x2xf32>
    tpu.vector_store %arg7[%c5_105, %c0_106, %c126], %176 {strides = array<i32>} : memref<7x32x128xf32, #tpu.memory_space<vmem>>, vector<1x32x2xf32>,
    %cst_107 = arith.constant 0.000000e+00 : f32
    %177 = vector.broadcast %cst_107 : f32 to vector<32x3xf32>
    %c6_108 = arith.constant 6 : index
    %c0_109 = arith.constant 0 : index
    %c125 = arith.constant 125 : index
    %178 = vector.load %arg7[%c6_108, %c0_109, %c125] : memref<7x32x128xf32, #tpu.memory_space<vmem>>, vector<1x32x3xf32>
    %179 = vector.shape_cast %178 : vector<1x32x3xf32> to vector<32x3xf32>
    %180 = vector.shape_cast %177 : vector<32x3xf32> to vector<1x32x3xf32>
    tpu.vector_store %arg7[%c6_108, %c0_109, %c125], %180 {strides = array<i32>} : memref<7x32x128xf32, #tpu.memory_space<vmem>>, vector<1x32x3xf32>,
    %cst_110 = arith.constant 0.000000e+00 : f32
    %181 = vector.broadcast %cst_110 : f32 to vector<32x128xf32>
    %cst_111 = arith.constant 0.000000e+00 : f32
    %182 = vector.broadcast %cst_111 : f32 to vector<32x128xf32>
    %cst_112 = arith.constant 0.000000e+00 : f32
    %183 = vector.broadcast %cst_112 : f32 to vector<32x128xf32>
    %c5_i32 = arith.constant 5 : i32
    %184 = arith.addi %1, %c5_i32 : i32
    %c0_113 = arith.constant 0 : index
    %185 = arith.index_cast %184 : i32 to index
    %c0_114 = arith.constant 0 : index
    %186 = vector.load %arg8[%c0_113, %185, %c0_114] : memref<3x144x128xf32, #tpu.memory_space<vmem>>, vector<1x38x128xf32>
    %187 = vector.shape_cast %186 : vector<1x38x128xf32> to vector<38x128xf32>
    %c3_i32 = arith.constant 3 : i32
    %188 = tpu.dynamic_rotate %187 by %c3_i32 dim 1 : vector<38x128xf32>, i32 -> vector<38x128xf32>
    %c0_115 = arith.constant 0 : index
    %c0_116 = arith.constant 0 : index
    %c0_117 = arith.constant 0 : index
    %189 = vector.load %arg9[%c0_115, %c0_116, %c0_117] : memref<3x38x128xf32, #tpu.memory_space<vmem>>, vector<1x38x128xf32>
    %190 = vector.shape_cast %189 : vector<1x38x128xf32> to vector<38x128xf32>
    %191 = vector.shape_cast %188 : vector<38x128xf32> to vector<1x38x128xf32>
    tpu.vector_store %arg9[%c0_115, %c0_116, %c0_117], %191 {strides = array<i32>} : memref<3x38x128xf32, #tpu.memory_space<vmem>>, vector<1x38x128xf32>,
    %c5_i32_118 = arith.constant 5 : i32
    %192 = arith.addi %1, %c5_i32_118 : i32
    %c1_119 = arith.constant 1 : index
    %193 = arith.index_cast %192 : i32 to index
    %c0_120 = arith.constant 0 : index
    %194 = vector.load %arg8[%c1_119, %193, %c0_120] : memref<3x144x128xf32, #tpu.memory_space<vmem>>, vector<1x38x128xf32>
    %195 = vector.shape_cast %194 : vector<1x38x128xf32> to vector<38x128xf32>
    %c3_i32_121 = arith.constant 3 : i32
    %196 = tpu.dynamic_rotate %195 by %c3_i32_121 dim 1 : vector<38x128xf32>, i32 -> vector<38x128xf32>
    %c1_122 = arith.constant 1 : index
    %c0_123 = arith.constant 0 : index
    %c0_124 = arith.constant 0 : index
    %197 = vector.load %arg9[%c1_122, %c0_123, %c0_124] : memref<3x38x128xf32, #tpu.memory_space<vmem>>, vector<1x38x128xf32>
    %198 = vector.shape_cast %197 : vector<1x38x128xf32> to vector<38x128xf32>
    %199 = vector.shape_cast %196 : vector<38x128xf32> to vector<1x38x128xf32>
    tpu.vector_store %arg9[%c1_122, %c0_123, %c0_124], %199 {strides = array<i32>} : memref<3x38x128xf32, #tpu.memory_space<vmem>>, vector<1x38x128xf32>,
    %c5_i32_125 = arith.constant 5 : i32
    %200 = arith.addi %1, %c5_i32_125 : i32
    %c2_126 = arith.constant 2 : index
    %201 = arith.index_cast %200 : i32 to index
    %c0_127 = arith.constant 0 : index
    %202 = vector.load %arg8[%c2_126, %201, %c0_127] : memref<3x144x128xf32, #tpu.memory_space<vmem>>, vector<1x38x128xf32>
    %203 = vector.shape_cast %202 : vector<1x38x128xf32> to vector<38x128xf32>
    %c3_i32_128 = arith.constant 3 : i32
    %204 = tpu.dynamic_rotate %203 by %c3_i32_128 dim 1 : vector<38x128xf32>, i32 -> vector<38x128xf32>
    %c2_129 = arith.constant 2 : index
    %c0_130 = arith.constant 0 : index
    %c0_131 = arith.constant 0 : index
    %205 = vector.load %arg9[%c2_129, %c0_130, %c0_131] : memref<3x38x128xf32, #tpu.memory_space<vmem>>, vector<1x38x128xf32>
    %206 = vector.shape_cast %205 : vector<1x38x128xf32> to vector<38x128xf32>
    %207 = vector.shape_cast %204 : vector<38x128xf32> to vector<1x38x128xf32>
    tpu.vector_store %arg9[%c2_129, %c0_130, %c0_131], %207 {strides = array<i32>} : memref<3x38x128xf32, #tpu.memory_space<vmem>>, vector<1x38x128xf32>,
    %c0_132 = arith.constant 0 : index
    %c0_133 = arith.constant 0 : index
    %c0_134 = arith.constant 0 : index
    %208 = vector.load %arg7[%c0_132, %c0_133, %c0_134] : memref<7x32x128xf32, #tpu.memory_space<vmem>>, vector<1x32x128xf32>
    %209 = vector.shape_cast %208 : vector<1x32x128xf32> to vector<32x128xf32>
    %c0_135 = arith.constant 0 : index
    %c0_136 = arith.constant 0 : index
    %c0_137 = arith.constant 0 : index
    %210 = vector.load %arg6[%c0_135, %c0_136, %c0_137] : memref<7x32x128xf32, #tpu.memory_space<vmem>>, vector<1x32x128xf32>
    %211 = vector.shape_cast %210 : vector<1x32x128xf32> to vector<32x128xf32>
    %212 = arith.mulf %211, %209 : vector<32x128xf32>
    %c0_138 = arith.constant 0 : index
    %c0_139 = arith.constant 0 : index
    %c0_140 = arith.constant 0 : index
    %213 = vector.load %arg9[%c0_138, %c0_139, %c0_140] : memref<3x38x128xf32, #tpu.memory_space<vmem>>, vector<1x32x128xf32>
    %214 = vector.shape_cast %213 : vector<1x32x128xf32> to vector<32x128xf32>
    %215 = arith.mulf %212, %214 : vector<32x128xf32>
    %216 = arith.addf %181, %215 : vector<32x128xf32>
    %c1_141 = arith.constant 1 : index
    %c0_142 = arith.constant 0 : index
    %c0_143 = arith.constant 0 : index
    %217 = vector.load %arg9[%c1_141, %c0_142, %c0_143] : memref<3x38x128xf32, #tpu.memory_space<vmem>>, vector<1x32x128xf32>
    %218 = vector.shape_cast %217 : vector<1x32x128xf32> to vector<32x128xf32>
    %219 = arith.mulf %212, %218 : vector<32x128xf32>
    %220 = arith.addf %182, %219 : vector<32x128xf32>
    %c2_144 = arith.constant 2 : index
    %c0_145 = arith.constant 0 : index
    %c0_146 = arith.constant 0 : index
    %221 = vector.load %arg9[%c2_144, %c0_145, %c0_146] : memref<3x38x128xf32, #tpu.memory_space<vmem>>, vector<1x32x128xf32>
    %222 = vector.shape_cast %221 : vector<1x32x128xf32> to vector<32x128xf32>
    %223 = arith.mulf %212, %222 : vector<32x128xf32>
    %224 = arith.addf %183, %223 : vector<32x128xf32>
    %c1_147 = arith.constant 1 : index
    %c0_148 = arith.constant 0 : index
    %c0_149 = arith.constant 0 : index
    %225 = vector.load %arg6[%c1_147, %c0_148, %c0_149] : memref<7x32x128xf32, #tpu.memory_space<vmem>>, vector<1x32x128xf32>
    %226 = vector.shape_cast %225 : vector<1x32x128xf32> to vector<32x128xf32>
    %227 = arith.mulf %226, %209 : vector<32x128xf32>
    %c0_150 = arith.constant 0 : index
    %c1_151 = arith.constant 1 : index
    %c0_152 = arith.constant 0 : index
    %228 = vector.load %arg9[%c0_150, %c1_151, %c0_152] : memref<3x38x128xf32, #tpu.memory_space<vmem>>, vector<1x32x128xf32>
    %229 = vector.shape_cast %228 : vector<1x32x128xf32> to vector<32x128xf32>
    %230 = arith.mulf %227, %229 : vector<32x128xf32>
    %231 = arith.addf %216, %230 : vector<32x128xf32>
    %c1_153 = arith.constant 1 : index
    %c1_154 = arith.constant 1 : index
    %c0_155 = arith.constant 0 : index
    %232 = vector.load %arg9[%c1_153, %c1_154, %c0_155] : memref<3x38x128xf32, #tpu.memory_space<vmem>>, vector<1x32x128xf32>
    %233 = vector.shape_cast %232 : vector<1x32x128xf32> to vector<32x128xf32>
    %234 = arith.mulf %227, %233 : vector<32x128xf32>
    %235 = arith.addf %220, %234 : vector<32x128xf32>
    %c2_156 = arith.constant 2 : index
    %c1_157 = arith.constant 1 : index
    %c0_158 = arith.constant 0 : index
    %236 = vector.load %arg9[%c2_156, %c1_157, %c0_158] : memref<3x38x128xf32, #tpu.memory_space<vmem>>, vector<1x32x128xf32>
    %237 = vector.shape_cast %236 : vector<1x32x128xf32> to vector<32x128xf32>
    %238 = arith.mulf %227, %237 : vector<32x128xf32>
    %239 = arith.addf %224, %238 : vector<32x128xf32>
    %c2_159 = arith.constant 2 : index
    %c0_160 = arith.constant 0 : index
    %c0_161 = arith.constant 0 : index
    %240 = vector.load %arg6[%c2_159, %c0_160, %c0_161] : memref<7x32x128xf32, #tpu.memory_space<vmem>>, vector<1x32x128xf32>
    %241 = vector.shape_cast %240 : vector<1x32x128xf32> to vector<32x128xf32>
    %242 = arith.mulf %241, %209 : vector<32x128xf32>
    %c0_162 = arith.constant 0 : index
    %c2_163 = arith.constant 2 : index
    %c0_164 = arith.constant 0 : index
    %243 = vector.load %arg9[%c0_162, %c2_163, %c0_164] : memref<3x38x128xf32, #tpu.memory_space<vmem>>, vector<1x32x128xf32>
    %244 = vector.shape_cast %243 : vector<1x32x128xf32> to vector<32x128xf32>
    %245 = arith.mulf %242, %244 : vector<32x128xf32>
    %246 = arith.addf %231, %245 : vector<32x128xf32>
    %c1_165 = arith.constant 1 : index
    %c2_166 = arith.constant 2 : index
    %c0_167 = arith.constant 0 : index
    %247 = vector.load %arg9[%c1_165, %c2_166, %c0_167] : memref<3x38x128xf32, #tpu.memory_space<vmem>>, vector<1x32x128xf32>
    %248 = vector.shape_cast %247 : vector<1x32x128xf32> to vector<32x128xf32>
    %249 = arith.mulf %242, %248 : vector<32x128xf32>
    %250 = arith.addf %235, %249 : vector<32x128xf32>
    %c2_168 = arith.constant 2 : index
    %c2_169 = arith.constant 2 : index
    %c0_170 = arith.constant 0 : index
    %251 = vector.load %arg9[%c2_168, %c2_169, %c0_170] : memref<3x38x128xf32, #tpu.memory_space<vmem>>, vector<1x32x128xf32>
    %252 = vector.shape_cast %251 : vector<1x32x128xf32> to vector<32x128xf32>
    %253 = arith.mulf %242, %252 : vector<32x128xf32>
    %254 = arith.addf %239, %253 : vector<32x128xf32>
    %c3_171 = arith.constant 3 : index
    %c0_172 = arith.constant 0 : index
    %c0_173 = arith.constant 0 : index
    %255 = vector.load %arg6[%c3_171, %c0_172, %c0_173] : memref<7x32x128xf32, #tpu.memory_space<vmem>>, vector<1x32x128xf32>
    %256 = vector.shape_cast %255 : vector<1x32x128xf32> to vector<32x128xf32>
    %257 = arith.mulf %256, %209 : vector<32x128xf32>
    %c0_174 = arith.constant 0 : index
    %c3_175 = arith.constant 3 : index
    %c0_176 = arith.constant 0 : index
    %258 = vector.load %arg9[%c0_174, %c3_175, %c0_176] : memref<3x38x128xf32, #tpu.memory_space<vmem>>, vector<1x32x128xf32>
    %259 = vector.shape_cast %258 : vector<1x32x128xf32> to vector<32x128xf32>
    %260 = arith.mulf %257, %259 : vector<32x128xf32>
    %261 = arith.addf %246, %260 : vector<32x128xf32>
    %c1_177 = arith.constant 1 : index
    %c3_178 = arith.constant 3 : index
    %c0_179 = arith.constant 0 : index
    %262 = vector.load %arg9[%c1_177, %c3_178, %c0_179] : memref<3x38x128xf32, #tpu.memory_space<vmem>>, vector<1x32x128xf32>
    %263 = vector.shape_cast %262 : vector<1x32x128xf32> to vector<32x128xf32>
    %264 = arith.mulf %257, %263 : vector<32x128xf32>
    %265 = arith.addf %250, %264 : vector<32x128xf32>
    %c2_180 = arith.constant 2 : index
    %c3_181 = arith.constant 3 : index
    %c0_182 = arith.constant 0 : index
    %266 = vector.load %arg9[%c2_180, %c3_181, %c0_182] : memref<3x38x128xf32, #tpu.memory_space<vmem>>, vector<1x32x128xf32>
    %267 = vector.shape_cast %266 : vector<1x32x128xf32> to vector<32x128xf32>
    %268 = arith.mulf %257, %267 : vector<32x128xf32>
    %269 = arith.addf %254, %268 : vector<32x128xf32>
    %c4_183 = arith.constant 4 : index
    %c0_184 = arith.constant 0 : index
    %c0_185 = arith.constant 0 : index
    %270 = vector.load %arg6[%c4_183, %c0_184, %c0_185] : memref<7x32x128xf32, #tpu.memory_space<vmem>>, vector<1x32x128xf32>
    %271 = vector.shape_cast %270 : vector<1x32x128xf32> to vector<32x128xf32>
    %272 = arith.mulf %271, %209 : vector<32x128xf32>
    %c0_186 = arith.constant 0 : index
    %c4_187 = arith.constant 4 : index
    %c0_188 = arith.constant 0 : index
    %273 = vector.load %arg9[%c0_186, %c4_187, %c0_188] : memref<3x38x128xf32, #tpu.memory_space<vmem>>, vector<1x32x128xf32>
    %274 = vector.shape_cast %273 : vector<1x32x128xf32> to vector<32x128xf32>
    %275 = arith.mulf %272, %274 : vector<32x128xf32>
    %276 = arith.addf %261, %275 : vector<32x128xf32>
    %c1_189 = arith.constant 1 : index
    %c4_190 = arith.constant 4 : index
    %c0_191 = arith.constant 0 : index
    %277 = vector.load %arg9[%c1_189, %c4_190, %c0_191] : memref<3x38x128xf32, #tpu.memory_space<vmem>>, vector<1x32x128xf32>
    %278 = vector.shape_cast %277 : vector<1x32x128xf32> to vector<32x128xf32>
    %279 = arith.mulf %272, %278 : vector<32x128xf32>
    %280 = arith.addf %265, %279 : vector<32x128xf32>
    %c2_192 = arith.constant 2 : index
    %c4_193 = arith.constant 4 : index
    %c0_194 = arith.constant 0 : index
    %281 = vector.load %arg9[%c2_192, %c4_193, %c0_194] : memref<3x38x128xf32, #tpu.memory_space<vmem>>, vector<1x32x128xf32>
    %282 = vector.shape_cast %281 : vector<1x32x128xf32> to vector<32x128xf32>
    %283 = arith.mulf %272, %282 : vector<32x128xf32>
    %284 = arith.addf %269, %283 : vector<32x128xf32>
    %c5_195 = arith.constant 5 : index
    %c0_196 = arith.constant 0 : index
    %c0_197 = arith.constant 0 : index
    %285 = vector.load %arg6[%c5_195, %c0_196, %c0_197] : memref<7x32x128xf32, #tpu.memory_space<vmem>>, vector<1x32x128xf32>
    %286 = vector.shape_cast %285 : vector<1x32x128xf32> to vector<32x128xf32>
    %287 = arith.mulf %286, %209 : vector<32x128xf32>
    %c0_198 = arith.constant 0 : index
    %c5_199 = arith.constant 5 : index
    %c0_200 = arith.constant 0 : index
    %288 = vector.load %arg9[%c0_198, %c5_199, %c0_200] : memref<3x38x128xf32, #tpu.memory_space<vmem>>, vector<1x32x128xf32>
    %289 = vector.shape_cast %288 : vector<1x32x128xf32> to vector<32x128xf32>
    %290 = arith.mulf %287, %289 : vector<32x128xf32>
    %291 = arith.addf %276, %290 : vector<32x128xf32>
    %c1_201 = arith.constant 1 : index
    %c5_202 = arith.constant 5 : index
    %c0_203 = arith.constant 0 : index
    %292 = vector.load %arg9[%c1_201, %c5_202, %c0_203] : memref<3x38x128xf32, #tpu.memory_space<vmem>>, vector<1x32x128xf32>
    %293 = vector.shape_cast %292 : vector<1x32x128xf32> to vector<32x128xf32>
    %294 = arith.mulf %287, %293 : vector<32x128xf32>
    %295 = arith.addf %280, %294 : vector<32x128xf32>
    %c2_204 = arith.constant 2 : index
    %c5_205 = arith.constant 5 : index
    %c0_206 = arith.constant 0 : index
    %296 = vector.load %arg9[%c2_204, %c5_205, %c0_206] : memref<3x38x128xf32, #tpu.memory_space<vmem>>, vector<1x32x128xf32>
    %297 = vector.shape_cast %296 : vector<1x32x128xf32> to vector<32x128xf32>
    %298 = arith.mulf %287, %297 : vector<32x128xf32>
    %299 = arith.addf %284, %298 : vector<32x128xf32>
    %c6_207 = arith.constant 6 : index
    %c0_208 = arith.constant 0 : index
    %c0_209 = arith.constant 0 : index
    %300 = vector.load %arg6[%c6_207, %c0_208, %c0_209] : memref<7x32x128xf32, #tpu.memory_space<vmem>>, vector<1x32x128xf32>
    %301 = vector.shape_cast %300 : vector<1x32x128xf32> to vector<32x128xf32>
    %302 = arith.mulf %301, %209 : vector<32x128xf32>
    %c0_210 = arith.constant 0 : index
    %c6_211 = arith.constant 6 : index
    %c0_212 = arith.constant 0 : index
    %303 = vector.load %arg9[%c0_210, %c6_211, %c0_212] : memref<3x38x128xf32, #tpu.memory_space<vmem>>, vector<1x32x128xf32>
    %304 = vector.shape_cast %303 : vector<1x32x128xf32> to vector<32x128xf32>
    %305 = arith.mulf %302, %304 : vector<32x128xf32>
    %306 = arith.addf %291, %305 : vector<32x128xf32>
    %c1_213 = arith.constant 1 : index
    %c6_214 = arith.constant 6 : index
    %c0_215 = arith.constant 0 : index
    %307 = vector.load %arg9[%c1_213, %c6_214, %c0_215] : memref<3x38x128xf32, #tpu.memory_space<vmem>>, vector<1x32x128xf32>
    %308 = vector.shape_cast %307 : vector<1x32x128xf32> to vector<32x128xf32>
    %309 = arith.mulf %302, %308 : vector<32x128xf32>
    %310 = arith.addf %295, %309 : vector<32x128xf32>
    %c2_216 = arith.constant 2 : index
    %c6_217 = arith.constant 6 : index
    %c0_218 = arith.constant 0 : index
    %311 = vector.load %arg9[%c2_216, %c6_217, %c0_218] : memref<3x38x128xf32, #tpu.memory_space<vmem>>, vector<1x32x128xf32>
    %312 = vector.shape_cast %311 : vector<1x32x128xf32> to vector<32x128xf32>
    %313 = arith.mulf %302, %312 : vector<32x128xf32>
    %314 = arith.addf %299, %313 : vector<32x128xf32>
    %c5_i32_219 = arith.constant 5 : i32
    %315 = arith.addi %1, %c5_i32_219 : i32
    %c0_220 = arith.constant 0 : index
    %316 = arith.index_cast %315 : i32 to index
    %c0_221 = arith.constant 0 : index
    %317 = vector.load %arg8[%c0_220, %316, %c0_221] : memref<3x144x128xf32, #tpu.memory_space<vmem>>, vector<1x38x128xf32>
    %318 = vector.shape_cast %317 : vector<1x38x128xf32> to vector<38x128xf32>
    %c2_i32 = arith.constant 2 : i32
    %319 = tpu.dynamic_rotate %318 by %c2_i32 dim 1 : vector<38x128xf32>, i32 -> vector<38x128xf32>
    %c0_222 = arith.constant 0 : index
    %c0_223 = arith.constant 0 : index
    %c0_224 = arith.constant 0 : index
    %320 = vector.load %arg9[%c0_222, %c0_223, %c0_224] : memref<3x38x128xf32, #tpu.memory_space<vmem>>, vector<1x38x128xf32>
    %321 = vector.shape_cast %320 : vector<1x38x128xf32> to vector<38x128xf32>
    %322 = vector.shape_cast %319 : vector<38x128xf32> to vector<1x38x128xf32>
    tpu.vector_store %arg9[%c0_222, %c0_223, %c0_224], %322 {strides = array<i32>} : memref<3x38x128xf32, #tpu.memory_space<vmem>>, vector<1x38x128xf32>,
    %c5_i32_225 = arith.constant 5 : i32
    %323 = arith.addi %1, %c5_i32_225 : i32
    %c1_226 = arith.constant 1 : index
    %324 = arith.index_cast %323 : i32 to index
    %c0_227 = arith.constant 0 : index
    %325 = vector.load %arg8[%c1_226, %324, %c0_227] : memref<3x144x128xf32, #tpu.memory_space<vmem>>, vector<1x38x128xf32>
    %326 = vector.shape_cast %325 : vector<1x38x128xf32> to vector<38x128xf32>
    %c2_i32_228 = arith.constant 2 : i32
    %327 = tpu.dynamic_rotate %326 by %c2_i32_228 dim 1 : vector<38x128xf32>, i32 -> vector<38x128xf32>
    %c1_229 = arith.constant 1 : index
    %c0_230 = arith.constant 0 : index
    %c0_231 = arith.constant 0 : index
    %328 = vector.load %arg9[%c1_229, %c0_230, %c0_231] : memref<3x38x128xf32, #tpu.memory_space<vmem>>, vector<1x38x128xf32>
    %329 = vector.shape_cast %328 : vector<1x38x128xf32> to vector<38x128xf32>
    %330 = vector.shape_cast %327 : vector<38x128xf32> to vector<1x38x128xf32>
    tpu.vector_store %arg9[%c1_229, %c0_230, %c0_231], %330 {strides = array<i32>} : memref<3x38x128xf32, #tpu.memory_space<vmem>>, vector<1x38x128xf32>,
    %c5_i32_232 = arith.constant 5 : i32
    %331 = arith.addi %1, %c5_i32_232 : i32
    %c2_233 = arith.constant 2 : index
    %332 = arith.index_cast %331 : i32 to index
    %c0_234 = arith.constant 0 : index
    %333 = vector.load %arg8[%c2_233, %332, %c0_234] : memref<3x144x128xf32, #tpu.memory_space<vmem>>, vector<1x38x128xf32>
    %334 = vector.shape_cast %333 : vector<1x38x128xf32> to vector<38x128xf32>
    %c2_i32_235 = arith.constant 2 : i32
    %335 = tpu.dynamic_rotate %334 by %c2_i32_235 dim 1 : vector<38x128xf32>, i32 -> vector<38x128xf32>
    %c2_236 = arith.constant 2 : index
    %c0_237 = arith.constant 0 : index
    %c0_238 = arith.constant 0 : index
    %336 = vector.load %arg9[%c2_236, %c0_237, %c0_238] : memref<3x38x128xf32, #tpu.memory_space<vmem>>, vector<1x38x128xf32>
    %337 = vector.shape_cast %336 : vector<1x38x128xf32> to vector<38x128xf32>
    %338 = vector.shape_cast %335 : vector<38x128xf32> to vector<1x38x128xf32>
    tpu.vector_store %arg9[%c2_236, %c0_237, %c0_238], %338 {strides = array<i32>} : memref<3x38x128xf32, #tpu.memory_space<vmem>>, vector<1x38x128xf32>,
    %c1_239 = arith.constant 1 : index
    %c0_240 = arith.constant 0 : index
    %c0_241 = arith.constant 0 : index
    %339 = vector.load %arg7[%c1_239, %c0_240, %c0_241] : memref<7x32x128xf32, #tpu.memory_space<vmem>>, vector<1x32x128xf32>
    %340 = vector.shape_cast %339 : vector<1x32x128xf32> to vector<32x128xf32>
    %c0_242 = arith.constant 0 : index
    %c0_243 = arith.constant 0 : index
    %c0_244 = arith.constant 0 : index
    %341 = vector.load %arg6[%c0_242, %c0_243, %c0_244] : memref<7x32x128xf32, #tpu.memory_space<vmem>>, vector<1x32x128xf32>
    %342 = vector.shape_cast %341 : vector<1x32x128xf32> to vector<32x128xf32>
    %343 = arith.mulf %342, %340 : vector<32x128xf32>
    %c0_245 = arith.constant 0 : index
    %c0_246 = arith.constant 0 : index
    %c0_247 = arith.constant 0 : index
    %344 = vector.load %arg9[%c0_245, %c0_246, %c0_247] : memref<3x38x128xf32, #tpu.memory_space<vmem>>, vector<1x32x128xf32>
    %345 = vector.shape_cast %344 : vector<1x32x128xf32> to vector<32x128xf32>
    %346 = arith.mulf %343, %345 : vector<32x128xf32>
    %347 = arith.addf %306, %346 : vector<32x128xf32>
    %c1_248 = arith.constant 1 : index
    %c0_249 = arith.constant 0 : index
    %c0_250 = arith.constant 0 : index
    %348 = vector.load %arg9[%c1_248, %c0_249, %c0_250] : memref<3x38x128xf32, #tpu.memory_space<vmem>>, vector<1x32x128xf32>
    %349 = vector.shape_cast %348 : vector<1x32x128xf32> to vector<32x128xf32>
    %350 = arith.mulf %343, %349 : vector<32x128xf32>
    %351 = arith.addf %310, %350 : vector<32x128xf32>
    %c2_251 = arith.constant 2 : index
    %c0_252 = arith.constant 0 : index
    %c0_253 = arith.constant 0 : index
    %352 = vector.load %arg9[%c2_251, %c0_252, %c0_253] : memref<3x38x128xf32, #tpu.memory_space<vmem>>, vector<1x32x128xf32>
    %353 = vector.shape_cast %352 : vector<1x32x128xf32> to vector<32x128xf32>
    %354 = arith.mulf %343, %353 : vector<32x128xf32>
    %355 = arith.addf %314, %354 : vector<32x128xf32>
    %c1_254 = arith.constant 1 : index
    %c0_255 = arith.constant 0 : index
    %c0_256 = arith.constant 0 : index
    %356 = vector.load %arg6[%c1_254, %c0_255, %c0_256] : memref<7x32x128xf32, #tpu.memory_space<vmem>>, vector<1x32x128xf32>
    %357 = vector.shape_cast %356 : vector<1x32x128xf32> to vector<32x128xf32>
    %358 = arith.mulf %357, %340 : vector<32x128xf32>
    %c0_257 = arith.constant 0 : index
    %c1_258 = arith.constant 1 : index
    %c0_259 = arith.constant 0 : index
    %359 = vector.load %arg9[%c0_257, %c1_258, %c0_259] : memref<3x38x128xf32, #tpu.memory_space<vmem>>, vector<1x32x128xf32>
    %360 = vector.shape_cast %359 : vector<1x32x128xf32> to vector<32x128xf32>
    %361 = arith.mulf %358, %360 : vector<32x128xf32>
    %362 = arith.addf %347, %361 : vector<32x128xf32>
    %c1_260 = arith.constant 1 : index
    %c1_261 = arith.constant 1 : index
    %c0_262 = arith.constant 0 : index
    %363 = vector.load %arg9[%c1_260, %c1_261, %c0_262] : memref<3x38x128xf32, #tpu.memory_space<vmem>>, vector<1x32x128xf32>
    %364 = vector.shape_cast %363 : vector<1x32x128xf32> to vector<32x128xf32>
    %365 = arith.mulf %358, %364 : vector<32x128xf32>
    %366 = arith.addf %351, %365 : vector<32x128xf32>
    %c2_263 = arith.constant 2 : index
    %c1_264 = arith.constant 1 : index
    %c0_265 = arith.constant 0 : index
    %367 = vector.load %arg9[%c2_263, %c1_264, %c0_265] : memref<3x38x128xf32, #tpu.memory_space<vmem>>, vector<1x32x128xf32>
    %368 = vector.shape_cast %367 : vector<1x32x128xf32> to vector<32x128xf32>
    %369 = arith.mulf %358, %368 : vector<32x128xf32>
    %370 = arith.addf %355, %369 : vector<32x128xf32>
    %c2_266 = arith.constant 2 : index
    %c0_267 = arith.constant 0 : index
    %c0_268 = arith.constant 0 : index
    %371 = vector.load %arg6[%c2_266, %c0_267, %c0_268] : memref<7x32x128xf32, #tpu.memory_space<vmem>>, vector<1x32x128xf32>
    %372 = vector.shape_cast %371 : vector<1x32x128xf32> to vector<32x128xf32>
    %373 = arith.mulf %372, %340 : vector<32x128xf32>
    %c0_269 = arith.constant 0 : index
    %c2_270 = arith.constant 2 : index
    %c0_271 = arith.constant 0 : index
    %374 = vector.load %arg9[%c0_269, %c2_270, %c0_271] : memref<3x38x128xf32, #tpu.memory_space<vmem>>, vector<1x32x128xf32>
    %375 = vector.shape_cast %374 : vector<1x32x128xf32> to vector<32x128xf32>
    %376 = arith.mulf %373, %375 : vector<32x128xf32>
    %377 = arith.addf %362, %376 : vector<32x128xf32>
    %c1_272 = arith.constant 1 : index
    %c2_273 = arith.constant 2 : index
    %c0_274 = arith.constant 0 : index
    %378 = vector.load %arg9[%c1_272, %c2_273, %c0_274] : memref<3x38x128xf32, #tpu.memory_space<vmem>>, vector<1x32x128xf32>
    %379 = vector.shape_cast %378 : vector<1x32x128xf32> to vector<32x128xf32>
    %380 = arith.mulf %373, %379 : vector<32x128xf32>
    %381 = arith.addf %366, %380 : vector<32x128xf32>
    %c2_275 = arith.constant 2 : index
    %c2_276 = arith.constant 2 : index
    %c0_277 = arith.constant 0 : index
    %382 = vector.load %arg9[%c2_275, %c2_276, %c0_277] : memref<3x38x128xf32, #tpu.memory_space<vmem>>, vector<1x32x128xf32>
    %383 = vector.shape_cast %382 : vector<1x32x128xf32> to vector<32x128xf32>
    %384 = arith.mulf %373, %383 : vector<32x128xf32>
    %385 = arith.addf %370, %384 : vector<32x128xf32>
    %c3_278 = arith.constant 3 : index
    %c0_279 = arith.constant 0 : index
    %c0_280 = arith.constant 0 : index
    %386 = vector.load %arg6[%c3_278, %c0_279, %c0_280] : memref<7x32x128xf32, #tpu.memory_space<vmem>>, vector<1x32x128xf32>
    %387 = vector.shape_cast %386 : vector<1x32x128xf32> to vector<32x128xf32>
    %388 = arith.mulf %387, %340 : vector<32x128xf32>
    %c0_281 = arith.constant 0 : index
    %c3_282 = arith.constant 3 : index
    %c0_283 = arith.constant 0 : index
    %389 = vector.load %arg9[%c0_281, %c3_282, %c0_283] : memref<3x38x128xf32, #tpu.memory_space<vmem>>, vector<1x32x128xf32>
    %390 = vector.shape_cast %389 : vector<1x32x128xf32> to vector<32x128xf32>
    %391 = arith.mulf %388, %390 : vector<32x128xf32>
    %392 = arith.addf %377, %391 : vector<32x128xf32>
    %c1_284 = arith.constant 1 : index
    %c3_285 = arith.constant 3 : index
    %c0_286 = arith.constant 0 : index
    %393 = vector.load %arg9[%c1_284, %c3_285, %c0_286] : memref<3x38x128xf32, #tpu.memory_space<vmem>>, vector<1x32x128xf32>
    %394 = vector.shape_cast %393 : vector<1x32x128xf32> to vector<32x128xf32>
    %395 = arith.mulf %388, %394 : vector<32x128xf32>
    %396 = arith.addf %381, %395 : vector<32x128xf32>
    %c2_287 = arith.constant 2 : index
    %c3_288 = arith.constant 3 : index
    %c0_289 = arith.constant 0 : index
    %397 = vector.load %arg9[%c2_287, %c3_288, %c0_289] : memref<3x38x128xf32, #tpu.memory_space<vmem>>, vector<1x32x128xf32>
    %398 = vector.shape_cast %397 : vector<1x32x128xf32> to vector<32x128xf32>
    %399 = arith.mulf %388, %398 : vector<32x128xf32>
    %400 = arith.addf %385, %399 : vector<32x128xf32>
    %c4_290 = arith.constant 4 : index
    %c0_291 = arith.constant 0 : index
    %c0_292 = arith.constant 0 : index
    %401 = vector.load %arg6[%c4_290, %c0_291, %c0_292] : memref<7x32x128xf32, #tpu.memory_space<vmem>>, vector<1x32x128xf32>
    %402 = vector.shape_cast %401 : vector<1x32x128xf32> to vector<32x128xf32>
    %403 = arith.mulf %402, %340 : vector<32x128xf32>
    %c0_293 = arith.constant 0 : index
    %c4_294 = arith.constant 4 : index
    %c0_295 = arith.constant 0 : index
    %404 = vector.load %arg9[%c0_293, %c4_294, %c0_295] : memref<3x38x128xf32, #tpu.memory_space<vmem>>, vector<1x32x128xf32>
    %405 = vector.shape_cast %404 : vector<1x32x128xf32> to vector<32x128xf32>
    %406 = arith.mulf %403, %405 : vector<32x128xf32>
    %407 = arith.addf %392, %406 : vector<32x128xf32>
    %c1_296 = arith.constant 1 : index
    %c4_297 = arith.constant 4 : index
    %c0_298 = arith.constant 0 : index
    %408 = vector.load %arg9[%c1_296, %c4_297, %c0_298] : memref<3x38x128xf32, #tpu.memory_space<vmem>>, vector<1x32x128xf32>
    %409 = vector.shape_cast %408 : vector<1x32x128xf32> to vector<32x128xf32>
    %410 = arith.mulf %403, %409 : vector<32x128xf32>
    %411 = arith.addf %396, %410 : vector<32x128xf32>
    %c2_299 = arith.constant 2 : index
    %c4_300 = arith.constant 4 : index
    %c0_301 = arith.constant 0 : index
    %412 = vector.load %arg9[%c2_299, %c4_300, %c0_301] : memref<3x38x128xf32, #tpu.memory_space<vmem>>, vector<1x32x128xf32>
    %413 = vector.shape_cast %412 : vector<1x32x128xf32> to vector<32x128xf32>
    %414 = arith.mulf %403, %413 : vector<32x128xf32>
    %415 = arith.addf %400, %414 : vector<32x128xf32>
    %c5_302 = arith.constant 5 : index
    %c0_303 = arith.constant 0 : index
    %c0_304 = arith.constant 0 : index
    %416 = vector.load %arg6[%c5_302, %c0_303, %c0_304] : memref<7x32x128xf32, #tpu.memory_space<vmem>>, vector<1x32x128xf32>
    %417 = vector.shape_cast %416 : vector<1x32x128xf32> to vector<32x128xf32>
    %418 = arith.mulf %417, %340 : vector<32x128xf32>
    %c0_305 = arith.constant 0 : index
    %c5_306 = arith.constant 5 : index
    %c0_307 = arith.constant 0 : index
    %419 = vector.load %arg9[%c0_305, %c5_306, %c0_307] : memref<3x38x128xf32, #tpu.memory_space<vmem>>, vector<1x32x128xf32>
    %420 = vector.shape_cast %419 : vector<1x32x128xf32> to vector<32x128xf32>
    %421 = arith.mulf %418, %420 : vector<32x128xf32>
    %422 = arith.addf %407, %421 : vector<32x128xf32>
    %c1_308 = arith.constant 1 : index
    %c5_309 = arith.constant 5 : index
    %c0_310 = arith.constant 0 : index
    %423 = vector.load %arg9[%c1_308, %c5_309, %c0_310] : memref<3x38x128xf32, #tpu.memory_space<vmem>>, vector<1x32x128xf32>
    %424 = vector.shape_cast %423 : vector<1x32x128xf32> to vector<32x128xf32>
    %425 = arith.mulf %418, %424 : vector<32x128xf32>
    %426 = arith.addf %411, %425 : vector<32x128xf32>
    %c2_311 = arith.constant 2 : index
    %c5_312 = arith.constant 5 : index
    %c0_313 = arith.constant 0 : index
    %427 = vector.load %arg9[%c2_311, %c5_312, %c0_313] : memref<3x38x128xf32, #tpu.memory_space<vmem>>, vector<1x32x128xf32>
    %428 = vector.shape_cast %427 : vector<1x32x128xf32> to vector<32x128xf32>
    %429 = arith.mulf %418, %428 : vector<32x128xf32>
    %430 = arith.addf %415, %429 : vector<32x128xf32>
    %c6_314 = arith.constant 6 : index
    %c0_315 = arith.constant 0 : index
    %c0_316 = arith.constant 0 : index
    %431 = vector.load %arg6[%c6_314, %c0_315, %c0_316] : memref<7x32x128xf32, #tpu.memory_space<vmem>>, vector<1x32x128xf32>
    %432 = vector.shape_cast %431 : vector<1x32x128xf32> to vector<32x128xf32>
    %433 = arith.mulf %432, %340 : vector<32x128xf32>
    %c0_317 = arith.constant 0 : index
    %c6_318 = arith.constant 6 : index
    %c0_319 = arith.constant 0 : index
    %434 = vector.load %arg9[%c0_317, %c6_318, %c0_319] : memref<3x38x128xf32, #tpu.memory_space<vmem>>, vector<1x32x128xf32>
    %435 = vector.shape_cast %434 : vector<1x32x128xf32> to vector<32x128xf32>
    %436 = arith.mulf %433, %435 : vector<32x128xf32>
    %437 = arith.addf %422, %436 : vector<32x128xf32>
    %c1_320 = arith.constant 1 : index
    %c6_321 = arith.constant 6 : index
    %c0_322 = arith.constant 0 : index
    %438 = vector.load %arg9[%c1_320, %c6_321, %c0_322] : memref<3x38x128xf32, #tpu.memory_space<vmem>>, vector<1x32x128xf32>
    %439 = vector.shape_cast %438 : vector<1x32x128xf32> to vector<32x128xf32>
    %440 = arith.mulf %433, %439 : vector<32x128xf32>
    %441 = arith.addf %426, %440 : vector<32x128xf32>
    %c2_323 = arith.constant 2 : index
    %c6_324 = arith.constant 6 : index
    %c0_325 = arith.constant 0 : index
    %442 = vector.load %arg9[%c2_323, %c6_324, %c0_325] : memref<3x38x128xf32, #tpu.memory_space<vmem>>, vector<1x32x128xf32>
    %443 = vector.shape_cast %442 : vector<1x32x128xf32> to vector<32x128xf32>
    %444 = arith.mulf %433, %443 : vector<32x128xf32>
    %445 = arith.addf %430, %444 : vector<32x128xf32>
    %c5_i32_326 = arith.constant 5 : i32
    %446 = arith.addi %1, %c5_i32_326 : i32
    %c0_327 = arith.constant 0 : index
    %447 = arith.index_cast %446 : i32 to index
    %c0_328 = arith.constant 0 : index
    %448 = vector.load %arg8[%c0_327, %447, %c0_328] : memref<3x144x128xf32, #tpu.memory_space<vmem>>, vector<1x38x128xf32>
    %449 = vector.shape_cast %448 : vector<1x38x128xf32> to vector<38x128xf32>
    %c1_i32 = arith.constant 1 : i32
    %450 = tpu.dynamic_rotate %449 by %c1_i32 dim 1 : vector<38x128xf32>, i32 -> vector<38x128xf32>
    %c0_329 = arith.constant 0 : index
    %c0_330 = arith.constant 0 : index
    %c0_331 = arith.constant 0 : index
    %451 = vector.load %arg9[%c0_329, %c0_330, %c0_331] : memref<3x38x128xf32, #tpu.memory_space<vmem>>, vector<1x38x128xf32>
    %452 = vector.shape_cast %451 : vector<1x38x128xf32> to vector<38x128xf32>
    %453 = vector.shape_cast %450 : vector<38x128xf32> to vector<1x38x128xf32>
    tpu.vector_store %arg9[%c0_329, %c0_330, %c0_331], %453 {strides = array<i32>} : memref<3x38x128xf32, #tpu.memory_space<vmem>>, vector<1x38x128xf32>,
    %c5_i32_332 = arith.constant 5 : i32
    %454 = arith.addi %1, %c5_i32_332 : i32
    %c1_333 = arith.constant 1 : index
    %455 = arith.index_cast %454 : i32 to index
    %c0_334 = arith.constant 0 : index
    %456 = vector.load %arg8[%c1_333, %455, %c0_334] : memref<3x144x128xf32, #tpu.memory_space<vmem>>, vector<1x38x128xf32>
    %457 = vector.shape_cast %456 : vector<1x38x128xf32> to vector<38x128xf32>
    %c1_i32_335 = arith.constant 1 : i32
    %458 = tpu.dynamic_rotate %457 by %c1_i32_335 dim 1 : vector<38x128xf32>, i32 -> vector<38x128xf32>
    %c1_336 = arith.constant 1 : index
    %c0_337 = arith.constant 0 : index
    %c0_338 = arith.constant 0 : index
    %459 = vector.load %arg9[%c1_336, %c0_337, %c0_338] : memref<3x38x128xf32, #tpu.memory_space<vmem>>, vector<1x38x128xf32>
    %460 = vector.shape_cast %459 : vector<1x38x128xf32> to vector<38x128xf32>
    %461 = vector.shape_cast %458 : vector<38x128xf32> to vector<1x38x128xf32>
    tpu.vector_store %arg9[%c1_336, %c0_337, %c0_338], %461 {strides = array<i32>} : memref<3x38x128xf32, #tpu.memory_space<vmem>>, vector<1x38x128xf32>,
    %c5_i32_339 = arith.constant 5 : i32
    %462 = arith.addi %1, %c5_i32_339 : i32
    %c2_340 = arith.constant 2 : index
    %463 = arith.index_cast %462 : i32 to index
    %c0_341 = arith.constant 0 : index
    %464 = vector.load %arg8[%c2_340, %463, %c0_341] : memref<3x144x128xf32, #tpu.memory_space<vmem>>, vector<1x38x128xf32>
    %465 = vector.shape_cast %464 : vector<1x38x128xf32> to vector<38x128xf32>
    %c1_i32_342 = arith.constant 1 : i32
    %466 = tpu.dynamic_rotate %465 by %c1_i32_342 dim 1 : vector<38x128xf32>, i32 -> vector<38x128xf32>
    %c2_343 = arith.constant 2 : index
    %c0_344 = arith.constant 0 : index
    %c0_345 = arith.constant 0 : index
    %467 = vector.load %arg9[%c2_343, %c0_344, %c0_345] : memref<3x38x128xf32, #tpu.memory_space<vmem>>, vector<1x38x128xf32>
    %468 = vector.shape_cast %467 : vector<1x38x128xf32> to vector<38x128xf32>
    %469 = vector.shape_cast %466 : vector<38x128xf32> to vector<1x38x128xf32>
    tpu.vector_store %arg9[%c2_343, %c0_344, %c0_345], %469 {strides = array<i32>} : memref<3x38x128xf32, #tpu.memory_space<vmem>>, vector<1x38x128xf32>,
    %c2_346 = arith.constant 2 : index
    %c0_347 = arith.constant 0 : index
    %c0_348 = arith.constant 0 : index
    %470 = vector.load %arg7[%c2_346, %c0_347, %c0_348] : memref<7x32x128xf32, #tpu.memory_space<vmem>>, vector<1x32x128xf32>
    %471 = vector.shape_cast %470 : vector<1x32x128xf32> to vector<32x128xf32>
    %c0_349 = arith.constant 0 : index
    %c0_350 = arith.constant 0 : index
    %c0_351 = arith.constant 0 : index
    %472 = vector.load %arg6[%c0_349, %c0_350, %c0_351] : memref<7x32x128xf32, #tpu.memory_space<vmem>>, vector<1x32x128xf32>
    %473 = vector.shape_cast %472 : vector<1x32x128xf32> to vector<32x128xf32>
    %474 = arith.mulf %473, %471 : vector<32x128xf32>
    %c0_352 = arith.constant 0 : index
    %c0_353 = arith.constant 0 : index
    %c0_354 = arith.constant 0 : index
    %475 = vector.load %arg9[%c0_352, %c0_353, %c0_354] : memref<3x38x128xf32, #tpu.memory_space<vmem>>, vector<1x32x128xf32>
    %476 = vector.shape_cast %475 : vector<1x32x128xf32> to vector<32x128xf32>
    %477 = arith.mulf %474, %476 : vector<32x128xf32>
    %478 = arith.addf %437, %477 : vector<32x128xf32>
    %c1_355 = arith.constant 1 : index
    %c0_356 = arith.constant 0 : index
    %c0_357 = arith.constant 0 : index
    %479 = vector.load %arg9[%c1_355, %c0_356, %c0_357] : memref<3x38x128xf32, #tpu.memory_space<vmem>>, vector<1x32x128xf32>
    %480 = vector.shape_cast %479 : vector<1x32x128xf32> to vector<32x128xf32>
    %481 = arith.mulf %474, %480 : vector<32x128xf32>
    %482 = arith.addf %441, %481 : vector<32x128xf32>
    %c2_358 = arith.constant 2 : index
    %c0_359 = arith.constant 0 : index
    %c0_360 = arith.constant 0 : index
    %483 = vector.load %arg9[%c2_358, %c0_359, %c0_360] : memref<3x38x128xf32, #tpu.memory_space<vmem>>, vector<1x32x128xf32>
    %484 = vector.shape_cast %483 : vector<1x32x128xf32> to vector<32x128xf32>
    %485 = arith.mulf %474, %484 : vector<32x128xf32>
    %486 = arith.addf %445, %485 : vector<32x128xf32>
    %c1_361 = arith.constant 1 : index
    %c0_362 = arith.constant 0 : index
    %c0_363 = arith.constant 0 : index
    %487 = vector.load %arg6[%c1_361, %c0_362, %c0_363] : memref<7x32x128xf32, #tpu.memory_space<vmem>>, vector<1x32x128xf32>
    %488 = vector.shape_cast %487 : vector<1x32x128xf32> to vector<32x128xf32>
    %489 = arith.mulf %488, %471 : vector<32x128xf32>
    %c0_364 = arith.constant 0 : index
    %c1_365 = arith.constant 1 : index
    %c0_366 = arith.constant 0 : index
    %490 = vector.load %arg9[%c0_364, %c1_365, %c0_366] : memref<3x38x128xf32, #tpu.memory_space<vmem>>, vector<1x32x128xf32>
    %491 = vector.shape_cast %490 : vector<1x32x128xf32> to vector<32x128xf32>
    %492 = arith.mulf %489, %491 : vector<32x128xf32>
    %493 = arith.addf %478, %492 : vector<32x128xf32>
    %c1_367 = arith.constant 1 : index
    %c1_368 = arith.constant 1 : index
    %c0_369 = arith.constant 0 : index
    %494 = vector.load %arg9[%c1_367, %c1_368, %c0_369] : memref<3x38x128xf32, #tpu.memory_space<vmem>>, vector<1x32x128xf32>
    %495 = vector.shape_cast %494 : vector<1x32x128xf32> to vector<32x128xf32>
    %496 = arith.mulf %489, %495 : vector<32x128xf32>
    %497 = arith.addf %482, %496 : vector<32x128xf32>
    %c2_370 = arith.constant 2 : index
    %c1_371 = arith.constant 1 : index
    %c0_372 = arith.constant 0 : index
    %498 = vector.load %arg9[%c2_370, %c1_371, %c0_372] : memref<3x38x128xf32, #tpu.memory_space<vmem>>, vector<1x32x128xf32>
    %499 = vector.shape_cast %498 : vector<1x32x128xf32> to vector<32x128xf32>
    %500 = arith.mulf %489, %499 : vector<32x128xf32>
    %501 = arith.addf %486, %500 : vector<32x128xf32>
    %c2_373 = arith.constant 2 : index
    %c0_374 = arith.constant 0 : index
    %c0_375 = arith.constant 0 : index
    %502 = vector.load %arg6[%c2_373, %c0_374, %c0_375] : memref<7x32x128xf32, #tpu.memory_space<vmem>>, vector<1x32x128xf32>
    %503 = vector.shape_cast %502 : vector<1x32x128xf32> to vector<32x128xf32>
    %504 = arith.mulf %503, %471 : vector<32x128xf32>
    %c0_376 = arith.constant 0 : index
    %c2_377 = arith.constant 2 : index
    %c0_378 = arith.constant 0 : index
    %505 = vector.load %arg9[%c0_376, %c2_377, %c0_378] : memref<3x38x128xf32, #tpu.memory_space<vmem>>, vector<1x32x128xf32>
    %506 = vector.shape_cast %505 : vector<1x32x128xf32> to vector<32x128xf32>
    %507 = arith.mulf %504, %506 : vector<32x128xf32>
    %508 = arith.addf %493, %507 : vector<32x128xf32>
    %c1_379 = arith.constant 1 : index
    %c2_380 = arith.constant 2 : index
    %c0_381 = arith.constant 0 : index
    %509 = vector.load %arg9[%c1_379, %c2_380, %c0_381] : memref<3x38x128xf32, #tpu.memory_space<vmem>>, vector<1x32x128xf32>
    %510 = vector.shape_cast %509 : vector<1x32x128xf32> to vector<32x128xf32>
    %511 = arith.mulf %504, %510 : vector<32x128xf32>
    %512 = arith.addf %497, %511 : vector<32x128xf32>
    %c2_382 = arith.constant 2 : index
    %c2_383 = arith.constant 2 : index
    %c0_384 = arith.constant 0 : index
    %513 = vector.load %arg9[%c2_382, %c2_383, %c0_384] : memref<3x38x128xf32, #tpu.memory_space<vmem>>, vector<1x32x128xf32>
    %514 = vector.shape_cast %513 : vector<1x32x128xf32> to vector<32x128xf32>
    %515 = arith.mulf %504, %514 : vector<32x128xf32>
    %516 = arith.addf %501, %515 : vector<32x128xf32>
    %c3_385 = arith.constant 3 : index
    %c0_386 = arith.constant 0 : index
    %c0_387 = arith.constant 0 : index
    %517 = vector.load %arg6[%c3_385, %c0_386, %c0_387] : memref<7x32x128xf32, #tpu.memory_space<vmem>>, vector<1x32x128xf32>
    %518 = vector.shape_cast %517 : vector<1x32x128xf32> to vector<32x128xf32>
    %519 = arith.mulf %518, %471 : vector<32x128xf32>
    %c0_388 = arith.constant 0 : index
    %c3_389 = arith.constant 3 : index
    %c0_390 = arith.constant 0 : index
    %520 = vector.load %arg9[%c0_388, %c3_389, %c0_390] : memref<3x38x128xf32, #tpu.memory_space<vmem>>, vector<1x32x128xf32>
    %521 = vector.shape_cast %520 : vector<1x32x128xf32> to vector<32x128xf32>
    %522 = arith.mulf %519, %521 : vector<32x128xf32>
    %523 = arith.addf %508, %522 : vector<32x128xf32>
    %c1_391 = arith.constant 1 : index
    %c3_392 = arith.constant 3 : index
    %c0_393 = arith.constant 0 : index
    %524 = vector.load %arg9[%c1_391, %c3_392, %c0_393] : memref<3x38x128xf32, #tpu.memory_space<vmem>>, vector<1x32x128xf32>
    %525 = vector.shape_cast %524 : vector<1x32x128xf32> to vector<32x128xf32>
    %526 = arith.mulf %519, %525 : vector<32x128xf32>
    %527 = arith.addf %512, %526 : vector<32x128xf32>
    %c2_394 = arith.constant 2 : index
    %c3_395 = arith.constant 3 : index
    %c0_396 = arith.constant 0 : index
    %528 = vector.load %arg9[%c2_394, %c3_395, %c0_396] : memref<3x38x128xf32, #tpu.memory_space<vmem>>, vector<1x32x128xf32>
    %529 = vector.shape_cast %528 : vector<1x32x128xf32> to vector<32x128xf32>
    %530 = arith.mulf %519, %529 : vector<32x128xf32>
    %531 = arith.addf %516, %530 : vector<32x128xf32>
    %c4_397 = arith.constant 4 : index
    %c0_398 = arith.constant 0 : index
    %c0_399 = arith.constant 0 : index
    %532 = vector.load %arg6[%c4_397, %c0_398, %c0_399] : memref<7x32x128xf32, #tpu.memory_space<vmem>>, vector<1x32x128xf32>
    %533 = vector.shape_cast %532 : vector<1x32x128xf32> to vector<32x128xf32>
    %534 = arith.mulf %533, %471 : vector<32x128xf32>
    %c0_400 = arith.constant 0 : index
    %c4_401 = arith.constant 4 : index
    %c0_402 = arith.constant 0 : index
    %535 = vector.load %arg9[%c0_400, %c4_401, %c0_402] : memref<3x38x128xf32, #tpu.memory_space<vmem>>, vector<1x32x128xf32>
    %536 = vector.shape_cast %535 : vector<1x32x128xf32> to vector<32x128xf32>
    %537 = arith.mulf %534, %536 : vector<32x128xf32>
    %538 = arith.addf %523, %537 : vector<32x128xf32>
    %c1_403 = arith.constant 1 : index
    %c4_404 = arith.constant 4 : index
    %c0_405 = arith.constant 0 : index
    %539 = vector.load %arg9[%c1_403, %c4_404, %c0_405] : memref<3x38x128xf32, #tpu.memory_space<vmem>>, vector<1x32x128xf32>
    %540 = vector.shape_cast %539 : vector<1x32x128xf32> to vector<32x128xf32>
    %541 = arith.mulf %534, %540 : vector<32x128xf32>
    %542 = arith.addf %527, %541 : vector<32x128xf32>
    %c2_406 = arith.constant 2 : index
    %c4_407 = arith.constant 4 : index
    %c0_408 = arith.constant 0 : index
    %543 = vector.load %arg9[%c2_406, %c4_407, %c0_408] : memref<3x38x128xf32, #tpu.memory_space<vmem>>, vector<1x32x128xf32>
    %544 = vector.shape_cast %543 : vector<1x32x128xf32> to vector<32x128xf32>
    %545 = arith.mulf %534, %544 : vector<32x128xf32>
    %546 = arith.addf %531, %545 : vector<32x128xf32>
    %c5_409 = arith.constant 5 : index
    %c0_410 = arith.constant 0 : index
    %c0_411 = arith.constant 0 : index
    %547 = vector.load %arg6[%c5_409, %c0_410, %c0_411] : memref<7x32x128xf32, #tpu.memory_space<vmem>>, vector<1x32x128xf32>
    %548 = vector.shape_cast %547 : vector<1x32x128xf32> to vector<32x128xf32>
    %549 = arith.mulf %548, %471 : vector<32x128xf32>
    %c0_412 = arith.constant 0 : index
    %c5_413 = arith.constant 5 : index
    %c0_414 = arith.constant 0 : index
    %550 = vector.load %arg9[%c0_412, %c5_413, %c0_414] : memref<3x38x128xf32, #tpu.memory_space<vmem>>, vector<1x32x128xf32>
    %551 = vector.shape_cast %550 : vector<1x32x128xf32> to vector<32x128xf32>
    %552 = arith.mulf %549, %551 : vector<32x128xf32>
    %553 = arith.addf %538, %552 : vector<32x128xf32>
    %c1_415 = arith.constant 1 : index
    %c5_416 = arith.constant 5 : index
    %c0_417 = arith.constant 0 : index
    %554 = vector.load %arg9[%c1_415, %c5_416, %c0_417] : memref<3x38x128xf32, #tpu.memory_space<vmem>>, vector<1x32x128xf32>
    %555 = vector.shape_cast %554 : vector<1x32x128xf32> to vector<32x128xf32>
    %556 = arith.mulf %549, %555 : vector<32x128xf32>
    %557 = arith.addf %542, %556 : vector<32x128xf32>
    %c2_418 = arith.constant 2 : index
    %c5_419 = arith.constant 5 : index
    %c0_420 = arith.constant 0 : index
    %558 = vector.load %arg9[%c2_418, %c5_419, %c0_420] : memref<3x38x128xf32, #tpu.memory_space<vmem>>, vector<1x32x128xf32>
    %559 = vector.shape_cast %558 : vector<1x32x128xf32> to vector<32x128xf32>
    %560 = arith.mulf %549, %559 : vector<32x128xf32>
    %561 = arith.addf %546, %560 : vector<32x128xf32>
    %c6_421 = arith.constant 6 : index
    %c0_422 = arith.constant 0 : index
    %c0_423 = arith.constant 0 : index
    %562 = vector.load %arg6[%c6_421, %c0_422, %c0_423] : memref<7x32x128xf32, #tpu.memory_space<vmem>>, vector<1x32x128xf32>
    %563 = vector.shape_cast %562 : vector<1x32x128xf32> to vector<32x128xf32>
    %564 = arith.mulf %563, %471 : vector<32x128xf32>
    %c0_424 = arith.constant 0 : index
    %c6_425 = arith.constant 6 : index
    %c0_426 = arith.constant 0 : index
    %565 = vector.load %arg9[%c0_424, %c6_425, %c0_426] : memref<3x38x128xf32, #tpu.memory_space<vmem>>, vector<1x32x128xf32>
    %566 = vector.shape_cast %565 : vector<1x32x128xf32> to vector<32x128xf32>
    %567 = arith.mulf %564, %566 : vector<32x128xf32>
    %568 = arith.addf %553, %567 : vector<32x128xf32>
    %c1_427 = arith.constant 1 : index
    %c6_428 = arith.constant 6 : index
    %c0_429 = arith.constant 0 : index
    %569 = vector.load %arg9[%c1_427, %c6_428, %c0_429] : memref<3x38x128xf32, #tpu.memory_space<vmem>>, vector<1x32x128xf32>
    %570 = vector.shape_cast %569 : vector<1x32x128xf32> to vector<32x128xf32>
    %571 = arith.mulf %564, %570 : vector<32x128xf32>
    %572 = arith.addf %557, %571 : vector<32x128xf32>
    %c2_430 = arith.constant 2 : index
    %c6_431 = arith.constant 6 : index
    %c0_432 = arith.constant 0 : index
    %573 = vector.load %arg9[%c2_430, %c6_431, %c0_432] : memref<3x38x128xf32, #tpu.memory_space<vmem>>, vector<1x32x128xf32>
    %574 = vector.shape_cast %573 : vector<1x32x128xf32> to vector<32x128xf32>
    %575 = arith.mulf %564, %574 : vector<32x128xf32>
    %576 = arith.addf %561, %575 : vector<32x128xf32>
    %c3_433 = arith.constant 3 : index
    %c0_434 = arith.constant 0 : index
    %c0_435 = arith.constant 0 : index
    %577 = vector.load %arg7[%c3_433, %c0_434, %c0_435] : memref<7x32x128xf32, #tpu.memory_space<vmem>>, vector<1x32x128xf32>
    %578 = vector.shape_cast %577 : vector<1x32x128xf32> to vector<32x128xf32>
    %c0_436 = arith.constant 0 : index
    %c0_437 = arith.constant 0 : index
    %c0_438 = arith.constant 0 : index
    %579 = vector.load %arg6[%c0_436, %c0_437, %c0_438] : memref<7x32x128xf32, #tpu.memory_space<vmem>>, vector<1x32x128xf32>
    %580 = vector.shape_cast %579 : vector<1x32x128xf32> to vector<32x128xf32>
    %581 = arith.mulf %580, %578 : vector<32x128xf32>
    %c5_i32_439 = arith.constant 5 : i32
    %582 = arith.addi %1, %c5_i32_439 : i32
    %c0_440 = arith.constant 0 : index
    %583 = arith.index_cast %582 : i32 to index
    %c0_441 = arith.constant 0 : index
    %584 = vector.load %arg8[%c0_440, %583, %c0_441] : memref<3x144x128xf32, #tpu.memory_space<vmem>>, vector<1x32x128xf32>
    %585 = vector.shape_cast %584 : vector<1x32x128xf32> to vector<32x128xf32>
    %586 = arith.mulf %581, %585 : vector<32x128xf32>
    %587 = arith.addf %568, %586 : vector<32x128xf32>
    %c5_i32_442 = arith.constant 5 : i32
    %588 = arith.addi %1, %c5_i32_442 : i32
    %c1_443 = arith.constant 1 : index
    %589 = arith.index_cast %588 : i32 to index
    %c0_444 = arith.constant 0 : index
    %590 = vector.load %arg8[%c1_443, %589, %c0_444] : memref<3x144x128xf32, #tpu.memory_space<vmem>>, vector<1x32x128xf32>
    %591 = vector.shape_cast %590 : vector<1x32x128xf32> to vector<32x128xf32>
    %592 = arith.mulf %581, %591 : vector<32x128xf32>
    %593 = arith.addf %572, %592 : vector<32x128xf32>
    %c5_i32_445 = arith.constant 5 : i32
    %594 = arith.addi %1, %c5_i32_445 : i32
    %c2_446 = arith.constant 2 : index
    %595 = arith.index_cast %594 : i32 to index
    %c0_447 = arith.constant 0 : index
    %596 = vector.load %arg8[%c2_446, %595, %c0_447] : memref<3x144x128xf32, #tpu.memory_space<vmem>>, vector<1x32x128xf32>
    %597 = vector.shape_cast %596 : vector<1x32x128xf32> to vector<32x128xf32>
    %598 = arith.mulf %581, %597 : vector<32x128xf32>
    %599 = arith.addf %576, %598 : vector<32x128xf32>
    %c1_448 = arith.constant 1 : index
    %c0_449 = arith.constant 0 : index
    %c0_450 = arith.constant 0 : index
    %600 = vector.load %arg6[%c1_448, %c0_449, %c0_450] : memref<7x32x128xf32, #tpu.memory_space<vmem>>, vector<1x32x128xf32>
    %601 = vector.shape_cast %600 : vector<1x32x128xf32> to vector<32x128xf32>
    %602 = arith.mulf %601, %578 : vector<32x128xf32>
    %c6_i32 = arith.constant 6 : i32
    %603 = arith.addi %1, %c6_i32 : i32
    %c0_451 = arith.constant 0 : index
    %604 = arith.index_cast %603 : i32 to index
    %c0_452 = arith.constant 0 : index
    %605 = vector.load %arg8[%c0_451, %604, %c0_452] : memref<3x144x128xf32, #tpu.memory_space<vmem>>, vector<1x32x128xf32>
    %606 = vector.shape_cast %605 : vector<1x32x128xf32> to vector<32x128xf32>
    %607 = arith.mulf %602, %606 : vector<32x128xf32>
    %608 = arith.addf %587, %607 : vector<32x128xf32>
    %c6_i32_453 = arith.constant 6 : i32
    %609 = arith.addi %1, %c6_i32_453 : i32
    %c1_454 = arith.constant 1 : index
    %610 = arith.index_cast %609 : i32 to index
    %c0_455 = arith.constant 0 : index
    %611 = vector.load %arg8[%c1_454, %610, %c0_455] : memref<3x144x128xf32, #tpu.memory_space<vmem>>, vector<1x32x128xf32>
    %612 = vector.shape_cast %611 : vector<1x32x128xf32> to vector<32x128xf32>
    %613 = arith.mulf %602, %612 : vector<32x128xf32>
    %614 = arith.addf %593, %613 : vector<32x128xf32>
    %c6_i32_456 = arith.constant 6 : i32
    %615 = arith.addi %1, %c6_i32_456 : i32
    %c2_457 = arith.constant 2 : index
    %616 = arith.index_cast %615 : i32 to index
    %c0_458 = arith.constant 0 : index
    %617 = vector.load %arg8[%c2_457, %616, %c0_458] : memref<3x144x128xf32, #tpu.memory_space<vmem>>, vector<1x32x128xf32>
    %618 = vector.shape_cast %617 : vector<1x32x128xf32> to vector<32x128xf32>
    %619 = arith.mulf %602, %618 : vector<32x128xf32>
    %620 = arith.addf %599, %619 : vector<32x128xf32>
    %c2_459 = arith.constant 2 : index
    %c0_460 = arith.constant 0 : index
    %c0_461 = arith.constant 0 : index
    %621 = vector.load %arg6[%c2_459, %c0_460, %c0_461] : memref<7x32x128xf32, #tpu.memory_space<vmem>>, vector<1x32x128xf32>
    %622 = vector.shape_cast %621 : vector<1x32x128xf32> to vector<32x128xf32>
    %623 = arith.mulf %622, %578 : vector<32x128xf32>
    %c7_i32 = arith.constant 7 : i32
    %624 = arith.addi %1, %c7_i32 : i32
    %c0_462 = arith.constant 0 : index
    %625 = arith.index_cast %624 : i32 to index
    %c0_463 = arith.constant 0 : index
    %626 = vector.load %arg8[%c0_462, %625, %c0_463] : memref<3x144x128xf32, #tpu.memory_space<vmem>>, vector<1x32x128xf32>
    %627 = vector.shape_cast %626 : vector<1x32x128xf32> to vector<32x128xf32>
    %628 = arith.mulf %623, %627 : vector<32x128xf32>
    %629 = arith.addf %608, %628 : vector<32x128xf32>
    %c7_i32_464 = arith.constant 7 : i32
    %630 = arith.addi %1, %c7_i32_464 : i32
    %c1_465 = arith.constant 1 : index
    %631 = arith.index_cast %630 : i32 to index
    %c0_466 = arith.constant 0 : index
    %632 = vector.load %arg8[%c1_465, %631, %c0_466] : memref<3x144x128xf32, #tpu.memory_space<vmem>>, vector<1x32x128xf32>
    %633 = vector.shape_cast %632 : vector<1x32x128xf32> to vector<32x128xf32>
    %634 = arith.mulf %623, %633 : vector<32x128xf32>
    %635 = arith.addf %614, %634 : vector<32x128xf32>
    %c7_i32_467 = arith.constant 7 : i32
    %636 = arith.addi %1, %c7_i32_467 : i32
    %c2_468 = arith.constant 2 : index
    %637 = arith.index_cast %636 : i32 to index
    %c0_469 = arith.constant 0 : index
    %638 = vector.load %arg8[%c2_468, %637, %c0_469] : memref<3x144x128xf32, #tpu.memory_space<vmem>>, vector<1x32x128xf32>
    %639 = vector.shape_cast %638 : vector<1x32x128xf32> to vector<32x128xf32>
    %640 = arith.mulf %623, %639 : vector<32x128xf32>
    %641 = arith.addf %620, %640 : vector<32x128xf32>
    %c3_470 = arith.constant 3 : index
    %c0_471 = arith.constant 0 : index
    %c0_472 = arith.constant 0 : index
    %642 = vector.load %arg6[%c3_470, %c0_471, %c0_472] : memref<7x32x128xf32, #tpu.memory_space<vmem>>, vector<1x32x128xf32>
    %643 = vector.shape_cast %642 : vector<1x32x128xf32> to vector<32x128xf32>
    %644 = arith.mulf %643, %578 : vector<32x128xf32>
    %c8_i32 = arith.constant 8 : i32
    %645 = arith.addi %1, %c8_i32 : i32
    %c0_473 = arith.constant 0 : index
    %646 = arith.index_cast %645 : i32 to index
    %c0_474 = arith.constant 0 : index
    %647 = vector.load %arg8[%c0_473, %646, %c0_474] : memref<3x144x128xf32, #tpu.memory_space<vmem>>, vector<1x32x128xf32>
    %648 = vector.shape_cast %647 : vector<1x32x128xf32> to vector<32x128xf32>
    %649 = arith.mulf %644, %648 : vector<32x128xf32>
    %650 = arith.addf %629, %649 : vector<32x128xf32>
    %c8_i32_475 = arith.constant 8 : i32
    %651 = arith.addi %1, %c8_i32_475 : i32
    %c1_476 = arith.constant 1 : index
    %652 = arith.index_cast %651 : i32 to index
    %c0_477 = arith.constant 0 : index
    %653 = vector.load %arg8[%c1_476, %652, %c0_477] : memref<3x144x128xf32, #tpu.memory_space<vmem>>, vector<1x32x128xf32>
    %654 = vector.shape_cast %653 : vector<1x32x128xf32> to vector<32x128xf32>
    %655 = arith.mulf %644, %654 : vector<32x128xf32>
    %656 = arith.addf %635, %655 : vector<32x128xf32>
    %c8_i32_478 = arith.constant 8 : i32
    %657 = arith.addi %1, %c8_i32_478 : i32
    %c2_479 = arith.constant 2 : index
    %658 = arith.index_cast %657 : i32 to index
    %c0_480 = arith.constant 0 : index
    %659 = vector.load %arg8[%c2_479, %658, %c0_480] : memref<3x144x128xf32, #tpu.memory_space<vmem>>, vector<1x32x128xf32>
    %660 = vector.shape_cast %659 : vector<1x32x128xf32> to vector<32x128xf32>
    %661 = arith.mulf %644, %660 : vector<32x128xf32>
    %662 = arith.addf %641, %661 : vector<32x128xf32>
    %c4_481 = arith.constant 4 : index
    %c0_482 = arith.constant 0 : index
    %c0_483 = arith.constant 0 : index
    %663 = vector.load %arg6[%c4_481, %c0_482, %c0_483] : memref<7x32x128xf32, #tpu.memory_space<vmem>>, vector<1x32x128xf32>
    %664 = vector.shape_cast %663 : vector<1x32x128xf32> to vector<32x128xf32>
    %665 = arith.mulf %664, %578 : vector<32x128xf32>
    %c9_i32 = arith.constant 9 : i32
    %666 = arith.addi %1, %c9_i32 : i32
    %c0_484 = arith.constant 0 : index
    %667 = arith.index_cast %666 : i32 to index
    %c0_485 = arith.constant 0 : index
    %668 = vector.load %arg8[%c0_484, %667, %c0_485] : memref<3x144x128xf32, #tpu.memory_space<vmem>>, vector<1x32x128xf32>
    %669 = vector.shape_cast %668 : vector<1x32x128xf32> to vector<32x128xf32>
    %670 = arith.mulf %665, %669 : vector<32x128xf32>
    %671 = arith.addf %650, %670 : vector<32x128xf32>
    %c9_i32_486 = arith.constant 9 : i32
    %672 = arith.addi %1, %c9_i32_486 : i32
    %c1_487 = arith.constant 1 : index
    %673 = arith.index_cast %672 : i32 to index
    %c0_488 = arith.constant 0 : index
    %674 = vector.load %arg8[%c1_487, %673, %c0_488] : memref<3x144x128xf32, #tpu.memory_space<vmem>>, vector<1x32x128xf32>
    %675 = vector.shape_cast %674 : vector<1x32x128xf32> to vector<32x128xf32>
    %676 = arith.mulf %665, %675 : vector<32x128xf32>
    %677 = arith.addf %656, %676 : vector<32x128xf32>
    %c9_i32_489 = arith.constant 9 : i32
    %678 = arith.addi %1, %c9_i32_489 : i32
    %c2_490 = arith.constant 2 : index
    %679 = arith.index_cast %678 : i32 to index
    %c0_491 = arith.constant 0 : index
    %680 = vector.load %arg8[%c2_490, %679, %c0_491] : memref<3x144x128xf32, #tpu.memory_space<vmem>>, vector<1x32x128xf32>
    %681 = vector.shape_cast %680 : vector<1x32x128xf32> to vector<32x128xf32>
    %682 = arith.mulf %665, %681 : vector<32x128xf32>
    %683 = arith.addf %662, %682 : vector<32x128xf32>
    %c5_492 = arith.constant 5 : index
    %c0_493 = arith.constant 0 : index
    %c0_494 = arith.constant 0 : index
    %684 = vector.load %arg6[%c5_492, %c0_493, %c0_494] : memref<7x32x128xf32, #tpu.memory_space<vmem>>, vector<1x32x128xf32>
    %685 = vector.shape_cast %684 : vector<1x32x128xf32> to vector<32x128xf32>
    %686 = arith.mulf %685, %578 : vector<32x128xf32>
    %c10_i32 = arith.constant 10 : i32
    %687 = arith.addi %1, %c10_i32 : i32
    %c0_495 = arith.constant 0 : index
    %688 = arith.index_cast %687 : i32 to index
    %c0_496 = arith.constant 0 : index
    %689 = vector.load %arg8[%c0_495, %688, %c0_496] : memref<3x144x128xf32, #tpu.memory_space<vmem>>, vector<1x32x128xf32>
    %690 = vector.shape_cast %689 : vector<1x32x128xf32> to vector<32x128xf32>
    %691 = arith.mulf %686, %690 : vector<32x128xf32>
    %692 = arith.addf %671, %691 : vector<32x128xf32>
    %c10_i32_497 = arith.constant 10 : i32
    %693 = arith.addi %1, %c10_i32_497 : i32
    %c1_498 = arith.constant 1 : index
    %694 = arith.index_cast %693 : i32 to index
    %c0_499 = arith.constant 0 : index
    %695 = vector.load %arg8[%c1_498, %694, %c0_499] : memref<3x144x128xf32, #tpu.memory_space<vmem>>, vector<1x32x128xf32>
    %696 = vector.shape_cast %695 : vector<1x32x128xf32> to vector<32x128xf32>
    %697 = arith.mulf %686, %696 : vector<32x128xf32>
    %698 = arith.addf %677, %697 : vector<32x128xf32>
    %c10_i32_500 = arith.constant 10 : i32
    %699 = arith.addi %1, %c10_i32_500 : i32
    %c2_501 = arith.constant 2 : index
    %700 = arith.index_cast %699 : i32 to index
    %c0_502 = arith.constant 0 : index
    %701 = vector.load %arg8[%c2_501, %700, %c0_502] : memref<3x144x128xf32, #tpu.memory_space<vmem>>, vector<1x32x128xf32>
    %702 = vector.shape_cast %701 : vector<1x32x128xf32> to vector<32x128xf32>
    %703 = arith.mulf %686, %702 : vector<32x128xf32>
    %704 = arith.addf %683, %703 : vector<32x128xf32>
    %c6_503 = arith.constant 6 : index
    %c0_504 = arith.constant 0 : index
    %c0_505 = arith.constant 0 : index
    %705 = vector.load %arg6[%c6_503, %c0_504, %c0_505] : memref<7x32x128xf32, #tpu.memory_space<vmem>>, vector<1x32x128xf32>
    %706 = vector.shape_cast %705 : vector<1x32x128xf32> to vector<32x128xf32>
    %707 = arith.mulf %706, %578 : vector<32x128xf32>
    %c11_i32 = arith.constant 11 : i32
    %708 = arith.addi %1, %c11_i32 : i32
    %c0_506 = arith.constant 0 : index
    %709 = arith.index_cast %708 : i32 to index
    %c0_507 = arith.constant 0 : index
    %710 = vector.load %arg8[%c0_506, %709, %c0_507] : memref<3x144x128xf32, #tpu.memory_space<vmem>>, vector<1x32x128xf32>
    %711 = vector.shape_cast %710 : vector<1x32x128xf32> to vector<32x128xf32>
    %712 = arith.mulf %707, %711 : vector<32x128xf32>
    %713 = arith.addf %692, %712 : vector<32x128xf32>
    %c11_i32_508 = arith.constant 11 : i32
    %714 = arith.addi %1, %c11_i32_508 : i32
    %c1_509 = arith.constant 1 : index
    %715 = arith.index_cast %714 : i32 to index
    %c0_510 = arith.constant 0 : index
    %716 = vector.load %arg8[%c1_509, %715, %c0_510] : memref<3x144x128xf32, #tpu.memory_space<vmem>>, vector<1x32x128xf32>
    %717 = vector.shape_cast %716 : vector<1x32x128xf32> to vector<32x128xf32>
    %718 = arith.mulf %707, %717 : vector<32x128xf32>
    %719 = arith.addf %698, %718 : vector<32x128xf32>
    %c11_i32_511 = arith.constant 11 : i32
    %720 = arith.addi %1, %c11_i32_511 : i32
    %c2_512 = arith.constant 2 : index
    %721 = arith.index_cast %720 : i32 to index
    %c0_513 = arith.constant 0 : index
    %722 = vector.load %arg8[%c2_512, %721, %c0_513] : memref<3x144x128xf32, #tpu.memory_space<vmem>>, vector<1x32x128xf32>
    %723 = vector.shape_cast %722 : vector<1x32x128xf32> to vector<32x128xf32>
    %724 = arith.mulf %707, %723 : vector<32x128xf32>
    %725 = arith.addf %704, %724 : vector<32x128xf32>
    %c5_i32_514 = arith.constant 5 : i32
    %726 = arith.addi %1, %c5_i32_514 : i32
    %c0_515 = arith.constant 0 : index
    %727 = arith.index_cast %726 : i32 to index
    %c0_516 = arith.constant 0 : index
    %728 = vector.load %arg8[%c0_515, %727, %c0_516] : memref<3x144x128xf32, #tpu.memory_space<vmem>>, vector<1x38x128xf32>
    %729 = vector.shape_cast %728 : vector<1x38x128xf32> to vector<38x128xf32>
    %c127_i32 = arith.constant 127 : i32
    %730 = tpu.dynamic_rotate %729 by %c127_i32 dim 1 : vector<38x128xf32>, i32 -> vector<38x128xf32>
    %c0_517 = arith.constant 0 : index
    %c0_518 = arith.constant 0 : index
    %c0_519 = arith.constant 0 : index
    %731 = vector.load %arg9[%c0_517, %c0_518, %c0_519] : memref<3x38x128xf32, #tpu.memory_space<vmem>>, vector<1x38x128xf32>
    %732 = vector.shape_cast %731 : vector<1x38x128xf32> to vector<38x128xf32>
    %733 = vector.shape_cast %730 : vector<38x128xf32> to vector<1x38x128xf32>
    tpu.vector_store %arg9[%c0_517, %c0_518, %c0_519], %733 {strides = array<i32>} : memref<3x38x128xf32, #tpu.memory_space<vmem>>, vector<1x38x128xf32>,
    %c5_i32_520 = arith.constant 5 : i32
    %734 = arith.addi %1, %c5_i32_520 : i32
    %c1_521 = arith.constant 1 : index
    %735 = arith.index_cast %734 : i32 to index
    %c0_522 = arith.constant 0 : index
    %736 = vector.load %arg8[%c1_521, %735, %c0_522] : memref<3x144x128xf32, #tpu.memory_space<vmem>>, vector<1x38x128xf32>
    %737 = vector.shape_cast %736 : vector<1x38x128xf32> to vector<38x128xf32>
    %c127_i32_523 = arith.constant 127 : i32
    %738 = tpu.dynamic_rotate %737 by %c127_i32_523 dim 1 : vector<38x128xf32>, i32 -> vector<38x128xf32>
    %c1_524 = arith.constant 1 : index
    %c0_525 = arith.constant 0 : index
    %c0_526 = arith.constant 0 : index
    %739 = vector.load %arg9[%c1_524, %c0_525, %c0_526] : memref<3x38x128xf32, #tpu.memory_space<vmem>>, vector<1x38x128xf32>
    %740 = vector.shape_cast %739 : vector<1x38x128xf32> to vector<38x128xf32>
    %741 = vector.shape_cast %738 : vector<38x128xf32> to vector<1x38x128xf32>
    tpu.vector_store %arg9[%c1_524, %c0_525, %c0_526], %741 {strides = array<i32>} : memref<3x38x128xf32, #tpu.memory_space<vmem>>, vector<1x38x128xf32>,
    %c5_i32_527 = arith.constant 5 : i32
    %742 = arith.addi %1, %c5_i32_527 : i32
    %c2_528 = arith.constant 2 : index
    %743 = arith.index_cast %742 : i32 to index
    %c0_529 = arith.constant 0 : index
    %744 = vector.load %arg8[%c2_528, %743, %c0_529] : memref<3x144x128xf32, #tpu.memory_space<vmem>>, vector<1x38x128xf32>
    %745 = vector.shape_cast %744 : vector<1x38x128xf32> to vector<38x128xf32>
    %c127_i32_530 = arith.constant 127 : i32
    %746 = tpu.dynamic_rotate %745 by %c127_i32_530 dim 1 : vector<38x128xf32>, i32 -> vector<38x128xf32>
    %c2_531 = arith.constant 2 : index
    %c0_532 = arith.constant 0 : index
    %c0_533 = arith.constant 0 : index
    %747 = vector.load %arg9[%c2_531, %c0_532, %c0_533] : memref<3x38x128xf32, #tpu.memory_space<vmem>>, vector<1x38x128xf32>
    %748 = vector.shape_cast %747 : vector<1x38x128xf32> to vector<38x128xf32>
    %749 = vector.shape_cast %746 : vector<38x128xf32> to vector<1x38x128xf32>
    tpu.vector_store %arg9[%c2_531, %c0_532, %c0_533], %749 {strides = array<i32>} : memref<3x38x128xf32, #tpu.memory_space<vmem>>, vector<1x38x128xf32>,
    %c4_534 = arith.constant 4 : index
    %c0_535 = arith.constant 0 : index
    %c0_536 = arith.constant 0 : index
    %750 = vector.load %arg7[%c4_534, %c0_535, %c0_536] : memref<7x32x128xf32, #tpu.memory_space<vmem>>, vector<1x32x128xf32>
    %751 = vector.shape_cast %750 : vector<1x32x128xf32> to vector<32x128xf32>
    %c0_537 = arith.constant 0 : index
    %c0_538 = arith.constant 0 : index
    %c0_539 = arith.constant 0 : index
    %752 = vector.load %arg6[%c0_537, %c0_538, %c0_539] : memref<7x32x128xf32, #tpu.memory_space<vmem>>, vector<1x32x128xf32>
    %753 = vector.shape_cast %752 : vector<1x32x128xf32> to vector<32x128xf32>
    %754 = arith.mulf %753, %751 : vector<32x128xf32>
    %c0_540 = arith.constant 0 : index
    %c0_541 = arith.constant 0 : index
    %c0_542 = arith.constant 0 : index
    %755 = vector.load %arg9[%c0_540, %c0_541, %c0_542] : memref<3x38x128xf32, #tpu.memory_space<vmem>>, vector<1x32x128xf32>
    %756 = vector.shape_cast %755 : vector<1x32x128xf32> to vector<32x128xf32>
    %757 = arith.mulf %754, %756 : vector<32x128xf32>
    %758 = arith.addf %713, %757 : vector<32x128xf32>
    %c1_543 = arith.constant 1 : index
    %c0_544 = arith.constant 0 : index
    %c0_545 = arith.constant 0 : index
    %759 = vector.load %arg9[%c1_543, %c0_544, %c0_545] : memref<3x38x128xf32, #tpu.memory_space<vmem>>, vector<1x32x128xf32>
    %760 = vector.shape_cast %759 : vector<1x32x128xf32> to vector<32x128xf32>
    %761 = arith.mulf %754, %760 : vector<32x128xf32>
    %762 = arith.addf %719, %761 : vector<32x128xf32>
    %c2_546 = arith.constant 2 : index
    %c0_547 = arith.constant 0 : index
    %c0_548 = arith.constant 0 : index
    %763 = vector.load %arg9[%c2_546, %c0_547, %c0_548] : memref<3x38x128xf32, #tpu.memory_space<vmem>>, vector<1x32x128xf32>
    %764 = vector.shape_cast %763 : vector<1x32x128xf32> to vector<32x128xf32>
    %765 = arith.mulf %754, %764 : vector<32x128xf32>
    %766 = arith.addf %725, %765 : vector<32x128xf32>
    %c1_549 = arith.constant 1 : index
    %c0_550 = arith.constant 0 : index
    %c0_551 = arith.constant 0 : index
    %767 = vector.load %arg6[%c1_549, %c0_550, %c0_551] : memref<7x32x128xf32, #tpu.memory_space<vmem>>, vector<1x32x128xf32>
    %768 = vector.shape_cast %767 : vector<1x32x128xf32> to vector<32x128xf32>
    %769 = arith.mulf %768, %751 : vector<32x128xf32>
    %c0_552 = arith.constant 0 : index
    %c1_553 = arith.constant 1 : index
    %c0_554 = arith.constant 0 : index
    %770 = vector.load %arg9[%c0_552, %c1_553, %c0_554] : memref<3x38x128xf32, #tpu.memory_space<vmem>>, vector<1x32x128xf32>
    %771 = vector.shape_cast %770 : vector<1x32x128xf32> to vector<32x128xf32>
    %772 = arith.mulf %769, %771 : vector<32x128xf32>
    %773 = arith.addf %758, %772 : vector<32x128xf32>
    %c1_555 = arith.constant 1 : index
    %c1_556 = arith.constant 1 : index
    %c0_557 = arith.constant 0 : index
    %774 = vector.load %arg9[%c1_555, %c1_556, %c0_557] : memref<3x38x128xf32, #tpu.memory_space<vmem>>, vector<1x32x128xf32>
    %775 = vector.shape_cast %774 : vector<1x32x128xf32> to vector<32x128xf32>
    %776 = arith.mulf %769, %775 : vector<32x128xf32>
    %777 = arith.addf %762, %776 : vector<32x128xf32>
    %c2_558 = arith.constant 2 : index
    %c1_559 = arith.constant 1 : index
    %c0_560 = arith.constant 0 : index
    %778 = vector.load %arg9[%c2_558, %c1_559, %c0_560] : memref<3x38x128xf32, #tpu.memory_space<vmem>>, vector<1x32x128xf32>
    %779 = vector.shape_cast %778 : vector<1x32x128xf32> to vector<32x128xf32>
    %780 = arith.mulf %769, %779 : vector<32x128xf32>
    %781 = arith.addf %766, %780 : vector<32x128xf32>
    %c2_561 = arith.constant 2 : index
    %c0_562 = arith.constant 0 : index
    %c0_563 = arith.constant 0 : index
    %782 = vector.load %arg6[%c2_561, %c0_562, %c0_563] : memref<7x32x128xf32, #tpu.memory_space<vmem>>, vector<1x32x128xf32>
    %783 = vector.shape_cast %782 : vector<1x32x128xf32> to vector<32x128xf32>
    %784 = arith.mulf %783, %751 : vector<32x128xf32>
    %c0_564 = arith.constant 0 : index
    %c2_565 = arith.constant 2 : index
    %c0_566 = arith.constant 0 : index
    %785 = vector.load %arg9[%c0_564, %c2_565, %c0_566] : memref<3x38x128xf32, #tpu.memory_space<vmem>>, vector<1x32x128xf32>
    %786 = vector.shape_cast %785 : vector<1x32x128xf32> to vector<32x128xf32>
    %787 = arith.mulf %784, %786 : vector<32x128xf32>
    %788 = arith.addf %773, %787 : vector<32x128xf32>
    %c1_567 = arith.constant 1 : index
    %c2_568 = arith.constant 2 : index
    %c0_569 = arith.constant 0 : index
    %789 = vector.load %arg9[%c1_567, %c2_568, %c0_569] : memref<3x38x128xf32, #tpu.memory_space<vmem>>, vector<1x32x128xf32>
    %790 = vector.shape_cast %789 : vector<1x32x128xf32> to vector<32x128xf32>
    %791 = arith.mulf %784, %790 : vector<32x128xf32>
    %792 = arith.addf %777, %791 : vector<32x128xf32>
    %c2_570 = arith.constant 2 : index
    %c2_571 = arith.constant 2 : index
    %c0_572 = arith.constant 0 : index
    %793 = vector.load %arg9[%c2_570, %c2_571, %c0_572] : memref<3x38x128xf32, #tpu.memory_space<vmem>>, vector<1x32x128xf32>
    %794 = vector.shape_cast %793 : vector<1x32x128xf32> to vector<32x128xf32>
    %795 = arith.mulf %784, %794 : vector<32x128xf32>
    %796 = arith.addf %781, %795 : vector<32x128xf32>
    %c3_573 = arith.constant 3 : index
    %c0_574 = arith.constant 0 : index
    %c0_575 = arith.constant 0 : index
    %797 = vector.load %arg6[%c3_573, %c0_574, %c0_575] : memref<7x32x128xf32, #tpu.memory_space<vmem>>, vector<1x32x128xf32>
    %798 = vector.shape_cast %797 : vector<1x32x128xf32> to vector<32x128xf32>
    %799 = arith.mulf %798, %751 : vector<32x128xf32>
    %c0_576 = arith.constant 0 : index
    %c3_577 = arith.constant 3 : index
    %c0_578 = arith.constant 0 : index
    %800 = vector.load %arg9[%c0_576, %c3_577, %c0_578] : memref<3x38x128xf32, #tpu.memory_space<vmem>>, vector<1x32x128xf32>
    %801 = vector.shape_cast %800 : vector<1x32x128xf32> to vector<32x128xf32>
    %802 = arith.mulf %799, %801 : vector<32x128xf32>
    %803 = arith.addf %788, %802 : vector<32x128xf32>
    %c1_579 = arith.constant 1 : index
    %c3_580 = arith.constant 3 : index
    %c0_581 = arith.constant 0 : index
    %804 = vector.load %arg9[%c1_579, %c3_580, %c0_581] : memref<3x38x128xf32, #tpu.memory_space<vmem>>, vector<1x32x128xf32>
    %805 = vector.shape_cast %804 : vector<1x32x128xf32> to vector<32x128xf32>
    %806 = arith.mulf %799, %805 : vector<32x128xf32>
    %807 = arith.addf %792, %806 : vector<32x128xf32>
    %c2_582 = arith.constant 2 : index
    %c3_583 = arith.constant 3 : index
    %c0_584 = arith.constant 0 : index
    %808 = vector.load %arg9[%c2_582, %c3_583, %c0_584] : memref<3x38x128xf32, #tpu.memory_space<vmem>>, vector<1x32x128xf32>
    %809 = vector.shape_cast %808 : vector<1x32x128xf32> to vector<32x128xf32>
    %810 = arith.mulf %799, %809 : vector<32x128xf32>
    %811 = arith.addf %796, %810 : vector<32x128xf32>
    %c4_585 = arith.constant 4 : index
    %c0_586 = arith.constant 0 : index
    %c0_587 = arith.constant 0 : index
    %812 = vector.load %arg6[%c4_585, %c0_586, %c0_587] : memref<7x32x128xf32, #tpu.memory_space<vmem>>, vector<1x32x128xf32>
    %813 = vector.shape_cast %812 : vector<1x32x128xf32> to vector<32x128xf32>
    %814 = arith.mulf %813, %751 : vector<32x128xf32>
    %c0_588 = arith.constant 0 : index
    %c4_589 = arith.constant 4 : index
    %c0_590 = arith.constant 0 : index
    %815 = vector.load %arg9[%c0_588, %c4_589, %c0_590] : memref<3x38x128xf32, #tpu.memory_space<vmem>>, vector<1x32x128xf32>
    %816 = vector.shape_cast %815 : vector<1x32x128xf32> to vector<32x128xf32>
    %817 = arith.mulf %814, %816 : vector<32x128xf32>
    %818 = arith.addf %803, %817 : vector<32x128xf32>
    %c1_591 = arith.constant 1 : index
    %c4_592 = arith.constant 4 : index
    %c0_593 = arith.constant 0 : index
    %819 = vector.load %arg9[%c1_591, %c4_592, %c0_593] : memref<3x38x128xf32, #tpu.memory_space<vmem>>, vector<1x32x128xf32>
    %820 = vector.shape_cast %819 : vector<1x32x128xf32> to vector<32x128xf32>
    %821 = arith.mulf %814, %820 : vector<32x128xf32>
    %822 = arith.addf %807, %821 : vector<32x128xf32>
    %c2_594 = arith.constant 2 : index
    %c4_595 = arith.constant 4 : index
    %c0_596 = arith.constant 0 : index
    %823 = vector.load %arg9[%c2_594, %c4_595, %c0_596] : memref<3x38x128xf32, #tpu.memory_space<vmem>>, vector<1x32x128xf32>
    %824 = vector.shape_cast %823 : vector<1x32x128xf32> to vector<32x128xf32>
    %825 = arith.mulf %814, %824 : vector<32x128xf32>
    %826 = arith.addf %811, %825 : vector<32x128xf32>
    %c5_597 = arith.constant 5 : index
    %c0_598 = arith.constant 0 : index
    %c0_599 = arith.constant 0 : index
    %827 = vector.load %arg6[%c5_597, %c0_598, %c0_599] : memref<7x32x128xf32, #tpu.memory_space<vmem>>, vector<1x32x128xf32>
    %828 = vector.shape_cast %827 : vector<1x32x128xf32> to vector<32x128xf32>
    %829 = arith.mulf %828, %751 : vector<32x128xf32>
    %c0_600 = arith.constant 0 : index
    %c5_601 = arith.constant 5 : index
    %c0_602 = arith.constant 0 : index
    %830 = vector.load %arg9[%c0_600, %c5_601, %c0_602] : memref<3x38x128xf32, #tpu.memory_space<vmem>>, vector<1x32x128xf32>
    %831 = vector.shape_cast %830 : vector<1x32x128xf32> to vector<32x128xf32>
    %832 = arith.mulf %829, %831 : vector<32x128xf32>
    %833 = arith.addf %818, %832 : vector<32x128xf32>
    %c1_603 = arith.constant 1 : index
    %c5_604 = arith.constant 5 : index
    %c0_605 = arith.constant 0 : index
    %834 = vector.load %arg9[%c1_603, %c5_604, %c0_605] : memref<3x38x128xf32, #tpu.memory_space<vmem>>, vector<1x32x128xf32>
    %835 = vector.shape_cast %834 : vector<1x32x128xf32> to vector<32x128xf32>
    %836 = arith.mulf %829, %835 : vector<32x128xf32>
    %837 = arith.addf %822, %836 : vector<32x128xf32>
    %c2_606 = arith.constant 2 : index
    %c5_607 = arith.constant 5 : index
    %c0_608 = arith.constant 0 : index
    %838 = vector.load %arg9[%c2_606, %c5_607, %c0_608] : memref<3x38x128xf32, #tpu.memory_space<vmem>>, vector<1x32x128xf32>
    %839 = vector.shape_cast %838 : vector<1x32x128xf32> to vector<32x128xf32>
    %840 = arith.mulf %829, %839 : vector<32x128xf32>
    %841 = arith.addf %826, %840 : vector<32x128xf32>
    %c6_609 = arith.constant 6 : index
    %c0_610 = arith.constant 0 : index
    %c0_611 = arith.constant 0 : index
    %842 = vector.load %arg6[%c6_609, %c0_610, %c0_611] : memref<7x32x128xf32, #tpu.memory_space<vmem>>, vector<1x32x128xf32>
    %843 = vector.shape_cast %842 : vector<1x32x128xf32> to vector<32x128xf32>
    %844 = arith.mulf %843, %751 : vector<32x128xf32>
    %c0_612 = arith.constant 0 : index
    %c6_613 = arith.constant 6 : index
    %c0_614 = arith.constant 0 : index
    %845 = vector.load %arg9[%c0_612, %c6_613, %c0_614] : memref<3x38x128xf32, #tpu.memory_space<vmem>>, vector<1x32x128xf32>
    %846 = vector.shape_cast %845 : vector<1x32x128xf32> to vector<32x128xf32>
    %847 = arith.mulf %844, %846 : vector<32x128xf32>
    %848 = arith.addf %833, %847 : vector<32x128xf32>
    %c1_615 = arith.constant 1 : index
    %c6_616 = arith.constant 6 : index
    %c0_617 = arith.constant 0 : index
    %849 = vector.load %arg9[%c1_615, %c6_616, %c0_617] : memref<3x38x128xf32, #tpu.memory_space<vmem>>, vector<1x32x128xf32>
    %850 = vector.shape_cast %849 : vector<1x32x128xf32> to vector<32x128xf32>
    %851 = arith.mulf %844, %850 : vector<32x128xf32>
    %852 = arith.addf %837, %851 : vector<32x128xf32>
    %c2_618 = arith.constant 2 : index
    %c6_619 = arith.constant 6 : index
    %c0_620 = arith.constant 0 : index
    %853 = vector.load %arg9[%c2_618, %c6_619, %c0_620] : memref<3x38x128xf32, #tpu.memory_space<vmem>>, vector<1x32x128xf32>
    %854 = vector.shape_cast %853 : vector<1x32x128xf32> to vector<32x128xf32>
    %855 = arith.mulf %844, %854 : vector<32x128xf32>
    %856 = arith.addf %841, %855 : vector<32x128xf32>
    %c5_i32_621 = arith.constant 5 : i32
    %857 = arith.addi %1, %c5_i32_621 : i32
    %c0_622 = arith.constant 0 : index
    %858 = arith.index_cast %857 : i32 to index
    %c0_623 = arith.constant 0 : index
    %859 = vector.load %arg8[%c0_622, %858, %c0_623] : memref<3x144x128xf32, #tpu.memory_space<vmem>>, vector<1x38x128xf32>
    %860 = vector.shape_cast %859 : vector<1x38x128xf32> to vector<38x128xf32>
    %c126_i32 = arith.constant 126 : i32
    %861 = tpu.dynamic_rotate %860 by %c126_i32 dim 1 : vector<38x128xf32>, i32 -> vector<38x128xf32>
    %c0_624 = arith.constant 0 : index
    %c0_625 = arith.constant 0 : index
    %c0_626 = arith.constant 0 : index
    %862 = vector.load %arg9[%c0_624, %c0_625, %c0_626] : memref<3x38x128xf32, #tpu.memory_space<vmem>>, vector<1x38x128xf32>
    %863 = vector.shape_cast %862 : vector<1x38x128xf32> to vector<38x128xf32>
    %864 = vector.shape_cast %861 : vector<38x128xf32> to vector<1x38x128xf32>
    tpu.vector_store %arg9[%c0_624, %c0_625, %c0_626], %864 {strides = array<i32>} : memref<3x38x128xf32, #tpu.memory_space<vmem>>, vector<1x38x128xf32>,
    %c5_i32_627 = arith.constant 5 : i32
    %865 = arith.addi %1, %c5_i32_627 : i32
    %c1_628 = arith.constant 1 : index
    %866 = arith.index_cast %865 : i32 to index
    %c0_629 = arith.constant 0 : index
    %867 = vector.load %arg8[%c1_628, %866, %c0_629] : memref<3x144x128xf32, #tpu.memory_space<vmem>>, vector<1x38x128xf32>
    %868 = vector.shape_cast %867 : vector<1x38x128xf32> to vector<38x128xf32>
    %c126_i32_630 = arith.constant 126 : i32
    %869 = tpu.dynamic_rotate %868 by %c126_i32_630 dim 1 : vector<38x128xf32>, i32 -> vector<38x128xf32>
    %c1_631 = arith.constant 1 : index
    %c0_632 = arith.constant 0 : index
    %c0_633 = arith.constant 0 : index
    %870 = vector.load %arg9[%c1_631, %c0_632, %c0_633] : memref<3x38x128xf32, #tpu.memory_space<vmem>>, vector<1x38x128xf32>
    %871 = vector.shape_cast %870 : vector<1x38x128xf32> to vector<38x128xf32>
    %872 = vector.shape_cast %869 : vector<38x128xf32> to vector<1x38x128xf32>
    tpu.vector_store %arg9[%c1_631, %c0_632, %c0_633], %872 {strides = array<i32>} : memref<3x38x128xf32, #tpu.memory_space<vmem>>, vector<1x38x128xf32>,
    %c5_i32_634 = arith.constant 5 : i32
    %873 = arith.addi %1, %c5_i32_634 : i32
    %c2_635 = arith.constant 2 : index
    %874 = arith.index_cast %873 : i32 to index
    %c0_636 = arith.constant 0 : index
    %875 = vector.load %arg8[%c2_635, %874, %c0_636] : memref<3x144x128xf32, #tpu.memory_space<vmem>>, vector<1x38x128xf32>
    %876 = vector.shape_cast %875 : vector<1x38x128xf32> to vector<38x128xf32>
    %c126_i32_637 = arith.constant 126 : i32
    %877 = tpu.dynamic_rotate %876 by %c126_i32_637 dim 1 : vector<38x128xf32>, i32 -> vector<38x128xf32>
    %c2_638 = arith.constant 2 : index
    %c0_639 = arith.constant 0 : index
    %c0_640 = arith.constant 0 : index
    %878 = vector.load %arg9[%c2_638, %c0_639, %c0_640] : memref<3x38x128xf32, #tpu.memory_space<vmem>>, vector<1x38x128xf32>
    %879 = vector.shape_cast %878 : vector<1x38x128xf32> to vector<38x128xf32>
    %880 = vector.shape_cast %877 : vector<38x128xf32> to vector<1x38x128xf32>
    tpu.vector_store %arg9[%c2_638, %c0_639, %c0_640], %880 {strides = array<i32>} : memref<3x38x128xf32, #tpu.memory_space<vmem>>, vector<1x38x128xf32>,
    %c5_641 = arith.constant 5 : index
    %c0_642 = arith.constant 0 : index
    %c0_643 = arith.constant 0 : index
    %881 = vector.load %arg7[%c5_641, %c0_642, %c0_643] : memref<7x32x128xf32, #tpu.memory_space<vmem>>, vector<1x32x128xf32>
    %882 = vector.shape_cast %881 : vector<1x32x128xf32> to vector<32x128xf32>
    %c0_644 = arith.constant 0 : index
    %c0_645 = arith.constant 0 : index
    %c0_646 = arith.constant 0 : index
    %883 = vector.load %arg6[%c0_644, %c0_645, %c0_646] : memref<7x32x128xf32, #tpu.memory_space<vmem>>, vector<1x32x128xf32>
    %884 = vector.shape_cast %883 : vector<1x32x128xf32> to vector<32x128xf32>
    %885 = arith.mulf %884, %882 : vector<32x128xf32>
    %c0_647 = arith.constant 0 : index
    %c0_648 = arith.constant 0 : index
    %c0_649 = arith.constant 0 : index
    %886 = vector.load %arg9[%c0_647, %c0_648, %c0_649] : memref<3x38x128xf32, #tpu.memory_space<vmem>>, vector<1x32x128xf32>
    %887 = vector.shape_cast %886 : vector<1x32x128xf32> to vector<32x128xf32>
    %888 = arith.mulf %885, %887 : vector<32x128xf32>
    %889 = arith.addf %848, %888 : vector<32x128xf32>
    %c1_650 = arith.constant 1 : index
    %c0_651 = arith.constant 0 : index
    %c0_652 = arith.constant 0 : index
    %890 = vector.load %arg9[%c1_650, %c0_651, %c0_652] : memref<3x38x128xf32, #tpu.memory_space<vmem>>, vector<1x32x128xf32>
    %891 = vector.shape_cast %890 : vector<1x32x128xf32> to vector<32x128xf32>
    %892 = arith.mulf %885, %891 : vector<32x128xf32>
    %893 = arith.addf %852, %892 : vector<32x128xf32>
    %c2_653 = arith.constant 2 : index
    %c0_654 = arith.constant 0 : index
    %c0_655 = arith.constant 0 : index
    %894 = vector.load %arg9[%c2_653, %c0_654, %c0_655] : memref<3x38x128xf32, #tpu.memory_space<vmem>>, vector<1x32x128xf32>
    %895 = vector.shape_cast %894 : vector<1x32x128xf32> to vector<32x128xf32>
    %896 = arith.mulf %885, %895 : vector<32x128xf32>
    %897 = arith.addf %856, %896 : vector<32x128xf32>
    %c1_656 = arith.constant 1 : index
    %c0_657 = arith.constant 0 : index
    %c0_658 = arith.constant 0 : index
    %898 = vector.load %arg6[%c1_656, %c0_657, %c0_658] : memref<7x32x128xf32, #tpu.memory_space<vmem>>, vector<1x32x128xf32>
    %899 = vector.shape_cast %898 : vector<1x32x128xf32> to vector<32x128xf32>
    %900 = arith.mulf %899, %882 : vector<32x128xf32>
    %c0_659 = arith.constant 0 : index
    %c1_660 = arith.constant 1 : index
    %c0_661 = arith.constant 0 : index
    %901 = vector.load %arg9[%c0_659, %c1_660, %c0_661] : memref<3x38x128xf32, #tpu.memory_space<vmem>>, vector<1x32x128xf32>
    %902 = vector.shape_cast %901 : vector<1x32x128xf32> to vector<32x128xf32>
    %903 = arith.mulf %900, %902 : vector<32x128xf32>
    %904 = arith.addf %889, %903 : vector<32x128xf32>
    %c1_662 = arith.constant 1 : index
    %c1_663 = arith.constant 1 : index
    %c0_664 = arith.constant 0 : index
    %905 = vector.load %arg9[%c1_662, %c1_663, %c0_664] : memref<3x38x128xf32, #tpu.memory_space<vmem>>, vector<1x32x128xf32>
    %906 = vector.shape_cast %905 : vector<1x32x128xf32> to vector<32x128xf32>
    %907 = arith.mulf %900, %906 : vector<32x128xf32>
    %908 = arith.addf %893, %907 : vector<32x128xf32>
    %c2_665 = arith.constant 2 : index
    %c1_666 = arith.constant 1 : index
    %c0_667 = arith.constant 0 : index
    %909 = vector.load %arg9[%c2_665, %c1_666, %c0_667] : memref<3x38x128xf32, #tpu.memory_space<vmem>>, vector<1x32x128xf32>
    %910 = vector.shape_cast %909 : vector<1x32x128xf32> to vector<32x128xf32>
    %911 = arith.mulf %900, %910 : vector<32x128xf32>
    %912 = arith.addf %897, %911 : vector<32x128xf32>
    %c2_668 = arith.constant 2 : index
    %c0_669 = arith.constant 0 : index
    %c0_670 = arith.constant 0 : index
    %913 = vector.load %arg6[%c2_668, %c0_669, %c0_670] : memref<7x32x128xf32, #tpu.memory_space<vmem>>, vector<1x32x128xf32>
    %914 = vector.shape_cast %913 : vector<1x32x128xf32> to vector<32x128xf32>
    %915 = arith.mulf %914, %882 : vector<32x128xf32>
    %c0_671 = arith.constant 0 : index
    %c2_672 = arith.constant 2 : index
    %c0_673 = arith.constant 0 : index
    %916 = vector.load %arg9[%c0_671, %c2_672, %c0_673] : memref<3x38x128xf32, #tpu.memory_space<vmem>>, vector<1x32x128xf32>
    %917 = vector.shape_cast %916 : vector<1x32x128xf32> to vector<32x128xf32>
    %918 = arith.mulf %915, %917 : vector<32x128xf32>
    %919 = arith.addf %904, %918 : vector<32x128xf32>
    %c1_674 = arith.constant 1 : index
    %c2_675 = arith.constant 2 : index
    %c0_676 = arith.constant 0 : index
    %920 = vector.load %arg9[%c1_674, %c2_675, %c0_676] : memref<3x38x128xf32, #tpu.memory_space<vmem>>, vector<1x32x128xf32>
    %921 = vector.shape_cast %920 : vector<1x32x128xf32> to vector<32x128xf32>
    %922 = arith.mulf %915, %921 : vector<32x128xf32>
    %923 = arith.addf %908, %922 : vector<32x128xf32>
    %c2_677 = arith.constant 2 : index
    %c2_678 = arith.constant 2 : index
    %c0_679 = arith.constant 0 : index
    %924 = vector.load %arg9[%c2_677, %c2_678, %c0_679] : memref<3x38x128xf32, #tpu.memory_space<vmem>>, vector<1x32x128xf32>
    %925 = vector.shape_cast %924 : vector<1x32x128xf32> to vector<32x128xf32>
    %926 = arith.mulf %915, %925 : vector<32x128xf32>
    %927 = arith.addf %912, %926 : vector<32x128xf32>
    %c3_680 = arith.constant 3 : index
    %c0_681 = arith.constant 0 : index
    %c0_682 = arith.constant 0 : index
    %928 = vector.load %arg6[%c3_680, %c0_681, %c0_682] : memref<7x32x128xf32, #tpu.memory_space<vmem>>, vector<1x32x128xf32>
    %929 = vector.shape_cast %928 : vector<1x32x128xf32> to vector<32x128xf32>
    %930 = arith.mulf %929, %882 : vector<32x128xf32>
    %c0_683 = arith.constant 0 : index
    %c3_684 = arith.constant 3 : index
    %c0_685 = arith.constant 0 : index
    %931 = vector.load %arg9[%c0_683, %c3_684, %c0_685] : memref<3x38x128xf32, #tpu.memory_space<vmem>>, vector<1x32x128xf32>
    %932 = vector.shape_cast %931 : vector<1x32x128xf32> to vector<32x128xf32>
    %933 = arith.mulf %930, %932 : vector<32x128xf32>
    %934 = arith.addf %919, %933 : vector<32x128xf32>
    %c1_686 = arith.constant 1 : index
    %c3_687 = arith.constant 3 : index
    %c0_688 = arith.constant 0 : index
    %935 = vector.load %arg9[%c1_686, %c3_687, %c0_688] : memref<3x38x128xf32, #tpu.memory_space<vmem>>, vector<1x32x128xf32>
    %936 = vector.shape_cast %935 : vector<1x32x128xf32> to vector<32x128xf32>
    %937 = arith.mulf %930, %936 : vector<32x128xf32>
    %938 = arith.addf %923, %937 : vector<32x128xf32>
    %c2_689 = arith.constant 2 : index
    %c3_690 = arith.constant 3 : index
    %c0_691 = arith.constant 0 : index
    %939 = vector.load %arg9[%c2_689, %c3_690, %c0_691] : memref<3x38x128xf32, #tpu.memory_space<vmem>>, vector<1x32x128xf32>
    %940 = vector.shape_cast %939 : vector<1x32x128xf32> to vector<32x128xf32>
    %941 = arith.mulf %930, %940 : vector<32x128xf32>
    %942 = arith.addf %927, %941 : vector<32x128xf32>
    %c4_692 = arith.constant 4 : index
    %c0_693 = arith.constant 0 : index
    %c0_694 = arith.constant 0 : index
    %943 = vector.load %arg6[%c4_692, %c0_693, %c0_694] : memref<7x32x128xf32, #tpu.memory_space<vmem>>, vector<1x32x128xf32>
    %944 = vector.shape_cast %943 : vector<1x32x128xf32> to vector<32x128xf32>
    %945 = arith.mulf %944, %882 : vector<32x128xf32>
    %c0_695 = arith.constant 0 : index
    %c4_696 = arith.constant 4 : index
    %c0_697 = arith.constant 0 : index
    %946 = vector.load %arg9[%c0_695, %c4_696, %c0_697] : memref<3x38x128xf32, #tpu.memory_space<vmem>>, vector<1x32x128xf32>
    %947 = vector.shape_cast %946 : vector<1x32x128xf32> to vector<32x128xf32>
    %948 = arith.mulf %945, %947 : vector<32x128xf32>
    %949 = arith.addf %934, %948 : vector<32x128xf32>
    %c1_698 = arith.constant 1 : index
    %c4_699 = arith.constant 4 : index
    %c0_700 = arith.constant 0 : index
    %950 = vector.load %arg9[%c1_698, %c4_699, %c0_700] : memref<3x38x128xf32, #tpu.memory_space<vmem>>, vector<1x32x128xf32>
    %951 = vector.shape_cast %950 : vector<1x32x128xf32> to vector<32x128xf32>
    %952 = arith.mulf %945, %951 : vector<32x128xf32>
    %953 = arith.addf %938, %952 : vector<32x128xf32>
    %c2_701 = arith.constant 2 : index
    %c4_702 = arith.constant 4 : index
    %c0_703 = arith.constant 0 : index
    %954 = vector.load %arg9[%c2_701, %c4_702, %c0_703] : memref<3x38x128xf32, #tpu.memory_space<vmem>>, vector<1x32x128xf32>
    %955 = vector.shape_cast %954 : vector<1x32x128xf32> to vector<32x128xf32>
    %956 = arith.mulf %945, %955 : vector<32x128xf32>
    %957 = arith.addf %942, %956 : vector<32x128xf32>
    %c5_704 = arith.constant 5 : index
    %c0_705 = arith.constant 0 : index
    %c0_706 = arith.constant 0 : index
    %958 = vector.load %arg6[%c5_704, %c0_705, %c0_706] : memref<7x32x128xf32, #tpu.memory_space<vmem>>, vector<1x32x128xf32>
    %959 = vector.shape_cast %958 : vector<1x32x128xf32> to vector<32x128xf32>
    %960 = arith.mulf %959, %882 : vector<32x128xf32>
    %c0_707 = arith.constant 0 : index
    %c5_708 = arith.constant 5 : index
    %c0_709 = arith.constant 0 : index
    %961 = vector.load %arg9[%c0_707, %c5_708, %c0_709] : memref<3x38x128xf32, #tpu.memory_space<vmem>>, vector<1x32x128xf32>
    %962 = vector.shape_cast %961 : vector<1x32x128xf32> to vector<32x128xf32>
    %963 = arith.mulf %960, %962 : vector<32x128xf32>
    %964 = arith.addf %949, %963 : vector<32x128xf32>
    %c1_710 = arith.constant 1 : index
    %c5_711 = arith.constant 5 : index
    %c0_712 = arith.constant 0 : index
    %965 = vector.load %arg9[%c1_710, %c5_711, %c0_712] : memref<3x38x128xf32, #tpu.memory_space<vmem>>, vector<1x32x128xf32>
    %966 = vector.shape_cast %965 : vector<1x32x128xf32> to vector<32x128xf32>
    %967 = arith.mulf %960, %966 : vector<32x128xf32>
    %968 = arith.addf %953, %967 : vector<32x128xf32>
    %c2_713 = arith.constant 2 : index
    %c5_714 = arith.constant 5 : index
    %c0_715 = arith.constant 0 : index
    %969 = vector.load %arg9[%c2_713, %c5_714, %c0_715] : memref<3x38x128xf32, #tpu.memory_space<vmem>>, vector<1x32x128xf32>
    %970 = vector.shape_cast %969 : vector<1x32x128xf32> to vector<32x128xf32>
    %971 = arith.mulf %960, %970 : vector<32x128xf32>
    %972 = arith.addf %957, %971 : vector<32x128xf32>
    %c6_716 = arith.constant 6 : index
    %c0_717 = arith.constant 0 : index
    %c0_718 = arith.constant 0 : index
    %973 = vector.load %arg6[%c6_716, %c0_717, %c0_718] : memref<7x32x128xf32, #tpu.memory_space<vmem>>, vector<1x32x128xf32>
    %974 = vector.shape_cast %973 : vector<1x32x128xf32> to vector<32x128xf32>
    %975 = arith.mulf %974, %882 : vector<32x128xf32>
    %c0_719 = arith.constant 0 : index
    %c6_720 = arith.constant 6 : index
    %c0_721 = arith.constant 0 : index
    %976 = vector.load %arg9[%c0_719, %c6_720, %c0_721] : memref<3x38x128xf32, #tpu.memory_space<vmem>>, vector<1x32x128xf32>
    %977 = vector.shape_cast %976 : vector<1x32x128xf32> to vector<32x128xf32>
    %978 = arith.mulf %975, %977 : vector<32x128xf32>
    %979 = arith.addf %964, %978 : vector<32x128xf32>
    %c1_722 = arith.constant 1 : index
    %c6_723 = arith.constant 6 : index
    %c0_724 = arith.constant 0 : index
    %980 = vector.load %arg9[%c1_722, %c6_723, %c0_724] : memref<3x38x128xf32, #tpu.memory_space<vmem>>, vector<1x32x128xf32>
    %981 = vector.shape_cast %980 : vector<1x32x128xf32> to vector<32x128xf32>
    %982 = arith.mulf %975, %981 : vector<32x128xf32>
    %983 = arith.addf %968, %982 : vector<32x128xf32>
    %c2_725 = arith.constant 2 : index
    %c6_726 = arith.constant 6 : index
    %c0_727 = arith.constant 0 : index
    %984 = vector.load %arg9[%c2_725, %c6_726, %c0_727] : memref<3x38x128xf32, #tpu.memory_space<vmem>>, vector<1x32x128xf32>
    %985 = vector.shape_cast %984 : vector<1x32x128xf32> to vector<32x128xf32>
    %986 = arith.mulf %975, %985 : vector<32x128xf32>
    %987 = arith.addf %972, %986 : vector<32x128xf32>
    %c5_i32_728 = arith.constant 5 : i32
    %988 = arith.addi %1, %c5_i32_728 : i32
    %c0_729 = arith.constant 0 : index
    %989 = arith.index_cast %988 : i32 to index
    %c0_730 = arith.constant 0 : index
    %990 = vector.load %arg8[%c0_729, %989, %c0_730] : memref<3x144x128xf32, #tpu.memory_space<vmem>>, vector<1x38x128xf32>
    %991 = vector.shape_cast %990 : vector<1x38x128xf32> to vector<38x128xf32>
    %c125_i32 = arith.constant 125 : i32
    %992 = tpu.dynamic_rotate %991 by %c125_i32 dim 1 : vector<38x128xf32>, i32 -> vector<38x128xf32>
    %c0_731 = arith.constant 0 : index
    %c0_732 = arith.constant 0 : index
    %c0_733 = arith.constant 0 : index
    %993 = vector.load %arg9[%c0_731, %c0_732, %c0_733] : memref<3x38x128xf32, #tpu.memory_space<vmem>>, vector<1x38x128xf32>
    %994 = vector.shape_cast %993 : vector<1x38x128xf32> to vector<38x128xf32>
    %995 = vector.shape_cast %992 : vector<38x128xf32> to vector<1x38x128xf32>
    tpu.vector_store %arg9[%c0_731, %c0_732, %c0_733], %995 {strides = array<i32>} : memref<3x38x128xf32, #tpu.memory_space<vmem>>, vector<1x38x128xf32>,
    %c5_i32_734 = arith.constant 5 : i32
    %996 = arith.addi %1, %c5_i32_734 : i32
    %c1_735 = arith.constant 1 : index
    %997 = arith.index_cast %996 : i32 to index
    %c0_736 = arith.constant 0 : index
    %998 = vector.load %arg8[%c1_735, %997, %c0_736] : memref<3x144x128xf32, #tpu.memory_space<vmem>>, vector<1x38x128xf32>
    %999 = vector.shape_cast %998 : vector<1x38x128xf32> to vector<38x128xf32>
    %c125_i32_737 = arith.constant 125 : i32
    %1000 = tpu.dynamic_rotate %999 by %c125_i32_737 dim 1 : vector<38x128xf32>, i32 -> vector<38x128xf32>
    %c1_738 = arith.constant 1 : index
    %c0_739 = arith.constant 0 : index
    %c0_740 = arith.constant 0 : index
    %1001 = vector.load %arg9[%c1_738, %c0_739, %c0_740] : memref<3x38x128xf32, #tpu.memory_space<vmem>>, vector<1x38x128xf32>
    %1002 = vector.shape_cast %1001 : vector<1x38x128xf32> to vector<38x128xf32>
    %1003 = vector.shape_cast %1000 : vector<38x128xf32> to vector<1x38x128xf32>
    tpu.vector_store %arg9[%c1_738, %c0_739, %c0_740], %1003 {strides = array<i32>} : memref<3x38x128xf32, #tpu.memory_space<vmem>>, vector<1x38x128xf32>,
    %c5_i32_741 = arith.constant 5 : i32
    %1004 = arith.addi %1, %c5_i32_741 : i32
    %c2_742 = arith.constant 2 : index
    %1005 = arith.index_cast %1004 : i32 to index
    %c0_743 = arith.constant 0 : index
    %1006 = vector.load %arg8[%c2_742, %1005, %c0_743] : memref<3x144x128xf32, #tpu.memory_space<vmem>>, vector<1x38x128xf32>
    %1007 = vector.shape_cast %1006 : vector<1x38x128xf32> to vector<38x128xf32>
    %c125_i32_744 = arith.constant 125 : i32
    %1008 = tpu.dynamic_rotate %1007 by %c125_i32_744 dim 1 : vector<38x128xf32>, i32 -> vector<38x128xf32>
    %c2_745 = arith.constant 2 : index
    %c0_746 = arith.constant 0 : index
    %c0_747 = arith.constant 0 : index
    %1009 = vector.load %arg9[%c2_745, %c0_746, %c0_747] : memref<3x38x128xf32, #tpu.memory_space<vmem>>, vector<1x38x128xf32>
    %1010 = vector.shape_cast %1009 : vector<1x38x128xf32> to vector<38x128xf32>
    %1011 = vector.shape_cast %1008 : vector<38x128xf32> to vector<1x38x128xf32>
    tpu.vector_store %arg9[%c2_745, %c0_746, %c0_747], %1011 {strides = array<i32>} : memref<3x38x128xf32, #tpu.memory_space<vmem>>, vector<1x38x128xf32>,
    %c6_748 = arith.constant 6 : index
    %c0_749 = arith.constant 0 : index
    %c0_750 = arith.constant 0 : index
    %1012 = vector.load %arg7[%c6_748, %c0_749, %c0_750] : memref<7x32x128xf32, #tpu.memory_space<vmem>>, vector<1x32x128xf32>
    %1013 = vector.shape_cast %1012 : vector<1x32x128xf32> to vector<32x128xf32>
    %c0_751 = arith.constant 0 : index
    %c0_752 = arith.constant 0 : index
    %c0_753 = arith.constant 0 : index
    %1014 = vector.load %arg6[%c0_751, %c0_752, %c0_753] : memref<7x32x128xf32, #tpu.memory_space<vmem>>, vector<1x32x128xf32>
    %1015 = vector.shape_cast %1014 : vector<1x32x128xf32> to vector<32x128xf32>
    %1016 = arith.mulf %1015, %1013 : vector<32x128xf32>
    %c0_754 = arith.constant 0 : index
    %c0_755 = arith.constant 0 : index
    %c0_756 = arith.constant 0 : index
    %1017 = vector.load %arg9[%c0_754, %c0_755, %c0_756] : memref<3x38x128xf32, #tpu.memory_space<vmem>>, vector<1x32x128xf32>
    %1018 = vector.shape_cast %1017 : vector<1x32x128xf32> to vector<32x128xf32>
    %1019 = arith.mulf %1016, %1018 : vector<32x128xf32>
    %1020 = arith.addf %979, %1019 : vector<32x128xf32>
    %c1_757 = arith.constant 1 : index
    %c0_758 = arith.constant 0 : index
    %c0_759 = arith.constant 0 : index
    %1021 = vector.load %arg9[%c1_757, %c0_758, %c0_759] : memref<3x38x128xf32, #tpu.memory_space<vmem>>, vector<1x32x128xf32>
    %1022 = vector.shape_cast %1021 : vector<1x32x128xf32> to vector<32x128xf32>
    %1023 = arith.mulf %1016, %1022 : vector<32x128xf32>
    %1024 = arith.addf %983, %1023 : vector<32x128xf32>
    %c2_760 = arith.constant 2 : index
    %c0_761 = arith.constant 0 : index
    %c0_762 = arith.constant 0 : index
    %1025 = vector.load %arg9[%c2_760, %c0_761, %c0_762] : memref<3x38x128xf32, #tpu.memory_space<vmem>>, vector<1x32x128xf32>
    %1026 = vector.shape_cast %1025 : vector<1x32x128xf32> to vector<32x128xf32>
    %1027 = arith.mulf %1016, %1026 : vector<32x128xf32>
    %1028 = arith.addf %987, %1027 : vector<32x128xf32>
    %c1_763 = arith.constant 1 : index
    %c0_764 = arith.constant 0 : index
    %c0_765 = arith.constant 0 : index
    %1029 = vector.load %arg6[%c1_763, %c0_764, %c0_765] : memref<7x32x128xf32, #tpu.memory_space<vmem>>, vector<1x32x128xf32>
    %1030 = vector.shape_cast %1029 : vector<1x32x128xf32> to vector<32x128xf32>
    %1031 = arith.mulf %1030, %1013 : vector<32x128xf32>
    %c0_766 = arith.constant 0 : index
    %c1_767 = arith.constant 1 : index
    %c0_768 = arith.constant 0 : index
    %1032 = vector.load %arg9[%c0_766, %c1_767, %c0_768] : memref<3x38x128xf32, #tpu.memory_space<vmem>>, vector<1x32x128xf32>
    %1033 = vector.shape_cast %1032 : vector<1x32x128xf32> to vector<32x128xf32>
    %1034 = arith.mulf %1031, %1033 : vector<32x128xf32>
    %1035 = arith.addf %1020, %1034 : vector<32x128xf32>
    %c1_769 = arith.constant 1 : index
    %c1_770 = arith.constant 1 : index
    %c0_771 = arith.constant 0 : index
    %1036 = vector.load %arg9[%c1_769, %c1_770, %c0_771] : memref<3x38x128xf32, #tpu.memory_space<vmem>>, vector<1x32x128xf32>
    %1037 = vector.shape_cast %1036 : vector<1x32x128xf32> to vector<32x128xf32>
    %1038 = arith.mulf %1031, %1037 : vector<32x128xf32>
    %1039 = arith.addf %1024, %1038 : vector<32x128xf32>
    %c2_772 = arith.constant 2 : index
    %c1_773 = arith.constant 1 : index
    %c0_774 = arith.constant 0 : index
    %1040 = vector.load %arg9[%c2_772, %c1_773, %c0_774] : memref<3x38x128xf32, #tpu.memory_space<vmem>>, vector<1x32x128xf32>
    %1041 = vector.shape_cast %1040 : vector<1x32x128xf32> to vector<32x128xf32>
    %1042 = arith.mulf %1031, %1041 : vector<32x128xf32>
    %1043 = arith.addf %1028, %1042 : vector<32x128xf32>
    %c2_775 = arith.constant 2 : index
    %c0_776 = arith.constant 0 : index
    %c0_777 = arith.constant 0 : index
    %1044 = vector.load %arg6[%c2_775, %c0_776, %c0_777] : memref<7x32x128xf32, #tpu.memory_space<vmem>>, vector<1x32x128xf32>
    %1045 = vector.shape_cast %1044 : vector<1x32x128xf32> to vector<32x128xf32>
    %1046 = arith.mulf %1045, %1013 : vector<32x128xf32>
    %c0_778 = arith.constant 0 : index
    %c2_779 = arith.constant 2 : index
    %c0_780 = arith.constant 0 : index
    %1047 = vector.load %arg9[%c0_778, %c2_779, %c0_780] : memref<3x38x128xf32, #tpu.memory_space<vmem>>, vector<1x32x128xf32>
    %1048 = vector.shape_cast %1047 : vector<1x32x128xf32> to vector<32x128xf32>
    %1049 = arith.mulf %1046, %1048 : vector<32x128xf32>
    %1050 = arith.addf %1035, %1049 : vector<32x128xf32>
    %c1_781 = arith.constant 1 : index
    %c2_782 = arith.constant 2 : index
    %c0_783 = arith.constant 0 : index
    %1051 = vector.load %arg9[%c1_781, %c2_782, %c0_783] : memref<3x38x128xf32, #tpu.memory_space<vmem>>, vector<1x32x128xf32>
    %1052 = vector.shape_cast %1051 : vector<1x32x128xf32> to vector<32x128xf32>
    %1053 = arith.mulf %1046, %1052 : vector<32x128xf32>
    %1054 = arith.addf %1039, %1053 : vector<32x128xf32>
    %c2_784 = arith.constant 2 : index
    %c2_785 = arith.constant 2 : index
    %c0_786 = arith.constant 0 : index
    %1055 = vector.load %arg9[%c2_784, %c2_785, %c0_786] : memref<3x38x128xf32, #tpu.memory_space<vmem>>, vector<1x32x128xf32>
    %1056 = vector.shape_cast %1055 : vector<1x32x128xf32> to vector<32x128xf32>
    %1057 = arith.mulf %1046, %1056 : vector<32x128xf32>
    %1058 = arith.addf %1043, %1057 : vector<32x128xf32>
    %c3_787 = arith.constant 3 : index
    %c0_788 = arith.constant 0 : index
    %c0_789 = arith.constant 0 : index
    %1059 = vector.load %arg6[%c3_787, %c0_788, %c0_789] : memref<7x32x128xf32, #tpu.memory_space<vmem>>, vector<1x32x128xf32>
    %1060 = vector.shape_cast %1059 : vector<1x32x128xf32> to vector<32x128xf32>
    %1061 = arith.mulf %1060, %1013 : vector<32x128xf32>
    %c0_790 = arith.constant 0 : index
    %c3_791 = arith.constant 3 : index
    %c0_792 = arith.constant 0 : index
    %1062 = vector.load %arg9[%c0_790, %c3_791, %c0_792] : memref<3x38x128xf32, #tpu.memory_space<vmem>>, vector<1x32x128xf32>
    %1063 = vector.shape_cast %1062 : vector<1x32x128xf32> to vector<32x128xf32>
    %1064 = arith.mulf %1061, %1063 : vector<32x128xf32>
    %1065 = arith.addf %1050, %1064 : vector<32x128xf32>
    %c1_793 = arith.constant 1 : index
    %c3_794 = arith.constant 3 : index
    %c0_795 = arith.constant 0 : index
    %1066 = vector.load %arg9[%c1_793, %c3_794, %c0_795] : memref<3x38x128xf32, #tpu.memory_space<vmem>>, vector<1x32x128xf32>
    %1067 = vector.shape_cast %1066 : vector<1x32x128xf32> to vector<32x128xf32>
    %1068 = arith.mulf %1061, %1067 : vector<32x128xf32>
    %1069 = arith.addf %1054, %1068 : vector<32x128xf32>
    %c2_796 = arith.constant 2 : index
    %c3_797 = arith.constant 3 : index
    %c0_798 = arith.constant 0 : index
    %1070 = vector.load %arg9[%c2_796, %c3_797, %c0_798] : memref<3x38x128xf32, #tpu.memory_space<vmem>>, vector<1x32x128xf32>
    %1071 = vector.shape_cast %1070 : vector<1x32x128xf32> to vector<32x128xf32>
    %1072 = arith.mulf %1061, %1071 : vector<32x128xf32>
    %1073 = arith.addf %1058, %1072 : vector<32x128xf32>
    %c4_799 = arith.constant 4 : index
    %c0_800 = arith.constant 0 : index
    %c0_801 = arith.constant 0 : index
    %1074 = vector.load %arg6[%c4_799, %c0_800, %c0_801] : memref<7x32x128xf32, #tpu.memory_space<vmem>>, vector<1x32x128xf32>
    %1075 = vector.shape_cast %1074 : vector<1x32x128xf32> to vector<32x128xf32>
    %1076 = arith.mulf %1075, %1013 : vector<32x128xf32>
    %c0_802 = arith.constant 0 : index
    %c4_803 = arith.constant 4 : index
    %c0_804 = arith.constant 0 : index
    %1077 = vector.load %arg9[%c0_802, %c4_803, %c0_804] : memref<3x38x128xf32, #tpu.memory_space<vmem>>, vector<1x32x128xf32>
    %1078 = vector.shape_cast %1077 : vector<1x32x128xf32> to vector<32x128xf32>
    %1079 = arith.mulf %1076, %1078 : vector<32x128xf32>
    %1080 = arith.addf %1065, %1079 : vector<32x128xf32>
    %c1_805 = arith.constant 1 : index
    %c4_806 = arith.constant 4 : index
    %c0_807 = arith.constant 0 : index
    %1081 = vector.load %arg9[%c1_805, %c4_806, %c0_807] : memref<3x38x128xf32, #tpu.memory_space<vmem>>, vector<1x32x128xf32>
    %1082 = vector.shape_cast %1081 : vector<1x32x128xf32> to vector<32x128xf32>
    %1083 = arith.mulf %1076, %1082 : vector<32x128xf32>
    %1084 = arith.addf %1069, %1083 : vector<32x128xf32>
    %c2_808 = arith.constant 2 : index
    %c4_809 = arith.constant 4 : index
    %c0_810 = arith.constant 0 : index
    %1085 = vector.load %arg9[%c2_808, %c4_809, %c0_810] : memref<3x38x128xf32, #tpu.memory_space<vmem>>, vector<1x32x128xf32>
    %1086 = vector.shape_cast %1085 : vector<1x32x128xf32> to vector<32x128xf32>
    %1087 = arith.mulf %1076, %1086 : vector<32x128xf32>
    %1088 = arith.addf %1073, %1087 : vector<32x128xf32>
    %c5_811 = arith.constant 5 : index
    %c0_812 = arith.constant 0 : index
    %c0_813 = arith.constant 0 : index
    %1089 = vector.load %arg6[%c5_811, %c0_812, %c0_813] : memref<7x32x128xf32, #tpu.memory_space<vmem>>, vector<1x32x128xf32>
    %1090 = vector.shape_cast %1089 : vector<1x32x128xf32> to vector<32x128xf32>
    %1091 = arith.mulf %1090, %1013 : vector<32x128xf32>
    %c0_814 = arith.constant 0 : index
    %c5_815 = arith.constant 5 : index
    %c0_816 = arith.constant 0 : index
    %1092 = vector.load %arg9[%c0_814, %c5_815, %c0_816] : memref<3x38x128xf32, #tpu.memory_space<vmem>>, vector<1x32x128xf32>
    %1093 = vector.shape_cast %1092 : vector<1x32x128xf32> to vector<32x128xf32>
    %1094 = arith.mulf %1091, %1093 : vector<32x128xf32>
    %1095 = arith.addf %1080, %1094 : vector<32x128xf32>
    %c1_817 = arith.constant 1 : index
    %c5_818 = arith.constant 5 : index
    %c0_819 = arith.constant 0 : index
    %1096 = vector.load %arg9[%c1_817, %c5_818, %c0_819] : memref<3x38x128xf32, #tpu.memory_space<vmem>>, vector<1x32x128xf32>
    %1097 = vector.shape_cast %1096 : vector<1x32x128xf32> to vector<32x128xf32>
    %1098 = arith.mulf %1091, %1097 : vector<32x128xf32>
    %1099 = arith.addf %1084, %1098 : vector<32x128xf32>
    %c2_820 = arith.constant 2 : index
    %c5_821 = arith.constant 5 : index
    %c0_822 = arith.constant 0 : index
    %1100 = vector.load %arg9[%c2_820, %c5_821, %c0_822] : memref<3x38x128xf32, #tpu.memory_space<vmem>>, vector<1x32x128xf32>
    %1101 = vector.shape_cast %1100 : vector<1x32x128xf32> to vector<32x128xf32>
    %1102 = arith.mulf %1091, %1101 : vector<32x128xf32>
    %1103 = arith.addf %1088, %1102 : vector<32x128xf32>
    %c6_823 = arith.constant 6 : index
    %c0_824 = arith.constant 0 : index
    %c0_825 = arith.constant 0 : index
    %1104 = vector.load %arg6[%c6_823, %c0_824, %c0_825] : memref<7x32x128xf32, #tpu.memory_space<vmem>>, vector<1x32x128xf32>
    %1105 = vector.shape_cast %1104 : vector<1x32x128xf32> to vector<32x128xf32>
    %1106 = arith.mulf %1105, %1013 : vector<32x128xf32>
    %c0_826 = arith.constant 0 : index
    %c6_827 = arith.constant 6 : index
    %c0_828 = arith.constant 0 : index
    %1107 = vector.load %arg9[%c0_826, %c6_827, %c0_828] : memref<3x38x128xf32, #tpu.memory_space<vmem>>, vector<1x32x128xf32>
    %1108 = vector.shape_cast %1107 : vector<1x32x128xf32> to vector<32x128xf32>
    %1109 = arith.mulf %1106, %1108 : vector<32x128xf32>
    %1110 = arith.addf %1095, %1109 : vector<32x128xf32>
    %c1_829 = arith.constant 1 : index
    %c6_830 = arith.constant 6 : index
    %c0_831 = arith.constant 0 : index
    %1111 = vector.load %arg9[%c1_829, %c6_830, %c0_831] : memref<3x38x128xf32, #tpu.memory_space<vmem>>, vector<1x32x128xf32>
    %1112 = vector.shape_cast %1111 : vector<1x32x128xf32> to vector<32x128xf32>
    %1113 = arith.mulf %1106, %1112 : vector<32x128xf32>
    %1114 = arith.addf %1099, %1113 : vector<32x128xf32>
    %c2_832 = arith.constant 2 : index
    %c6_833 = arith.constant 6 : index
    %c0_834 = arith.constant 0 : index
    %1115 = vector.load %arg9[%c2_832, %c6_833, %c0_834] : memref<3x38x128xf32, #tpu.memory_space<vmem>>, vector<1x32x128xf32>
    %1116 = vector.shape_cast %1115 : vector<1x32x128xf32> to vector<32x128xf32>
    %1117 = arith.mulf %1106, %1116 : vector<32x128xf32>
    %1118 = arith.addf %1103, %1117 : vector<32x128xf32>
    %1119 = arith.index_cast %arg0 : i32 to index
    %c0_835 = arith.constant 0 : index
    %1120 = memref.load %arg2[%1119, %c0_835] : memref<2x9xf32, #tpu.memory_space<smem>>
    %1121 = vector.broadcast %1120 : f32 to vector<32x128xf32>
    %1122 = arith.mulf %1121, %1110 : vector<32x128xf32>
    %1123 = arith.index_cast %arg0 : i32 to index
    %c3_836 = arith.constant 3 : index
    %1124 = memref.load %arg2[%1123, %c3_836] : memref<2x9xf32, #tpu.memory_space<smem>>
    %1125 = vector.broadcast %1124 : f32 to vector<32x128xf32>
    %1126 = arith.mulf %1125, %1114 : vector<32x128xf32>
    %1127 = arith.addf %1122, %1126 : vector<32x128xf32>
    %1128 = arith.index_cast %arg0 : i32 to index
    %c6_837 = arith.constant 6 : index
    %1129 = memref.load %arg2[%1128, %c6_837] : memref<2x9xf32, #tpu.memory_space<smem>>
    %1130 = vector.broadcast %1129 : f32 to vector<32x128xf32>
    %1131 = arith.mulf %1130, %1118 : vector<32x128xf32>
    %1132 = arith.addf %1127, %1131 : vector<32x128xf32>
    %1133 = arith.truncf %1132 : vector<32x128xf32> to vector<32x128xbf16>
    %c0_838 = arith.constant 0 : index
    %c0_839 = arith.constant 0 : index
    %c0_840 = arith.constant 0 : index
    %c0_841 = arith.constant 0 : index
    %1134 = vector.load %arg5[%c0_838, %c0_839, %c0_840, %c0_841] : memref<1x3x32x128xbf16, #tpu.memory_space<vmem>>, vector<1x1x32x128xbf16>
    %1135 = vector.shape_cast %1134 : vector<1x1x32x128xbf16> to vector<32x128xbf16>
    %1136 = vector.shape_cast %1133 : vector<32x128xbf16> to vector<1x1x32x128xbf16>
    tpu.vector_store %arg5[%c0_838, %c0_839, %c0_840, %c0_841], %1136 {strides = array<i32>} : memref<1x3x32x128xbf16, #tpu.memory_space<vmem>>, vector<1x1x32x128xbf16>,
    %1137 = arith.index_cast %arg0 : i32 to index
    %c1_842 = arith.constant 1 : index
    %1138 = memref.load %arg2[%1137, %c1_842] : memref<2x9xf32, #tpu.memory_space<smem>>
    %1139 = vector.broadcast %1138 : f32 to vector<32x128xf32>
    %1140 = arith.mulf %1139, %1110 : vector<32x128xf32>
    %1141 = arith.index_cast %arg0 : i32 to index
    %c4_843 = arith.constant 4 : index
    %1142 = memref.load %arg2[%1141, %c4_843] : memref<2x9xf32, #tpu.memory_space<smem>>
    %1143 = vector.broadcast %1142 : f32 to vector<32x128xf32>
    %1144 = arith.mulf %1143, %1114 : vector<32x128xf32>
    %1145 = arith.addf %1140, %1144 : vector<32x128xf32>
    %1146 = arith.index_cast %arg0 : i32 to index
    %c7 = arith.constant 7 : index
    %1147 = memref.load %arg2[%1146, %c7] : memref<2x9xf32, #tpu.memory_space<smem>>
    %1148 = vector.broadcast %1147 : f32 to vector<32x128xf32>
    %1149 = arith.mulf %1148, %1118 : vector<32x128xf32>
    %1150 = arith.addf %1145, %1149 : vector<32x128xf32>
    %1151 = arith.truncf %1150 : vector<32x128xf32> to vector<32x128xbf16>
    %c0_844 = arith.constant 0 : index
    %c1_845 = arith.constant 1 : index
    %c0_846 = arith.constant 0 : index
    %c0_847 = arith.constant 0 : index
    %1152 = vector.load %arg5[%c0_844, %c1_845, %c0_846, %c0_847] : memref<1x3x32x128xbf16, #tpu.memory_space<vmem>>, vector<1x1x32x128xbf16>
    %1153 = vector.shape_cast %1152 : vector<1x1x32x128xbf16> to vector<32x128xbf16>
    %1154 = vector.shape_cast %1151 : vector<32x128xbf16> to vector<1x1x32x128xbf16>
    tpu.vector_store %arg5[%c0_844, %c1_845, %c0_846, %c0_847], %1154 {strides = array<i32>} : memref<1x3x32x128xbf16, #tpu.memory_space<vmem>>, vector<1x1x32x128xbf16>,
    %1155 = arith.index_cast %arg0 : i32 to index
    %c2_848 = arith.constant 2 : index
    %1156 = memref.load %arg2[%1155, %c2_848] : memref<2x9xf32, #tpu.memory_space<smem>>
    %1157 = vector.broadcast %1156 : f32 to vector<32x128xf32>
    %1158 = arith.mulf %1157, %1110 : vector<32x128xf32>
    %1159 = arith.index_cast %arg0 : i32 to index
    %c5_849 = arith.constant 5 : index
    %1160 = memref.load %arg2[%1159, %c5_849] : memref<2x9xf32, #tpu.memory_space<smem>>
    %1161 = vector.broadcast %1160 : f32 to vector<32x128xf32>
    %1162 = arith.mulf %1161, %1114 : vector<32x128xf32>
    %1163 = arith.addf %1158, %1162 : vector<32x128xf32>
    %1164 = arith.index_cast %arg0 : i32 to index
    %c8 = arith.constant 8 : index
    %1165 = memref.load %arg2[%1164, %c8] : memref<2x9xf32, #tpu.memory_space<smem>>
    %1166 = vector.broadcast %1165 : f32 to vector<32x128xf32>
    %1167 = arith.mulf %1166, %1118 : vector<32x128xf32>
    %1168 = arith.addf %1163, %1167 : vector<32x128xf32>
    %1169 = arith.truncf %1168 : vector<32x128xf32> to vector<32x128xbf16>
    %c0_850 = arith.constant 0 : index
    %c2_851 = arith.constant 2 : index
    %c0_852 = arith.constant 0 : index
    %c0_853 = arith.constant 0 : index
    %1170 = vector.load %arg5[%c0_850, %c2_851, %c0_852, %c0_853] : memref<1x3x32x128xbf16, #tpu.memory_space<vmem>>, vector<1x1x32x128xbf16>
    %1171 = vector.shape_cast %1170 : vector<1x1x32x128xbf16> to vector<32x128xbf16>
    %1172 = vector.shape_cast %1169 : vector<32x128xbf16> to vector<1x1x32x128xbf16>
    tpu.vector_store %arg5[%c0_850, %c2_851, %c0_852, %c0_853], %1172 {strides = array<i32>} : memref<1x3x32x128xbf16, #tpu.memory_space<vmem>>, vector<1x1x32x128xbf16>,
    return
  }
  func.func @transform_0(%arg0: i32, %arg1: i32) -> (i32, i32) {
    %c0_i32 = arith.constant 0 : i32
    %c0_i32_0 = arith.constant 0 : i32
    %c0_i32_1 = arith.constant 0 : i32
    return %c0_i32, %c0_i32_0 : i32, i32
  }
  func.func @transform_1(%arg0: i32, %arg1: i32) -> (i32, i32, i32, i32) {
    %c0_i32 = arith.constant 0 : i32
    %c0_i32_0 = arith.constant 0 : i32
    %c0_i32_1 = arith.constant 0 : i32
    return %arg0, %c0_i32, %arg1, %c0_i32_0 : i32, i32, i32, i32
  }
  func.func @transform_2(%arg0: i32, %arg1: i32) -> (i32, i32, i32, i32) {
    %c0_i32 = arith.constant 0 : i32
    %c0_i32_0 = arith.constant 0 : i32
    %c0_i32_1 = arith.constant 0 : i32
    %c0_i32_2 = arith.constant 0 : i32
    return %arg0, %c0_i32, %c0_i32_0, %c0_i32_1 : i32, i32, i32, i32
  }
  func.func @transform_3(%arg0: i32, %arg1: i32) -> (i32, i32, i32, i32) {
    %c0_i32 = arith.constant 0 : i32
    %c0_i32_0 = arith.constant 0 : i32
    %c0_i32_1 = arith.constant 0 : i32
    return %arg0, %c0_i32, %arg1, %c0_i32_0 : i32, i32, i32, i32
  }
}

</mosaic_0001>

<llo_original>
// kernel: custom-call.14
$region0: #{custom-call.14}
  %s0 = inlined_call_operand.vmem [shape: f32[2,36,3], index: 0, kind: input, shape index: {}]
  %s1 = inlined_call_operand.vmem [shape: f32[2,36,3], index: 1, kind: output, shape index: {0}]
  %s2 = inlined_call_operand.vmem [shape: f32[2,3], index: 2, kind: output, shape index: {1}]
  %3 = xla_tuple %s1, %s2
  $region1: #{custom-call.14} parent=0
    #allocation0 [shape = 'u8[40960]{0}', space=vmem, size = 0xa000, scoped, tag = 'operand span for operand 0']
    #allocation1 [shape = 'u8[40960]{0}', space=vmem, size = 0xa000, scoped, tag = 'operand span for operand 1']
    #allocation2 [shape = 'u8[4096]{0}', space=vmem, size = 0x1000, scoped, tag = 'operand span for operand 2']
    #allocation3 [shape = 'u8[2048]{0}', space=vmem, size = 0x800, scoped, tag = 'packed  for operand 2']
    loop: start=0, step=1, limit=4
    $region2: #{custom-call.14} parent=1 // loop_pre_header
      _
    $region3: #{custom-call.14} parent=1 // loop_header
      %s5 = sphi 0, %s9
      %p6 = scmp.ge.s32.totalorder %s5, 4
      %s12 = sphi 0, %s31
      %s13 = sphi 0, %s27
      %s14 = sphi 0, %s23
      %s15 = sphi 0, %s12
      %s16 = sphi 0, %s13
      %s17 = sphi 0, %s14
      %s18 = sphi 0, %s15
      %s19 = sphi 0, %s16
      %s20 = sphi 0, %s17
      %s46 = sphi 0, %s48
      %s49 = sphi 0, %s46
      %s50 = sphi 0, %s49
      %s66 = sphi 0, %s50
    $region4: #{custom-call.14} parent=1 // loop_header_branch
      %8 = sbr.rel (%p6) target = $region8
    $region5: #{custom-call.14} parent=1 // loop_body
      %s10 = ssub.s32 %s5, 1
      %s11 = ssub.s32 %s5, 2
      %s21 = sadd.s32 1, %s14
      %p22 = scmp.ge.s32.totalorder %s21, 1
      %s23 = scalar_select %p22, 0, %s21
      %s24 = sadd.s32 1, %s13
      %s25 = scalar_select %p22, %s24, %s13
      %p26 = scmp.ge.s32.totalorder %s25, 1
      %s27 = scalar_select %p26, 0, %s25
      %s28 = sadd.s32 1, %s12
      %s29 = scalar_select %p26, %s28, %s12
      %p30 = scmp.ge.s32.totalorder %s29, 2
      %s31 = scalar_select %p30, 0, %s29
      %p32 = scmp.lt.s32.totalorder %s12, 0
      %s33 = ssub.s32 0, %s12
      %s34 = scalar_select %p32, %s33, %s12
      %s35 = sshrl.u32 %s34, 3
      %s36 = ssub.s32 0, %s35
      %s37 = scalar_select %p32, %s36, %s35
      %p38 = scmp.lt.s32.totalorder %s31, 0
      %s39 = ssub.s32 0, %s31
      %s40 = scalar_select %p38, %s39, %s31
      %s41 = sshrl.u32 %s40, 3
      %s42 = ssub.s32 0, %s41
      %s43 = scalar_select %p38, %s42, %s41
      %s44 = ssub.s32 %s37, %s43
      %p45 = scmp.eq.s32.totalorder %s44, 0
      %s47 = sadd.s32 %s46, 1
      %s48 = scalar_select %p45, %s46, %s47
      %p51 = pneg %p45
      %p52 = scmp.eq.s32.totalorder %s5, 1
      %p53 = por %p51, %p52
      %p54 = scmp.ne.s32.totalorder %s46, %s49
      %p55 = scmp.eq.s32.totalorder %s5, 0
      %p56 = por %p54, %p55
      %p57 = scmp.ne.s32.totalorder %s46, %s49
      %p58 = scmp.eq.s32.totalorder %s10, 1
      %p59 = por %p57, %p58
      %p60 = scmp.ne.s32.totalorder %s49, %s50
      %p61 = scmp.eq.s32.totalorder %s10, 0
      %p62 = por %p60, %p61
      %p63 = scmp.ne.s32.totalorder %s49, %s50
      %p64 = scmp.eq.s32.totalorder %s11, 1
      %p65 = por %p63, %p64
      %p67 = scmp.ne.s32.totalorder %s50, %s66
      %p68 = scmp.eq.s32.totalorder %s11, 0
      %p69 = por %p67, %p68
      %p70 = scmp.le.s32.totalorder 1, %s5
      %p71 = scmp.lt.s32.totalorder %s5, 3
      %p72 = pnand %p70, %p71
      %p73 = pneg %p72
      // Predicated region
      $region9: #{custom-call.14} parent=5 // pred_check
        _
      $region10: #{custom-call.14} parent=5 // pred_check_branch
        %75 = sbr.rel (%p72) target = $region12
      $region11: #{custom-call.14} parent=5 // pred_region
        %s76 = ssub.s32 %s5, 1
      $region12: #{custom-call.14} parent=5 // pred_fallthru
        _
      %p77 = scmp.lt.s32.totalorder %s5, 2
      // Predicated region
      $region13: #{custom-call.14} parent=5 // pred_check
        %p78 = pneg %p77
      $region14: #{custom-call.14} parent=5 // pred_check_branch
        %80 = sbr.rel (%p78) target = $region16
      $region15: #{custom-call.14} parent=5 // pred_region
        %s81 = sand.u32 %s5, 1
        %s82 = sand.u32 %s5, 1
        %s83 = smul.addr %s82, 40
        %s84 = scalar_lea.vmem [#allocation0], %s83
        %s85 = smul.u32 5, %s13
        %s86 = sadd.s32 %s14, %s85
        %s87 = smul.addr %s12, 5
        %s88 = sadd.s32 %s86, %s87
        %s89 = smul.addr %s88, 8
        %s90 = scalar_lea.vmem %s0, %s89
        // Predicated region
        $region17: #{custom-call.14} parent=15 // pred_check
          _
        $region18: #{custom-call.14} parent=15 // pred_check_branch
          %92 = sbr.rel (0) target = $region20
        $region19: #{custom-call.14} parent=15 // pred_region
          // Predicated region
          $region21: #{custom-call.14} parent=19 // pred_check
            _
          $region22: #{custom-call.14} parent=19 // pred_check_branch
            %94 = sbr.rel (0) target = $region24
          $region23: #{custom-call.14} parent=19 // pred_region
            // Predicated region
            $region36: #{custom-call.14} parent=23 // pred_check
              _
            $region37: #{custom-call.14} parent=23 // pred_check_branch
              %117 = sbr.rel (0) target = $region39
            $region38: #{custom-call.14} parent=23 // pred_region
              loop: start=0, step=1, limit=1
              $region40: #{custom-call.14} parent=38 // loop_pre_header
                _
              $region41: #{custom-call.14} parent=38 // loop_header
                %s119 = sphi 0, %s123
                %p120 = scmp.ge.s32.totalorder %s119, 1
                %s124 = sphi %s90, %s90
                %s125 = sphi %s84, %s84
              $region42: #{custom-call.14} parent=38 // loop_header_branch
                %122 = sbr.rel (%p120) target = $region46
              $region43: #{custom-call.14} parent=38 // loop_body
                %v126 = vld [vmem:[%s124] sm:$0xff]
                %127 = vst [vmem:[%s125] sm:$0xff] %v126
                %v128 = vld [vmem:[%s124 + $0x8] sm:$0xff]
                %129 = vst [vmem:[%s125 + $0x8] sm:$0xff] %v128
                %v130 = vld [vmem:[%s124 + $0x10] sm:$0xff]
                %131 = vst [vmem:[%s125 + $0x10] sm:$0xff] %v130
                %v132 = vld [vmem:[%s124 + $0x18] sm:$0xff]
                %133 = vst [vmem:[%s125 + $0x18] sm:$0xff] %v132
                %v134 = vld [vmem:[%s124 + $0x20] sm:$0xff]
                %135 = vst [vmem:[%s125 + $0x20] sm:$0xff] %v134
              $region44: #{custom-call.14} parent=38 // loop_footer
                %s123 = sadd.s32 1, %s119
              $region45: #{custom-call.14} parent=38 // loop_footer_branch
                %118 = sbr.rel target = $region41
              $region46: #{custom-call.14} parent=38 // loop_exit
                _
            $region39: #{custom-call.14} parent=23 // pred_fallthru
              _
            // Predicated region
            $region47: #{custom-call.14} parent=23 // pred_check
              _
            $region48: #{custom-call.14} parent=23 // pred_check_branch
              %137 = sbr.rel target = $region50
            $region49: #{custom-call.14} parent=23 // pred_region
              _
            $region50: #{custom-call.14} parent=23 // pred_fallthru
              _
          $region24: #{custom-call.14} parent=19 // pred_fallthru
            _
          // Predicated region
          $region25: #{custom-call.14} parent=19 // pred_check
            _
          $region26: #{custom-call.14} parent=19 // pred_check_branch
            %96 = sbr.rel target = $region28
          $region27: #{custom-call.14} parent=19 // pred_region
            loop: start=0, step=1, limit=1
            $region29: #{custom-call.14} parent=27 // loop_pre_header
              _
            $region30: #{custom-call.14} parent=27 // loop_header
              %s99 = sphi 0, %s103
              %p100 = scmp.ge.s32.totalorder %s99, 1
              %s104 = sphi %s90, %s90
              %s105 = sphi %s84, %s84
            $region31: #{custom-call.14} parent=27 // loop_header_branch
              %102 = sbr.rel (%p100) target = $region35
            $region32: #{custom-call.14} parent=27 // loop_body
              %v106 = vld [vmem:[%s104] sm:$0xff]
              %107 = vst [vmem:[%s105] sm:$0xff] %v106
              %v108 = vld [vmem:[%s104 + $0x8] sm:$0xff]
              %109 = vst [vmem:[%s105 + $0x8] sm:$0xff] %v108
              %v110 = vld [vmem:[%s104 + $0x10] sm:$0xff]
              %111 = vst [vmem:[%s105 + $0x10] sm:$0xff] %v110
              %v112 = vld [vmem:[%s104 + $0x18] sm:$0xff]
              %113 = vst [vmem:[%s105 + $0x18] sm:$0xff] %v112
              %v114 = vld [vmem:[%s104 + $0x20] sm:$0xff]
              %115 = vst [vmem:[%s105 + $0x20] sm:$0xff] %v114
            $region33: #{custom-call.14} parent=27 // loop_footer
              %s103 = sadd.s32 1, %s99
            $region34: #{custom-call.14} parent=27 // loop_footer_branch
              %98 = sbr.rel target = $region30
            $region35: #{custom-call.14} parent=27 // loop_exit
              _
          $region28: #{custom-call.14} parent=19 // pred_fallthru
            _
        $region20: #{custom-call.14} parent=15 // pred_fallthru
          _
        %138 = vnop
      $region16: #{custom-call.14} parent=5 // pred_fallthru
        _
      %p139 = scmp.le.s32.totalorder 1, %s5
      %p140 = scmp.lt.s32.totalorder %s5, 3
      %p141 = pnand %p139, %p140
      %p142 = pneg %p141
      // Predicated region
      $region51: #{custom-call.14} parent=5 // pred_check
        _
      $region52: #{custom-call.14} parent=5 // pred_check_branch
        %144 = sbr.rel (%p141) target = $region54
      $region53: #{custom-call.14} parent=5 // pred_region
        #allocation4 [shape = 'f32[36,128]{1,0}', space=vmem, size = 0x5000, scoped, tag = 'scratch for Householder reflectors']
        %s145 = ssub.s32 %s5, 1
        %s146 = sand.u32 %s10, 1
        %s147 = sand.u32 %s10, 1
        %s148 = smul.addr %s147, 40
        %s149 = scalar_lea.vmem [#allocation0], %s148
        %s150 = sand.u32 %s10, 1
        %s151 = sand.u32 %s10, 1
        %s152 = smul.addr %s151, 40
        %s153 = scalar_lea.vmem [#allocation0], %s152
        %s154 = sand.u32 %s10, 1
        %s155 = sand.u32 %s10, 1
        %s156 = smul.addr %s155, 40
        %s157 = scalar_lea.vmem [#allocation1], %s156
        %p158 = pneg %p62
        %p159 = pneg %p59
        %s160 = sand.u32 %s49, 1
        %s161 = sand.u32 %s49, 1
        %s162 = smul.addr %s161, 2
        %s163 = scalar_lea.vmem [#allocation3], %s162
        %s164 = smul.u32 5, %s16
        %s165 = smul.u32 5, %s16
        %p166 = scmp.lt.s32.totalorder %s15, 0
        %s167 = ssub.s32 0, %s15
        %s168 = scalar_select %p166, %s167, %s15
        %s169 = sshrl.u32 %s168, 3
        %s170 = ssub.s32 0, %s169
        %s171 = scalar_select %p166, %s170, %s169
        %s172 = sand.u32 %s15, 7
        %s173 = scalar_lea.vmem [#allocation2], %s172
        %v174 = vld [vmem:[%s149] sm:$0xff]
        %175 = vst [vmem:[%s157] sm:$0xff] %v174
        %s176 = scalar_lea.vmem %s157, 8 [#allocation1]
        %s177 = scalar_lea.vmem %s149, 8 [#allocation0]
        %v178 = vld [vmem:[%s177] sm:$0xff]
        %179 = vst [vmem:[%s176] sm:$0xff] %v178
        %s180 = scalar_lea.vmem %s157, 16 [#allocation1]
        %s181 = scalar_lea.vmem %s149, 16 [#allocation0]
        %v182 = vld [vmem:[%s181] sm:$0xff]
        %183 = vst [vmem:[%s180] sm:$0xff] %v182
        %s184 = scalar_lea.vmem %s157, 24 [#allocation1]
        %s185 = scalar_lea.vmem %s149, 24 [#allocation0]
        %v186 = vld [vmem:[%s185] sm:$0xff]
        %187 = vst [vmem:[%s184] sm:$0xff] %v186
        %s188 = scalar_lea.vmem %s157, 32 [#allocation1]
        %s189 = scalar_lea.vmem %s149, 32 [#allocation0]
        %v190 = vld [vmem:[%s189] sm:$0xff]
        %191 = vst [vmem:[%s188] sm:$0xff] %v190
        %192 = vst [vmem:[%s173] sm:$0x1] 0.0
        loop: start=0, step=1, limit=3
        $region55: #{custom-call.14} parent=53 // loop_pre_header
          _
        $region56: #{custom-call.14} parent=53 // loop_header
          %s194 = sphi 0, %s198
          %p195 = scmp.ge.s32.totalorder %s194, 3
        $region57: #{custom-call.14} parent=53 // loop_header_branch
          %197 = sbr.rel (%p195) target = $region61
        $region58: #{custom-call.14} parent=53 // loop_body
          %v199 = vld [vmem:[%s157] sm:$0xff]
          %v200 = vlaneseq
          %v201 = vshrl.u32 %v200, 7
          %v203 = vstv %s194
          %vm204 = vcmp.gt.s32.totalorder %v201, %v203
          %v205 = vsel %vm204, %v199, 0.0
          %v206 = vmul.f32 %v205, %v205
          %s207 = scalar_lea.vmem %s157, 8 [#allocation1]
          %v208 = vld [vmem:[%s207] sm:$0xff]
          %v209 = vlaneseq
          %v210 = vshrl.u32 %v209, 7
          %v211 = vadd.s32 %v210, 8
          %v212 = vstv %s194
          %vm213 = vcmp.gt.s32.totalorder %v211, %v212
          %v214 = vsel %vm213, %v208, 0.0
          %v215 = vmul.f32 %v214, %v214
          %v216 = vadd.f32 %v206, %v215
          %s217 = scalar_lea.vmem %s157, 16 [#allocation1]
          %v218 = vld [vmem:[%s217] sm:$0xff]
          %v219 = vlaneseq
          %v220 = vshrl.u32 %v219, 7
          %v221 = vadd.s32 %v220, 16
          %v222 = vstv %s194
          %vm223 = vcmp.gt.s32.totalorder %v221, %v222
          %v224 = vsel %vm223, %v218, 0.0
          %v225 = vmul.f32 %v224, %v224
          %v226 = vadd.f32 %v216, %v225
          %s227 = scalar_lea.vmem %s157, 24 [#allocation1]
          %v228 = vld [vmem:[%s227] sm:$0xff]
          %v229 = vlaneseq
          %v230 = vshrl.u32 %v229, 7
          %v231 = vadd.s32 %v230, 24
          %v232 = vstv %s194
          %vm233 = vcmp.gt.s32.totalorder %v231, %v232
          %v234 = vsel %vm233, %v228, 0.0
          %v235 = vmul.f32 %v234, %v234
          %v236 = vadd.f32 %v226, %v235
          %s237 = scalar_lea.vmem %s157, 32 [#allocation1]
          %v238 = vld [vmem:[%s237] sm:$0xff]
          %v239 = vlaneseq
          %v240 = vshrl.u32 %v239, 7
          %v241 = vadd.s32 %v240, 32
          %v242 = vstv %s194
          %vm243 = vcmp.gt.s32.totalorder %v241, %v242
          %vm244 = vcmp.lt.s32.totalorder %v241, 36
          %vm245 = vmand %vm243, %vm244
          %v246 = vsel %vm245, %v238, 0.0
          %v247 = vmul.f32 %v246, %v246
          %v248 = vadd.f32 %v236, %v247
          %v249 = vrot.slane %v248, 4
          %v250 = vadd.f32 %v248, %v249
          %v251 = vrot.slane %v250, 2
          %v252 = vadd.f32 %v250, %v251
          %v253 = vrot.slane %v252, 1
          %v254 = vadd.f32 %v252, %v253
          %v255 = vrsqrt.pop %v254
          %v256 = vmul.f32 %v254, %v255
          %vm257 = vcmp.eq.f32.partialorder %v254, inf
          %v258 = vsel %vm257, %v254, %v256
          %vm259 = vcmp.eq.f32.partialorder %v254, 0.0
          %v260 = vand.u32 %v254, 2147483648
          %v261 = vsel %vm259, %v260, %v258
          %vm262 = vcmp.eq.f32.partialorder %v254, 0.0
          %s263 = sshrl.u32 %s194, 3
          %s264 = sand.u32 %s194, 7
          %s265 = smul.addr %s263, 8
          %s266 = sadd.s32 %s264, %s265
          %s267 = scalar_lea.vmem %s157, %s266 [#allocation1]
          %v268 = vld [vmem:[%s267] ss:$0 sm:$0xff]
          %v269 = vand.u32 2147483647, %v268
          %v270 = vmax.f32 %v269, 0.0
          %v271 = vand.u32 2147483647, %v261
          %v272 = vmax.f32 %v270, %v271
          %v273 = vrcp.pop %v272
          %v274 = vmul.f32 %v269, %v273
          %v275 = vmul.f32 %v274, %v274
          %v276 = vrcp.pop %v272
          %v277 = vmul.f32 0.0, %v276
          %v278 = vmul.f32 %v277, %v277
          %v279 = vadd.f32 %v275, %v278
          %v280 = vrcp.pop %v272
          %v281 = vmul.f32 %v271, %v280
          %v282 = vmul.f32 %v281, %v281
          %v283 = vadd.f32 %v279, %v282
          %vm284 = vcmp.eq.f32.partialorder %v272, 0.0
          %v285 = vrsqrt.pop %v283
          %v286 = vmul.f32 %v283, %v285
          %vm287 = vcmp.eq.f32.partialorder %v283, inf
          %v288 = vsel %vm287, %v283, %v286
          %vm289 = vcmp.eq.f32.partialorder %v283, 0.0
          %v290 = vand.u32 %v283, 2147483648
          %v291 = vsel %vm289, %v290, %v288
          %v292 = vmul.f32 %v272, %v291
          %v293 = vsel %vm284, 0.0, %v292
          %vm294 = vcmp.lt.f32.partialorder %v268, 0.0
          %v295 = vxor.u32 %v293, 2147483648
          %v296 = vsel %vm294, %v293, %v295
          %v297 = vsub.f32 %v296, %v268
          %v298 = vrcp.pop %v296
          %v299 = vmul.f32 %v297, %v298
          %v300 = vsel %vm262, %v268, %v296
          %v301 = vsel %vm262, 0.0, %v299
          %v302 = vsub.f32 %v268, %v300
          %s303 = smov %s157
          %v304 = vlaneseq
          %v305 = vshrl.u32 %v304, 7
          %v306 = vmov %v305
          %v307 = vld [vmem:[%s303] sm:$0xff]
          %v309 = vstv %s194
          %vm310 = vcmp.gt.s32.totalorder %v306, %v309
          %v311 = vsel %vm310, %v307, 0.0
          %v312 = vrcp.pop %v302
          %v313 = vmul.f32 %v311, %v312
          %v314 = vsel %vm262, 0.0, %v313
          %v315 = vstv %s194
          %v316 = vlaneseq
          %v317 = vand.u32 %v316, 127
          %vm318 = vcmp.eq.s32.totalorder %v317, %v315
          %v319 = vsel %vm318, %v314, 0.0
          %320 = vadd.xlane.f32.xlu0 %v319
          %v321 = vpop.xlane.xlu0 %320
          %322 = vst [vmem:[#allocation4] sm:$0xff] %v321
          %s323 = scalar_lea.vmem %s303, 8
          %v324 = vld [vmem:[%s323] sm:$0xff]
          %v325 = vadd.s32 %v306, 8
          %v326 = vstv %s194
          %vm327 = vcmp.gt.s32.totalorder %v325, %v326
          %v328 = vsel %vm327, %v324, 0.0
          %v329 = vrcp.pop %v302
          %v330 = vmul.f32 %v328, %v329
          %v331 = vsel %vm262, 0.0, %v330
          %v332 = vstv %s194
          %v333 = vlaneseq
          %v334 = vand.u32 %v333, 127
          %vm335 = vcmp.eq.s32.totalorder %v334, %v332
          %v336 = vsel %vm335, %v331, 0.0
          %337 = vadd.xlane.f32.xlu0 %v336
          %v338 = vpop.xlane.xlu0 %337
          %s339 = scalar_lea.vmem [#allocation4], 8
          %340 = vst [vmem:[%s339] sm:$0xff] %v338
          %s341 = scalar_lea.vmem %s303, 16
          %v342 = vld [vmem:[%s341] sm:$0xff]
          %v343 = vadd.s32 %v306, 16
          %v344 = vstv %s194
          %vm345 = vcmp.gt.s32.totalorder %v343, %v344
          %v346 = vsel %vm345, %v342, 0.0
          %v347 = vrcp.pop %v302
          %v348 = vmul.f32 %v346, %v347
          %v349 = vsel %vm262, 0.0, %v348
          %v350 = vstv %s194
          %v351 = vlaneseq
          %v352 = vand.u32 %v351, 127
          %vm353 = vcmp.eq.s32.totalorder %v352, %v350
          %v354 = vsel %vm353, %v349, 0.0
          %355 = vadd.xlane.f32.xlu0 %v354
          %v356 = vpop.xlane.xlu0 %355
          %s357 = scalar_lea.vmem [#allocation4], 16
          %358 = vst [vmem:[%s357] sm:$0xff] %v356
          %s359 = scalar_lea.vmem %s303, 24
          %v360 = vld [vmem:[%s359] sm:$0xff]
          %v361 = vadd.s32 %v306, 24
          %v362 = vstv %s194
          %vm363 = vcmp.gt.s32.totalorder %v361, %v362
          %v364 = vsel %vm363, %v360, 0.0
          %v365 = vrcp.pop %v302
          %v366 = vmul.f32 %v364, %v365
          %v367 = vsel %vm262, 0.0, %v366
          %v368 = vstv %s194
          %v369 = vlaneseq
          %v370 = vand.u32 %v369, 127
          %vm371 = vcmp.eq.s32.totalorder %v370, %v368
          %v372 = vsel %vm371, %v367, 0.0
          %373 = vadd.xlane.f32.xlu0 %v372
          %v374 = vpop.xlane.xlu0 %373
          %s375 = scalar_lea.vmem [#allocation4], 24
          %376 = vst [vmem:[%s375] sm:$0xff] %v374
          %s377 = scalar_lea.vmem %s303, 32
          %v378 = vld [vmem:[%s377] sm:$0xff]
          %v379 = vadd.s32 %v306, 32
          %v380 = vstv %s194
          %vm381 = vcmp.gt.s32.totalorder %v379, %v380
          %vm382 = vcmp.lt.s32.totalorder %v379, 36
          %vm383 = vmand %vm381, %vm382
          %v384 = vsel %vm383, %v378, 0.0
          %v385 = vrcp.pop %v302
          %v386 = vmul.f32 %v384, %v385
          %v387 = vsel %vm262, 0.0, %v386
          %v388 = vstv %s194
          %v389 = vlaneseq
          %v390 = vand.u32 %v389, 127
          %vm391 = vcmp.eq.s32.totalorder %v390, %v388
          %v392 = vsel %vm391, %v387, 0.0
          %393 = vadd.xlane.f32.xlu0 %v392
          %v394 = vpop.xlane.xlu0 %393
          %s395 = scalar_lea.vmem [#allocation4], 32
          %396 = vst [vmem:[%s395] sm:$0xff] %v394
          %s397 = scalar_lea.vmem [#allocation4], %s194
          %398 = vst [vmem:[%s397] sm:$0x1] 1.0
          %v399 = vstv %s194
          %v400 = vlaneseq
          %v401 = vand.u32 %v400, 127
          %vm402 = vcmp.eq.s32.totalorder %v401, %v399
          %v403 = vsel %vm402, %v301, 0.0
          %404 = vadd.xlane.f32.xlu0 %v403
          %v405 = vpop.xlane.xlu0 %404
          %v406 = vstv %s194
          %v407 = vlaneseq
          %v408 = vand.u32 %v407, 127
          %vm409 = vcmp.eq.s32.totalorder %v408, %v406
          %v410 = vld [vmem:[%s173] ss:$0 sm:$0xff]
          %v411 = vsel %vm409, %v405, %v410
          %412 = vst [vmem:[%s173] sm:$0x1] %v411
          %s413 = smov %s157
          %s414 = smov [#allocation4]
          %v415 = vlaneseq
          %v416 = vshrl.u32 %v415, 7
          %v417 = vmov %v416
          %v419 = vld [vmem:[%s414] sm:$0xff]
          %v420 = vld [vmem:[%s413] sm:$0xff]
          %v421 = vmul.f32 %v419, %v420
          %v422 = vadd.s32 %v417, 8
          %s423 = scalar_lea.vmem %s414, 8
          %v424 = vld [vmem:[%s423] sm:$0xff]
          %s425 = scalar_lea.vmem %s413, 8
          %v426 = vld [vmem:[%s425] sm:$0xff]
          %v427 = vmul.f32 %v424, %v426
          %v428 = vadd.f32 %v421, %v427
          %v429 = vadd.s32 %v417, 16
          %s430 = scalar_lea.vmem %s414, 16
          %v431 = vld [vmem:[%s430] sm:$0xff]
          %s432 = scalar_lea.vmem %s413, 16
          %v433 = vld [vmem:[%s432] sm:$0xff]
          %v434 = vmul.f32 %v431, %v433
          %v435 = vadd.f32 %v428, %v434
          %v436 = vadd.s32 %v417, 24
          %s437 = scalar_lea.vmem %s414, 24
          %v438 = vld [vmem:[%s437] sm:$0xff]
          %s439 = scalar_lea.vmem %s413, 24
          %v440 = vld [vmem:[%s439] sm:$0xff]
          %v441 = vmul.f32 %v438, %v440
          %v442 = vadd.f32 %v435, %v441
          %v443 = vadd.s32 %v417, 32
          %s444 = scalar_lea.vmem %s414, 32
          %v445 = vld [vmem:[%s444] sm:$0xff]
          %s446 = scalar_lea.vmem %s413, 32
          %v447 = vld [vmem:[%s446] sm:$0xff]
          %v448 = vmul.f32 %v445, %v447
          %vm449 = vcmp.lt.s32.totalorder %v443, 36
          %v450 = vsel %vm449, %v448, 0.0
          %v451 = vadd.f32 %v442, %v450
          %v452 = vrot.slane %v451, 4
          %v453 = vadd.f32 %v451, %v452
          %v454 = vrot.slane %v453, 2
          %v455 = vadd.f32 %v453, %v454
          %v456 = vrot.slane %v455, 1
          %v457 = vadd.f32 %v455, %v456
          %s458 = smov %s413
          %s459 = smov %s414
          %v460 = vlaneseq
          %v461 = vshrl.u32 %v460, 7
          %v462 = vmov %v461
          %v463 = vmul.f32 %v457, %v405
          %v465 = vlaneseq
          %v466 = vand.u32 %v465, 127
          %v467 = vld [vmem:[%s459] sm:$0xff]
          %v468 = vmul.f32 %v467, %v463
          %v469 = vld [vmem:[%s458] sm:$0xff]
          %v470 = vstv %s194
          %vm471 = vcmp.gt.s32.totalorder %v466, %v470
          %v472 = vsub.f32 %v469, %v468
          %v473 = vsel %vm471, %v472, %v469
          %v474 = vstv %s194
          %v475 = vlaneseq
          %v476 = vand.u32 %v475, 127
          %vm477 = vcmp.eq.s32.totalorder %v476, %v474
          %v478 = vstv %s194
          %vm479 = vcmp.ge.s32.totalorder %v462, %v478
          %vm480 = vmand %vm477, %vm479
          %v481 = vsel %vm480, %v467, %v473
          %482 = vst [vmem:[%s458] sm:$0xff] %v481
          %v483 = vadd.s32 %v462, 8
          %v484 = vlaneseq
          %v485 = vand.u32 %v484, 127
          %s486 = scalar_lea.vmem %s459, 8
          %v487 = vld [vmem:[%s486] sm:$0xff]
          %v488 = vmul.f32 %v487, %v463
          %s489 = scalar_lea.vmem %s458, 8
          %v490 = vld [vmem:[%s489] sm:$0xff]
          %v491 = vstv %s194
          %vm492 = vcmp.gt.s32.totalorder %v485, %v491
          %v493 = vsub.f32 %v490, %v488
          %v494 = vsel %vm492, %v493, %v490
          %v495 = vstv %s194
          %v496 = vlaneseq
          %v497 = vand.u32 %v496, 127
          %vm498 = vcmp.eq.s32.totalorder %v497, %v495
          %v499 = vstv %s194
          %vm500 = vcmp.ge.s32.totalorder %v483, %v499
          %vm501 = vmand %vm498, %vm500
          %v502 = vsel %vm501, %v487, %v494
          %503 = vst [vmem:[%s489] sm:$0xff] %v502
          %v504 = vadd.s32 %v462, 16
          %v505 = vlaneseq
          %v506 = vand.u32 %v505, 127
          %s507 = scalar_lea.vmem %s459, 16
          %v508 = vld [vmem:[%s507] sm:$0xff]
          %v509 = vmul.f32 %v508, %v463
          %s510 = scalar_lea.vmem %s458, 16
          %v511 = vld [vmem:[%s510] sm:$0xff]
          %v512 = vstv %s194
          %vm513 = vcmp.gt.s32.totalorder %v506, %v512
          %v514 = vsub.f32 %v511, %v509
          %v515 = vsel %vm513, %v514, %v511
          %v516 = vstv %s194
          %v517 = vlaneseq
          %v518 = vand.u32 %v517, 127
          %vm519 = vcmp.eq.s32.totalorder %v518, %v516
          %v520 = vstv %s194
          %vm521 = vcmp.ge.s32.totalorder %v504, %v520
          %vm522 = vmand %vm519, %vm521
          %v523 = vsel %vm522, %v508, %v515
          %524 = vst [vmem:[%s510] sm:$0xff] %v523
          %v525 = vadd.s32 %v462, 24
          %v526 = vlaneseq
          %v527 = vand.u32 %v526, 127
          %s528 = scalar_lea.vmem %s459, 24
          %v529 = vld [vmem:[%s528] sm:$0xff]
          %v530 = vmul.f32 %v529, %v463
          %s531 = scalar_lea.vmem %s458, 24
          %v532 = vld [vmem:[%s531] sm:$0xff]
          %v533 = vstv %s194
          %vm534 = vcmp.gt.s32.totalorder %v527, %v533
          %v535 = vsub.f32 %v532, %v530
          %v536 = vsel %vm534, %v535, %v532
          %v537 = vstv %s194
          %v538 = vlaneseq
          %v539 = vand.u32 %v538, 127
          %vm540 = vcmp.eq.s32.totalorder %v539, %v537
          %v541 = vstv %s194
          %vm542 = vcmp.ge.s32.totalorder %v525, %v541
          %vm543 = vmand %vm540, %vm542
          %v544 = vsel %vm543, %v529, %v536
          %545 = vst [vmem:[%s531] sm:$0xff] %v544
          %v546 = vadd.s32 %v462, 32
          %v547 = vlaneseq
          %v548 = vand.u32 %v547, 127
          %s549 = scalar_lea.vmem %s459, 32
          %v550 = vld [vmem:[%s549] sm:$0xff]
          %v551 = vmul.f32 %v550, %v463
          %s552 = scalar_lea.vmem %s458, 32
          %v553 = vld [vmem:[%s552] sm:$0xff]
          %v554 = vstv %s194
          %vm555 = vcmp.gt.s32.totalorder %v548, %v554
          %v556 = vsub.f32 %v553, %v551
          %v557 = vsel %vm555, %v556, %v553
          %v558 = vstv %s194
          %v559 = vlaneseq
          %v560 = vand.u32 %v559, 127
          %vm561 = vcmp.eq.s32.totalorder %v560, %v558
          %v562 = vstv %s194
          %vm563 = vcmp.ge.s32.totalorder %v546, %v562
          %vm564 = vmand %vm561, %vm563
          %v565 = vsel %vm564, %v550, %v557
          %566 = vst [vmem:[%s552] sm:$0xff] %v565
          %s567 = scalar_lea.vmem %s458, %s194
          %v568 = vld [vmem:[%s567] ss:$0 sm:$0xff]
          %v569 = vstv %s194
          %v570 = vlaneseq
          %v571 = vand.u32 %v570, 127
          %vm572 = vcmp.eq.s32.totalorder %v571, %v569
          %v573 = vsel %vm572, %v300, %v568
          %574 = vst [vmem:[%s567] sm:$0x1] %v573
        $region59: #{custom-call.14} parent=53 // loop_footer
          %s198 = sadd.s32 1, %s194
        $region60: #{custom-call.14} parent=53 // loop_footer_branch
          %193 = sbr.rel target = $region56
        $region61: #{custom-call.14} parent=53 // loop_exit
          _
        %s576 = sshllo.u32 0, 2
        %v578 = vld [vmem:[#allocation2] sm:%s576]
        %s579 = sshllo.u32 0, 2
        %580 = vst [vmem:[%s163] sm:%s579] %v578
        %s581 = sand.u32 %s10, 1
        %s582 = sand.u32 %s10, 1
        %s583 = smul.addr %s582, 40
        %s584 = scalar_lea.vmem [#allocation1], %s583
        %s585 = sand.u32 %s49, 1
        %s586 = sand.u32 %s49, 1
        %s587 = smul.addr %s586, 2
        %s588 = scalar_lea.vmem [#allocation3], %s587
        %s589 = smul.u32 5, %s16
        %s590 = sadd.s32 %s17, %s589
        %s591 = smul.addr %s15, 5
        %s592 = sadd.s32 %s590, %s591
        %s593 = smul.addr %s592, 8
        %s594 = scalar_lea.vmem %s1, %s593
        // Predicated region
        $region62: #{custom-call.14} parent=53 // pred_check
          _
        $region63: #{custom-call.14} parent=53 // pred_check_branch
          %596 = sbr.rel (0) target = $region65
        $region64: #{custom-call.14} parent=53 // pred_region
          // Predicated region
          $region66: #{custom-call.14} parent=64 // pred_check
            _
          $region67: #{custom-call.14} parent=64 // pred_check_branch
            %598 = sbr.rel (0) target = $region69
          $region68: #{custom-call.14} parent=64 // pred_region
            // Predicated region
            $region81: #{custom-call.14} parent=68 // pred_check
              _
            $region82: #{custom-call.14} parent=68 // pred_check_branch
              %621 = sbr.rel (0) target = $region84
            $region83: #{custom-call.14} parent=68 // pred_region
              loop: start=0, step=1, limit=1
              $region85: #{custom-call.14} parent=83 // loop_pre_header
                _
              $region86: #{custom-call.14} parent=83 // loop_header
                %s623 = sphi 0, %s627
                %p624 = scmp.ge.s32.totalorder %s623, 1
                %s628 = sphi %s584, %s584
                %s629 = sphi %s594, %s594
              $region87: #{custom-call.14} parent=83 // loop_header_branch
                %626 = sbr.rel (%p624) target = $region91
              $region88: #{custom-call.14} parent=83 // loop_body
                %v630 = vld [vmem:[%s628] sm:$0xff]
                %631 = vst [vmem:[%s629] sm:$0xff] %v630
                %v632 = vld [vmem:[%s628 + $0x8] sm:$0xff]
                %633 = vst [vmem:[%s629 + $0x8] sm:$0xff] %v632
                %v634 = vld [vmem:[%s628 + $0x10] sm:$0xff]
                %635 = vst [vmem:[%s629 + $0x10] sm:$0xff] %v634
                %v636 = vld [vmem:[%s628 + $0x18] sm:$0xff]
                %637 = vst [vmem:[%s629 + $0x18] sm:$0xff] %v636
                %v638 = vld [vmem:[%s628 + $0x20] sm:$0xff]
                %639 = vst [vmem:[%s629 + $0x20] sm:$0xff] %v638
              $region89: #{custom-call.14} parent=83 // loop_footer
                %s627 = sadd.s32 1, %s623
              $region90: #{custom-call.14} parent=83 // loop_footer_branch
                %622 = sbr.rel target = $region86
              $region91: #{custom-call.14} parent=83 // loop_exit
                _
            $region84: #{custom-call.14} parent=68 // pred_fallthru
              _
            // Predicated region
            $region92: #{custom-call.14} parent=68 // pred_check
              _
            $region93: #{custom-call.14} parent=68 // pred_check_branch
              %641 = sbr.rel target = $region95
            $region94: #{custom-call.14} parent=68 // pred_region
              _
            $region95: #{custom-call.14} parent=68 // pred_fallthru
              _
          $region69: #{custom-call.14} parent=64 // pred_fallthru
            _
          // Predicated region
          $region70: #{custom-call.14} parent=64 // pred_check
            _
          $region71: #{custom-call.14} parent=64 // pred_check_branch
            %600 = sbr.rel target = $region73
          $region72: #{custom-call.14} parent=64 // pred_region
            loop: start=0, step=1, limit=1
            $region74: #{custom-call.14} parent=72 // loop_pre_header
              _
            $region75: #{custom-call.14} parent=72 // loop_header
              %s603 = sphi 0, %s607
              %p604 = scmp.ge.s32.totalorder %s603, 1
              %s608 = sphi %s584, %s584
              %s609 = sphi %s594, %s594
            $region76: #{custom-call.14} parent=72 // loop_header_branch
              %606 = sbr.rel (%p604) target = $region80
            $region77: #{custom-call.14} parent=72 // loop_body
              %v610 = vld [vmem:[%s608] sm:$0xff]
              %611 = vst [vmem:[%s609] sm:$0xff] %v610
              %v612 = vld [vmem:[%s608 + $0x8] sm:$0xff]
              %613 = vst [vmem:[%s609 + $0x8] sm:$0xff] %v612
              %v614 = vld [vmem:[%s608 + $0x10] sm:$0xff]
              %615 = vst [vmem:[%s609 + $0x10] sm:$0xff] %v614
              %v616 = vld [vmem:[%s608 + $0x18] sm:$0xff]
              %617 = vst [vmem:[%s609 + $0x18] sm:$0xff] %v616
              %v618 = vld [vmem:[%s608 + $0x20] sm:$0xff]
              %619 = vst [vmem:[%s609 + $0x20] sm:$0xff] %v618
            $region78: #{custom-call.14} parent=72 // loop_footer
              %s607 = sadd.s32 1, %s603
            $region79: #{custom-call.14} parent=72 // loop_footer_branch
              %602 = sbr.rel target = $region75
            $region80: #{custom-call.14} parent=72 // loop_exit
              _
          $region73: #{custom-call.14} parent=64 // pred_fallthru
            _
        $region65: #{custom-call.14} parent=53 // pred_fallthru
          _
        %642 = vnop
        // Predicated region
        $region96: #{custom-call.14} parent=53 // pred_check
          %p643 = pneg %p59
        $region97: #{custom-call.14} parent=53 // pred_check_branch
          %645 = sbr.rel (%p643) target = $region99
        $region98: #{custom-call.14} parent=53 // pred_region
          %p646 = scmp.lt.s32.totalorder %s15, 0
          %s647 = ssub.s32 0, %s15
          %s648 = scalar_select %p646, %s647, %s15
          %s649 = sshrl.u32 %s648, 3
          %s650 = ssub.s32 0, %s649
          %s651 = scalar_select %p646, %s650, %s649
          %s652 = smul.addr %s651, 2
          %s653 = scalar_lea.vmem %s2, %s652
          // Predicated region
          $region100: #{custom-call.14} parent=98 // pred_check
            _
          $region101: #{custom-call.14} parent=98 // pred_check_branch
            %655 = sbr.rel (0) target = $region103
          $region102: #{custom-call.14} parent=98 // pred_region
            // Predicated region
            $region104: #{custom-call.14} parent=102 // pred_check
              _
            $region105: #{custom-call.14} parent=102 // pred_check_branch
              %657 = sbr.rel target = $region107
            $region106: #{custom-call.14} parent=102 // pred_region
              // Predicated region
              $region119: #{custom-call.14} parent=106 // pred_check
                _
              $region120: #{custom-call.14} parent=106 // pred_check_branch
                %672 = sbr.rel (0) target = $region122
              $region121: #{custom-call.14} parent=106 // pred_region
                loop: start=0, step=1, limit=1
                $region123: #{custom-call.14} parent=121 // loop_pre_header
                  _
                $region124: #{custom-call.14} parent=121 // loop_header
                  %s675 = sphi 0, %s679
                  %p676 = scmp.ge.s32.totalorder %s675, 1
                  %s680 = sphi %s588, %s588
                  %s681 = sphi %s653, %s653
                $region125: #{custom-call.14} parent=121 // loop_header_branch
                  %678 = sbr.rel (%p676) target = $region129
                $region126: #{custom-call.14} parent=121 // loop_body
                  %v682 = vld [vmem:[%s680] sm:$0x3]
                  %683 = vst [vmem:[%s681] sm:$0x3] %v682
                $region127: #{custom-call.14} parent=121 // loop_footer
                  %s679 = sadd.s32 1, %s675
                $region128: #{custom-call.14} parent=121 // loop_footer_branch
                  %674 = sbr.rel target = $region124
                $region129: #{custom-call.14} parent=121 // loop_exit
                  _
              $region122: #{custom-call.14} parent=106 // pred_fallthru
                _
            $region107: #{custom-call.14} parent=102 // pred_fallthru
              _
            // Predicated region
            $region108: #{custom-call.14} parent=102 // pred_check
              _
            $region109: #{custom-call.14} parent=102 // pred_check_branch
              %659 = sbr.rel (0) target = $region111
            $region110: #{custom-call.14} parent=102 // pred_region
              loop: start=0, step=1, limit=1
              $region112: #{custom-call.14} parent=110 // loop_pre_header
                _
              $region113: #{custom-call.14} parent=110 // loop_header
                %s662 = sphi 0, %s666
                %p663 = scmp.ge.s32.totalorder %s662, 1
                %s667 = sphi %s588, %s588
                %s668 = sphi %s653, %s653
              $region114: #{custom-call.14} parent=110 // loop_header_branch
                %665 = sbr.rel (%p663) target = $region118
              $region115: #{custom-call.14} parent=110 // loop_body
                %v669 = vld [vmem:[%s667] sm:$0x3]
                %670 = vst [vmem:[%s668] sm:$0x3] %v669
              $region116: #{custom-call.14} parent=110 // loop_footer
                %s666 = sadd.s32 1, %s662
              $region117: #{custom-call.14} parent=110 // loop_footer_branch
                %661 = sbr.rel target = $region113
              $region118: #{custom-call.14} parent=110 // loop_exit
                _
            $region111: #{custom-call.14} parent=102 // pred_fallthru
              _
          $region103: #{custom-call.14} parent=98 // pred_fallthru
            _
          %684 = vnop
        $region99: #{custom-call.14} parent=53 // pred_fallthru
          _
      $region54: #{custom-call.14} parent=5 // pred_fallthru
        _
      %p685 = scmp.le.s32.totalorder 2, %s5
      // Predicated region
      $region130: #{custom-call.14} parent=5 // pred_check
        %p686 = pneg %p685
      $region131: #{custom-call.14} parent=5 // pred_check_branch
        %688 = sbr.rel (%p686) target = $region133
      $region132: #{custom-call.14} parent=5 // pred_region
        %s689 = ssub.s32 %s5, 2
        %s690 = sand.u32 %s11, 1
        %s691 = sand.u32 %s11, 1
        %s692 = smul.addr %s691, 40
        %s693 = scalar_lea.vmem [#allocation1], %s692
        // Predicated region
        $region134: #{custom-call.14} parent=132 // pred_check
          %p694 = pneg %p65
        $region135: #{custom-call.14} parent=132 // pred_check_branch
          %696 = sbr.rel (%p694) target = $region137
        $region136: #{custom-call.14} parent=132 // pred_region
          %s697 = sand.u32 %s50, 1
          %s698 = sand.u32 %s50, 1
          %s699 = smul.addr %s698, 2
          %s700 = scalar_lea.vmem [#allocation3], %s699
        $region137: #{custom-call.14} parent=132 // pred_fallthru
          _
      $region133: #{custom-call.14} parent=5 // pred_fallthru
        _
    $region6: #{custom-call.14} parent=1 // loop_footer
      %s9 = sadd.s32 1, %s5
    $region7: #{custom-call.14} parent=1 // loop_footer_branch
      %4 = sbr.rel target = $region3
    $region8: #{custom-call.14} parent=1 // loop_exit
      _

// kernel: custom-call.16
$region0: #{custom-call.16}
  %s0 = inlined_call_operand.vmem [shape: f32[2,3,3], index: 0, kind: input, shape index: {}]
  %s1 = inlined_call_operand.vmem [shape: f32[2,3,3], index: 1, kind: output, shape index: {}]
  $region1: #{custom-call.16} parent=0
    #allocation0 [shape = 'u8[4096]{0}', space=vmem, size = 0x1000, scoped, tag = 'operand span for operand 0']
    #allocation1 [shape = 'u8[4096]{0}', space=vmem, size = 0x1000, scoped, tag = 'packed  for operand 0']
    #allocation2 [shape = 'u8[4096]{0}', space=vmem, size = 0x1000, scoped, tag = 'operand span for operand 1']
    #allocation3 [shape = 'u8[4096]{0}', space=vmem, size = 0x1000, scoped, tag = 'packed  for operand 1']
    loop: start=0, step=1, limit=4
    $region2: #{custom-call.16} parent=1 // loop_pre_header
      _
    $region3: #{custom-call.16} parent=1 // loop_header
      %s3 = sphi 0, %s7
      %p4 = scmp.ge.s32.totalorder %s3, 4
    $region4: #{custom-call.16} parent=1 // loop_header_branch
      %6 = sbr.rel (%p4) target = $region8
    $region5: #{custom-call.16} parent=1 // loop_body
      %s8 = ssub.s32 %s3, 1
      %s9 = ssub.s32 %s3, 2
      %s10 = sadd.s32 %s3, 1
      %p11 = scmp.le.s32.totalorder 1, %s3
      %p12 = scmp.lt.s32.totalorder %s3, 3
      %p13 = pnand %p11, %p12
      %p14 = pneg %p13
      // Predicated region
      $region9: #{custom-call.16} parent=5 // pred_check
        _
      $region10: #{custom-call.16} parent=5 // pred_check_branch
        %16 = sbr.rel (%p13) target = $region12
      $region11: #{custom-call.16} parent=5 // pred_region
        %s17 = ssub.s32 %s3, 1
      $region12: #{custom-call.16} parent=5 // pred_fallthru
        _
      %p18 = scmp.lt.s32.totalorder %s3, 2
      // Predicated region
      $region13: #{custom-call.16} parent=5 // pred_check
        %p19 = pneg %p18
      $region14: #{custom-call.16} parent=5 // pred_check_branch
        %21 = sbr.rel (%p19) target = $region16
      $region15: #{custom-call.16} parent=5 // pred_region
        %s22 = sand.u32 %s3, 1
        %s23 = sand.u32 %s3, 1
        %s24 = smul.addr %s23, 4
        %s25 = scalar_lea.vmem [#allocation1], %s24
        %s26 = smul.addr %s3, 4
        %s27 = scalar_lea.vmem %s0, %s26
        // Predicated region
        $region17: #{custom-call.16} parent=15 // pred_check
          _
        $region18: #{custom-call.16} parent=15 // pred_check_branch
          %29 = sbr.rel (0) target = $region20
        $region19: #{custom-call.16} parent=15 // pred_region
          // Predicated region
          $region21: #{custom-call.16} parent=19 // pred_check
            _
          $region22: #{custom-call.16} parent=19 // pred_check_branch
            %31 = sbr.rel target = $region24
          $region23: #{custom-call.16} parent=19 // pred_region
            // Predicated region
            $region36: #{custom-call.16} parent=23 // pred_check
              _
            $region37: #{custom-call.16} parent=23 // pred_check_branch
              %46 = sbr.rel (0) target = $region39
            $region38: #{custom-call.16} parent=23 // pred_region
              loop: start=0, step=1, limit=1
              $region40: #{custom-call.16} parent=38 // loop_pre_header
                _
              $region41: #{custom-call.16} parent=38 // loop_header
                %s49 = sphi 0, %s53
                %p50 = scmp.ge.s32.totalorder %s49, 1
                %s54 = sphi %s27, %s27
                %s55 = sphi %s25, %s25
              $region42: #{custom-call.16} parent=38 // loop_header_branch
                %52 = sbr.rel (%p50) target = $region46
              $region43: #{custom-call.16} parent=38 // loop_body
                %v56 = vld [vmem:[%s54] sm:$0xf]
                %57 = vst [vmem:[%s55] sm:$0xf] %v56
              $region44: #{custom-call.16} parent=38 // loop_footer
                %s53 = sadd.s32 1, %s49
              $region45: #{custom-call.16} parent=38 // loop_footer_branch
                %48 = sbr.rel target = $region41
              $region46: #{custom-call.16} parent=38 // loop_exit
                _
            $region39: #{custom-call.16} parent=23 // pred_fallthru
              _
          $region24: #{custom-call.16} parent=19 // pred_fallthru
            _
          // Predicated region
          $region25: #{custom-call.16} parent=19 // pred_check
            _
          $region26: #{custom-call.16} parent=19 // pred_check_branch
            %33 = sbr.rel (0) target = $region28
          $region27: #{custom-call.16} parent=19 // pred_region
            loop: start=0, step=1, limit=1
            $region29: #{custom-call.16} parent=27 // loop_pre_header
              _
            $region30: #{custom-call.16} parent=27 // loop_header
              %s36 = sphi 0, %s40
              %p37 = scmp.ge.s32.totalorder %s36, 1
              %s41 = sphi %s27, %s27
              %s42 = sphi %s25, %s25
            $region31: #{custom-call.16} parent=27 // loop_header_branch
              %39 = sbr.rel (%p37) target = $region35
            $region32: #{custom-call.16} parent=27 // loop_body
              %v43 = vld [vmem:[%s41] sm:$0xf]
              %44 = vst [vmem:[%s42] sm:$0xf] %v43
            $region33: #{custom-call.16} parent=27 // loop_footer
              %s40 = sadd.s32 1, %s36
            $region34: #{custom-call.16} parent=27 // loop_footer_branch
              %35 = sbr.rel target = $region30
            $region35: #{custom-call.16} parent=27 // loop_exit
              _
          $region28: #{custom-call.16} parent=19 // pred_fallthru
            _
        $region20: #{custom-call.16} parent=15 // pred_fallthru
          _
        %58 = vnop
      $region16: #{custom-call.16} parent=5 // pred_fallthru
        _
      %p59 = scmp.le.s32.totalorder 1, %s3
      %p60 = scmp.lt.s32.totalorder %s3, 3
      %p61 = pnand %p59, %p60
      %p62 = pneg %p61
      // Predicated region
      $region47: #{custom-call.16} parent=5 // pred_check
        _
      $region48: #{custom-call.16} parent=5 // pred_check_branch
        %64 = sbr.rel (%p61) target = $region50
      $region49: #{custom-call.16} parent=5 // pred_region
        %s65 = ssub.s32 %s3, 1
        %s66 = sand.u32 %s8, 1
        %s67 = sand.u32 %s8, 1
        %s68 = smul.addr %s67, 4
        %s69 = scalar_lea.vmem [#allocation1], %s68
        %s70 = sand.u32 %s8, 1
        %s71 = sand.u32 %s8, 1
        %s72 = smul.addr %s71, 4
        %s73 = scalar_lea.vmem [#allocation1], %s72
        %s74 = sand.u32 %s8, 1
        %s75 = sand.u32 %s8, 1
        %s76 = smul.addr %s75, 4
        %s77 = scalar_lea.vmem [#allocation3], %s76
        %s79 = sshllo.u32 0, 4
        %v80 = vld [vmem:[%s73] sm:%s79]
        %81 = vst [vmem:[#allocation0] sm:%s79] %v80
        %v82 = vlaneseq
        %v83 = vand.u32 %v82, 127
        %v84 = vlaneseq
        %v85 = vshrl.u32 %v84, 7
        %vm87 = vcmp.eq.s32.totalorder %v83, %v85
        %v88 = vld [vmem:[#allocation0] sm:$0xff]
        %v89 = vlaneseq
        %v90 = vand.u32 %v89, 127
        %vm91 = vcmp.eq.s32.totalorder %v90, 0
        %v92 = vsel %vm91, %v88, 1.0
        %v93 = vsel %vm87, %v92, 0.0
        %s94 = scalar_lea.vmem [#allocation0], 1
        %v95 = vld [vmem:[%s94] ss:$0 sm:$0xff]
        %vm96 = vcmask 23552
        %v97 = vsel %vm96, %v95, 0.0
        %v98 = vlaneseq
        %v99 = vand.u32 %v98, 127
        %vm100 = vcmp.eq.s32.totalorder %v99, 1
        %v101 = vmul.f32 %v97, %v93
        %102 = vadd.xlane.f32.xlu0 %v101
        %v103 = vpop.xlane.xlu0 %102
        %v104 = vsel %vm100, %v103, %v93
        %s105 = scalar_lea.vmem [#allocation0], 2
        %v106 = vld [vmem:[%s105] ss:$0 sm:$0xff]
        %vm107 = vcmask 23552
        %v108 = vsel %vm107, %v106, 0.0
        %v109 = vlaneseq
        %v110 = vand.u32 %v109, 127
        %vm111 = vcmp.eq.s32.totalorder %v110, 2
        %v112 = vmul.f32 %v108, %v104
        %113 = vadd.xlane.f32.xlu0 %v112
        %v114 = vpop.xlane.xlu0 %113
        %v115 = vsel %vm111, %v114, %v104
        %116 = vst [vmem:[#allocation2] sm:$0xff] %v115
        %s118 = sshllo.u32 0, 4
        %v120 = vld [vmem:[#allocation2] sm:%s118]
        %s121 = sshllo.u32 0, 4
        %122 = vst [vmem:[%s77] sm:%s121] %v120
        %s123 = sand.u32 %s8, 1
        %s124 = sand.u32 %s8, 1
        %s125 = smul.addr %s124, 4
        %s126 = scalar_lea.vmem [#allocation3], %s125
        %s127 = smul.addr %s8, 4
        %s128 = scalar_lea.vmem %s1, %s127
        // Predicated region
        $region51: #{custom-call.16} parent=49 // pred_check
          _
        $region52: #{custom-call.16} parent=49 // pred_check_branch
          %130 = sbr.rel (0) target = $region54
        $region53: #{custom-call.16} parent=49 // pred_region
          // Predicated region
          $region55: #{custom-call.16} parent=53 // pred_check
            _
          $region56: #{custom-call.16} parent=53 // pred_check_branch
            %132 = sbr.rel target = $region58
          $region57: #{custom-call.16} parent=53 // pred_region
            // Predicated region
            $region70: #{custom-call.16} parent=57 // pred_check
              _
            $region71: #{custom-call.16} parent=57 // pred_check_branch
              %147 = sbr.rel (0) target = $region73
            $region72: #{custom-call.16} parent=57 // pred_region
              loop: start=0, step=1, limit=1
              $region74: #{custom-call.16} parent=72 // loop_pre_header
                _
              $region75: #{custom-call.16} parent=72 // loop_header
                %s150 = sphi 0, %s154
                %p151 = scmp.ge.s32.totalorder %s150, 1
                %s155 = sphi %s126, %s126
                %s156 = sphi %s128, %s128
              $region76: #{custom-call.16} parent=72 // loop_header_branch
                %153 = sbr.rel (%p151) target = $region80
              $region77: #{custom-call.16} parent=72 // loop_body
                %v157 = vld [vmem:[%s155] sm:$0xf]
                %158 = vst [vmem:[%s156] sm:$0xf] %v157
              $region78: #{custom-call.16} parent=72 // loop_footer
                %s154 = sadd.s32 1, %s150
              $region79: #{custom-call.16} parent=72 // loop_footer_branch
                %149 = sbr.rel target = $region75
              $region80: #{custom-call.16} parent=72 // loop_exit
                _
            $region73: #{custom-call.16} parent=57 // pred_fallthru
              _
          $region58: #{custom-call.16} parent=53 // pred_fallthru
            _
          // Predicated region
          $region59: #{custom-call.16} parent=53 // pred_check
            _
          $region60: #{custom-call.16} parent=53 // pred_check_branch
            %134 = sbr.rel (0) target = $region62
          $region61: #{custom-call.16} parent=53 // pred_region
            loop: start=0, step=1, limit=1
            $region63: #{custom-call.16} parent=61 // loop_pre_header
              _
            $region64: #{custom-call.16} parent=61 // loop_header
              %s137 = sphi 0, %s141
              %p138 = scmp.ge.s32.totalorder %s137, 1
              %s142 = sphi %s126, %s126
              %s143 = sphi %s128, %s128
            $region65: #{custom-call.16} parent=61 // loop_header_branch
              %140 = sbr.rel (%p138) target = $region69
            $region66: #{custom-call.16} parent=61 // loop_body
              %v144 = vld [vmem:[%s142] sm:$0xf]
              %145 = vst [vmem:[%s143] sm:$0xf] %v144
            $region67: #{custom-call.16} parent=61 // loop_footer
              %s141 = sadd.s32 1, %s137
            $region68: #{custom-call.16} parent=61 // loop_footer_branch
              %136 = sbr.rel target = $region64
            $region69: #{custom-call.16} parent=61 // loop_exit
              _
          $region62: #{custom-call.16} parent=53 // pred_fallthru
            _
        $region54: #{custom-call.16} parent=49 // pred_fallthru
          _
        %159 = vnop
      $region50: #{custom-call.16} parent=5 // pred_fallthru
        _
      %p160 = scmp.le.s32.totalorder 2, %s3
      // Predicated region
      $region81: #{custom-call.16} parent=5 // pred_check
        %p161 = pneg %p160
      $region82: #{custom-call.16} parent=5 // pred_check_branch
        %163 = sbr.rel (%p161) target = $region84
      $region83: #{custom-call.16} parent=5 // pred_region
        %s164 = ssub.s32 %s3, 2
        %s165 = sand.u32 %s9, 1
        %s166 = sand.u32 %s9, 1
        %s167 = smul.addr %s166, 4
        %s168 = scalar_lea.vmem [#allocation3], %s167
      $region84: #{custom-call.16} parent=5 // pred_fallthru
        _
    $region6: #{custom-call.16} parent=1 // loop_footer
      %s7 = sadd.s32 1, %s3
    $region7: #{custom-call.16} parent=1 // loop_footer_branch
      %2 = sbr.rel target = $region3
    $region8: #{custom-call.16} parent=1 // loop_exit
      _

// kernel: custom-call.17
$region0: #{custom-call.17}
  %s0 = inlined_call_operand.vmem [shape: f32[2,3,3], index: 0, kind: input, shape index: {}]
  %s1 = inlined_call_operand.vmem [shape: f32[2,3,3], index: 1, kind: output, shape index: {0}]
  %s2 = inlined_call_operand.hbm [shape: s32[2,3], index: 2, kind: output, shape index: {1}]
  %s3 = inlined_call_operand.vmem [shape: s32[2,3], index: 3, kind: output, shape index: {2}]
  %4 = xla_tuple %s1, %s2, %s3
  $region1: #{custom-call.17} parent=0
    #allocation0 [shape = 'u8[4096]{0}', space=vmem, size = 0x1000, scoped, tag = 'operand span for operand 0']
    #allocation1 [shape = 'u8[4096]{0}', space=vmem, size = 0x1000, scoped, tag = 'packed  for operand 0']
    #allocation2 [shape = 'u8[4096]{0}', space=vmem, size = 0x1000, scoped, tag = 'operand span for operand 1']
    #allocation3 [shape = 'u8[4096]{0}', space=vmem, size = 0x1000, scoped, tag = 'packed  for operand 1']
    #allocation4 [shape = 'u8[4096]{0}', space=vmem, size = 0x1000, scoped, tag = 'operand span for operand 2']
    #allocation5 [shape = 'u8[2048]{0}', space=vmem, size = 0x800, scoped, tag = 'packed  for operand 2']
    #allocation6 [shape = 's32[2]{0}', space=sflag, size = 0x8, scoped, tag = 'scoped memory for custom-call.17']
    #allocation7 [shape = 'u8[4096]{0}', space=vmem, size = 0x1000, scoped, tag = 'operand span for operand 3']
    #allocation8 [shape = 'u8[2048]{0}', space=vmem, size = 0x800, scoped, tag = 'packed  for operand 3']
    %5 = vsyncpa [#allocation6], 0
    %s6 = scalar_lea.sflag [#allocation6], 1
    %7 = vsyncpa %s6, 0
    loop: start=0, step=1, limit=4
    $region2: #{custom-call.17} parent=1 // loop_pre_header
      _
    $region3: #{custom-call.17} parent=1 // loop_header
      %s9 = sphi 0, %s13
      %p10 = scmp.ge.s32.totalorder %s9, 4
      %s21 = sphi 0, %s23
      %s24 = sphi 0, %s21
      %s25 = sphi 0, %s24
      %s41 = sphi 0, %s25
      %s49 = sphi 0, %s51
      %s52 = sphi 0, %s49
      %s53 = sphi 0, %s52
      %s69 = sphi 0, %s53
    $region4: #{custom-call.17} parent=1 // loop_header_branch
      %12 = sbr.rel (%p10) target = $region8
    $region5: #{custom-call.17} parent=1 // loop_body
      %s14 = ssub.s32 %s9, 1
      %s15 = ssub.s32 %s9, 2
      %s16 = sadd.s32 %s9, 1
      %s17 = sshrl.u32 %s9, 3
      %s18 = sshrl.u32 %s16, 3
      %s19 = ssub.s32 %s17, %s18
      %p20 = scmp.eq.s32.totalorder %s19, 0
      %s22 = sadd.s32 %s21, 1
      %s23 = scalar_select %p20, %s21, %s22
      %p26 = pneg %p20
      %p27 = scmp.eq.s32.totalorder %s9, 1
      %p28 = por %p26, %p27
      %p29 = scmp.ne.s32.totalorder %s21, %s24
      %p30 = scmp.eq.s32.totalorder %s9, 0
      %p31 = por %p29, %p30
      %p32 = scmp.ne.s32.totalorder %s21, %s24
      %p33 = scmp.eq.s32.totalorder %s14, 1
      %p34 = por %p32, %p33
      %p35 = scmp.ne.s32.totalorder %s24, %s25
      %p36 = scmp.eq.s32.totalorder %s14, 0
      %p37 = por %p35, %p36
      %p38 = scmp.ne.s32.totalorder %s24, %s25
      %p39 = scmp.eq.s32.totalorder %s15, 1
      %p40 = por %p38, %p39
      %p42 = scmp.ne.s32.totalorder %s25, %s41
      %p43 = scmp.eq.s32.totalorder %s15, 0
      %p44 = por %p42, %p43
      %s45 = sshrl.u32 %s9, 3
      %s46 = sshrl.u32 %s16, 3
      %s47 = ssub.s32 %s45, %s46
      %p48 = scmp.eq.s32.totalorder %s47, 0
      %s50 = sadd.s32 %s49, 1
      %s51 = scalar_select %p48, %s49, %s50
      %p54 = pneg %p48
      %p55 = scmp.eq.s32.totalorder %s9, 1
      %p56 = por %p54, %p55
      %p57 = scmp.ne.s32.totalorder %s49, %s52
      %p58 = scmp.eq.s32.totalorder %s9, 0
      %p59 = por %p57, %p58
      %p60 = scmp.ne.s32.totalorder %s49, %s52
      %p61 = scmp.eq.s32.totalorder %s14, 1
      %p62 = por %p60, %p61
      %p63 = scmp.ne.s32.totalorder %s52, %s53
      %p64 = scmp.eq.s32.totalorder %s14, 0
      %p65 = por %p63, %p64
      %p66 = scmp.ne.s32.totalorder %s52, %s53
      %p67 = scmp.eq.s32.totalorder %s15, 1
      %p68 = por %p66, %p67
      %p70 = scmp.ne.s32.totalorder %s53, %s69
      %p71 = scmp.eq.s32.totalorder %s15, 0
      %p72 = por %p70, %p71
      %p73 = scmp.le.s32.totalorder 1, %s9
      %p74 = scmp.lt.s32.totalorder %s9, 3
      %p75 = pnand %p73, %p74
      %p76 = pneg %p75
      // Predicated region
      $region9: #{custom-call.17} parent=5 // pred_check
        _
      $region10: #{custom-call.17} parent=5 // pred_check_branch
        %78 = sbr.rel (%p75) target = $region12
      $region11: #{custom-call.17} parent=5 // pred_region
        %s79 = ssub.s32 %s9, 1
      $region12: #{custom-call.17} parent=5 // pred_fallthru
        _
      %p80 = scmp.lt.s32.totalorder %s9, 2
      // Predicated region
      $region13: #{custom-call.17} parent=5 // pred_check
        %p81 = pneg %p80
      $region14: #{custom-call.17} parent=5 // pred_check_branch
        %83 = sbr.rel (%p81) target = $region16
      $region15: #{custom-call.17} parent=5 // pred_region
        %s84 = sand.u32 %s9, 1
        %s85 = sand.u32 %s9, 1
        %s86 = smul.addr %s85, 4
        %s87 = scalar_lea.vmem [#allocation1], %s86
        %s88 = smul.addr %s9, 4
        %s89 = scalar_lea.vmem %s0, %s88
        // Predicated region
        $region17: #{custom-call.17} parent=15 // pred_check
          _
        $region18: #{custom-call.17} parent=15 // pred_check_branch
          %91 = sbr.rel (0) target = $region20
        $region19: #{custom-call.17} parent=15 // pred_region
          // Predicated region
          $region21: #{custom-call.17} parent=19 // pred_check
            _
          $region22: #{custom-call.17} parent=19 // pred_check_branch
            %93 = sbr.rel target = $region24
          $region23: #{custom-call.17} parent=19 // pred_region
            // Predicated region
            $region36: #{custom-call.17} parent=23 // pred_check
              _
            $region37: #{custom-call.17} parent=23 // pred_check_branch
              %108 = sbr.rel (0) target = $region39
            $region38: #{custom-call.17} parent=23 // pred_region
              loop: start=0, step=1, limit=1
              $region40: #{custom-call.17} parent=38 // loop_pre_header
                _
              $region41: #{custom-call.17} parent=38 // loop_header
                %s111 = sphi 0, %s115
                %p112 = scmp.ge.s32.totalorder %s111, 1
                %s116 = sphi %s89, %s89
                %s117 = sphi %s87, %s87
              $region42: #{custom-call.17} parent=38 // loop_header_branch
                %114 = sbr.rel (%p112) target = $region46
              $region43: #{custom-call.17} parent=38 // loop_body
                %v118 = vld [vmem:[%s116] sm:$0xf]
                %119 = vst [vmem:[%s117] sm:$0xf] %v118
              $region44: #{custom-call.17} parent=38 // loop_footer
                %s115 = sadd.s32 1, %s111
              $region45: #{custom-call.17} parent=38 // loop_footer_branch
                %110 = sbr.rel target = $region41
              $region46: #{custom-call.17} parent=38 // loop_exit
                _
            $region39: #{custom-call.17} parent=23 // pred_fallthru
              _
          $region24: #{custom-call.17} parent=19 // pred_fallthru
            _
          // Predicated region
          $region25: #{custom-call.17} parent=19 // pred_check
            _
          $region26: #{custom-call.17} parent=19 // pred_check_branch
            %95 = sbr.rel (0) target = $region28
          $region27: #{custom-call.17} parent=19 // pred_region
            loop: start=0, step=1, limit=1
            $region29: #{custom-call.17} parent=27 // loop_pre_header
              _
            $region30: #{custom-call.17} parent=27 // loop_header
              %s98 = sphi 0, %s102
              %p99 = scmp.ge.s32.totalorder %s98, 1
              %s103 = sphi %s89, %s89
              %s104 = sphi %s87, %s87
            $region31: #{custom-call.17} parent=27 // loop_header_branch
              %101 = sbr.rel (%p99) target = $region35
            $region32: #{custom-call.17} parent=27 // loop_body
              %v105 = vld [vmem:[%s103] sm:$0xf]
              %106 = vst [vmem:[%s104] sm:$0xf] %v105
            $region33: #{custom-call.17} parent=27 // loop_footer
              %s102 = sadd.s32 1, %s98
            $region34: #{custom-call.17} parent=27 // loop_footer_branch
              %97 = sbr.rel target = $region30
            $region35: #{custom-call.17} parent=27 // loop_exit
              _
          $region28: #{custom-call.17} parent=19 // pred_fallthru
            _
        $region20: #{custom-call.17} parent=15 // pred_fallthru
          _
        %120 = vnop
      $region16: #{custom-call.17} parent=5 // pred_fallthru
        _
      %p121 = scmp.le.s32.totalorder 1, %s9
      %p122 = scmp.lt.s32.totalorder %s9, 3
      %p123 = pnand %p121, %p122
      %p124 = pneg %p123
      // Predicated region
      $region47: #{custom-call.17} parent=5 // pred_check
        _
      $region48: #{custom-call.17} parent=5 // pred_check_branch
        %126 = sbr.rel (%p123) target = $region50
      $region49: #{custom-call.17} parent=5 // pred_region
        #allocation9 [shape = 's32[3,128]{1,0}', space=vmem, size = 0x1000, scoped, tag = 'scratch for permutations']
        %s127 = ssub.s32 %s9, 1
        %s128 = sand.u32 %s14, 1
        %s129 = sand.u32 %s14, 1
        %s130 = smul.addr %s129, 4
        %s131 = scalar_lea.vmem [#allocation1], %s130
        %s132 = sand.u32 %s14, 1
        %s133 = sand.u32 %s14, 1
        %s134 = smul.addr %s133, 4
        %s135 = scalar_lea.vmem [#allocation1], %s134
        %s136 = sand.u32 %s14, 1
        %s137 = sand.u32 %s14, 1
        %s138 = smul.addr %s137, 4
        %s139 = scalar_lea.vmem [#allocation3], %s138
        %p140 = pneg %p37
        %p141 = pneg %p34
        %s142 = sand.u32 %s24, 1
        %s143 = scalar_lea.sflag [#allocation6], %s142
        %s144 = sand.u32 %s24, 1
        %s145 = smul.addr %s144, 2
        %s146 = scalar_lea.vmem [#allocation5], %s145
        %p147 = pneg %p65
        %p148 = pneg %p62
        %s149 = sand.u32 %s52, 1
        %s150 = sand.u32 %s52, 1
        %s151 = smul.addr %s150, 2
        %s152 = scalar_lea.vmem [#allocation8], %s151
        %s154 = sshllo.u32 0, 4
        %v155 = vld [vmem:[%s135] sm:%s154]
        %156 = vst [vmem:[#allocation0] sm:%s154] %v155
        %s157 = sshrl.u32 %s14, 3
        %s158 = sshrl.u32 %s14, 3
        %v159 = vld [vmem:[#allocation0] sm:$0xff]
        %160 = vst [vmem:[#allocation2] sm:$0xff] %v159
        %s161 = sand.u32 %s14, 7
        %s162 = scalar_lea.vmem [#allocation4], %s161
        %s163 = sand.u32 %s14, 7
        %s164 = scalar_lea.vmem [#allocation7], %s163
        %165 = vst [vmem:[%s162] sm:$0x1] 0
        %v166 = vlaneseq
        %v167 = vshrl.u32 %v166, 7
        %v168 = vmov %v167
        %170 = vst [vmem:[#allocation9] sm:$0xff] %v168
        loop: start=0, step=1, limit=3
        $region52: #{custom-call.17} parent=49 // loop_pre_header
          _
        $region53: #{custom-call.17} parent=49 // loop_header
          %s172 = sphi 0, %s176
          %p173 = scmp.ge.s32.totalorder %s172, 3
        $region54: #{custom-call.17} parent=49 // loop_header_branch
          %175 = sbr.rel (%p173) target = $region58
        $region55: #{custom-call.17} parent=49 // loop_body
          %v177 = vstv %s172
          %v178 = vlaneseq
          %v179 = vshrl.u32 %v178, 7
          %v180 = vmov %v179
          %v181 = vld [vmem:[#allocation2] sm:$0xff]
          %v182 = vand.u32 2147483647, %v181
          %v184 = vstv %s172
          %vm185 = vcmp.ge.s32.totalorder %v180, %v184
          %vm186 = vcmp.lt.s32.totalorder %v180, 3
          %vm187 = vmand %vm185, %vm186
          %vm188 = vcmp.lt.f32.partialorder -inf, %v182
          %vm189 = vmand %vm187, %vm188
          %v190 = vsel %vm189, %v180, %v177
          %v191 = vsel %vm189, %v182, -inf
          %v192 = vrot.slane %v191, 1
          %v193 = vrot.slane %v190, 1
          %vm194 = vcmp.ge.f32.partialorder %v192, %v191
          %v195 = vsel %vm194, %v192, %v191
          %v196 = vsel %vm194, %v193, %v190
          %v197 = vrot.slane %v192, 1
          %v198 = vrot.slane %v193, 1
          %vm199 = vcmp.ge.f32.partialorder %v197, %v195
          %v200 = vsel %vm199, %v197, %v195
          %v201 = vsel %vm199, %v198, %v196
          %v202 = vrot.slane %v197, 1
          %v203 = vrot.slane %v198, 1
          %vm204 = vcmp.ge.f32.partialorder %v202, %v200
          %v205 = vsel %vm204, %v202, %v200
          %v206 = vsel %vm204, %v203, %v201
          %v207 = vrot.slane %v202, 1
          %v208 = vrot.slane %v203, 1
          %vm209 = vcmp.ge.f32.partialorder %v207, %v205
          %v210 = vsel %vm209, %v207, %v205
          %v211 = vsel %vm209, %v208, %v206
          %v212 = vrot.slane %v207, 1
          %v213 = vrot.slane %v208, 1
          %vm214 = vcmp.ge.f32.partialorder %v212, %v210
          %v215 = vsel %vm214, %v212, %v210
          %v216 = vsel %vm214, %v213, %v211
          %v217 = vrot.slane %v212, 1
          %v218 = vrot.slane %v213, 1
          %vm219 = vcmp.ge.f32.partialorder %v217, %v215
          %v220 = vsel %vm219, %v217, %v215
          %v221 = vsel %vm219, %v218, %v216
          %v222 = vrot.slane %v217, 1
          %v223 = vrot.slane %v218, 1
          %vm224 = vcmp.ge.f32.partialorder %v222, %v220
          %v225 = vsel %vm224, %v222, %v220
          %v226 = vsel %vm224, %v223, %v221
          %s227 = ssub.s32 128, %s172
          %228 = vrot.lane.b32.xlu0 %v226, %s227
          %v229 = vpop.permute.xlu0 %228
          %s230 = vtos %v229
          %v231 = vstv %s172
          %v232 = vlaneseq
          %v233 = vand.u32 %v232, 127
          %vm234 = vcmp.eq.s32.totalorder %v233, %v231
          %v235 = vstv %s230
          %v236 = vld [vmem:[%s162] ss:$0 sm:$0xff]
          %v237 = vsel %vm234, %v235, %v236
          %238 = vst [vmem:[%s162] sm:$0x1] %v237
          %s239 = scalar_lea.vmem [#allocation2], %s172
          %s240 = scalar_lea.vmem [#allocation2], %s230
          %v241 = vld [vmem:[%s239] ss:$0 sm:$0xff]
          %v242 = vld [vmem:[%s240] ss:$0 sm:$0xff]
          %243 = vst [vmem:[%s240] sm:$0x1] %v241
          %244 = vst [vmem:[%s239] sm:$0x1] %v242
          %s245 = scalar_lea.vmem [#allocation9], %s172
          %s246 = scalar_lea.vmem [#allocation9], %s230
          %v247 = vld [vmem:[%s245] ss:$0 sm:$0xff]
          %v248 = vld [vmem:[%s246] ss:$0 sm:$0xff]
          %249 = vst [vmem:[%s246] sm:$0x1] %v247
          %250 = vst [vmem:[%s245] sm:$0x1] %v248
          %vm251 = vcmp.ne.f32.partialorder %v242, 0.0
          %vm252 = vmand %vm234, %vm251
          %v253 = vsel %vm252, %v242, 1.0
          %v254 = vlaneseq
          %v255 = vand.u32 %v254, 127
          %v256 = vstv %s172
          %vm257 = vcmp.gt.s32.totalorder %v255, %v256
          %v258 = vsel %vm257, %v242, 0.0
          %v259 = vlaneseq
          %v260 = vshrl.u32 %v259, 7
          %v261 = vmov %v260
          %v262 = vld [vmem:[#allocation2] sm:$0xff]
          %v264 = vstv %s172
          %vm265 = vcmp.gt.s32.totalorder %v261, %v264
          %v266 = vsel %vm265, %v253, 1.0
          %v267 = vrcp.pop %v266
          %v268 = vmul.f32 %v262, %v267
          %vm269 = vmand %vm265, %vm234
          %v270 = vsel %vm269, %v268, 0.0
          %271 = vadd.xlane.f32.xlu0 %v270
          %v272 = vpop.xlane.xlu0 %271
          %v273 = vmul.f32 %v272, %v258
          %v274 = vsub.f32 %v268, %v273
          %275 = vst [vmem:[#allocation2] sm:$0xff] %v274
        $region56: #{custom-call.17} parent=49 // loop_footer
          %s176 = sadd.s32 1, %s172
        $region57: #{custom-call.17} parent=49 // loop_footer_branch
          %171 = sbr.rel target = $region53
        $region58: #{custom-call.17} parent=49 // loop_exit
          _
        %v276 = vld [vmem:[#allocation9] sm:$0xff]
        %s277 = scalar_lea.vmem [#allocation9], 8
        %s278 = scalar_lea.vmem [#allocation9], 16
        %s279 = scalar_lea.vmem [#allocation9], 24
        %s280 = scalar_lea.vmem [#allocation9], 32
        %s281 = scalar_lea.vmem [#allocation9], 40
        %s282 = scalar_lea.vmem [#allocation9], 48
        %s283 = scalar_lea.vmem [#allocation9], 56
        %s284 = scalar_lea.vmem [#allocation9], 64
        %s285 = scalar_lea.vmem [#allocation9], 72
        %s286 = scalar_lea.vmem [#allocation9], 80
        %s287 = scalar_lea.vmem [#allocation9], 88
        %s288 = scalar_lea.vmem [#allocation9], 96
        %s289 = scalar_lea.vmem [#allocation9], 104
        %s290 = scalar_lea.vmem [#allocation9], 112
        %s291 = scalar_lea.vmem [#allocation9], 120
        %292 = vxpose.xlu0.b32.start [1/16] %v276, 128
        %293 = vxpose.xlu0.b32.cont [2/16] 0, 128
        %294 = vxpose.xlu0.b32.cont [3/16] 0, 128
        %295 = vxpose.xlu0.b32.cont [4/16] 0, 128
        %296 = vxpose.xlu0.b32.cont [5/16] 0, 128
        %297 = vxpose.xlu0.b32.cont [6/16] 0, 128
        %298 = vxpose.xlu0.b32.cont [7/16] 0, 128
        %299 = vxpose.xlu0.b32.cont [8/16] 0, 128
        %300 = vxpose.xlu0.b32.cont [9/16] 0, 128
        %301 = vxpose.xlu0.b32.cont [10/16] 0, 128
        %302 = vxpose.xlu0.b32.cont [11/16] 0, 128
        %303 = vxpose.xlu0.b32.cont [12/16] 0, 128
        %304 = vxpose.xlu0.b32.cont [13/16] 0, 128
        %305 = vxpose.xlu0.b32.cont [14/16] 0, 128
        %306 = vxpose.xlu0.b32.cont [15/16] 0, 128
        %307 = vxpose.xlu0.b32.end [16/16] 0, 128
        %v308 = vpop.trf.xlu0
        %v309 = vpop.trf.xlu0
        %v310 = vpop.trf.xlu0
        %v311 = vpop.trf.xlu0
        %v312 = vpop.trf.xlu0
        %v313 = vpop.trf.xlu0
        %v314 = vpop.trf.xlu0
        %v315 = vpop.trf.xlu0
        %v316 = vpop.trf.xlu0
        %v317 = vpop.trf.xlu0
        %v318 = vpop.trf.xlu0
        %v319 = vpop.trf.xlu0
        %v320 = vpop.trf.xlu0
        %v321 = vpop.trf.xlu0
        %v322 = vpop.trf.xlu0
        %v323 = vpop.trf.xlu0
        %324 = vst [vmem:[%s164] sm:$0x1] %v308
        %s326 = sshllo.u32 0, 4
        %v328 = vld [vmem:[#allocation2] sm:%s326]
        %s329 = sshllo.u32 0, 4
        %330 = vst [vmem:[%s139] sm:%s329] %v328
        %s332 = sshllo.u32 0, 2
        %v334 = vld [vmem:[#allocation4] sm:%s332]
        %s335 = sshllo.u32 0, 2
        %336 = vst [vmem:[%s146] sm:%s335] %v334
        %s338 = sshllo.u32 0, 2
        %v340 = vld [vmem:[#allocation7] sm:%s338]
        %s341 = sshllo.u32 0, 2
        %342 = vst [vmem:[%s152] sm:%s341] %v340
        %s343 = sand.u32 %s14, 1
        %s344 = sand.u32 %s14, 1
        %s345 = smul.addr %s344, 4
        %s346 = scalar_lea.vmem [#allocation3], %s345
        %s347 = sand.u32 %s24, 1
        %s348 = scalar_lea.sflag [#allocation6], %s347
        %s349 = sand.u32 %s24, 1
        %s350 = smul.addr %s349, 2
        %s351 = scalar_lea.vmem [#allocation5], %s350
        %s352 = sand.u32 %s52, 1
        %s353 = sand.u32 %s52, 1
        %s354 = smul.addr %s353, 2
        %s355 = scalar_lea.vmem [#allocation8], %s354
        %s356 = smul.addr %s14, 4
        %s357 = scalar_lea.vmem %s1, %s356
        // Predicated region
        $region59: #{custom-call.17} parent=49 // pred_check
          _
        $region60: #{custom-call.17} parent=49 // pred_check_branch
          %359 = sbr.rel (0) target = $region62
        $region61: #{custom-call.17} parent=49 // pred_region
          // Predicated region
          $region63: #{custom-call.17} parent=61 // pred_check
            _
          $region64: #{custom-call.17} parent=61 // pred_check_branch
            %361 = sbr.rel target = $region66
          $region65: #{custom-call.17} parent=61 // pred_region
            // Predicated region
            $region78: #{custom-call.17} parent=65 // pred_check
              _
            $region79: #{custom-call.17} parent=65 // pred_check_branch
              %376 = sbr.rel (0) target = $region81
            $region80: #{custom-call.17} parent=65 // pred_region
              loop: start=0, step=1, limit=1
              $region82: #{custom-call.17} parent=80 // loop_pre_header
                _
              $region83: #{custom-call.17} parent=80 // loop_header
                %s379 = sphi 0, %s383
                %p380 = scmp.ge.s32.totalorder %s379, 1
                %s384 = sphi %s346, %s346
                %s385 = sphi %s357, %s357
              $region84: #{custom-call.17} parent=80 // loop_header_branch
                %382 = sbr.rel (%p380) target = $region88
              $region85: #{custom-call.17} parent=80 // loop_body
                %v386 = vld [vmem:[%s384] sm:$0xf]
                %387 = vst [vmem:[%s385] sm:$0xf] %v386
              $region86: #{custom-call.17} parent=80 // loop_footer
                %s383 = sadd.s32 1, %s379
              $region87: #{custom-call.17} parent=80 // loop_footer_branch
                %378 = sbr.rel target = $region83
              $region88: #{custom-call.17} parent=80 // loop_exit
                _
            $region81: #{custom-call.17} parent=65 // pred_fallthru
              _
          $region66: #{custom-call.17} parent=61 // pred_fallthru
            _
          // Predicated region
          $region67: #{custom-call.17} parent=61 // pred_check
            _
          $region68: #{custom-call.17} parent=61 // pred_check_branch
            %363 = sbr.rel (0) target = $region70
          $region69: #{custom-call.17} parent=61 // pred_region
            loop: start=0, step=1, limit=1
            $region71: #{custom-call.17} parent=69 // loop_pre_header
              _
            $region72: #{custom-call.17} parent=69 // loop_header
              %s366 = sphi 0, %s370
              %p367 = scmp.ge.s32.totalorder %s366, 1
              %s371 = sphi %s346, %s346
              %s372 = sphi %s357, %s357
            $region73: #{custom-call.17} parent=69 // loop_header_branch
              %369 = sbr.rel (%p367) target = $region77
            $region74: #{custom-call.17} parent=69 // loop_body
              %v373 = vld [vmem:[%s371] sm:$0xf]
              %374 = vst [vmem:[%s372] sm:$0xf] %v373
            $region75: #{custom-call.17} parent=69 // loop_footer
              %s370 = sadd.s32 1, %s366
            $region76: #{custom-call.17} parent=69 // loop_footer_branch
              %365 = sbr.rel target = $region72
            $region77: #{custom-call.17} parent=69 // loop_exit
              _
          $region70: #{custom-call.17} parent=61 // pred_fallthru
            _
        $region62: #{custom-call.17} parent=49 // pred_fallthru
          _
        %388 = vnop
        // Predicated region
        $region89: #{custom-call.17} parent=49 // pred_check
          %p389 = pneg %p34
        $region90: #{custom-call.17} parent=49 // pred_check_branch
          %391 = sbr.rel (%p389) target = $region92
        $region91: #{custom-call.17} parent=49 // pred_region
          %s392 = sshrl.u32 %s14, 3
          %s394 = ssub.s32 32, 32
          %395 = vsyncadd %s348, %s394
          %s396 = smul.addr %s392, 32
          %s397 = scalar_lea.hbm %s2, %s396
          %s399 = sshll.u32 %s351, 4
          %s400 = int_to_ptr.vmem [resolvable:$true] %s399
          %402 = dma.vmem_to_hbm [thread:$0]  %s400, 32, %s397, %s348
        $region92: #{custom-call.17} parent=49 // pred_fallthru
          _
        // Predicated region
        $region93: #{custom-call.17} parent=49 // pred_check
          %p403 = pneg %p62
        $region94: #{custom-call.17} parent=49 // pred_check_branch
          %405 = sbr.rel (%p403) target = $region96
        $region95: #{custom-call.17} parent=49 // pred_region
          %s406 = sshrl.u32 %s14, 3
          %s407 = smul.addr %s406, 2
          %s408 = scalar_lea.vmem %s3, %s407
          // Predicated region
          $region97: #{custom-call.17} parent=95 // pred_check
            _
          $region98: #{custom-call.17} parent=95 // pred_check_branch
            %410 = sbr.rel (0) target = $region100
          $region99: #{custom-call.17} parent=95 // pred_region
            // Predicated region
            $region101: #{custom-call.17} parent=99 // pred_check
              _
            $region102: #{custom-call.17} parent=99 // pred_check_branch
              %412 = sbr.rel target = $region104
            $region103: #{custom-call.17} parent=99 // pred_region
              // Predicated region
              $region116: #{custom-call.17} parent=103 // pred_check
                _
              $region117: #{custom-call.17} parent=103 // pred_check_branch
                %427 = sbr.rel (0) target = $region119
              $region118: #{custom-call.17} parent=103 // pred_region
                loop: start=0, step=1, limit=1
                $region120: #{custom-call.17} parent=118 // loop_pre_header
                  _
                $region121: #{custom-call.17} parent=118 // loop_header
                  %s430 = sphi 0, %s434
                  %p431 = scmp.ge.s32.totalorder %s430, 1
                  %s435 = sphi %s355, %s355
                  %s436 = sphi %s408, %s408
                $region122: #{custom-call.17} parent=118 // loop_header_branch
                  %433 = sbr.rel (%p431) target = $region126
                $region123: #{custom-call.17} parent=118 // loop_body
                  %v437 = vld [vmem:[%s435] sm:$0x3]
                  %438 = vst [vmem:[%s436] sm:$0x3] %v437
                $region124: #{custom-call.17} parent=118 // loop_footer
                  %s434 = sadd.s32 1, %s430
                $region125: #{custom-call.17} parent=118 // loop_footer_branch
                  %429 = sbr.rel target = $region121
                $region126: #{custom-call.17} parent=118 // loop_exit
                  _
              $region119: #{custom-call.17} parent=103 // pred_fallthru
                _
            $region104: #{custom-call.17} parent=99 // pred_fallthru
              _
            // Predicated region
            $region105: #{custom-call.17} parent=99 // pred_check
              _
            $region106: #{custom-call.17} parent=99 // pred_check_branch
              %414 = sbr.rel (0) target = $region108
            $region107: #{custom-call.17} parent=99 // pred_region
              loop: start=0, step=1, limit=1
              $region109: #{custom-call.17} parent=107 // loop_pre_header
                _
              $region110: #{custom-call.17} parent=107 // loop_header
                %s417 = sphi 0, %s421
                %p418 = scmp.ge.s32.totalorder %s417, 1
                %s422 = sphi %s355, %s355
                %s423 = sphi %s408, %s408
              $region111: #{custom-call.17} parent=107 // loop_header_branch
                %420 = sbr.rel (%p418) target = $region115
              $region112: #{custom-call.17} parent=107 // loop_body
                %v424 = vld [vmem:[%s422] sm:$0x3]
                %425 = vst [vmem:[%s423] sm:$0x3] %v424
              $region113: #{custom-call.17} parent=107 // loop_footer
                %s421 = sadd.s32 1, %s417
              $region114: #{custom-call.17} parent=107 // loop_footer_branch
                %416 = sbr.rel target = $region110
              $region115: #{custom-call.17} parent=107 // loop_exit
                _
            $region108: #{custom-call.17} parent=99 // pred_fallthru
              _
          $region100: #{custom-call.17} parent=95 // pred_fallthru
            _
          %439 = vnop
        $region96: #{custom-call.17} parent=49 // pred_fallthru
          _
      $region50: #{custom-call.17} parent=5 // pred_fallthru
        _
      %p440 = scmp.le.s32.totalorder 2, %s9
      // Predicated region
      $region127: #{custom-call.17} parent=5 // pred_check
        %p441 = pneg %p440
      $region128: #{custom-call.17} parent=5 // pred_check_branch
        %443 = sbr.rel (%p441) target = $region130
      $region129: #{custom-call.17} parent=5 // pred_region
        %s444 = ssub.s32 %s9, 2
        %s445 = sand.u32 %s15, 1
        %s446 = sand.u32 %s15, 1
        %s447 = smul.addr %s446, 4
        %s448 = scalar_lea.vmem [#allocation3], %s447
        // Predicated region
        $region131: #{custom-call.17} parent=129 // pred_check
          %p449 = pneg %p40
        $region132: #{custom-call.17} parent=129 // pred_check_branch
          %451 = sbr.rel (%p449) target = $region134
        $region133: #{custom-call.17} parent=129 // pred_region
          %s452 = sand.u32 %s25, 1
          %s453 = scalar_lea.sflag [#allocation6], %s452
          %s454 = sand.u32 %s25, 1
          %s455 = smul.addr %s454, 2
          %s456 = scalar_lea.vmem [#allocation5], %s455
          %457 = dma.done %s453, 32
        $region134: #{custom-call.17} parent=129 // pred_fallthru
          _
        // Predicated region
        $region135: #{custom-call.17} parent=129 // pred_check
          %p458 = pneg %p68
        $region136: #{custom-call.17} parent=129 // pred_check_branch
          %460 = sbr.rel (%p458) target = $region138
        $region137: #{custom-call.17} parent=129 // pred_region
          %s461 = sand.u32 %s53, 1
          %s462 = sand.u32 %s53, 1
          %s463 = smul.addr %s462, 2
          %s464 = scalar_lea.vmem [#allocation8], %s463
        $region138: #{custom-call.17} parent=129 // pred_fallthru
          _
      $region130: #{custom-call.17} parent=5 // pred_fallthru
        _
    $region6: #{custom-call.17} parent=1 // loop_footer
      %s13 = sadd.s32 1, %s9
    $region7: #{custom-call.17} parent=1 // loop_footer_branch
      %8 = sbr.rel target = $region3
    $region8: #{custom-call.17} parent=1 // loop_exit
      _
    %465 = vsyncpa [#allocation6], 1
    %s466 = scalar_lea.sflag [#allocation6], 1
    %467 = vsyncpa %s466, 1

// kernel: custom-call.19
$region0: #{custom-call.19}
  %s0 = inlined_call_operand.vmem [shape: f32[2,1,3,3], index: 0, kind: input, shape index: {}]
  %s1 = inlined_call_operand.vmem [shape: f32[2,1,3,3], index: 1, kind: output, shape index: {}]
  $region1: #{custom-call.19} parent=0
    #allocation0 [shape = 'u8[4096]{0}', space=vmem, size = 0x1000, scoped, tag = 'operand span for operand 0']
    #allocation1 [shape = 'u8[4096]{0}', space=vmem, size = 0x1000, scoped, tag = 'packed  for operand 0']
    #allocation2 [shape = 'u8[4096]{0}', space=vmem, size = 0x1000, scoped, tag = 'operand span for operand 1']
    #allocation3 [shape = 'u8[4096]{0}', space=vmem, size = 0x1000, scoped, tag = 'packed  for operand 1']
    loop: start=0, step=1, limit=4
    $region2: #{custom-call.19} parent=1 // loop_pre_header
      _
    $region3: #{custom-call.19} parent=1 // loop_header
      %s3 = sphi 0, %s7
      %p4 = scmp.ge.s32.totalorder %s3, 4
      %s10 = sphi 0, %s36
      %s11 = sphi 0, %s32
      %s12 = sphi 0, %s28
      %s13 = sphi 0, %s24
      %s14 = sphi 0, %s10
      %s15 = sphi 0, %s11
      %s16 = sphi 0, %s12
      %s17 = sphi 0, %s13
      %s18 = sphi 0, %s14
      %s19 = sphi 0, %s15
      %s20 = sphi 0, %s16
      %s21 = sphi 0, %s17
    $region4: #{custom-call.19} parent=1 // loop_header_branch
      %6 = sbr.rel (%p4) target = $region8
    $region5: #{custom-call.19} parent=1 // loop_body
      %s8 = ssub.s32 %s3, 1
      %s9 = ssub.s32 %s3, 2
      %s22 = sadd.s32 1, %s13
      %p23 = scmp.ge.s32.totalorder %s22, 1
      %s24 = scalar_select %p23, 0, %s22
      %s25 = sadd.s32 1, %s12
      %s26 = scalar_select %p23, %s25, %s12
      %p27 = scmp.ge.s32.totalorder %s26, 1
      %s28 = scalar_select %p27, 0, %s26
      %s29 = sadd.s32 1, %s11
      %s30 = scalar_select %p27, %s29, %s11
      %p31 = scmp.ge.s32.totalorder %s30, 1
      %s32 = scalar_select %p31, 0, %s30
      %s33 = sadd.s32 1, %s10
      %s34 = scalar_select %p31, %s33, %s10
      %p35 = scmp.ge.s32.totalorder %s34, 2
      %s36 = scalar_select %p35, 0, %s34
      %p37 = scmp.le.s32.totalorder 1, %s3
      %p38 = scmp.lt.s32.totalorder %s3, 3
      %p39 = pnand %p37, %p38
      %p40 = pneg %p39
      // Predicated region
      $region9: #{custom-call.19} parent=5 // pred_check
        _
      $region10: #{custom-call.19} parent=5 // pred_check_branch
        %42 = sbr.rel (%p39) target = $region12
      $region11: #{custom-call.19} parent=5 // pred_region
        %s43 = ssub.s32 %s3, 1
      $region12: #{custom-call.19} parent=5 // pred_fallthru
        _
      %p44 = scmp.lt.s32.totalorder %s3, 2
      // Predicated region
      $region13: #{custom-call.19} parent=5 // pred_check
        %p45 = pneg %p44
      $region14: #{custom-call.19} parent=5 // pred_check_branch
        %47 = sbr.rel (%p45) target = $region16
      $region15: #{custom-call.19} parent=5 // pred_region
        %s48 = sand.u32 %s3, 1
        %s49 = sand.u32 %s3, 1
        %s50 = smul.addr %s49, 4
        %s51 = scalar_lea.vmem [#allocation1], %s50
        %s52 = sadd.s32 %s13, %s12
        %s53 = sadd.s32 %s52, %s11
        %s54 = sadd.s32 %s53, %s10
        %s55 = smul.addr %s54, 4
        %s56 = scalar_lea.vmem %s0, %s55
        // Predicated region
        $region17: #{custom-call.19} parent=15 // pred_check
          _
        $region18: #{custom-call.19} parent=15 // pred_check_branch
          %58 = sbr.rel (0) target = $region20
        $region19: #{custom-call.19} parent=15 // pred_region
          // Predicated region
          $region21: #{custom-call.19} parent=19 // pred_check
            _
          $region22: #{custom-call.19} parent=19 // pred_check_branch
            %60 = sbr.rel target = $region24
          $region23: #{custom-call.19} parent=19 // pred_region
            // Predicated region
            $region36: #{custom-call.19} parent=23 // pred_check
              _
            $region37: #{custom-call.19} parent=23 // pred_check_branch
              %75 = sbr.rel (0) target = $region39
            $region38: #{custom-call.19} parent=23 // pred_region
              loop: start=0, step=1, limit=1
              $region40: #{custom-call.19} parent=38 // loop_pre_header
                _
              $region41: #{custom-call.19} parent=38 // loop_header
                %s78 = sphi 0, %s82
                %p79 = scmp.ge.s32.totalorder %s78, 1
                %s83 = sphi %s56, %s56
                %s84 = sphi %s51, %s51
              $region42: #{custom-call.19} parent=38 // loop_header_branch
                %81 = sbr.rel (%p79) target = $region46
              $region43: #{custom-call.19} parent=38 // loop_body
                %v85 = vld [vmem:[%s83] sm:$0xf]
                %86 = vst [vmem:[%s84] sm:$0xf] %v85
              $region44: #{custom-call.19} parent=38 // loop_footer
                %s82 = sadd.s32 1, %s78
              $region45: #{custom-call.19} parent=38 // loop_footer_branch
                %77 = sbr.rel target = $region41
              $region46: #{custom-call.19} parent=38 // loop_exit
                _
            $region39: #{custom-call.19} parent=23 // pred_fallthru
              _
          $region24: #{custom-call.19} parent=19 // pred_fallthru
            _
          // Predicated region
          $region25: #{custom-call.19} parent=19 // pred_check
            _
          $region26: #{custom-call.19} parent=19 // pred_check_branch
            %62 = sbr.rel (0) target = $region28
          $region27: #{custom-call.19} parent=19 // pred_region
            loop: start=0, step=1, limit=1
            $region29: #{custom-call.19} parent=27 // loop_pre_header
              _
            $region30: #{custom-call.19} parent=27 // loop_header
              %s65 = sphi 0, %s69
              %p66 = scmp.ge.s32.totalorder %s65, 1
              %s70 = sphi %s56, %s56
              %s71 = sphi %s51, %s51
            $region31: #{custom-call.19} parent=27 // loop_header_branch
              %68 = sbr.rel (%p66) target = $region35
            $region32: #{custom-call.19} parent=27 // loop_body
              %v72 = vld [vmem:[%s70] sm:$0xf]
              %73 = vst [vmem:[%s71] sm:$0xf] %v72
            $region33: #{custom-call.19} parent=27 // loop_footer
              %s69 = sadd.s32 1, %s65
            $region34: #{custom-call.19} parent=27 // loop_footer_branch
              %64 = sbr.rel target = $region30
            $region35: #{custom-call.19} parent=27 // loop_exit
              _
          $region28: #{custom-call.19} parent=19 // pred_fallthru
            _
        $region20: #{custom-call.19} parent=15 // pred_fallthru
          _
        %87 = vnop
      $region16: #{custom-call.19} parent=5 // pred_fallthru
        _
      %p88 = scmp.le.s32.totalorder 1, %s3
      %p89 = scmp.lt.s32.totalorder %s3, 3
      %p90 = pnand %p88, %p89
      %p91 = pneg %p90
      // Predicated region
      $region47: #{custom-call.19} parent=5 // pred_check
        _
      $region48: #{custom-call.19} parent=5 // pred_check_branch
        %93 = sbr.rel (%p90) target = $region50
      $region49: #{custom-call.19} parent=5 // pred_region
        #allocation4 [shape = 'f32[3,3]{1,0}', space=vmem, size = 0x1000, scoped, tag = 'rescaled input a']
        %s94 = ssub.s32 %s3, 1
        %s95 = sand.u32 %s8, 1
        %s96 = sand.u32 %s8, 1
        %s97 = smul.addr %s96, 4
        %s98 = scalar_lea.vmem [#allocation1], %s97
        %s99 = sand.u32 %s8, 1
        %s100 = sand.u32 %s8, 1
        %s101 = smul.addr %s100, 4
        %s102 = scalar_lea.vmem [#allocation1], %s101
        %s103 = sand.u32 %s8, 1
        %s104 = sand.u32 %s8, 1
        %s105 = smul.addr %s104, 4
        %s106 = scalar_lea.vmem [#allocation3], %s105
        %s108 = sshllo.u32 0, 4
        %v109 = vld [vmem:[%s102] sm:%s108]
        %110 = vst [vmem:[#allocation0] sm:%s108] %v109
        %v111 = vlaneseq
        %v112 = vand.u32 %v111, 127
        %vm113 = vcmp.lt.s32.totalorder %v112, 3
        %v114 = vlaneseq
        %v115 = vshrl.u32 %v114, 7
        %vm117 = vcmp.eq.s32.totalorder %v115, %v112
        %v118 = vld [vmem:[#allocation0] sm:$0xff]
        %v119 = vsel %vm117, %v118, 0.0
        %120 = vadd.xlane.f32.xlu0 %v119
        %v121 = vpop.xlane.xlu0 %120
        %vm122 = vcmp.ge.s32.totalorder %v115, %v112
        %vm123 = vmand %vm122, %vm113
        %v124 = vsel %vm123, %v118, 0.0
        %v125 = vrcp.pop %v121
        %v126 = vmul.f32 %v124, %v125
        %127 = vst [vmem:[#allocation4] sm:$0xff] %v126
        %v128 = vlaneseq
        %v129 = vand.u32 %v128, 127
        %v130 = vlaneseq
        %v131 = vshrl.u32 %v130, 7
        %vm133 = vcmp.eq.s32.totalorder %v129, %v131
        %v134 = vlaneseq
        %v135 = vand.u32 %v134, 127
        %vm136 = vcmp.eq.s32.totalorder %v135, 0
        %v137 = vsel %vm136, 1.0, -1.0
        %v138 = vsel %vm133, %v137, 0.0
        %s139 = scalar_lea.vmem [#allocation4], 1
        %v140 = vld [vmem:[%s139] ss:$0 sm:$0xff]
        %v141 = vxor.u32 %v140, 2147483648
        %v142 = vlaneseq
        %v143 = vand.u32 %v142, 127
        %vm144 = vcmp.eq.s32.totalorder %v143, 1
        %v145 = vmul.f32 %v141, %v138
        %146 = vadd.xlane.f32.xlu0 %v145
        %v147 = vpop.xlane.xlu0 %146
        %v148 = vsel %vm144, %v147, %v138
        %s149 = scalar_lea.vmem [#allocation4], 2
        %v150 = vld [vmem:[%s149] ss:$0 sm:$0xff]
        %v151 = vxor.u32 %v150, 2147483648
        %v152 = vlaneseq
        %v153 = vand.u32 %v152, 127
        %vm154 = vcmp.eq.s32.totalorder %v153, 2
        %v155 = vmul.f32 %v151, %v148
        %156 = vadd.xlane.f32.xlu0 %v155
        %v157 = vpop.xlane.xlu0 %156
        %v158 = vsel %vm154, %v157, %v148
        %v159 = vrcp.pop %v121
        %v160 = vmul.f32 %v158, %v159
        %vm161 = vweird.f32 %v121
        %v162 = vsel %vm161, %v158, %v160
        %163 = vst [vmem:[#allocation2] sm:$0xff] %v162
        %s165 = sshllo.u32 0, 4
        %v167 = vld [vmem:[#allocation2] sm:%s165]
        %s168 = sshllo.u32 0, 4
        %169 = vst [vmem:[%s106] sm:%s168] %v167
        %s170 = sand.u32 %s8, 1
        %s171 = sand.u32 %s8, 1
        %s172 = smul.addr %s171, 4
        %s173 = scalar_lea.vmem [#allocation3], %s172
        %s174 = sadd.s32 %s17, %s16
        %s175 = sadd.s32 %s174, %s15
        %s176 = sadd.s32 %s175, %s14
        %s177 = smul.addr %s176, 4
        %s178 = scalar_lea.vmem %s1, %s177
        // Predicated region
        $region51: #{custom-call.19} parent=49 // pred_check
          _
        $region52: #{custom-call.19} parent=49 // pred_check_branch
          %180 = sbr.rel (0) target = $region54
        $region53: #{custom-call.19} parent=49 // pred_region
          // Predicated region
          $region55: #{custom-call.19} parent=53 // pred_check
            _
          $region56: #{custom-call.19} parent=53 // pred_check_branch
            %182 = sbr.rel target = $region58
          $region57: #{custom-call.19} parent=53 // pred_region
            // Predicated region
            $region70: #{custom-call.19} parent=57 // pred_check
              _
            $region71: #{custom-call.19} parent=57 // pred_check_branch
              %197 = sbr.rel (0) target = $region73
            $region72: #{custom-call.19} parent=57 // pred_region
              loop: start=0, step=1, limit=1
              $region74: #{custom-call.19} parent=72 // loop_pre_header
                _
              $region75: #{custom-call.19} parent=72 // loop_header
                %s200 = sphi 0, %s204
                %p201 = scmp.ge.s32.totalorder %s200, 1
                %s205 = sphi %s173, %s173
                %s206 = sphi %s178, %s178
              $region76: #{custom-call.19} parent=72 // loop_header_branch
                %203 = sbr.rel (%p201) target = $region80
              $region77: #{custom-call.19} parent=72 // loop_body
                %v207 = vld [vmem:[%s205] sm:$0xf]
                %208 = vst [vmem:[%s206] sm:$0xf] %v207
              $region78: #{custom-call.19} parent=72 // loop_footer
                %s204 = sadd.s32 1, %s200
              $region79: #{custom-call.19} parent=72 // loop_footer_branch
                %199 = sbr.rel target = $region75
              $region80: #{custom-call.19} parent=72 // loop_exit
                _
            $region73: #{custom-call.19} parent=57 // pred_fallthru
              _
          $region58: #{custom-call.19} parent=53 // pred_fallthru
            _
          // Predicated region
          $region59: #{custom-call.19} parent=53 // pred_check
            _
          $region60: #{custom-call.19} parent=53 // pred_check_branch
            %184 = sbr.rel (0) target = $region62
          $region61: #{custom-call.19} parent=53 // pred_region
            loop: start=0, step=1, limit=1
            $region63: #{custom-call.19} parent=61 // loop_pre_header
              _
            $region64: #{custom-call.19} parent=61 // loop_header
              %s187 = sphi 0, %s191
              %p188 = scmp.ge.s32.totalorder %s187, 1
              %s192 = sphi %s173, %s173
              %s193 = sphi %s178, %s178
            $region65: #{custom-call.19} parent=61 // loop_header_branch
              %190 = sbr.rel (%p188) target = $region69
            $region66: #{custom-call.19} parent=61 // loop_body
              %v194 = vld [vmem:[%s192] sm:$0xf]
              %195 = vst [vmem:[%s193] sm:$0xf] %v194
            $region67: #{custom-call.19} parent=61 // loop_footer
              %s191 = sadd.s32 1, %s187
            $region68: #{custom-call.19} parent=61 // loop_footer_branch
              %186 = sbr.rel target = $region64
            $region69: #{custom-call.19} parent=61 // loop_exit
              _
          $region62: #{custom-call.19} parent=53 // pred_fallthru
            _
        $region54: #{custom-call.19} parent=49 // pred_fallthru
          _
        %209 = vnop
      $region50: #{custom-call.19} parent=5 // pred_fallthru
        _
      %p210 = scmp.le.s32.totalorder 2, %s3
      // Predicated region
      $region81: #{custom-call.19} parent=5 // pred_check
        %p211 = pneg %p210
      $region82: #{custom-call.19} parent=5 // pred_check_branch
        %213 = sbr.rel (%p211) target = $region84
      $region83: #{custom-call.19} parent=5 // pred_region
        %s214 = ssub.s32 %s3, 2
        %s215 = sand.u32 %s9, 1
        %s216 = sand.u32 %s9, 1
        %s217 = smul.addr %s216, 4
        %s218 = scalar_lea.vmem [#allocation3], %s217
      $region84: #{custom-call.19} parent=5 // pred_fallthru
        _
    $region6: #{custom-call.19} parent=1 // loop_footer
      %s7 = sadd.s32 1, %s3
    $region7: #{custom-call.19} parent=1 // loop_footer_branch
      %2 = sbr.rel target = $region3
    $region8: #{custom-call.19} parent=1 // loop_exit
      _

// kernel: custom-call.18
$region0: #{custom-call.18}
  %s0 = inlined_call_operand.vmem [shape: f32[2,1,3,3], index: 0, kind: input, shape index: {}]
  %s1 = inlined_call_operand.vmem [shape: f32[2,1,3,3], index: 1, kind: output, shape index: {}]
  $region1: #{custom-call.18} parent=0
    #allocation0 [shape = 'u8[4096]{0}', space=vmem, size = 0x1000, scoped, tag = 'operand span for operand 0']
    #allocation1 [shape = 'u8[4096]{0}', space=vmem, size = 0x1000, scoped, tag = 'packed  for operand 0']
    #allocation2 [shape = 'u8[4096]{0}', space=vmem, size = 0x1000, scoped, tag = 'operand span for operand 1']
    #allocation3 [shape = 'u8[4096]{0}', space=vmem, size = 0x1000, scoped, tag = 'packed  for operand 1']
    loop: start=0, step=1, limit=4
    $region2: #{custom-call.18} parent=1 // loop_pre_header
      _
    $region3: #{custom-call.18} parent=1 // loop_header
      %s3 = sphi 0, %s7
      %p4 = scmp.ge.s32.totalorder %s3, 4
      %s10 = sphi 0, %s36
      %s11 = sphi 0, %s32
      %s12 = sphi 0, %s28
      %s13 = sphi 0, %s24
      %s14 = sphi 0, %s10
      %s15 = sphi 0, %s11
      %s16 = sphi 0, %s12
      %s17 = sphi 0, %s13
      %s18 = sphi 0, %s14
      %s19 = sphi 0, %s15
      %s20 = sphi 0, %s16
      %s21 = sphi 0, %s17
    $region4: #{custom-call.18} parent=1 // loop_header_branch
      %6 = sbr.rel (%p4) target = $region8
    $region5: #{custom-call.18} parent=1 // loop_body
      %s8 = ssub.s32 %s3, 1
      %s9 = ssub.s32 %s3, 2
      %s22 = sadd.s32 1, %s13
      %p23 = scmp.ge.s32.totalorder %s22, 1
      %s24 = scalar_select %p23, 0, %s22
      %s25 = sadd.s32 1, %s12
      %s26 = scalar_select %p23, %s25, %s12
      %p27 = scmp.ge.s32.totalorder %s26, 1
      %s28 = scalar_select %p27, 0, %s26
      %s29 = sadd.s32 1, %s11
      %s30 = scalar_select %p27, %s29, %s11
      %p31 = scmp.ge.s32.totalorder %s30, 1
      %s32 = scalar_select %p31, 0, %s30
      %s33 = sadd.s32 1, %s10
      %s34 = scalar_select %p31, %s33, %s10
      %p35 = scmp.ge.s32.totalorder %s34, 2
      %s36 = scalar_select %p35, 0, %s34
      %p37 = scmp.le.s32.totalorder 1, %s3
      %p38 = scmp.lt.s32.totalorder %s3, 3
      %p39 = pnand %p37, %p38
      %p40 = pneg %p39
      // Predicated region
      $region9: #{custom-call.18} parent=5 // pred_check
        _
      $region10: #{custom-call.18} parent=5 // pred_check_branch
        %42 = sbr.rel (%p39) target = $region12
      $region11: #{custom-call.18} parent=5 // pred_region
        %s43 = ssub.s32 %s3, 1
      $region12: #{custom-call.18} parent=5 // pred_fallthru
        _
      %p44 = scmp.lt.s32.totalorder %s3, 2
      // Predicated region
      $region13: #{custom-call.18} parent=5 // pred_check
        %p45 = pneg %p44
      $region14: #{custom-call.18} parent=5 // pred_check_branch
        %47 = sbr.rel (%p45) target = $region16
      $region15: #{custom-call.18} parent=5 // pred_region
        %s48 = sand.u32 %s3, 1
        %s49 = sand.u32 %s3, 1
        %s50 = smul.addr %s49, 4
        %s51 = scalar_lea.vmem [#allocation1], %s50
        %s52 = sadd.s32 %s13, %s12
        %s53 = sadd.s32 %s52, %s11
        %s54 = sadd.s32 %s53, %s10
        %s55 = smul.addr %s54, 4
        %s56 = scalar_lea.vmem %s0, %s55
        // Predicated region
        $region17: #{custom-call.18} parent=15 // pred_check
          _
        $region18: #{custom-call.18} parent=15 // pred_check_branch
          %58 = sbr.rel (0) target = $region20
        $region19: #{custom-call.18} parent=15 // pred_region
          // Predicated region
          $region21: #{custom-call.18} parent=19 // pred_check
            _
          $region22: #{custom-call.18} parent=19 // pred_check_branch
            %60 = sbr.rel target = $region24
          $region23: #{custom-call.18} parent=19 // pred_region
            // Predicated region
            $region36: #{custom-call.18} parent=23 // pred_check
              _
            $region37: #{custom-call.18} parent=23 // pred_check_branch
              %75 = sbr.rel (0) target = $region39
            $region38: #{custom-call.18} parent=23 // pred_region
              loop: start=0, step=1, limit=1
              $region40: #{custom-call.18} parent=38 // loop_pre_header
                _
              $region41: #{custom-call.18} parent=38 // loop_header
                %s78 = sphi 0, %s82
                %p79 = scmp.ge.s32.totalorder %s78, 1
                %s83 = sphi %s56, %s56
                %s84 = sphi %s51, %s51
              $region42: #{custom-call.18} parent=38 // loop_header_branch
                %81 = sbr.rel (%p79) target = $region46
              $region43: #{custom-call.18} parent=38 // loop_body
                %v85 = vld [vmem:[%s83] sm:$0xf]
                %86 = vst [vmem:[%s84] sm:$0xf] %v85
              $region44: #{custom-call.18} parent=38 // loop_footer
                %s82 = sadd.s32 1, %s78
              $region45: #{custom-call.18} parent=38 // loop_footer_branch
                %77 = sbr.rel target = $region41
              $region46: #{custom-call.18} parent=38 // loop_exit
                _
            $region39: #{custom-call.18} parent=23 // pred_fallthru
              _
          $region24: #{custom-call.18} parent=19 // pred_fallthru
            _
          // Predicated region
          $region25: #{custom-call.18} parent=19 // pred_check
            _
          $region26: #{custom-call.18} parent=19 // pred_check_branch
            %62 = sbr.rel (0) target = $region28
          $region27: #{custom-call.18} parent=19 // pred_region
            loop: start=0, step=1, limit=1
            $region29: #{custom-call.18} parent=27 // loop_pre_header
              _
            $region30: #{custom-call.18} parent=27 // loop_header
              %s65 = sphi 0, %s69
              %p66 = scmp.ge.s32.totalorder %s65, 1
              %s70 = sphi %s56, %s56
              %s71 = sphi %s51, %s51
            $region31: #{custom-call.18} parent=27 // loop_header_branch
              %68 = sbr.rel (%p66) target = $region35
            $region32: #{custom-call.18} parent=27 // loop_body
              %v72 = vld [vmem:[%s70] sm:$0xf]
              %73 = vst [vmem:[%s71] sm:$0xf] %v72
            $region33: #{custom-call.18} parent=27 // loop_footer
              %s69 = sadd.s32 1, %s65
            $region34: #{custom-call.18} parent=27 // loop_footer_branch
              %64 = sbr.rel target = $region30
            $region35: #{custom-call.18} parent=27 // loop_exit
              _
          $region28: #{custom-call.18} parent=19 // pred_fallthru
            _
        $region20: #{custom-call.18} parent=15 // pred_fallthru
          _
        %87 = vnop
      $region16: #{custom-call.18} parent=5 // pred_fallthru
        _
      %p88 = scmp.le.s32.totalorder 1, %s3
      %p89 = scmp.lt.s32.totalorder %s3, 3
      %p90 = pnand %p88, %p89
      %p91 = pneg %p90
      // Predicated region
      $region47: #{custom-call.18} parent=5 // pred_check
        _
      $region48: #{custom-call.18} parent=5 // pred_check_branch
        %93 = sbr.rel (%p90) target = $region50
      $region49: #{custom-call.18} parent=5 // pred_region
        #allocation4 [shape = 'f32[3,3]{1,0}', space=vmem, size = 0x1000, scoped, tag = 'rescaled input a']
        %s94 = ssub.s32 %s3, 1
        %s95 = sand.u32 %s8, 1
        %s96 = sand.u32 %s8, 1
        %s97 = smul.addr %s96, 4
        %s98 = scalar_lea.vmem [#allocation1], %s97
        %s99 = sand.u32 %s8, 1
        %s100 = sand.u32 %s8, 1
        %s101 = smul.addr %s100, 4
        %s102 = scalar_lea.vmem [#allocation1], %s101
        %s103 = sand.u32 %s8, 1
        %s104 = sand.u32 %s8, 1
        %s105 = smul.addr %s104, 4
        %s106 = scalar_lea.vmem [#allocation3], %s105
        %s108 = sshllo.u32 0, 4
        %v109 = vld [vmem:[%s102] sm:%s108]
        %110 = vst [vmem:[#allocation0] sm:%s108] %v109
        %v111 = vlaneseq
        %v112 = vand.u32 %v111, 127
        %vm113 = vcmp.lt.s32.totalorder %v112, 3
        %v114 = vlaneseq
        %v115 = vshrl.u32 %v114, 7
        %vm117 = vcmp.eq.s32.totalorder %v115, %v112
        %v118 = vld [vmem:[#allocation0] sm:$0xff]
        %v119 = vsel %vm117, %v118, 0.0
        %120 = vadd.xlane.f32.xlu0 %v119
        %v121 = vpop.xlane.xlu0 %120
        %vm122 = vcmp.le.s32.totalorder %v115, %v112
        %vm123 = vmand %vm122, %vm113
        %v124 = vsel %vm123, %v118, 0.0
        %v125 = vrcp.pop %v121
        %v126 = vmul.f32 %v124, %v125
        %127 = vst [vmem:[#allocation4] sm:$0xff] %v126
        %v128 = vlaneseq
        %v129 = vand.u32 %v128, 127
        %v130 = vlaneseq
        %v131 = vshrl.u32 %v130, 7
        %vm133 = vcmp.eq.s32.totalorder %v129, %v131
        %v134 = vlaneseq
        %v135 = vand.u32 %v134, 127
        %vm136 = vcmp.eq.s32.totalorder %v135, 2
        %v137 = vsel %vm136, 1.0, -1.0
        %v138 = vsel %vm133, %v137, 0.0
        %s139 = scalar_lea.vmem [#allocation4], 1
        %v140 = vld [vmem:[%s139] ss:$0 sm:$0xff]
        %v141 = vxor.u32 %v140, 2147483648
        %v142 = vlaneseq
        %v143 = vand.u32 %v142, 127
        %vm144 = vcmp.eq.s32.totalorder %v143, 1
        %v145 = vmul.f32 %v141, %v138
        %146 = vadd.xlane.f32.xlu0 %v145
        %v147 = vpop.xlane.xlu0 %146
        %v148 = vsel %vm144, %v147, %v138
        %v149 = vld [vmem:[#allocation4] ss:$0 sm:$0xff]
        %v150 = vxor.u32 %v149, 2147483648
        %v151 = vlaneseq
        %v152 = vand.u32 %v151, 127
        %vm153 = vcmp.eq.s32.totalorder %v152, 0
        %v154 = vmul.f32 %v150, %v148
        %155 = vadd.xlane.f32.xlu0 %v154
        %v156 = vpop.xlane.xlu0 %155
        %v157 = vsel %vm153, %v156, %v148
        %v158 = vrcp.pop %v121
        %v159 = vmul.f32 %v157, %v158
        %vm160 = vweird.f32 %v121
        %v161 = vsel %vm160, %v157, %v159
        %162 = vst [vmem:[#allocation2] sm:$0xff] %v161
        %s164 = sshllo.u32 0, 4
        %v166 = vld [vmem:[#allocation2] sm:%s164]
        %s167 = sshllo.u32 0, 4
        %168 = vst [vmem:[%s106] sm:%s167] %v166
        %s169 = sand.u32 %s8, 1
        %s170 = sand.u32 %s8, 1
        %s171 = smul.addr %s170, 4
        %s172 = scalar_lea.vmem [#allocation3], %s171
        %s173 = sadd.s32 %s17, %s16
        %s174 = sadd.s32 %s173, %s15
        %s175 = sadd.s32 %s174, %s14
        %s176 = smul.addr %s175, 4
        %s177 = scalar_lea.vmem %s1, %s176
        // Predicated region
        $region51: #{custom-call.18} parent=49 // pred_check
          _
        $region52: #{custom-call.18} parent=49 // pred_check_branch
          %179 = sbr.rel (0) target = $region54
        $region53: #{custom-call.18} parent=49 // pred_region
          // Predicated region
          $region55: #{custom-call.18} parent=53 // pred_check
            _
          $region56: #{custom-call.18} parent=53 // pred_check_branch
            %181 = sbr.rel target = $region58
          $region57: #{custom-call.18} parent=53 // pred_region
            // Predicated region
            $region70: #{custom-call.18} parent=57 // pred_check
              _
            $region71: #{custom-call.18} parent=57 // pred_check_branch
              %196 = sbr.rel (0) target = $region73
            $region72: #{custom-call.18} parent=57 // pred_region
              loop: start=0, step=1, limit=1
              $region74: #{custom-call.18} parent=72 // loop_pre_header
                _
              $region75: #{custom-call.18} parent=72 // loop_header
                %s199 = sphi 0, %s203
                %p200 = scmp.ge.s32.totalorder %s199, 1
                %s204 = sphi %s172, %s172
                %s205 = sphi %s177, %s177
              $region76: #{custom-call.18} parent=72 // loop_header_branch
                %202 = sbr.rel (%p200) target = $region80
              $region77: #{custom-call.18} parent=72 // loop_body
                %v206 = vld [vmem:[%s204] sm:$0xf]
                %207 = vst [vmem:[%s205] sm:$0xf] %v206
              $region78: #{custom-call.18} parent=72 // loop_footer
                %s203 = sadd.s32 1, %s199
              $region79: #{custom-call.18} parent=72 // loop_footer_branch
                %198 = sbr.rel target = $region75
              $region80: #{custom-call.18} parent=72 // loop_exit
                _
            $region73: #{custom-call.18} parent=57 // pred_fallthru
              _
          $region58: #{custom-call.18} parent=53 // pred_fallthru
            _
          // Predicated region
          $region59: #{custom-call.18} parent=53 // pred_check
            _
          $region60: #{custom-call.18} parent=53 // pred_check_branch
            %183 = sbr.rel (0) target = $region62
          $region61: #{custom-call.18} parent=53 // pred_region
            loop: start=0, step=1, limit=1
            $region63: #{custom-call.18} parent=61 // loop_pre_header
              _
            $region64: #{custom-call.18} parent=61 // loop_header
              %s186 = sphi 0, %s190
              %p187 = scmp.ge.s32.totalorder %s186, 1
              %s191 = sphi %s172, %s172
              %s192 = sphi %s177, %s177
            $region65: #{custom-call.18} parent=61 // loop_header_branch
              %189 = sbr.rel (%p187) target = $region69
            $region66: #{custom-call.18} parent=61 // loop_body
              %v193 = vld [vmem:[%s191] sm:$0xf]
              %194 = vst [vmem:[%s192] sm:$0xf] %v193
            $region67: #{custom-call.18} parent=61 // loop_footer
              %s190 = sadd.s32 1, %s186
            $region68: #{custom-call.18} parent=61 // loop_footer_branch
              %185 = sbr.rel target = $region64
            $region69: #{custom-call.18} parent=61 // loop_exit
              _
          $region62: #{custom-call.18} parent=53 // pred_fallthru
            _
        $region54: #{custom-call.18} parent=49 // pred_fallthru
          _
        %208 = vnop
      $region50: #{custom-call.18} parent=5 // pred_fallthru
        _
      %p209 = scmp.le.s32.totalorder 2, %s3
      // Predicated region
      $region81: #{custom-call.18} parent=5 // pred_check
        %p210 = pneg %p209
      $region82: #{custom-call.18} parent=5 // pred_check_branch
        %212 = sbr.rel (%p210) target = $region84
      $region83: #{custom-call.18} parent=5 // pred_region
        %s213 = ssub.s32 %s3, 2
        %s214 = sand.u32 %s9, 1
        %s215 = sand.u32 %s9, 1
        %s216 = smul.addr %s215, 4
        %s217 = scalar_lea.vmem [#allocation3], %s216
      $region84: #{custom-call.18} parent=5 // pred_fallthru
        _
    $region6: #{custom-call.18} parent=1 // loop_footer
      %s7 = sadd.s32 1, %s3
    $region7: #{custom-call.18} parent=1 // loop_footer_branch
      %2 = sbr.rel target = $region3
    $region8: #{custom-call.18} parent=1 // loop_exit
      _

// kernel: aligned_lpips_forward.1
$region0: #{aligned_lpips_forward.1}
  #allocation0 [shape = 'u32[]', space=smem, size = 0x4, offset = 0x4, fixed_abs, tag = 'smem constant byte address 0x4 - core index']
  #allocation1 [shape = 'u32[144,128]{1,0:T(1,128)}', space=vmem, size = 0x12000, scoped, tag = 'internal scratch']
  #allocation2 [shape = 'f32[7,32,128]{2,1,0:T(8,128)}', space=vmem, size = 0x1c000, scoped, tag = 'scratch operand']
  #allocation3 [shape = 'f32[7,32,128]{2,1,0:T(8,128)}', space=vmem, size = 0x1c000, scoped, tag = 'scratch operand']
  #allocation4 [shape = 'f32[3,144,128]{2,1,0:T(8,128)}', space=vmem, size = 0x36000, scoped, tag = 'scratch operand']
  #allocation5 [shape = 'f32[3,38,128]{2,1,0:T(8,128)}', space=vmem, size = 0xf000, scoped, tag = 'scratch operand']
  %s0 = inlined_call_operand.vmem [shape: f32[2,9], index: 0, kind: input, shape index: {}]
  %s1 = inlined_call_operand.vmem [shape: f32[2,2,128,128], index: 1, kind: input, shape index: {}]
  %s2 = inlined_call_operand.vmem [shape: f32[2,3,128,128], index: 2, kind: input, shape index: {}]
  %s3 = inlined_call_operand.vmem [shape: bf16[2,3,128,128], index: 3, kind: output, shape index: {}]
  %s4 = sld [smem:[#allocation0]]
  $region128: #{aligned_lpips_forward.1} parent=0
    _
  %s6 = ssub.s32 1, %s4
  %s7 = scalar_select 0, %s6, %s4
  $region1: #{aligned_lpips_forward.1} parent=0
    #allocation6 [shape = 'u8[1024]{0}', space=smem, size = 0x400, scoped, tag = 'input window, operand 0, single buffered']
    #allocation7 [shape = 's32[2]{0}', space=sflag, size = 0x8, scoped, tag = 'scoped memory for aligned_lpips_forward.1']
    #allocation8 [shape = 'u8[65536]{0}', space=vmem, size = 0x10000, scoped, tag = 'input window, operand 1']
    #allocation9 [shape = 'u8[49152]{0}', space=vmem, size = 0xc000, scoped, tag = 'output window, operand 0']
    %8 = vsyncpa [#allocation7], 0
    loop: start=0, step=1, limit=10
    $region2: #{aligned_lpips_forward.1} parent=1 // loop_pre_header
      _
    $region3: #{aligned_lpips_forward.1} parent=1 // loop_header
      %s10 = sphi 0, %s14
      %p11 = scmp.ge.s32.totalorder %s10, 10
      %s17 = sphi 0, %s29
      %s18 = sphi 0, %s25
      %s19 = sphi 0, %s17
      %s20 = sphi 0, %s18
      %s21 = sphi 0, %s19
      %s22 = sphi 0, %s20
      %s30 = sphi 0, %s30
      %s32 = sphi 0, %s30
      %s33 = sphi 0, %s32
      %s47 = sphi 0, %s33
      %s55 = sphi 0, %s57
      %s58 = sphi 0, %s55
      %s59 = sphi 0, %s58
      %s75 = sphi 0, %s59
      %s81 = sphi 0, %s83
      %s84 = sphi 0, %s81
      %s85 = sphi 0, %s84
      %s101 = sphi 0, %s85
      %s109 = sphi 0, %s111
      %s112 = sphi 0, %s109
      %s113 = sphi 0, %s112
      %s129 = sphi 0, %s113
    $region4: #{aligned_lpips_forward.1} parent=1 // loop_header_branch
      %13 = sbr.rel (%p11) target = $region8
    $region5: #{aligned_lpips_forward.1} parent=1 // loop_body
      %s15 = ssub.s32 %s10, 1
      %s16 = ssub.s32 %s10, 2
      %s23 = sadd.s32 1, %s18
      %p24 = scmp.ge.s32.totalorder %s23, 4
      %s25 = scalar_select %p24, 0, %s23
      %s26 = sadd.s32 1, %s17
      %s27 = scalar_select %p24, %s26, %s17
      %p28 = scmp.ge.s32.totalorder %s27, 2
      %s29 = scalar_select %p28, 0, %s27
      %s31 = sadd.s32 %s30, 1
      %p34 = scmp.eq.s32.totalorder %s10, 7
      %p35 = scmp.ne.s32.totalorder %s30, %s32
      %p36 = scmp.eq.s32.totalorder %s10, 0
      %p37 = por %p35, %p36
      %p38 = scmp.ne.s32.totalorder %s30, %s32
      %p39 = scmp.eq.s32.totalorder %s15, 7
      %p40 = por %p38, %p39
      %p41 = scmp.ne.s32.totalorder %s32, %s33
      %p42 = scmp.eq.s32.totalorder %s15, 0
      %p43 = por %p41, %p42
      %p44 = scmp.ne.s32.totalorder %s32, %s33
      %p45 = scmp.eq.s32.totalorder %s16, 7
      %p46 = por %p44, %p45
      %p48 = scmp.ne.s32.totalorder %s33, %s47
      %p49 = scmp.eq.s32.totalorder %s16, 0
      %p50 = por %p48, %p49
      %s51 = ssub.s32 %s17, %s29
      %s52 = ssub.s32 %s18, %s25
      %s53 = sor.u32 %s51, %s52
      %p54 = scmp.eq.s32.totalorder %s53, 0
      %s56 = sadd.s32 %s55, 1
      %s57 = scalar_select %p54, %s55, %s56
      %p60 = pneg %p54
      %p61 = scmp.eq.s32.totalorder %s10, 7
      %p62 = por %p60, %p61
      %p63 = scmp.ne.s32.totalorder %s55, %s58
      %p64 = scmp.eq.s32.totalorder %s10, 0
      %p65 = por %p63, %p64
      %p66 = scmp.ne.s32.totalorder %s55, %s58
      %p67 = scmp.eq.s32.totalorder %s15, 7
      %p68 = por %p66, %p67
      %p69 = scmp.ne.s32.totalorder %s58, %s59
      %p70 = scmp.eq.s32.totalorder %s15, 0
      %p71 = por %p69, %p70
      %p72 = scmp.ne.s32.totalorder %s58, %s59
      %p73 = scmp.eq.s32.totalorder %s16, 7
      %p74 = por %p72, %p73
      %p76 = scmp.ne.s32.totalorder %s59, %s75
      %p77 = scmp.eq.s32.totalorder %s16, 0
      %p78 = por %p76, %p77
      %s79 = ssub.s32 %s17, %s29
      %p80 = scmp.eq.s32.totalorder %s79, 0
      %s82 = sadd.s32 %s81, 1
      %s83 = scalar_select %p80, %s81, %s82
      %p86 = pneg %p80
      %p87 = scmp.eq.s32.totalorder %s10, 7
      %p88 = por %p86, %p87
      %p89 = scmp.ne.s32.totalorder %s81, %s84
      %p90 = scmp.eq.s32.totalorder %s10, 0
      %p91 = por %p89, %p90
      %p92 = scmp.ne.s32.totalorder %s81, %s84
      %p93 = scmp.eq.s32.totalorder %s15, 7
      %p94 = por %p92, %p93
      %p95 = scmp.ne.s32.totalorder %s84, %s85
      %p96 = scmp.eq.s32.totalorder %s15, 0
      %p97 = por %p95, %p96
      %p98 = scmp.ne.s32.totalorder %s84, %s85
      %p99 = scmp.eq.s32.totalorder %s16, 7
      %p100 = por %p98, %p99
      %p102 = scmp.ne.s32.totalorder %s85, %s101
      %p103 = scmp.eq.s32.totalorder %s16, 0
      %p104 = por %p102, %p103
      %s105 = ssub.s32 %s17, %s29
      %s106 = ssub.s32 %s18, %s25
      %s107 = sor.u32 %s105, %s106
      %p108 = scmp.eq.s32.totalorder %s107, 0
      %s110 = sadd.s32 %s109, 1
      %s111 = scalar_select %p108, %s109, %s110
      %p114 = pneg %p108
      %p115 = scmp.eq.s32.totalorder %s10, 7
      %p116 = por %p114, %p115
      %p117 = scmp.ne.s32.totalorder %s109, %s112
      %p118 = scmp.eq.s32.totalorder %s10, 0
      %p119 = por %p117, %p118
      %p120 = scmp.ne.s32.totalorder %s109, %s112
      %p121 = scmp.eq.s32.totalorder %s15, 7
      %p122 = por %p120, %p121
      %p123 = scmp.ne.s32.totalorder %s112, %s113
      %p124 = scmp.eq.s32.totalorder %s15, 0
      %p125 = por %p123, %p124
      %p126 = scmp.ne.s32.totalorder %s112, %s113
      %p127 = scmp.eq.s32.totalorder %s16, 7
      %p128 = por %p126, %p127
      %p130 = scmp.ne.s32.totalorder %s113, %s129
      %p131 = scmp.eq.s32.totalorder %s16, 0
      %p132 = por %p130, %p131
      %p133 = scmp.le.s32.totalorder 1, %s10
      %p134 = scmp.lt.s32.totalorder %s10, 9
      %p135 = pnand %p133, %p134
      %p136 = pneg %p135
      // Predicated region
      $region9: #{aligned_lpips_forward.1} parent=5 // pred_check
        _
      $region10: #{aligned_lpips_forward.1} parent=5 // pred_check_branch
        %138 = sbr.rel (%p135) target = $region12
      $region11: #{aligned_lpips_forward.1} parent=5 // pred_region
        %s139 = ssub.s32 %s10, 1
        // Predicated region
        $region13: #{aligned_lpips_forward.1} parent=11 // pred_check
          %p140 = pneg %p43
        $region14: #{aligned_lpips_forward.1} parent=11 // pred_check_branch
          %142 = sbr.rel (%p140) target = $region16
        $region15: #{aligned_lpips_forward.1} parent=11 // pred_region
          %s144 = ssub.s32 32, 32
          %145 = vsyncadd [#allocation7], %s144
          %s147 = sshll.u32 %s0, 4
          %s148 = int_to_ptr.vmem [resolvable:$true] %s147
          %150 = dma.vmem_to_smem %s148, 32, [#allocation6], [#allocation7]
        $region16: #{aligned_lpips_forward.1} parent=11 // pred_fallthru
          _
      $region12: #{aligned_lpips_forward.1} parent=5 // pred_fallthru
        _
      %p151 = scmp.lt.s32.totalorder %s10, 8
      // Predicated region
      $region17: #{aligned_lpips_forward.1} parent=5 // pred_check
        %p152 = pneg %p151
      $region18: #{aligned_lpips_forward.1} parent=5 // pred_check_branch
        %154 = sbr.rel (%p152) target = $region20
      $region19: #{aligned_lpips_forward.1} parent=5 // pred_region
        // Predicated region
        $region21: #{aligned_lpips_forward.1} parent=19 // pred_check
          %p155 = pneg %p65
        $region22: #{aligned_lpips_forward.1} parent=19 // pred_check_branch
          %157 = sbr.rel (%p155) target = $region24
        $region23: #{aligned_lpips_forward.1} parent=19 // pred_region
          %s158 = sand.u32 %s55, 1
          %s159 = sand.u32 %s55, 1
          %s160 = smul.addr %s159, 64
          %s161 = scalar_lea.vmem [#allocation8], %s160
          %s162 = smul.u32 4, %s18
          %s163 = smul.addr %s17, 32
          %s164 = sadd.s32 %s162, %s163
          %s165 = smul.addr %s164, 8
          %s166 = scalar_lea.vmem %s1, %s165
          // Predicated region
          $region25: #{aligned_lpips_forward.1} parent=23 // pred_check
            _
          $region26: #{aligned_lpips_forward.1} parent=23 // pred_check_branch
            %168 = sbr.rel (0) target = $region28
          $region27: #{aligned_lpips_forward.1} parent=23 // pred_region
            // Predicated region
            $region29: #{aligned_lpips_forward.1} parent=27 // pred_check
              _
            $region30: #{aligned_lpips_forward.1} parent=27 // pred_check_branch
              %170 = sbr.rel (0) target = $region32
            $region31: #{aligned_lpips_forward.1} parent=27 // pred_region
              // Predicated region
              $region44: #{aligned_lpips_forward.1} parent=31 // pred_check
                _
              $region45: #{aligned_lpips_forward.1} parent=31 // pred_check_branch
                %199 = sbr.rel (0) target = $region47
              $region46: #{aligned_lpips_forward.1} parent=31 // pred_region
                loop: start=0, step=1, limit=1
                $region48: #{aligned_lpips_forward.1} parent=46 // loop_pre_header
                  _
                $region49: #{aligned_lpips_forward.1} parent=46 // loop_header
                  %s201 = sphi 0, %s205
                  %p202 = scmp.ge.s32.totalorder %s201, 1
                  %s206 = sphi %s166, %s166
                  %s207 = sphi %s161, %s161
                $region50: #{aligned_lpips_forward.1} parent=46 // loop_header_branch
                  %204 = sbr.rel (%p202) target = $region54
                $region51: #{aligned_lpips_forward.1} parent=46 // loop_body
                  %v208 = vld [vmem:[%s206] sm:$0xff]
                  %209 = vst [vmem:[%s207] sm:$0xff] %v208
                  %v210 = vld [vmem:[%s206 + $0x8] sm:$0xff]
                  %211 = vst [vmem:[%s207 + $0x8] sm:$0xff] %v210
                  %v212 = vld [vmem:[%s206 + $0x10] sm:$0xff]
                  %213 = vst [vmem:[%s207 + $0x10] sm:$0xff] %v212
                  %v214 = vld [vmem:[%s206 + $0x18] sm:$0xff]
                  %215 = vst [vmem:[%s207 + $0x18] sm:$0xff] %v214
                  %v216 = vld [vmem:[%s206 + $0x80] sm:$0xff]
                  %217 = vst [vmem:[%s207 + $0x20] sm:$0xff] %v216
                  %v218 = vld [vmem:[%s206 + $0x88] sm:$0xff]
                  %219 = vst [vmem:[%s207 + $0x28] sm:$0xff] %v218
                  %v220 = vld [vmem:[%s206 + $0x90] sm:$0xff]
                  %221 = vst [vmem:[%s207 + $0x30] sm:$0xff] %v220
                  %v222 = vld [vmem:[%s206 + $0x98] sm:$0xff]
                  %223 = vst [vmem:[%s207 + $0x38] sm:$0xff] %v222
                $region52: #{aligned_lpips_forward.1} parent=46 // loop_footer
                  %s205 = sadd.s32 1, %s201
                $region53: #{aligned_lpips_forward.1} parent=46 // loop_footer_branch
                  %200 = sbr.rel target = $region49
                $region54: #{aligned_lpips_forward.1} parent=46 // loop_exit
                  _
              $region47: #{aligned_lpips_forward.1} parent=31 // pred_fallthru
                _
              // Predicated region
              $region55: #{aligned_lpips_forward.1} parent=31 // pred_check
                _
              $region56: #{aligned_lpips_forward.1} parent=31 // pred_check_branch
                %225 = sbr.rel target = $region58
              $region57: #{aligned_lpips_forward.1} parent=31 // pred_region
                _
              $region58: #{aligned_lpips_forward.1} parent=31 // pred_fallthru
                _
            $region32: #{aligned_lpips_forward.1} parent=27 // pred_fallthru
              _
            // Predicated region
            $region33: #{aligned_lpips_forward.1} parent=27 // pred_check
              _
            $region34: #{aligned_lpips_forward.1} parent=27 // pred_check_branch
              %172 = sbr.rel target = $region36
            $region35: #{aligned_lpips_forward.1} parent=27 // pred_region
              loop: start=0, step=1, limit=1
              $region37: #{aligned_lpips_forward.1} parent=35 // loop_pre_header
                _
              $region38: #{aligned_lpips_forward.1} parent=35 // loop_header
                %s175 = sphi 0, %s179
                %p176 = scmp.ge.s32.totalorder %s175, 1
                %s180 = sphi %s166, %s166
                %s181 = sphi %s161, %s161
              $region39: #{aligned_lpips_forward.1} parent=35 // loop_header_branch
                %178 = sbr.rel (%p176) target = $region43
              $region40: #{aligned_lpips_forward.1} parent=35 // loop_body
                %v182 = vld [vmem:[%s180] sm:$0xff]
                %183 = vst [vmem:[%s181] sm:$0xff] %v182
                %v184 = vld [vmem:[%s180 + $0x8] sm:$0xff]
                %185 = vst [vmem:[%s181 + $0x8] sm:$0xff] %v184
                %v186 = vld [vmem:[%s180 + $0x10] sm:$0xff]
                %187 = vst [vmem:[%s181 + $0x10] sm:$0xff] %v186
                %v188 = vld [vmem:[%s180 + $0x18] sm:$0xff]
                %189 = vst [vmem:[%s181 + $0x18] sm:$0xff] %v188
                %v190 = vld [vmem:[%s180 + $0x80] sm:$0xff]
                %191 = vst [vmem:[%s181 + $0x20] sm:$0xff] %v190
                %v192 = vld [vmem:[%s180 + $0x88] sm:$0xff]
                %193 = vst [vmem:[%s181 + $0x28] sm:$0xff] %v192
                %v194 = vld [vmem:[%s180 + $0x90] sm:$0xff]
                %195 = vst [vmem:[%s181 + $0x30] sm:$0xff] %v194
                %v196 = vld [vmem:[%s180 + $0x98] sm:$0xff]
                %197 = vst [vmem:[%s181 + $0x38] sm:$0xff] %v196
              $region41: #{aligned_lpips_forward.1} parent=35 // loop_footer
                %s179 = sadd.s32 1, %s175
              $region42: #{aligned_lpips_forward.1} parent=35 // loop_footer_branch
                %174 = sbr.rel target = $region38
              $region43: #{aligned_lpips_forward.1} parent=35 // loop_exit
                _
            $region36: #{aligned_lpips_forward.1} parent=27 // pred_fallthru
              _
          $region28: #{aligned_lpips_forward.1} parent=23 // pred_fallthru
            _
          %226 = vnop
        $region24: #{aligned_lpips_forward.1} parent=19 // pred_fallthru
          _
        // Predicated region
        $region59: #{aligned_lpips_forward.1} parent=19 // pred_check
          %p227 = pneg %p91
        $region60: #{aligned_lpips_forward.1} parent=19 // pred_check_branch
          %229 = sbr.rel (%p227) target = $region62
        $region61: #{aligned_lpips_forward.1} parent=19 // pred_region
          %p230 = scmp.lt.s32.totalorder %s17, 1
          %s231 = scalar_select %p230, %s17, 1
          %s232 = smul.addr %s231, 48
          %s233 = smul.addr %s232, 8
          %s234 = scalar_lea.vmem %s2, %s233
        $region62: #{aligned_lpips_forward.1} parent=19 // pred_fallthru
          _
      $region20: #{aligned_lpips_forward.1} parent=5 // pred_fallthru
        _
      %p235 = scmp.le.s32.totalorder 1, %s10
      %p236 = scmp.lt.s32.totalorder %s10, 9
      %p237 = pnand %p235, %p236
      %p238 = pneg %p237
      // Predicated region
      $region63: #{aligned_lpips_forward.1} parent=5 // pred_check
        _
      $region64: #{aligned_lpips_forward.1} parent=5 // pred_check_branch
        %240 = sbr.rel (%p237) target = $region66
      $region65: #{aligned_lpips_forward.1} parent=5 // pred_region
        %s241 = ssub.s32 %s10, 1
        // Predicated region
        $region67: #{aligned_lpips_forward.1} parent=65 // pred_check
          %p242 = pneg %p43
        $region68: #{aligned_lpips_forward.1} parent=65 // pred_check_branch
          %244 = sbr.rel (%p242) target = $region70
        $region69: #{aligned_lpips_forward.1} parent=65 // pred_region
          %245 = dma.done [#allocation7], 32
        $region70: #{aligned_lpips_forward.1} parent=65 // pred_fallthru
          _
        %s246 = sand.u32 %s58, 1
        %s247 = sand.u32 %s58, 1
        %s248 = smul.addr %s247, 64
        %s249 = scalar_lea.vmem [#allocation8], %s248
        // Predicated region
        $region71: #{aligned_lpips_forward.1} parent=65 // pred_check
          %p250 = pneg %p71
        $region72: #{aligned_lpips_forward.1} parent=65 // pred_check_branch
          %252 = sbr.rel (%p250) target = $region74
        $region73: #{aligned_lpips_forward.1} parent=65 // pred_region
          _
        $region74: #{aligned_lpips_forward.1} parent=65 // pred_fallthru
          _
        %253 = sfence
        %p254 = pneg %p43
        %p255 = pneg %p40
        %s256 = sand.u32 %s58, 1
        %s257 = sand.u32 %s58, 1
        %s258 = smul.addr %s257, 64
        %s259 = scalar_lea.vmem [#allocation8], %s258
        %p260 = pneg %p71
        %p261 = pneg %p68
        %p262 = scmp.lt.s32.totalorder %s19, 1
        %s263 = scalar_select %p262, %s19, 1
        %s264 = smul.addr %s263, 48
        %s265 = smul.addr %s264, 8
        %s266 = scalar_lea.vmem %s2, %s265
        %p267 = pneg %p97
        %p268 = pneg %p94
        %p269 = pneg %p125
        %p270 = pneg %p122
        %s271 = sand.u32 %s112, 1
        %s272 = sand.u32 %s112, 1
        %s273 = smul.addr %s272, 48
        %s274 = scalar_lea.vmem [#allocation9], %s273
        %s275 = smul.u32 4, %s20
        %p276 = scmp.lt.s32.totalorder %s19, 1
        %s277 = scalar_select %p276, %s19, 1
        %s278 = smul.addr %s277, 48
        %s279 = smul.addr %s278, 8
        %s280 = scalar_lea.vmem %s2, %s279
        %s281 = smul.u32 4, %s20
        %s282 = smul.u32 %s20, 32
        %p283 = scmp.eq.s32.totalorder %s20, 0
        // Predicated region
        $region75: #{aligned_lpips_forward.1} parent=65 // pred_check
          %p284 = pneg %p283
        $region76: #{aligned_lpips_forward.1} parent=65 // pred_check_branch
          %286 = sbr.rel (%p284) target = $region78
        $region77: #{aligned_lpips_forward.1} parent=65 // pred_region
          %287 = vst [vmem:[#allocation4] sm:$0xff] 0.0
          %288 = vst [vmem:[#allocation4 + $0x88] sm:$0xff] 0.0
          %v289 = vld [vmem:[%s280] sm:$0xff]
          %v290 = vld [vmem:[%s280 + $0x8] sm:$0xff]
          %v291 = vld [vmem:[%s280 + $0x10] sm:$0xff]
          %v292 = vld [vmem:[%s280 + $0x18] sm:$0xff]
          %v293 = vld [vmem:[%s280 + $0x20] sm:$0xff]
          %v294 = vld [vmem:[%s280 + $0x28] sm:$0xff]
          %v295 = vld [vmem:[%s280 + $0x30] sm:$0xff]
          %v296 = vld [vmem:[%s280 + $0x38] sm:$0xff]
          %v297 = vld [vmem:[%s280 + $0x40] sm:$0xff]
          %v298 = vld [vmem:[%s280 + $0x48] sm:$0xff]
          %v299 = vld [vmem:[%s280 + $0x50] sm:$0xff]
          %v300 = vld [vmem:[%s280 + $0x58] sm:$0xff]
          %v301 = vld [vmem:[%s280 + $0x60] sm:$0xff]
          %v302 = vld [vmem:[%s280 + $0x68] sm:$0xff]
          %v303 = vld [vmem:[%s280 + $0x70] sm:$0xff]
          %v304 = vld [vmem:[%s280 + $0x78] sm:$0xff]
          %305 = vst [vmem:[#allocation4 + $0x8] sm:$0xff] %v289
          %306 = vst [vmem:[#allocation4 + $0x10] sm:$0xff] %v290
          %307 = vst [vmem:[#allocation4 + $0x18] sm:$0xff] %v291
          %308 = vst [vmem:[#allocation4 + $0x20] sm:$0xff] %v292
          %309 = vst [vmem:[#allocation4 + $0x28] sm:$0xff] %v293
          %310 = vst [vmem:[#allocation4 + $0x30] sm:$0xff] %v294
          %311 = vst [vmem:[#allocation4 + $0x38] sm:$0xff] %v295
          %312 = vst [vmem:[#allocation4 + $0x40] sm:$0xff] %v296
          %313 = vst [vmem:[#allocation4 + $0x48] sm:$0xff] %v297
          %314 = vst [vmem:[#allocation4 + $0x50] sm:$0xff] %v298
          %315 = vst [vmem:[#allocation4 + $0x58] sm:$0xff] %v299
          %316 = vst [vmem:[#allocation4 + $0x60] sm:$0xff] %v300
          %317 = vst [vmem:[#allocation4 + $0x68] sm:$0xff] %v301
          %318 = vst [vmem:[#allocation4 + $0x70] sm:$0xff] %v302
          %319 = vst [vmem:[#allocation4 + $0x78] sm:$0xff] %v303
          %320 = vst [vmem:[#allocation4 + $0x80] sm:$0xff] %v304
          %s321 = scalar_lea.vmem [#allocation4], 144
          %322 = vst [vmem:[%s321] sm:$0xff] 0.0
          %323 = vst [vmem:[%s321 + $0x88] sm:$0xff] 0.0
          %s324 = scalar_lea.vmem %s280, 128
          %v325 = vld [vmem:[%s324] sm:$0xff]
          %v326 = vld [vmem:[%s324 + $0x8] sm:$0xff]
          %v327 = vld [vmem:[%s324 + $0x10] sm:$0xff]
          %v328 = vld [vmem:[%s324 + $0x18] sm:$0xff]
          %v329 = vld [vmem:[%s324 + $0x20] sm:$0xff]
          %v330 = vld [vmem:[%s324 + $0x28] sm:$0xff]
          %v331 = vld [vmem:[%s324 + $0x30] sm:$0xff]
          %v332 = vld [vmem:[%s324 + $0x38] sm:$0xff]
          %v333 = vld [vmem:[%s324 + $0x40] sm:$0xff]
          %v334 = vld [vmem:[%s324 + $0x48] sm:$0xff]
          %v335 = vld [vmem:[%s324 + $0x50] sm:$0xff]
          %v336 = vld [vmem:[%s324 + $0x58] sm:$0xff]
          %v337 = vld [vmem:[%s324 + $0x60] sm:$0xff]
          %v338 = vld [vmem:[%s324 + $0x68] sm:$0xff]
          %v339 = vld [vmem:[%s324 + $0x70] sm:$0xff]
          %v340 = vld [vmem:[%s324 + $0x78] sm:$0xff]
          %341 = vst [vmem:[%s321 + $0x8] sm:$0xff] %v325
          %342 = vst [vmem:[%s321 + $0x10] sm:$0xff] %v326
          %343 = vst [vmem:[%s321 + $0x18] sm:$0xff] %v327
          %344 = vst [vmem:[%s321 + $0x20] sm:$0xff] %v328
          %345 = vst [vmem:[%s321 + $0x28] sm:$0xff] %v329
          %346 = vst [vmem:[%s321 + $0x30] sm:$0xff] %v330
          %347 = vst [vmem:[%s321 + $0x38] sm:$0xff] %v331
          %348 = vst [vmem:[%s321 + $0x40] sm:$0xff] %v332
          %349 = vst [vmem:[%s321 + $0x48] sm:$0xff] %v333
          %350 = vst [vmem:[%s321 + $0x50] sm:$0xff] %v334
          %351 = vst [vmem:[%s321 + $0x58] sm:$0xff] %v335
          %352 = vst [vmem:[%s321 + $0x60] sm:$0xff] %v336
          %353 = vst [vmem:[%s321 + $0x68] sm:$0xff] %v337
          %354 = vst [vmem:[%s321 + $0x70] sm:$0xff] %v338
          %355 = vst [vmem:[%s321 + $0x78] sm:$0xff] %v339
          %356 = vst [vmem:[%s321 + $0x80] sm:$0xff] %v340
          %s357 = scalar_lea.vmem [#allocation4], 288
          %358 = vst [vmem:[%s357] sm:$0xff] 0.0
          %359 = vst [vmem:[%s357 + $0x88] sm:$0xff] 0.0
          %s360 = scalar_lea.vmem %s280, 256
          %v361 = vld [vmem:[%s360] sm:$0xff]
          %v362 = vld [vmem:[%s360 + $0x8] sm:$0xff]
          %v363 = vld [vmem:[%s360 + $0x10] sm:$0xff]
          %v364 = vld [vmem:[%s360 + $0x18] sm:$0xff]
          %v365 = vld [vmem:[%s360 + $0x20] sm:$0xff]
          %v366 = vld [vmem:[%s360 + $0x28] sm:$0xff]
          %v367 = vld [vmem:[%s360 + $0x30] sm:$0xff]
          %v368 = vld [vmem:[%s360 + $0x38] sm:$0xff]
          %v369 = vld [vmem:[%s360 + $0x40] sm:$0xff]
          %v370 = vld [vmem:[%s360 + $0x48] sm:$0xff]
          %v371 = vld [vmem:[%s360 + $0x50] sm:$0xff]
          %v372 = vld [vmem:[%s360 + $0x58] sm:$0xff]
          %v373 = vld [vmem:[%s360 + $0x60] sm:$0xff]
          %v374 = vld [vmem:[%s360 + $0x68] sm:$0xff]
          %v375 = vld [vmem:[%s360 + $0x70] sm:$0xff]
          %v376 = vld [vmem:[%s360 + $0x78] sm:$0xff]
          %377 = vst [vmem:[%s357 + $0x8] sm:$0xff] %v361
          %378 = vst [vmem:[%s357 + $0x10] sm:$0xff] %v362
          %379 = vst [vmem:[%s357 + $0x18] sm:$0xff] %v363
          %380 = vst [vmem:[%s357 + $0x20] sm:$0xff] %v364
          %381 = vst [vmem:[%s357 + $0x28] sm:$0xff] %v365
          %382 = vst [vmem:[%s357 + $0x30] sm:$0xff] %v366
          %383 = vst [vmem:[%s357 + $0x38] sm:$0xff] %v367
          %384 = vst [vmem:[%s357 + $0x40] sm:$0xff] %v368
          %385 = vst [vmem:[%s357 + $0x48] sm:$0xff] %v369
          %386 = vst [vmem:[%s357 + $0x50] sm:$0xff] %v370
          %387 = vst [vmem:[%s357 + $0x58] sm:$0xff] %v371
          %388 = vst [vmem:[%s357 + $0x60] sm:$0xff] %v372
          %389 = vst [vmem:[%s357 + $0x68] sm:$0xff] %v373
          %390 = vst [vmem:[%s357 + $0x70] sm:$0xff] %v374
          %391 = vst [vmem:[%s357 + $0x78] sm:$0xff] %v375
          %392 = vst [vmem:[%s357 + $0x80] sm:$0xff] %v376
        $region78: #{aligned_lpips_forward.1} parent=65 // pred_fallthru
          _
        %v393 = vld [vmem:[%s249] sm:$0xff]
        %v394 = vld [vmem:[%s249 + $0x8] sm:$0xff]
        %v395 = vld [vmem:[%s249 + $0x10] sm:$0xff]
        %v396 = vld [vmem:[%s249 + $0x18] sm:$0xff]
        %v397 = vmax.f32 %v393, -3.0
        %v398 = vmax.f32 %v394, -3.0
        %v399 = vmax.f32 %v395, -3.0
        %v400 = vmax.f32 %v396, -3.0
        %v401 = vmin.f32 %v397, 3.0
        %v402 = vmin.f32 %v398, 3.0
        %v403 = vmin.f32 %v399, 3.0
        %v404 = vmin.f32 %v400, 3.0
        %s405 = scalar_lea.vmem %s249, 32 [#allocation8]
        %v406 = vld [vmem:[%s405] sm:$0xff]
        %v407 = vld [vmem:[%s405 + $0x8] sm:$0xff]
        %v408 = vld [vmem:[%s405 + $0x10] sm:$0xff]
        %v409 = vld [vmem:[%s405 + $0x18] sm:$0xff]
        %v410 = vmax.f32 %v406, -3.0
        %v411 = vmax.f32 %v407, -3.0
        %v412 = vmax.f32 %v408, -3.0
        %v413 = vmax.f32 %v409, -3.0
        %v414 = vmin.f32 %v410, 3.0
        %v415 = vmin.f32 %v411, 3.0
        %v416 = vmin.f32 %v412, 3.0
        %v417 = vmin.f32 %v413, 3.0
        %v418 = vsub.f32 %v414, -3.0
        %v419 = vsub.f32 %v415, -3.0
        %v420 = vsub.f32 %v416, -3.0
        %v421 = vsub.f32 %v417, -3.0
        %v422 = vand.u32 2147483647, %v418
        %v423 = vand.u32 2147483647, %v419
        %v424 = vand.u32 2147483647, %v420
        %v425 = vand.u32 2147483647, %v421
        %v426 = vsub.f32 1.0, %v422
        %v427 = vsub.f32 1.0, %v423
        %v428 = vsub.f32 1.0, %v424
        %v429 = vsub.f32 1.0, %v425
        %v430 = vmax.f32 %v426, 0.0
        %v431 = vmax.f32 %v427, 0.0
        %v432 = vmax.f32 %v428, 0.0
        %v433 = vmax.f32 %v429, 0.0
        %434 = vst [vmem:[#allocation2] sm:$0xff] %v430
        %435 = vst [vmem:[#allocation2 + $0x8] sm:$0xff] %v431
        %436 = vst [vmem:[#allocation2 + $0x10] sm:$0xff] %v432
        %437 = vst [vmem:[#allocation2 + $0x18] sm:$0xff] %v433
        %v438 = vsub.f32 %v401, -3.0
        %v439 = vsub.f32 %v402, -3.0
        %v440 = vsub.f32 %v403, -3.0
        %v441 = vsub.f32 %v404, -3.0
        %v442 = vand.u32 2147483647, %v438
        %v443 = vand.u32 2147483647, %v439
        %v444 = vand.u32 2147483647, %v440
        %v445 = vand.u32 2147483647, %v441
        %v446 = vsub.f32 1.0, %v442
        %v447 = vsub.f32 1.0, %v443
        %v448 = vsub.f32 1.0, %v444
        %v449 = vsub.f32 1.0, %v445
        %v450 = vmax.f32 %v446, 0.0
        %v451 = vmax.f32 %v447, 0.0
        %v452 = vmax.f32 %v448, 0.0
        %v453 = vmax.f32 %v449, 0.0
        %454 = vst [vmem:[#allocation3] sm:$0xff] %v450
        %455 = vst [vmem:[#allocation3 + $0x8] sm:$0xff] %v451
        %456 = vst [vmem:[#allocation3 + $0x10] sm:$0xff] %v452
        %457 = vst [vmem:[#allocation3 + $0x18] sm:$0xff] %v453
        %v458 = vsub.f32 %v414, -2.0
        %v459 = vsub.f32 %v415, -2.0
        %v460 = vsub.f32 %v416, -2.0
        %v461 = vsub.f32 %v417, -2.0
        %v462 = vand.u32 2147483647, %v458
        %v463 = vand.u32 2147483647, %v459
        %v464 = vand.u32 2147483647, %v460
        %v465 = vand.u32 2147483647, %v461
        %v466 = vsub.f32 1.0, %v462
        %v467 = vsub.f32 1.0, %v463
        %v468 = vsub.f32 1.0, %v464
        %v469 = vsub.f32 1.0, %v465
        %v470 = vmax.f32 %v466, 0.0
        %v471 = vmax.f32 %v467, 0.0
        %v472 = vmax.f32 %v468, 0.0
        %v473 = vmax.f32 %v469, 0.0
        %s474 = scalar_lea.vmem [#allocation2], 32
        %475 = vst [vmem:[%s474] sm:$0xff] %v470
        %476 = vst [vmem:[%s474 + $0x8] sm:$0xff] %v471
        %477 = vst [vmem:[%s474 + $0x10] sm:$0xff] %v472
        %478 = vst [vmem:[%s474 + $0x18] sm:$0xff] %v473
        %v479 = vsub.f32 %v401, -2.0
        %v480 = vsub.f32 %v402, -2.0
        %v481 = vsub.f32 %v403, -2.0
        %v482 = vsub.f32 %v404, -2.0
        %v483 = vand.u32 2147483647, %v479
        %v484 = vand.u32 2147483647, %v480
        %v485 = vand.u32 2147483647, %v481
        %v486 = vand.u32 2147483647, %v482
        %v487 = vsub.f32 1.0, %v483
        %v488 = vsub.f32 1.0, %v484
        %v489 = vsub.f32 1.0, %v485
        %v490 = vsub.f32 1.0, %v486
        %v491 = vmax.f32 %v487, 0.0
        %v492 = vmax.f32 %v488, 0.0
        %v493 = vmax.f32 %v489, 0.0
        %v494 = vmax.f32 %v490, 0.0
        %s495 = scalar_lea.vmem [#allocation3], 32
        %496 = vst [vmem:[%s495] sm:$0xff] %v491
        %497 = vst [vmem:[%s495 + $0x8] sm:$0xff] %v492
        %498 = vst [vmem:[%s495 + $0x10] sm:$0xff] %v493
        %499 = vst [vmem:[%s495 + $0x18] sm:$0xff] %v494
        %v500 = vsub.f32 %v414, -1.0
        %v501 = vsub.f32 %v415, -1.0
        %v502 = vsub.f32 %v416, -1.0
        %v503 = vsub.f32 %v417, -1.0
        %v504 = vand.u32 2147483647, %v500
        %v505 = vand.u32 2147483647, %v501
        %v506 = vand.u32 2147483647, %v502
        %v507 = vand.u32 2147483647, %v503
        %v508 = vsub.f32 1.0, %v504
        %v509 = vsub.f32 1.0, %v505
        %v510 = vsub.f32 1.0, %v506
        %v511 = vsub.f32 1.0, %v507
        %v512 = vmax.f32 %v508, 0.0
        %v513 = vmax.f32 %v509, 0.0
        %v514 = vmax.f32 %v510, 0.0
        %v515 = vmax.f32 %v511, 0.0
        %s516 = scalar_lea.vmem [#allocation2], 64
        %517 = vst [vmem:[%s516] sm:$0xff] %v512
        %518 = vst [vmem:[%s516 + $0x8] sm:$0xff] %v513
        %519 = vst [vmem:[%s516 + $0x10] sm:$0xff] %v514
        %520 = vst [vmem:[%s516 + $0x18] sm:$0xff] %v515
        %v521 = vsub.f32 %v401, -1.0
        %v522 = vsub.f32 %v402, -1.0
        %v523 = vsub.f32 %v403, -1.0
        %v524 = vsub.f32 %v404, -1.0
        %v525 = vand.u32 2147483647, %v521
        %v526 = vand.u32 2147483647, %v522
        %v527 = vand.u32 2147483647, %v523
        %v528 = vand.u32 2147483647, %v524
        %v529 = vsub.f32 1.0, %v525
        %v530 = vsub.f32 1.0, %v526
        %v531 = vsub.f32 1.0, %v527
        %v532 = vsub.f32 1.0, %v528
        %v533 = vmax.f32 %v529, 0.0
        %v534 = vmax.f32 %v530, 0.0
        %v535 = vmax.f32 %v531, 0.0
        %v536 = vmax.f32 %v532, 0.0
        %s537 = scalar_lea.vmem [#allocation3], 64
        %538 = vst [vmem:[%s537] sm:$0xff] %v533
        %539 = vst [vmem:[%s537 + $0x8] sm:$0xff] %v534
        %540 = vst [vmem:[%s537 + $0x10] sm:$0xff] %v535
        %541 = vst [vmem:[%s537 + $0x18] sm:$0xff] %v536
        %v542 = vand.u32 2147483647, %v414
        %v543 = vand.u32 2147483647, %v415
        %v544 = vand.u32 2147483647, %v416
        %v545 = vand.u32 2147483647, %v417
        %v546 = vsub.f32 1.0, %v542
        %v547 = vsub.f32 1.0, %v543
        %v548 = vsub.f32 1.0, %v544
        %v549 = vsub.f32 1.0, %v545
        %v550 = vmax.f32 %v546, 0.0
        %v551 = vmax.f32 %v547, 0.0
        %v552 = vmax.f32 %v548, 0.0
        %v553 = vmax.f32 %v549, 0.0
        %s554 = scalar_lea.vmem [#allocation2], 96
        %555 = vst [vmem:[%s554] sm:$0xff] %v550
        %556 = vst [vmem:[%s554 + $0x8] sm:$0xff] %v551
        %557 = vst [vmem:[%s554 + $0x10] sm:$0xff] %v552
        %558 = vst [vmem:[%s554 + $0x18] sm:$0xff] %v553
        %v559 = vand.u32 2147483647, %v401
        %v560 = vand.u32 2147483647, %v402
        %v561 = vand.u32 2147483647, %v403
        %v562 = vand.u32 2147483647, %v404
        %v563 = vsub.f32 1.0, %v559
        %v564 = vsub.f32 1.0, %v560
        %v565 = vsub.f32 1.0, %v561
        %v566 = vsub.f32 1.0, %v562
        %v567 = vmax.f32 %v563, 0.0
        %v568 = vmax.f32 %v564, 0.0
        %v569 = vmax.f32 %v565, 0.0
        %v570 = vmax.f32 %v566, 0.0
        %s571 = scalar_lea.vmem [#allocation3], 96
        %572 = vst [vmem:[%s571] sm:$0xff] %v567
        %573 = vst [vmem:[%s571 + $0x8] sm:$0xff] %v568
        %574 = vst [vmem:[%s571 + $0x10] sm:$0xff] %v569
        %575 = vst [vmem:[%s571 + $0x18] sm:$0xff] %v570
        %v576 = vsub.f32 %v414, 1.0
        %v577 = vsub.f32 %v415, 1.0
        %v578 = vsub.f32 %v416, 1.0
        %v579 = vsub.f32 %v417, 1.0
        %v580 = vand.u32 2147483647, %v576
        %v581 = vand.u32 2147483647, %v577
        %v582 = vand.u32 2147483647, %v578
        %v583 = vand.u32 2147483647, %v579
        %v584 = vsub.f32 1.0, %v580
        %v585 = vsub.f32 1.0, %v581
        %v586 = vsub.f32 1.0, %v582
        %v587 = vsub.f32 1.0, %v583
        %v588 = vmax.f32 %v584, 0.0
        %v589 = vmax.f32 %v585, 0.0
        %v590 = vmax.f32 %v586, 0.0
        %v591 = vmax.f32 %v587, 0.0
        %s592 = scalar_lea.vmem [#allocation2], 128
        %593 = vst [vmem:[%s592] sm:$0xff] %v588
        %594 = vst [vmem:[%s592 + $0x8] sm:$0xff] %v589
        %595 = vst [vmem:[%s592 + $0x10] sm:$0xff] %v590
        %596 = vst [vmem:[%s592 + $0x18] sm:$0xff] %v591
        %v597 = vsub.f32 %v401, 1.0
        %v598 = vsub.f32 %v402, 1.0
        %v599 = vsub.f32 %v403, 1.0
        %v600 = vsub.f32 %v404, 1.0
        %v601 = vand.u32 2147483647, %v597
        %v602 = vand.u32 2147483647, %v598
        %v603 = vand.u32 2147483647, %v599
        %v604 = vand.u32 2147483647, %v600
        %v605 = vsub.f32 1.0, %v601
        %v606 = vsub.f32 1.0, %v602
        %v607 = vsub.f32 1.0, %v603
        %v608 = vsub.f32 1.0, %v604
        %v609 = vmax.f32 %v605, 0.0
        %v610 = vmax.f32 %v606, 0.0
        %v611 = vmax.f32 %v607, 0.0
        %v612 = vmax.f32 %v608, 0.0
        %s613 = scalar_lea.vmem [#allocation3], 128
        %614 = vst [vmem:[%s613] sm:$0xff] %v609
        %615 = vst [vmem:[%s613 + $0x8] sm:$0xff] %v610
        %616 = vst [vmem:[%s613 + $0x10] sm:$0xff] %v611
        %617 = vst [vmem:[%s613 + $0x18] sm:$0xff] %v612
        %v618 = vsub.f32 %v414, 2.0
        %v619 = vsub.f32 %v415, 2.0
        %v620 = vsub.f32 %v416, 2.0
        %v621 = vsub.f32 %v417, 2.0
        %v622 = vand.u32 2147483647, %v618
        %v623 = vand.u32 2147483647, %v619
        %v624 = vand.u32 2147483647, %v620
        %v625 = vand.u32 2147483647, %v621
        %v626 = vsub.f32 1.0, %v622
        %v627 = vsub.f32 1.0, %v623
        %v628 = vsub.f32 1.0, %v624
        %v629 = vsub.f32 1.0, %v625
        %v630 = vmax.f32 %v626, 0.0
        %v631 = vmax.f32 %v627, 0.0
        %v632 = vmax.f32 %v628, 0.0
        %v633 = vmax.f32 %v629, 0.0
        %s634 = scalar_lea.vmem [#allocation2], 160
        %635 = vst [vmem:[%s634] sm:$0xff] %v630
        %636 = vst [vmem:[%s634 + $0x8] sm:$0xff] %v631
        %637 = vst [vmem:[%s634 + $0x10] sm:$0xff] %v632
        %638 = vst [vmem:[%s634 + $0x18] sm:$0xff] %v633
        %v639 = vsub.f32 %v401, 2.0
        %v640 = vsub.f32 %v402, 2.0
        %v641 = vsub.f32 %v403, 2.0
        %v642 = vsub.f32 %v404, 2.0
        %v643 = vand.u32 2147483647, %v639
        %v644 = vand.u32 2147483647, %v640
        %v645 = vand.u32 2147483647, %v641
        %v646 = vand.u32 2147483647, %v642
        %v647 = vsub.f32 1.0, %v643
        %v648 = vsub.f32 1.0, %v644
        %v649 = vsub.f32 1.0, %v645
        %v650 = vsub.f32 1.0, %v646
        %v651 = vmax.f32 %v647, 0.0
        %v652 = vmax.f32 %v648, 0.0
        %v653 = vmax.f32 %v649, 0.0
        %v654 = vmax.f32 %v650, 0.0
        %s655 = scalar_lea.vmem [#allocation3], 160
        %656 = vst [vmem:[%s655] sm:$0xff] %v651
        %657 = vst [vmem:[%s655 + $0x8] sm:$0xff] %v652
        %658 = vst [vmem:[%s655 + $0x10] sm:$0xff] %v653
        %659 = vst [vmem:[%s655 + $0x18] sm:$0xff] %v654
        %v660 = vsub.f32 %v414, 3.0
        %v661 = vsub.f32 %v415, 3.0
        %v662 = vsub.f32 %v416, 3.0
        %v663 = vsub.f32 %v417, 3.0
        %v664 = vand.u32 2147483647, %v660
        %v665 = vand.u32 2147483647, %v661
        %v666 = vand.u32 2147483647, %v662
        %v667 = vand.u32 2147483647, %v663
        %v668 = vsub.f32 1.0, %v664
        %v669 = vsub.f32 1.0, %v665
        %v670 = vsub.f32 1.0, %v666
        %v671 = vsub.f32 1.0, %v667
        %v672 = vmax.f32 %v668, 0.0
        %v673 = vmax.f32 %v669, 0.0
        %v674 = vmax.f32 %v670, 0.0
        %v675 = vmax.f32 %v671, 0.0
        %s676 = scalar_lea.vmem [#allocation2], 192
        %677 = vst [vmem:[%s676] sm:$0xff] %v672
        %678 = vst [vmem:[%s676 + $0x8] sm:$0xff] %v673
        %679 = vst [vmem:[%s676 + $0x10] sm:$0xff] %v674
        %680 = vst [vmem:[%s676 + $0x18] sm:$0xff] %v675
        %v681 = vsub.f32 %v401, 3.0
        %v682 = vsub.f32 %v402, 3.0
        %v683 = vsub.f32 %v403, 3.0
        %v684 = vsub.f32 %v404, 3.0
        %v685 = vand.u32 2147483647, %v681
        %v686 = vand.u32 2147483647, %v682
        %v687 = vand.u32 2147483647, %v683
        %v688 = vand.u32 2147483647, %v684
        %v689 = vsub.f32 1.0, %v685
        %v690 = vsub.f32 1.0, %v686
        %v691 = vsub.f32 1.0, %v687
        %v692 = vsub.f32 1.0, %v688
        %v693 = vmax.f32 %v689, 0.0
        %v694 = vmax.f32 %v690, 0.0
        %v695 = vmax.f32 %v691, 0.0
        %v696 = vmax.f32 %v692, 0.0
        %s697 = scalar_lea.vmem [#allocation3], 192
        %698 = vst [vmem:[%s697] sm:$0xff] %v693
        %699 = vst [vmem:[%s697 + $0x8] sm:$0xff] %v694
        %700 = vst [vmem:[%s697 + $0x10] sm:$0xff] %v695
        %701 = vst [vmem:[%s697 + $0x18] sm:$0xff] %v696
        %vm702 = vcmask 23552
        %703 = vst.msk [vmem:[#allocation3] sm:$0xff] %vm702, 0.0
        %704 = vst.msk [vmem:[#allocation3 + $0x8] sm:$0xff] %vm702, 0.0
        %705 = vst.msk [vmem:[#allocation3 + $0x10] sm:$0xff] %vm702, 0.0
        %706 = vst.msk [vmem:[#allocation3 + $0x18] sm:$0xff] %vm702, 0.0
        %vm707 = vcmask 15360
        %708 = vst.msk [vmem:[%s495] sm:$0xff] %vm707, 0.0
        %709 = vst.msk [vmem:[%s495 + $0x8] sm:$0xff] %vm707, 0.0
        %710 = vst.msk [vmem:[%s495 + $0x10] sm:$0xff] %vm707, 0.0
        %711 = vst.msk [vmem:[%s495 + $0x18] sm:$0xff] %vm707, 0.0
        %vm712 = vcmask 7168
        %713 = vst.msk [vmem:[%s537] sm:$0xff] %vm712, 0.0
        %714 = vst.msk [vmem:[%s537 + $0x8] sm:$0xff] %vm712, 0.0
        %715 = vst.msk [vmem:[%s537 + $0x10] sm:$0xff] %vm712, 0.0
        %716 = vst.msk [vmem:[%s537 + $0x18] sm:$0xff] %vm712, 0.0
        %vm717 = vcmask 1048568
        %718 = vst.msk [vmem:[%s613] sm:$0xff] %vm717, 0.0
        %719 = vst.msk [vmem:[%s613 + $0x8] sm:$0xff] %vm717, 0.0
        %720 = vst.msk [vmem:[%s613 + $0x10] sm:$0xff] %vm717, 0.0
        %721 = vst.msk [vmem:[%s613 + $0x18] sm:$0xff] %vm717, 0.0
        %vm722 = vcmask 1048560
        %723 = vst.msk [vmem:[%s655] sm:$0xff] %vm722, 0.0
        %724 = vst.msk [vmem:[%s655 + $0x8] sm:$0xff] %vm722, 0.0
        %725 = vst.msk [vmem:[%s655 + $0x10] sm:$0xff] %vm722, 0.0
        %726 = vst.msk [vmem:[%s655 + $0x18] sm:$0xff] %vm722, 0.0
        %vm727 = vcmask 1048552
        %728 = vst.msk [vmem:[%s697] sm:$0xff] %vm727, 0.0
        %729 = vst.msk [vmem:[%s697 + $0x8] sm:$0xff] %vm727, 0.0
        %730 = vst.msk [vmem:[%s697 + $0x10] sm:$0xff] %vm727, 0.0
        %731 = vst.msk [vmem:[%s697 + $0x18] sm:$0xff] %vm727, 0.0
        %s732 = sadd.s32 %s282, 5
        %s733 = scalar_lea.vmem [#allocation4], %s732
        %v734 = vld [vmem:[%s733] sm:$0xff]
        %v735 = vld [vmem:[%s733 + $0x8] sm:$0xff]
        %v736 = vld [vmem:[%s733 + $0x10] sm:$0xff]
        %v737 = vld [vmem:[%s733 + $0x18] sm:$0xff]
        %v738 = vld [vmem:[%s733 + $0x20] sm:$0x3f]
        %739 = vrot.lane.b32.xlu0 %v734, 3
        %v740 = vpop.permute.xlu0 %739
        %741 = vrot.lane.b32.xlu0 %v735, 3
        %v742 = vpop.permute.xlu0 %741
        %743 = vrot.lane.b32.xlu0 %v736, 3
        %v744 = vpop.permute.xlu0 %743
        %745 = vrot.lane.b32.xlu0 %v737, 3
        %v746 = vpop.permute.xlu0 %745
        %747 = vrot.lane.b32.xlu0 %v738, 3
        %v748 = vpop.permute.xlu0 %747
        %749 = vst [vmem:[#allocation5] sm:$0xff] %v740
        %750 = vst [vmem:[#allocation5 + $0x8] sm:$0xff] %v742
        %751 = vst [vmem:[#allocation5 + $0x10] sm:$0xff] %v744
        %752 = vst [vmem:[#allocation5 + $0x18] sm:$0xff] %v746
        %753 = vst [vmem:[#allocation5 + $0x20] sm:$0x3f] %v748
        %s754 = sadd.s32 %s732, 144
        %s755 = scalar_lea.vmem [#allocation4], %s754
        %v756 = vld [vmem:[%s755] sm:$0xff]
        %v757 = vld [vmem:[%s755 + $0x8] sm:$0xff]
        %v758 = vld [vmem:[%s755 + $0x10] sm:$0xff]
        %v759 = vld [vmem:[%s755 + $0x18] sm:$0xff]
        %v760 = vld [vmem:[%s755 + $0x20] sm:$0x3f]
        %761 = vrot.lane.b32.xlu0 %v756, 3
        %v762 = vpop.permute.xlu0 %761
        %763 = vrot.lane.b32.xlu0 %v757, 3
        %v764 = vpop.permute.xlu0 %763
        %765 = vrot.lane.b32.xlu0 %v758, 3
        %v766 = vpop.permute.xlu0 %765
        %767 = vrot.lane.b32.xlu0 %v759, 3
        %v768 = vpop.permute.xlu0 %767
        %769 = vrot.lane.b32.xlu0 %v760, 3
        %v770 = vpop.permute.xlu0 %769
        %s771 = scalar_lea.vmem [#allocation5], 40
        %772 = vst [vmem:[%s771] sm:$0xff] %v762
        %773 = vst [vmem:[%s771 + $0x8] sm:$0xff] %v764
        %774 = vst [vmem:[%s771 + $0x10] sm:$0xff] %v766
        %775 = vst [vmem:[%s771 + $0x18] sm:$0xff] %v768
        %776 = vst [vmem:[%s771 + $0x20] sm:$0x3f] %v770
        %s777 = sadd.s32 %s732, 288
        %s778 = scalar_lea.vmem [#allocation4], %s777
        %v779 = vld [vmem:[%s778] sm:$0xff]
        %v780 = vld [vmem:[%s778 + $0x8] sm:$0xff]
        %v781 = vld [vmem:[%s778 + $0x10] sm:$0xff]
        %v782 = vld [vmem:[%s778 + $0x18] sm:$0xff]
        %v783 = vld [vmem:[%s778 + $0x20] sm:$0x3f]
        %784 = vrot.lane.b32.xlu0 %v779, 3
        %v785 = vpop.permute.xlu0 %784
        %786 = vrot.lane.b32.xlu0 %v780, 3
        %v787 = vpop.permute.xlu0 %786
        %788 = vrot.lane.b32.xlu0 %v781, 3
        %v789 = vpop.permute.xlu0 %788
        %790 = vrot.lane.b32.xlu0 %v782, 3
        %v791 = vpop.permute.xlu0 %790
        %792 = vrot.lane.b32.xlu0 %v783, 3
        %v793 = vpop.permute.xlu0 %792
        %s794 = scalar_lea.vmem [#allocation5], 80
        %795 = vst [vmem:[%s794] sm:$0xff] %v785
        %796 = vst [vmem:[%s794 + $0x8] sm:$0xff] %v787
        %797 = vst [vmem:[%s794 + $0x10] sm:$0xff] %v789
        %798 = vst [vmem:[%s794 + $0x18] sm:$0xff] %v791
        %799 = vst [vmem:[%s794 + $0x20] sm:$0x3f] %v793
        %v800 = vld [vmem:[#allocation3] sm:$0xff]
        %v801 = vld [vmem:[#allocation3 + $0x8] sm:$0xff]
        %v802 = vld [vmem:[#allocation3 + $0x10] sm:$0xff]
        %v803 = vld [vmem:[#allocation3 + $0x18] sm:$0xff]
        %v804 = vld [vmem:[#allocation2] sm:$0xff]
        %v805 = vld [vmem:[#allocation2 + $0x8] sm:$0xff]
        %v806 = vld [vmem:[#allocation2 + $0x10] sm:$0xff]
        %v807 = vld [vmem:[#allocation2 + $0x18] sm:$0xff]
        %v808 = vmul.f32 %v804, %v800
        %v809 = vmul.f32 %v805, %v801
        %v810 = vmul.f32 %v806, %v802
        %v811 = vmul.f32 %v807, %v803
        %v812 = vld [vmem:[#allocation5] sm:$0xff]
        %v813 = vld [vmem:[#allocation5 + $0x8] sm:$0xff]
        %v814 = vld [vmem:[#allocation5 + $0x10] sm:$0xff]
        %v815 = vld [vmem:[#allocation5 + $0x18] sm:$0xff]
        %v816 = vmul.f32 %v808, %v812
        %v817 = vmul.f32 %v809, %v813
        %v818 = vmul.f32 %v810, %v814
        %v819 = vmul.f32 %v811, %v815
        %v820 = vadd.f32 %v816, 0.0
        %v821 = vadd.f32 %v817, 0.0
        %v822 = vadd.f32 %v818, 0.0
        %v823 = vadd.f32 %v819, 0.0
        %v824 = vld [vmem:[%s771] sm:$0xff]
        %v825 = vld [vmem:[%s771 + $0x8] sm:$0xff]
        %v826 = vld [vmem:[%s771 + $0x10] sm:$0xff]
        %v827 = vld [vmem:[%s771 + $0x18] sm:$0xff]
        %v828 = vmul.f32 %v808, %v824
        %v829 = vmul.f32 %v809, %v825
        %v830 = vmul.f32 %v810, %v826
        %v831 = vmul.f32 %v811, %v827
        %v832 = vadd.f32 %v828, 0.0
        %v833 = vadd.f32 %v829, 0.0
        %v834 = vadd.f32 %v830, 0.0
        %v835 = vadd.f32 %v831, 0.0
        %v836 = vld [vmem:[%s794] sm:$0xff]
        %v837 = vld [vmem:[%s794 + $0x8] sm:$0xff]
        %v838 = vld [vmem:[%s794 + $0x10] sm:$0xff]
        %v839 = vld [vmem:[%s794 + $0x18] sm:$0xff]
        %v840 = vmul.f32 %v808, %v836
        %v841 = vmul.f32 %v809, %v837
        %v842 = vmul.f32 %v810, %v838
        %v843 = vmul.f32 %v811, %v839
        %v844 = vadd.f32 %v840, 0.0
        %v845 = vadd.f32 %v841, 0.0
        %v846 = vadd.f32 %v842, 0.0
        %v847 = vadd.f32 %v843, 0.0
        %v848 = vld [vmem:[%s474] sm:$0xff]
        %v849 = vld [vmem:[%s474 + $0x8] sm:$0xff]
        %v850 = vld [vmem:[%s474 + $0x10] sm:$0xff]
        %v851 = vld [vmem:[%s474 + $0x18] sm:$0xff]
        %v852 = vmul.f32 %v848, %v800
        %v853 = vmul.f32 %v849, %v801
        %v854 = vmul.f32 %v850, %v802
        %v855 = vmul.f32 %v851, %v803
        %v856 = vld [vmem:[#allocation5 + $0x1] sm:$0xff]
        %v857 = vld [vmem:[#allocation5 + $0x9] sm:$0xff]
        %v858 = vld [vmem:[#allocation5 + $0x11] sm:$0xff]
        %v859 = vld [vmem:[#allocation5 + $0x19] sm:$0xff]
        %v860 = vmul.f32 %v852, %v856
        %v861 = vmul.f32 %v853, %v857
        %v862 = vmul.f32 %v854, %v858
        %v863 = vmul.f32 %v855, %v859
        %v864 = vadd.f32 %v820, %v860
        %v865 = vadd.f32 %v821, %v861
        %v866 = vadd.f32 %v822, %v862
        %v867 = vadd.f32 %v823, %v863
        %v868 = vld [vmem:[%s771 + $0x1] sm:$0xff]
        %v869 = vld [vmem:[%s771 + $0x9] sm:$0xff]
        %v870 = vld [vmem:[%s771 + $0x11] sm:$0xff]
        %v871 = vld [vmem:[%s771 + $0x19] sm:$0xff]
        %v872 = vmul.f32 %v852, %v868
        %v873 = vmul.f32 %v853, %v869
        %v874 = vmul.f32 %v854, %v870
        %v875 = vmul.f32 %v855, %v871
        %v876 = vadd.f32 %v832, %v872
        %v877 = vadd.f32 %v833, %v873
        %v878 = vadd.f32 %v834, %v874
        %v879 = vadd.f32 %v835, %v875
        %v880 = vld [vmem:[%s794 + $0x1] sm:$0xff]
        %v881 = vld [vmem:[%s794 + $0x9] sm:$0xff]
        %v882 = vld [vmem:[%s794 + $0x11] sm:$0xff]
        %v883 = vld [vmem:[%s794 + $0x19] sm:$0xff]
        %v884 = vmul.f32 %v852, %v880
        %v885 = vmul.f32 %v853, %v881
        %v886 = vmul.f32 %v854, %v882
        %v887 = vmul.f32 %v855, %v883
        %v888 = vadd.f32 %v844, %v884
        %v889 = vadd.f32 %v845, %v885
        %v890 = vadd.f32 %v846, %v886
        %v891 = vadd.f32 %v847, %v887
        %v892 = vld [vmem:[%s516] sm:$0xff]
        %v893 = vld [vmem:[%s516 + $0x8] sm:$0xff]
        %v894 = vld [vmem:[%s516 + $0x10] sm:$0xff]
        %v895 = vld [vmem:[%s516 + $0x18] sm:$0xff]
        %v896 = vmul.f32 %v892, %v800
        %v897 = vmul.f32 %v893, %v801
        %v898 = vmul.f32 %v894, %v802
        %v899 = vmul.f32 %v895, %v803
        %v900 = vld [vmem:[#allocation5 + $0x2] sm:$0xff]
        %v901 = vld [vmem:[#allocation5 + $0xa] sm:$0xff]
        %v902 = vld [vmem:[#allocation5 + $0x12] sm:$0xff]
        %v903 = vld [vmem:[#allocation5 + $0x1a] sm:$0xff]
        %v904 = vmul.f32 %v896, %v900
        %v905 = vmul.f32 %v897, %v901
        %v906 = vmul.f32 %v898, %v902
        %v907 = vmul.f32 %v899, %v903
        %v908 = vadd.f32 %v864, %v904
        %v909 = vadd.f32 %v865, %v905
        %v910 = vadd.f32 %v866, %v906
        %v911 = vadd.f32 %v867, %v907
        %v912 = vld [vmem:[%s771 + $0x2] sm:$0xff]
        %v913 = vld [vmem:[%s771 + $0xa] sm:$0xff]
        %v914 = vld [vmem:[%s771 + $0x12] sm:$0xff]
        %v915 = vld [vmem:[%s771 + $0x1a] sm:$0xff]
        %v916 = vmul.f32 %v896, %v912
        %v917 = vmul.f32 %v897, %v913
        %v918 = vmul.f32 %v898, %v914
        %v919 = vmul.f32 %v899, %v915
        %v920 = vadd.f32 %v876, %v916
        %v921 = vadd.f32 %v877, %v917
        %v922 = vadd.f32 %v878, %v918
        %v923 = vadd.f32 %v879, %v919
        %v924 = vld [vmem:[%s794 + $0x2] sm:$0xff]
        %v925 = vld [vmem:[%s794 + $0xa] sm:$0xff]
        %v926 = vld [vmem:[%s794 + $0x12] sm:$0xff]
        %v927 = vld [vmem:[%s794 + $0x1a] sm:$0xff]
        %v928 = vmul.f32 %v896, %v924
        %v929 = vmul.f32 %v897, %v925
        %v930 = vmul.f32 %v898, %v926
        %v931 = vmul.f32 %v899, %v927
        %v932 = vadd.f32 %v888, %v928
        %v933 = vadd.f32 %v889, %v929
        %v934 = vadd.f32 %v890, %v930
        %v935 = vadd.f32 %v891, %v931
        %v936 = vld [vmem:[%s554] sm:$0xff]
        %v937 = vld [vmem:[%s554 + $0x8] sm:$0xff]
        %v938 = vld [vmem:[%s554 + $0x10] sm:$0xff]
        %v939 = vld [vmem:[%s554 + $0x18] sm:$0xff]
        %v940 = vmul.f32 %v936, %v800
        %v941 = vmul.f32 %v937, %v801
        %v942 = vmul.f32 %v938, %v802
        %v943 = vmul.f32 %v939, %v803
        %v944 = vld [vmem:[#allocation5 + $0x3] sm:$0xff]
        %v945 = vld [vmem:[#allocation5 + $0xb] sm:$0xff]
        %v946 = vld [vmem:[#allocation5 + $0x13] sm:$0xff]
        %v947 = vld [vmem:[#allocation5 + $0x1b] sm:$0xff]
        %v948 = vmul.f32 %v940, %v944
        %v949 = vmul.f32 %v941, %v945
        %v950 = vmul.f32 %v942, %v946
        %v951 = vmul.f32 %v943, %v947
        %v952 = vadd.f32 %v908, %v948
        %v953 = vadd.f32 %v909, %v949
        %v954 = vadd.f32 %v910, %v950
        %v955 = vadd.f32 %v911, %v951
        %v956 = vld [vmem:[%s771 + $0x3] sm:$0xff]
        %v957 = vld [vmem:[%s771 + $0xb] sm:$0xff]
        %v958 = vld [vmem:[%s771 + $0x13] sm:$0xff]
        %v959 = vld [vmem:[%s771 + $0x1b] sm:$0xff]
        %v960 = vmul.f32 %v940, %v956
        %v961 = vmul.f32 %v941, %v957
        %v962 = vmul.f32 %v942, %v958
        %v963 = vmul.f32 %v943, %v959
        %v964 = vadd.f32 %v920, %v960
        %v965 = vadd.f32 %v921, %v961
        %v966 = vadd.f32 %v922, %v962
        %v967 = vadd.f32 %v923, %v963
        %v968 = vld [vmem:[%s794 + $0x3] sm:$0xff]
        %v969 = vld [vmem:[%s794 + $0xb] sm:$0xff]
        %v970 = vld [vmem:[%s794 + $0x13] sm:$0xff]
        %v971 = vld [vmem:[%s794 + $0x1b] sm:$0xff]
        %v972 = vmul.f32 %v940, %v968
        %v973 = vmul.f32 %v941, %v969
        %v974 = vmul.f32 %v942, %v970
        %v975 = vmul.f32 %v943, %v971
        %v976 = vadd.f32 %v932, %v972
        %v977 = vadd.f32 %v933, %v973
        %v978 = vadd.f32 %v934, %v974
        %v979 = vadd.f32 %v935, %v975
        %v980 = vld [vmem:[%s592] sm:$0xff]
        %v981 = vld [vmem:[%s592 + $0x8] sm:$0xff]
        %v982 = vld [vmem:[%s592 + $0x10] sm:$0xff]
        %v983 = vld [vmem:[%s592 + $0x18] sm:$0xff]
        %v984 = vmul.f32 %v980, %v800
        %v985 = vmul.f32 %v981, %v801
        %v986 = vmul.f32 %v982, %v802
        %v987 = vmul.f32 %v983, %v803
        %v988 = vld [vmem:[#allocation5 + $0x4] sm:$0xff]
        %v989 = vld [vmem:[#allocation5 + $0xc] sm:$0xff]
        %v990 = vld [vmem:[#allocation5 + $0x14] sm:$0xff]
        %v991 = vld [vmem:[#allocation5 + $0x1c] sm:$0xff]
        %v992 = vmul.f32 %v984, %v988
        %v993 = vmul.f32 %v985, %v989
        %v994 = vmul.f32 %v986, %v990
        %v995 = vmul.f32 %v987, %v991
        %v996 = vadd.f32 %v952, %v992
        %v997 = vadd.f32 %v953, %v993
        %v998 = vadd.f32 %v954, %v994
        %v999 = vadd.f32 %v955, %v995
        %v1000 = vld [vmem:[%s771 + $0x4] sm:$0xff]
        %v1001 = vld [vmem:[%s771 + $0xc] sm:$0xff]
        %v1002 = vld [vmem:[%s771 + $0x14] sm:$0xff]
        %v1003 = vld [vmem:[%s771 + $0x1c] sm:$0xff]
        %v1004 = vmul.f32 %v984, %v1000
        %v1005 = vmul.f32 %v985, %v1001
        %v1006 = vmul.f32 %v986, %v1002
        %v1007 = vmul.f32 %v987, %v1003
        %v1008 = vadd.f32 %v964, %v1004
        %v1009 = vadd.f32 %v965, %v1005
        %v1010 = vadd.f32 %v966, %v1006
        %v1011 = vadd.f32 %v967, %v1007
        %v1012 = vld [vmem:[%s794 + $0x4] sm:$0xff]
        %v1013 = vld [vmem:[%s794 + $0xc] sm:$0xff]
        %v1014 = vld [vmem:[%s794 + $0x14] sm:$0xff]
        %v1015 = vld [vmem:[%s794 + $0x1c] sm:$0xff]
        %v1016 = vmul.f32 %v984, %v1012
        %v1017 = vmul.f32 %v985, %v1013
        %v1018 = vmul.f32 %v986, %v1014
        %v1019 = vmul.f32 %v987, %v1015
        %v1020 = vadd.f32 %v976, %v1016
        %v1021 = vadd.f32 %v977, %v1017
        %v1022 = vadd.f32 %v978, %v1018
        %v1023 = vadd.f32 %v979, %v1019
        %v1024 = vld [vmem:[%s634] sm:$0xff]
        %v1025 = vld [vmem:[%s634 + $0x8] sm:$0xff]
        %v1026 = vld [vmem:[%s634 + $0x10] sm:$0xff]
        %v1027 = vld [vmem:[%s634 + $0x18] sm:$0xff]
        %v1028 = vmul.f32 %v1024, %v800
        %v1029 = vmul.f32 %v1025, %v801
        %v1030 = vmul.f32 %v1026, %v802
        %v1031 = vmul.f32 %v1027, %v803
        %v1032 = vld [vmem:[#allocation5 + $0x5] sm:$0xff]
        %v1033 = vld [vmem:[#allocation5 + $0xd] sm:$0xff]
        %v1034 = vld [vmem:[#allocation5 + $0x15] sm:$0xff]
        %v1035 = vld [vmem:[#allocation5 + $0x1d] sm:$0xff]
        %v1036 = vmul.f32 %v1028, %v1032
        %v1037 = vmul.f32 %v1029, %v1033
        %v1038 = vmul.f32 %v1030, %v1034
        %v1039 = vmul.f32 %v1031, %v1035
        %v1040 = vadd.f32 %v996, %v1036
        %v1041 = vadd.f32 %v997, %v1037
        %v1042 = vadd.f32 %v998, %v1038
        %v1043 = vadd.f32 %v999, %v1039
        %v1044 = vld [vmem:[%s771 + $0x5] sm:$0xff]
        %v1045 = vld [vmem:[%s771 + $0xd] sm:$0xff]
        %v1046 = vld [vmem:[%s771 + $0x15] sm:$0xff]
        %v1047 = vld [vmem:[%s771 + $0x1d] sm:$0xff]
        %v1048 = vmul.f32 %v1028, %v1044
        %v1049 = vmul.f32 %v1029, %v1045
        %v1050 = vmul.f32 %v1030, %v1046
        %v1051 = vmul.f32 %v1031, %v1047
        %v1052 = vadd.f32 %v1008, %v1048
        %v1053 = vadd.f32 %v1009, %v1049
        %v1054 = vadd.f32 %v1010, %v1050
        %v1055 = vadd.f32 %v1011, %v1051
        %v1056 = vld [vmem:[%s794 + $0x5] sm:$0xff]
        %v1057 = vld [vmem:[%s794 + $0xd] sm:$0xff]
        %v1058 = vld [vmem:[%s794 + $0x15] sm:$0xff]
        %v1059 = vld [vmem:[%s794 + $0x1d] sm:$0xff]
        %v1060 = vmul.f32 %v1028, %v1056
        %v1061 = vmul.f32 %v1029, %v1057
        %v1062 = vmul.f32 %v1030, %v1058
        %v1063 = vmul.f32 %v1031, %v1059
        %v1064 = vadd.f32 %v1020, %v1060
        %v1065 = vadd.f32 %v1021, %v1061
        %v1066 = vadd.f32 %v1022, %v1062
        %v1067 = vadd.f32 %v1023, %v1063
        %v1068 = vld [vmem:[%s676] sm:$0xff]
        %v1069 = vld [vmem:[%s676 + $0x8] sm:$0xff]
        %v1070 = vld [vmem:[%s676 + $0x10] sm:$0xff]
        %v1071 = vld [vmem:[%s676 + $0x18] sm:$0xff]
        %v1072 = vmul.f32 %v1068, %v800
        %v1073 = vmul.f32 %v1069, %v801
        %v1074 = vmul.f32 %v1070, %v802
        %v1075 = vmul.f32 %v1071, %v803
        %v1076 = vld [vmem:[#allocation5 + $0x6] sm:$0xff]
        %v1077 = vld [vmem:[#allocation5 + $0xe] sm:$0xff]
        %v1078 = vld [vmem:[#allocation5 + $0x16] sm:$0xff]
        %v1079 = vld [vmem:[#allocation5 + $0x1e] sm:$0xff]
        %v1080 = vmul.f32 %v1072, %v1076
        %v1081 = vmul.f32 %v1073, %v1077
        %v1082 = vmul.f32 %v1074, %v1078
        %v1083 = vmul.f32 %v1075, %v1079
        %v1084 = vadd.f32 %v1040, %v1080
        %v1085 = vadd.f32 %v1041, %v1081
        %v1086 = vadd.f32 %v1042, %v1082
        %v1087 = vadd.f32 %v1043, %v1083
        %v1088 = vld [vmem:[%s771 + $0x6] sm:$0xff]
        %v1089 = vld [vmem:[%s771 + $0xe] sm:$0xff]
        %v1090 = vld [vmem:[%s771 + $0x16] sm:$0xff]
        %v1091 = vld [vmem:[%s771 + $0x1e] sm:$0xff]
        %v1092 = vmul.f32 %v1072, %v1088
        %v1093 = vmul.f32 %v1073, %v1089
        %v1094 = vmul.f32 %v1074, %v1090
        %v1095 = vmul.f32 %v1075, %v1091
        %v1096 = vadd.f32 %v1052, %v1092
        %v1097 = vadd.f32 %v1053, %v1093
        %v1098 = vadd.f32 %v1054, %v1094
        %v1099 = vadd.f32 %v1055, %v1095
        %v1100 = vld [vmem:[%s794 + $0x6] sm:$0xff]
        %v1101 = vld [vmem:[%s794 + $0xe] sm:$0xff]
        %v1102 = vld [vmem:[%s794 + $0x16] sm:$0xff]
        %v1103 = vld [vmem:[%s794 + $0x1e] sm:$0xff]
        %v1104 = vmul.f32 %v1072, %v1100
        %v1105 = vmul.f32 %v1073, %v1101
        %v1106 = vmul.f32 %v1074, %v1102
        %v1107 = vmul.f32 %v1075, %v1103
        %v1108 = vadd.f32 %v1064, %v1104
        %v1109 = vadd.f32 %v1065, %v1105
        %v1110 = vadd.f32 %v1066, %v1106
        %v1111 = vadd.f32 %v1067, %v1107
        %v1112 = vld [vmem:[%s733] sm:$0xff]
        %v1113 = vld [vmem:[%s733 + $0x8] sm:$0xff]
        %v1114 = vld [vmem:[%s733 + $0x10] sm:$0xff]
        %v1115 = vld [vmem:[%s733 + $0x18] sm:$0xff]
        %v1116 = vld [vmem:[%s733 + $0x20] sm:$0x3f]
        %1117 = vrot.lane.b32.xlu0 %v1112, 2
        %v1118 = vpop.permute.xlu0 %1117
        %1119 = vrot.lane.b32.xlu0 %v1113, 2
        %v1120 = vpop.permute.xlu0 %1119
        %1121 = vrot.lane.b32.xlu0 %v1114, 2
        %v1122 = vpop.permute.xlu0 %1121
        %1123 = vrot.lane.b32.xlu0 %v1115, 2
        %v1124 = vpop.permute.xlu0 %1123
        %1125 = vrot.lane.b32.xlu0 %v1116, 2
        %v1126 = vpop.permute.xlu0 %1125
        %1127 = vst [vmem:[#allocation5] sm:$0xff] %v1118
        %1128 = vst [vmem:[#allocation5 + $0x8] sm:$0xff] %v1120
        %1129 = vst [vmem:[#allocation5 + $0x10] sm:$0xff] %v1122
        %1130 = vst [vmem:[#allocation5 + $0x18] sm:$0xff] %v1124
        %1131 = vst [vmem:[#allocation5 + $0x20] sm:$0x3f] %v1126
        %v1132 = vld [vmem:[%s755] sm:$0xff]
        %v1133 = vld [vmem:[%s755 + $0x8] sm:$0xff]
        %v1134 = vld [vmem:[%s755 + $0x10] sm:$0xff]
        %v1135 = vld [vmem:[%s755 + $0x18] sm:$0xff]
        %v1136 = vld [vmem:[%s755 + $0x20] sm:$0x3f]
        %1137 = vrot.lane.b32.xlu0 %v1132, 2
        %v1138 = vpop.permute.xlu0 %1137
        %1139 = vrot.lane.b32.xlu0 %v1133, 2
        %v1140 = vpop.permute.xlu0 %1139
        %1141 = vrot.lane.b32.xlu0 %v1134, 2
        %v1142 = vpop.permute.xlu0 %1141
        %1143 = vrot.lane.b32.xlu0 %v1135, 2
        %v1144 = vpop.permute.xlu0 %1143
        %1145 = vrot.lane.b32.xlu0 %v1136, 2
        %v1146 = vpop.permute.xlu0 %1145
        %1147 = vst [vmem:[%s771] sm:$0xff] %v1138
        %1148 = vst [vmem:[%s771 + $0x8] sm:$0xff] %v1140
        %1149 = vst [vmem:[%s771 + $0x10] sm:$0xff] %v1142
        %1150 = vst [vmem:[%s771 + $0x18] sm:$0xff] %v1144
        %1151 = vst [vmem:[%s771 + $0x20] sm:$0x3f] %v1146
        %v1152 = vld [vmem:[%s778] sm:$0xff]
        %v1153 = vld [vmem:[%s778 + $0x8] sm:$0xff]
        %v1154 = vld [vmem:[%s778 + $0x10] sm:$0xff]
        %v1155 = vld [vmem:[%s778 + $0x18] sm:$0xff]
        %v1156 = vld [vmem:[%s778 + $0x20] sm:$0x3f]
        %1157 = vrot.lane.b32.xlu0 %v1152, 2
        %v1158 = vpop.permute.xlu0 %1157
        %1159 = vrot.lane.b32.xlu0 %v1153, 2
        %v1160 = vpop.permute.xlu0 %1159
        %1161 = vrot.lane.b32.xlu0 %v1154, 2
        %v1162 = vpop.permute.xlu0 %1161
        %1163 = vrot.lane.b32.xlu0 %v1155, 2
        %v1164 = vpop.permute.xlu0 %1163
        %1165 = vrot.lane.b32.xlu0 %v1156, 2
        %v1166 = vpop.permute.xlu0 %1165
        %1167 = vst [vmem:[%s794] sm:$0xff] %v1158
        %1168 = vst [vmem:[%s794 + $0x8] sm:$0xff] %v1160
        %1169 = vst [vmem:[%s794 + $0x10] sm:$0xff] %v1162
        %1170 = vst [vmem:[%s794 + $0x18] sm:$0xff] %v1164
        %1171 = vst [vmem:[%s794 + $0x20] sm:$0x3f] %v1166
        %v1172 = vld [vmem:[%s495] sm:$0xff]
        %v1173 = vld [vmem:[%s495 + $0x8] sm:$0xff]
        %v1174 = vld [vmem:[%s495 + $0x10] sm:$0xff]
        %v1175 = vld [vmem:[%s495 + $0x18] sm:$0xff]
        %v1176 = vld [vmem:[#allocation2] sm:$0xff]
        %v1177 = vld [vmem:[#allocation2 + $0x8] sm:$0xff]
        %v1178 = vld [vmem:[#allocation2 + $0x10] sm:$0xff]
        %v1179 = vld [vmem:[#allocation2 + $0x18] sm:$0xff]
        %v1180 = vmul.f32 %v1176, %v1172
        %v1181 = vmul.f32 %v1177, %v1173
        %v1182 = vmul.f32 %v1178, %v1174
        %v1183 = vmul.f32 %v1179, %v1175
        %v1184 = vld [vmem:[#allocation5] sm:$0xff]
        %v1185 = vld [vmem:[#allocation5 + $0x8] sm:$0xff]
        %v1186 = vld [vmem:[#allocation5 + $0x10] sm:$0xff]
        %v1187 = vld [vmem:[#allocation5 + $0x18] sm:$0xff]
        %v1188 = vmul.f32 %v1180, %v1184
        %v1189 = vmul.f32 %v1181, %v1185
        %v1190 = vmul.f32 %v1182, %v1186
        %v1191 = vmul.f32 %v1183, %v1187
        %v1192 = vadd.f32 %v1084, %v1188
        %v1193 = vadd.f32 %v1085, %v1189
        %v1194 = vadd.f32 %v1086, %v1190
        %v1195 = vadd.f32 %v1087, %v1191
        %v1196 = vld [vmem:[%s771] sm:$0xff]
        %v1197 = vld [vmem:[%s771 + $0x8] sm:$0xff]
        %v1198 = vld [vmem:[%s771 + $0x10] sm:$0xff]
        %v1199 = vld [vmem:[%s771 + $0x18] sm:$0xff]
        %v1200 = vmul.f32 %v1180, %v1196
        %v1201 = vmul.f32 %v1181, %v1197
        %v1202 = vmul.f32 %v1182, %v1198
        %v1203 = vmul.f32 %v1183, %v1199
        %v1204 = vadd.f32 %v1096, %v1200
        %v1205 = vadd.f32 %v1097, %v1201
        %v1206 = vadd.f32 %v1098, %v1202
        %v1207 = vadd.f32 %v1099, %v1203
        %v1208 = vld [vmem:[%s794] sm:$0xff]
        %v1209 = vld [vmem:[%s794 + $0x8] sm:$0xff]
        %v1210 = vld [vmem:[%s794 + $0x10] sm:$0xff]
        %v1211 = vld [vmem:[%s794 + $0x18] sm:$0xff]
        %v1212 = vmul.f32 %v1180, %v1208
        %v1213 = vmul.f32 %v1181, %v1209
        %v1214 = vmul.f32 %v1182, %v1210
        %v1215 = vmul.f32 %v1183, %v1211
        %v1216 = vadd.f32 %v1108, %v1212
        %v1217 = vadd.f32 %v1109, %v1213
        %v1218 = vadd.f32 %v1110, %v1214
        %v1219 = vadd.f32 %v1111, %v1215
        %v1220 = vld [vmem:[%s474] sm:$0xff]
        %v1221 = vld [vmem:[%s474 + $0x8] sm:$0xff]
        %v1222 = vld [vmem:[%s474 + $0x10] sm:$0xff]
        %v1223 = vld [vmem:[%s474 + $0x18] sm:$0xff]
        %v1224 = vmul.f32 %v1220, %v1172
        %v1225 = vmul.f32 %v1221, %v1173
        %v1226 = vmul.f32 %v1222, %v1174
        %v1227 = vmul.f32 %v1223, %v1175
        %v1228 = vld [vmem:[#allocation5 + $0x1] sm:$0xff]
        %v1229 = vld [vmem:[#allocation5 + $0x9] sm:$0xff]
        %v1230 = vld [vmem:[#allocation5 + $0x11] sm:$0xff]
        %v1231 = vld [vmem:[#allocation5 + $0x19] sm:$0xff]
        %v1232 = vmul.f32 %v1224, %v1228
        %v1233 = vmul.f32 %v1225, %v1229
        %v1234 = vmul.f32 %v1226, %v1230
        %v1235 = vmul.f32 %v1227, %v1231
        %v1236 = vadd.f32 %v1192, %v1232
        %v1237 = vadd.f32 %v1193, %v1233
        %v1238 = vadd.f32 %v1194, %v1234
        %v1239 = vadd.f32 %v1195, %v1235
        %v1240 = vld [vmem:[%s771 + $0x1] sm:$0xff]
        %v1241 = vld [vmem:[%s771 + $0x9] sm:$0xff]
        %v1242 = vld [vmem:[%s771 + $0x11] sm:$0xff]
        %v1243 = vld [vmem:[%s771 + $0x19] sm:$0xff]
        %v1244 = vmul.f32 %v1224, %v1240
        %v1245 = vmul.f32 %v1225, %v1241
        %v1246 = vmul.f32 %v1226, %v1242
        %v1247 = vmul.f32 %v1227, %v1243
        %v1248 = vadd.f32 %v1204, %v1244
        %v1249 = vadd.f32 %v1205, %v1245
        %v1250 = vadd.f32 %v1206, %v1246
        %v1251 = vadd.f32 %v1207, %v1247
        %v1252 = vld [vmem:[%s794 + $0x1] sm:$0xff]
        %v1253 = vld [vmem:[%s794 + $0x9] sm:$0xff]
        %v1254 = vld [vmem:[%s794 + $0x11] sm:$0xff]
        %v1255 = vld [vmem:[%s794 + $0x19] sm:$0xff]
        %v1256 = vmul.f32 %v1224, %v1252
        %v1257 = vmul.f32 %v1225, %v1253
        %v1258 = vmul.f32 %v1226, %v1254
        %v1259 = vmul.f32 %v1227, %v1255
        %v1260 = vadd.f32 %v1216, %v1256
        %v1261 = vadd.f32 %v1217, %v1257
        %v1262 = vadd.f32 %v1218, %v1258
        %v1263 = vadd.f32 %v1219, %v1259
        %v1264 = vld [vmem:[%s516] sm:$0xff]
        %v1265 = vld [vmem:[%s516 + $0x8] sm:$0xff]
        %v1266 = vld [vmem:[%s516 + $0x10] sm:$0xff]
        %v1267 = vld [vmem:[%s516 + $0x18] sm:$0xff]
        %v1268 = vmul.f32 %v1264, %v1172
        %v1269 = vmul.f32 %v1265, %v1173
        %v1270 = vmul.f32 %v1266, %v1174
        %v1271 = vmul.f32 %v1267, %v1175
        %v1272 = vld [vmem:[#allocation5 + $0x2] sm:$0xff]
        %v1273 = vld [vmem:[#allocation5 + $0xa] sm:$0xff]
        %v1274 = vld [vmem:[#allocation5 + $0x12] sm:$0xff]
        %v1275 = vld [vmem:[#allocation5 + $0x1a] sm:$0xff]
        %v1276 = vmul.f32 %v1268, %v1272
        %v1277 = vmul.f32 %v1269, %v1273
        %v1278 = vmul.f32 %v1270, %v1274
        %v1279 = vmul.f32 %v1271, %v1275
        %v1280 = vadd.f32 %v1236, %v1276
        %v1281 = vadd.f32 %v1237, %v1277
        %v1282 = vadd.f32 %v1238, %v1278
        %v1283 = vadd.f32 %v1239, %v1279
        %v1284 = vld [vmem:[%s771 + $0x2] sm:$0xff]
        %v1285 = vld [vmem:[%s771 + $0xa] sm:$0xff]
        %v1286 = vld [vmem:[%s771 + $0x12] sm:$0xff]
        %v1287 = vld [vmem:[%s771 + $0x1a] sm:$0xff]
        %v1288 = vmul.f32 %v1268, %v1284
        %v1289 = vmul.f32 %v1269, %v1285
        %v1290 = vmul.f32 %v1270, %v1286
        %v1291 = vmul.f32 %v1271, %v1287
        %v1292 = vadd.f32 %v1248, %v1288
        %v1293 = vadd.f32 %v1249, %v1289
        %v1294 = vadd.f32 %v1250, %v1290
        %v1295 = vadd.f32 %v1251, %v1291
        %v1296 = vld [vmem:[%s794 + $0x2] sm:$0xff]
        %v1297 = vld [vmem:[%s794 + $0xa] sm:$0xff]
        %v1298 = vld [vmem:[%s794 + $0x12] sm:$0xff]
        %v1299 = vld [vmem:[%s794 + $0x1a] sm:$0xff]
        %v1300 = vmul.f32 %v1268, %v1296
        %v1301 = vmul.f32 %v1269, %v1297
        %v1302 = vmul.f32 %v1270, %v1298
        %v1303 = vmul.f32 %v1271, %v1299
        %v1304 = vadd.f32 %v1260, %v1300
        %v1305 = vadd.f32 %v1261, %v1301
        %v1306 = vadd.f32 %v1262, %v1302
        %v1307 = vadd.f32 %v1263, %v1303
        %v1308 = vld [vmem:[%s554] sm:$0xff]
        %v1309 = vld [vmem:[%s554 + $0x8] sm:$0xff]
        %v1310 = vld [vmem:[%s554 + $0x10] sm:$0xff]
        %v1311 = vld [vmem:[%s554 + $0x18] sm:$0xff]
        %v1312 = vmul.f32 %v1308, %v1172
        %v1313 = vmul.f32 %v1309, %v1173
        %v1314 = vmul.f32 %v1310, %v1174
        %v1315 = vmul.f32 %v1311, %v1175
        %v1316 = vld [vmem:[#allocation5 + $0x3] sm:$0xff]
        %v1317 = vld [vmem:[#allocation5 + $0xb] sm:$0xff]
        %v1318 = vld [vmem:[#allocation5 + $0x13] sm:$0xff]
        %v1319 = vld [vmem:[#allocation5 + $0x1b] sm:$0xff]
        %v1320 = vmul.f32 %v1312, %v1316
        %v1321 = vmul.f32 %v1313, %v1317
        %v1322 = vmul.f32 %v1314, %v1318
        %v1323 = vmul.f32 %v1315, %v1319
        %v1324 = vadd.f32 %v1280, %v1320
        %v1325 = vadd.f32 %v1281, %v1321
        %v1326 = vadd.f32 %v1282, %v1322
        %v1327 = vadd.f32 %v1283, %v1323
        %v1328 = vld [vmem:[%s771 + $0x3] sm:$0xff]
        %v1329 = vld [vmem:[%s771 + $0xb] sm:$0xff]
        %v1330 = vld [vmem:[%s771 + $0x13] sm:$0xff]
        %v1331 = vld [vmem:[%s771 + $0x1b] sm:$0xff]
        %v1332 = vmul.f32 %v1312, %v1328
        %v1333 = vmul.f32 %v1313, %v1329
        %v1334 = vmul.f32 %v1314, %v1330
        %v1335 = vmul.f32 %v1315, %v1331
        %v1336 = vadd.f32 %v1292, %v1332
        %v1337 = vadd.f32 %v1293, %v1333
        %v1338 = vadd.f32 %v1294, %v1334
        %v1339 = vadd.f32 %v1295, %v1335
        %v1340 = vld [vmem:[%s794 + $0x3] sm:$0xff]
        %v1341 = vld [vmem:[%s794 + $0xb] sm:$0xff]
        %v1342 = vld [vmem:[%s794 + $0x13] sm:$0xff]
        %v1343 = vld [vmem:[%s794 + $0x1b] sm:$0xff]
        %v1344 = vmul.f32 %v1312, %v1340
        %v1345 = vmul.f32 %v1313, %v1341
        %v1346 = vmul.f32 %v1314, %v1342
        %v1347 = vmul.f32 %v1315, %v1343
        %v1348 = vadd.f32 %v1304, %v1344
        %v1349 = vadd.f32 %v1305, %v1345
        %v1350 = vadd.f32 %v1306, %v1346
        %v1351 = vadd.f32 %v1307, %v1347
        %v1352 = vld [vmem:[%s592] sm:$0xff]
        %v1353 = vld [vmem:[%s592 + $0x8] sm:$0xff]
        %v1354 = vld [vmem:[%s592 + $0x10] sm:$0xff]
        %v1355 = vld [vmem:[%s592 + $0x18] sm:$0xff]
        %v1356 = vmul.f32 %v1352, %v1172
        %v1357 = vmul.f32 %v1353, %v1173
        %v1358 = vmul.f32 %v1354, %v1174
        %v1359 = vmul.f32 %v1355, %v1175
        %v1360 = vld [vmem:[#allocation5 + $0x4] sm:$0xff]
        %v1361 = vld [vmem:[#allocation5 + $0xc] sm:$0xff]
        %v1362 = vld [vmem:[#allocation5 + $0x14] sm:$0xff]
        %v1363 = vld [vmem:[#allocation5 + $0x1c] sm:$0xff]
        %v1364 = vmul.f32 %v1356, %v1360
        %v1365 = vmul.f32 %v1357, %v1361
        %v1366 = vmul.f32 %v1358, %v1362
        %v1367 = vmul.f32 %v1359, %v1363
        %v1368 = vadd.f32 %v1324, %v1364
        %v1369 = vadd.f32 %v1325, %v1365
        %v1370 = vadd.f32 %v1326, %v1366
        %v1371 = vadd.f32 %v1327, %v1367
        %v1372 = vld [vmem:[%s771 + $0x4] sm:$0xff]
        %v1373 = vld [vmem:[%s771 + $0xc] sm:$0xff]
        %v1374 = vld [vmem:[%s771 + $0x14] sm:$0xff]
        %v1375 = vld [vmem:[%s771 + $0x1c] sm:$0xff]
        %v1376 = vmul.f32 %v1356, %v1372
        %v1377 = vmul.f32 %v1357, %v1373
        %v1378 = vmul.f32 %v1358, %v1374
        %v1379 = vmul.f32 %v1359, %v1375
        %v1380 = vadd.f32 %v1336, %v1376
        %v1381 = vadd.f32 %v1337, %v1377
        %v1382 = vadd.f32 %v1338, %v1378
        %v1383 = vadd.f32 %v1339, %v1379
        %v1384 = vld [vmem:[%s794 + $0x4] sm:$0xff]
        %v1385 = vld [vmem:[%s794 + $0xc] sm:$0xff]
        %v1386 = vld [vmem:[%s794 + $0x14] sm:$0xff]
        %v1387 = vld [vmem:[%s794 + $0x1c] sm:$0xff]
        %v1388 = vmul.f32 %v1356, %v1384
        %v1389 = vmul.f32 %v1357, %v1385
        %v1390 = vmul.f32 %v1358, %v1386
        %v1391 = vmul.f32 %v1359, %v1387
        %v1392 = vadd.f32 %v1348, %v1388
        %v1393 = vadd.f32 %v1349, %v1389
        %v1394 = vadd.f32 %v1350, %v1390
        %v1395 = vadd.f32 %v1351, %v1391
        %v1396 = vld [vmem:[%s634] sm:$0xff]
        %v1397 = vld [vmem:[%s634 + $0x8] sm:$0xff]
        %v1398 = vld [vmem:[%s634 + $0x10] sm:$0xff]
        %v1399 = vld [vmem:[%s634 + $0x18] sm:$0xff]
        %v1400 = vmul.f32 %v1396, %v1172
        %v1401 = vmul.f32 %v1397, %v1173
        %v1402 = vmul.f32 %v1398, %v1174
        %v1403 = vmul.f32 %v1399, %v1175
        %v1404 = vld [vmem:[#allocation5 + $0x5] sm:$0xff]
        %v1405 = vld [vmem:[#allocation5 + $0xd] sm:$0xff]
        %v1406 = vld [vmem:[#allocation5 + $0x15] sm:$0xff]
        %v1407 = vld [vmem:[#allocation5 + $0x1d] sm:$0xff]
        %v1408 = vmul.f32 %v1400, %v1404
        %v1409 = vmul.f32 %v1401, %v1405
        %v1410 = vmul.f32 %v1402, %v1406
        %v1411 = vmul.f32 %v1403, %v1407
        %v1412 = vadd.f32 %v1368, %v1408
        %v1413 = vadd.f32 %v1369, %v1409
        %v1414 = vadd.f32 %v1370, %v1410
        %v1415 = vadd.f32 %v1371, %v1411
        %v1416 = vld [vmem:[%s771 + $0x5] sm:$0xff]
        %v1417 = vld [vmem:[%s771 + $0xd] sm:$0xff]
        %v1418 = vld [vmem:[%s771 + $0x15] sm:$0xff]
        %v1419 = vld [vmem:[%s771 + $0x1d] sm:$0xff]
        %v1420 = vmul.f32 %v1400, %v1416
        %v1421 = vmul.f32 %v1401, %v1417
        %v1422 = vmul.f32 %v1402, %v1418
        %v1423 = vmul.f32 %v1403, %v1419
        %v1424 = vadd.f32 %v1380, %v1420
        %v1425 = vadd.f32 %v1381, %v1421
        %v1426 = vadd.f32 %v1382, %v1422
        %v1427 = vadd.f32 %v1383, %v1423
        %v1428 = vld [vmem:[%s794 + $0x5] sm:$0xff]
        %v1429 = vld [vmem:[%s794 + $0xd] sm:$0xff]
        %v1430 = vld [vmem:[%s794 + $0x15] sm:$0xff]
        %v1431 = vld [vmem:[%s794 + $0x1d] sm:$0xff]
        %v1432 = vmul.f32 %v1400, %v1428
        %v1433 = vmul.f32 %v1401, %v1429
        %v1434 = vmul.f32 %v1402, %v1430
        %v1435 = vmul.f32 %v1403, %v1431
        %v1436 = vadd.f32 %v1392, %v1432
        %v1437 = vadd.f32 %v1393, %v1433
        %v1438 = vadd.f32 %v1394, %v1434
        %v1439 = vadd.f32 %v1395, %v1435
        %v1440 = vld [vmem:[%s676] sm:$0xff]
        %v1441 = vld [vmem:[%s676 + $0x8] sm:$0xff]
        %v1442 = vld [vmem:[%s676 + $0x10] sm:$0xff]
        %v1443 = vld [vmem:[%s676 + $0x18] sm:$0xff]
        %v1444 = vmul.f32 %v1440, %v1172
        %v1445 = vmul.f32 %v1441, %v1173
        %v1446 = vmul.f32 %v1442, %v1174
        %v1447 = vmul.f32 %v1443, %v1175
        %v1448 = vld [vmem:[#allocation5 + $0x6] sm:$0xff]
        %v1449 = vld [vmem:[#allocation5 + $0xe] sm:$0xff]
        %v1450 = vld [vmem:[#allocation5 + $0x16] sm:$0xff]
        %v1451 = vld [vmem:[#allocation5 + $0x1e] sm:$0xff]
        %v1452 = vmul.f32 %v1444, %v1448
        %v1453 = vmul.f32 %v1445, %v1449
        %v1454 = vmul.f32 %v1446, %v1450
        %v1455 = vmul.f32 %v1447, %v1451
        %v1456 = vadd.f32 %v1412, %v1452
        %v1457 = vadd.f32 %v1413, %v1453
        %v1458 = vadd.f32 %v1414, %v1454
        %v1459 = vadd.f32 %v1415, %v1455
        %v1460 = vld [vmem:[%s771 + $0x6] sm:$0xff]
        %v1461 = vld [vmem:[%s771 + $0xe] sm:$0xff]
        %v1462 = vld [vmem:[%s771 + $0x16] sm:$0xff]
        %v1463 = vld [vmem:[%s771 + $0x1e] sm:$0xff]
        %v1464 = vmul.f32 %v1444, %v1460
        %v1465 = vmul.f32 %v1445, %v1461
        %v1466 = vmul.f32 %v1446, %v1462
        %v1467 = vmul.f32 %v1447, %v1463
        %v1468 = vadd.f32 %v1424, %v1464
        %v1469 = vadd.f32 %v1425, %v1465
        %v1470 = vadd.f32 %v1426, %v1466
        %v1471 = vadd.f32 %v1427, %v1467
        %v1472 = vld [vmem:[%s794 + $0x6] sm:$0xff]
        %v1473 = vld [vmem:[%s794 + $0xe] sm:$0xff]
        %v1474 = vld [vmem:[%s794 + $0x16] sm:$0xff]
        %v1475 = vld [vmem:[%s794 + $0x1e] sm:$0xff]
        %v1476 = vmul.f32 %v1444, %v1472
        %v1477 = vmul.f32 %v1445, %v1473
        %v1478 = vmul.f32 %v1446, %v1474
        %v1479 = vmul.f32 %v1447, %v1475
        %v1480 = vadd.f32 %v1436, %v1476
        %v1481 = vadd.f32 %v1437, %v1477
        %v1482 = vadd.f32 %v1438, %v1478
        %v1483 = vadd.f32 %v1439, %v1479
        %v1484 = vld [vmem:[%s733] sm:$0xff]
        %v1485 = vld [vmem:[%s733 + $0x8] sm:$0xff]
        %v1486 = vld [vmem:[%s733 + $0x10] sm:$0xff]
        %v1487 = vld [vmem:[%s733 + $0x18] sm:$0xff]
        %v1488 = vld [vmem:[%s733 + $0x20] sm:$0x3f]
        %1489 = vrot.lane.b32.xlu0 %v1484, 1
        %v1490 = vpop.permute.xlu0 %1489
        %1491 = vrot.lane.b32.xlu0 %v1485, 1
        %v1492 = vpop.permute.xlu0 %1491
        %1493 = vrot.lane.b32.xlu0 %v1486, 1
        %v1494 = vpop.permute.xlu0 %1493
        %1495 = vrot.lane.b32.xlu0 %v1487, 1
        %v1496 = vpop.permute.xlu0 %1495
        %1497 = vrot.lane.b32.xlu0 %v1488, 1
        %v1498 = vpop.permute.xlu0 %1497
        %1499 = vst [vmem:[#allocation5] sm:$0xff] %v1490
        %1500 = vst [vmem:[#allocation5 + $0x8] sm:$0xff] %v1492
        %1501 = vst [vmem:[#allocation5 + $0x10] sm:$0xff] %v1494
        %1502 = vst [vmem:[#allocation5 + $0x18] sm:$0xff] %v1496
        %1503 = vst [vmem:[#allocation5 + $0x20] sm:$0x3f] %v1498
        %v1504 = vld [vmem:[%s755] sm:$0xff]
        %v1505 = vld [vmem:[%s755 + $0x8] sm:$0xff]
        %v1506 = vld [vmem:[%s755 + $0x10] sm:$0xff]
        %v1507 = vld [vmem:[%s755 + $0x18] sm:$0xff]
        %v1508 = vld [vmem:[%s755 + $0x20] sm:$0x3f]
        %1509 = vrot.lane.b32.xlu0 %v1504, 1
        %v1510 = vpop.permute.xlu0 %1509
        %1511 = vrot.lane.b32.xlu0 %v1505, 1
        %v1512 = vpop.permute.xlu0 %1511
        %1513 = vrot.lane.b32.xlu0 %v1506, 1
        %v1514 = vpop.permute.xlu0 %1513
        %1515 = vrot.lane.b32.xlu0 %v1507, 1
        %v1516 = vpop.permute.xlu0 %1515
        %1517 = vrot.lane.b32.xlu0 %v1508, 1
        %v1518 = vpop.permute.xlu0 %1517
        %1519 = vst [vmem:[%s771] sm:$0xff] %v1510
        %1520 = vst [vmem:[%s771 + $0x8] sm:$0xff] %v1512
        %1521 = vst [vmem:[%s771 + $0x10] sm:$0xff] %v1514
        %1522 = vst [vmem:[%s771 + $0x18] sm:$0xff] %v1516
        %1523 = vst [vmem:[%s771 + $0x20] sm:$0x3f] %v1518
        %v1524 = vld [vmem:[%s778] sm:$0xff]
        %v1525 = vld [vmem:[%s778 + $0x8] sm:$0xff]
        %v1526 = vld [vmem:[%s778 + $0x10] sm:$0xff]
        %v1527 = vld [vmem:[%s778 + $0x18] sm:$0xff]
        %v1528 = vld [vmem:[%s778 + $0x20] sm:$0x3f]
        %1529 = vrot.lane.b32.xlu0 %v1524, 1
        %v1530 = vpop.permute.xlu0 %1529
        %1531 = vrot.lane.b32.xlu0 %v1525, 1
        %v1532 = vpop.permute.xlu0 %1531
        %1533 = vrot.lane.b32.xlu0 %v1526, 1
        %v1534 = vpop.permute.xlu0 %1533
        %1535 = vrot.lane.b32.xlu0 %v1527, 1
        %v1536 = vpop.permute.xlu0 %1535
        %1537 = vrot.lane.b32.xlu0 %v1528, 1
        %v1538 = vpop.permute.xlu0 %1537
        %1539 = vst [vmem:[%s794] sm:$0xff] %v1530
        %1540 = vst [vmem:[%s794 + $0x8] sm:$0xff] %v1532
        %1541 = vst [vmem:[%s794 + $0x10] sm:$0xff] %v1534
        %1542 = vst [vmem:[%s794 + $0x18] sm:$0xff] %v1536
        %1543 = vst [vmem:[%s794 + $0x20] sm:$0x3f] %v1538
        %v1544 = vld [vmem:[%s537] sm:$0xff]
        %v1545 = vld [vmem:[%s537 + $0x8] sm:$0xff]
        %v1546 = vld [vmem:[%s537 + $0x10] sm:$0xff]
        %v1547 = vld [vmem:[%s537 + $0x18] sm:$0xff]
        %v1548 = vld [vmem:[#allocation2] sm:$0xff]
        %v1549 = vld [vmem:[#allocation2 + $0x8] sm:$0xff]
        %v1550 = vld [vmem:[#allocation2 + $0x10] sm:$0xff]
        %v1551 = vld [vmem:[#allocation2 + $0x18] sm:$0xff]
        %v1552 = vmul.f32 %v1548, %v1544
        %v1553 = vmul.f32 %v1549, %v1545
        %v1554 = vmul.f32 %v1550, %v1546
        %v1555 = vmul.f32 %v1551, %v1547
        %v1556 = vld [vmem:[#allocation5] sm:$0xff]
        %v1557 = vld [vmem:[#allocation5 + $0x8] sm:$0xff]
        %v1558 = vld [vmem:[#allocation5 + $0x10] sm:$0xff]
        %v1559 = vld [vmem:[#allocation5 + $0x18] sm:$0xff]
        %v1560 = vmul.f32 %v1552, %v1556
        %v1561 = vmul.f32 %v1553, %v1557
        %v1562 = vmul.f32 %v1554, %v1558
        %v1563 = vmul.f32 %v1555, %v1559
        %v1564 = vadd.f32 %v1456, %v1560
        %v1565 = vadd.f32 %v1457, %v1561
        %v1566 = vadd.f32 %v1458, %v1562
        %v1567 = vadd.f32 %v1459, %v1563
        %v1568 = vld [vmem:[%s771] sm:$0xff]
        %v1569 = vld [vmem:[%s771 + $0x8] sm:$0xff]
        %v1570 = vld [vmem:[%s771 + $0x10] sm:$0xff]
        %v1571 = vld [vmem:[%s771 + $0x18] sm:$0xff]
        %v1572 = vmul.f32 %v1552, %v1568
        %v1573 = vmul.f32 %v1553, %v1569
        %v1574 = vmul.f32 %v1554, %v1570
        %v1575 = vmul.f32 %v1555, %v1571
        %v1576 = vadd.f32 %v1468, %v1572
        %v1577 = vadd.f32 %v1469, %v1573
        %v1578 = vadd.f32 %v1470, %v1574
        %v1579 = vadd.f32 %v1471, %v1575
        %v1580 = vld [vmem:[%s794] sm:$0xff]
        %v1581 = vld [vmem:[%s794 + $0x8] sm:$0xff]
        %v1582 = vld [vmem:[%s794 + $0x10] sm:$0xff]
        %v1583 = vld [vmem:[%s794 + $0x18] sm:$0xff]
        %v1584 = vmul.f32 %v1552, %v1580
        %v1585 = vmul.f32 %v1553, %v1581
        %v1586 = vmul.f32 %v1554, %v1582
        %v1587 = vmul.f32 %v1555, %v1583
        %v1588 = vadd.f32 %v1480, %v1584
        %v1589 = vadd.f32 %v1481, %v1585
        %v1590 = vadd.f32 %v1482, %v1586
        %v1591 = vadd.f32 %v1483, %v1587
        %v1592 = vld [vmem:[%s474] sm:$0xff]
        %v1593 = vld [vmem:[%s474 + $0x8] sm:$0xff]
        %v1594 = vld [vmem:[%s474 + $0x10] sm:$0xff]
        %v1595 = vld [vmem:[%s474 + $0x18] sm:$0xff]
        %v1596 = vmul.f32 %v1592, %v1544
        %v1597 = vmul.f32 %v1593, %v1545
        %v1598 = vmul.f32 %v1594, %v1546
        %v1599 = vmul.f32 %v1595, %v1547
        %v1600 = vld [vmem:[#allocation5 + $0x1] sm:$0xff]
        %v1601 = vld [vmem:[#allocation5 + $0x9] sm:$0xff]
        %v1602 = vld [vmem:[#allocation5 + $0x11] sm:$0xff]
        %v1603 = vld [vmem:[#allocation5 + $0x19] sm:$0xff]
        %v1604 = vmul.f32 %v1596, %v1600
        %v1605 = vmul.f32 %v1597, %v1601
        %v1606 = vmul.f32 %v1598, %v1602
        %v1607 = vmul.f32 %v1599, %v1603
        %v1608 = vadd.f32 %v1564, %v1604
        %v1609 = vadd.f32 %v1565, %v1605
        %v1610 = vadd.f32 %v1566, %v1606
        %v1611 = vadd.f32 %v1567, %v1607
        %v1612 = vld [vmem:[%s771 + $0x1] sm:$0xff]
        %v1613 = vld [vmem:[%s771 + $0x9] sm:$0xff]
        %v1614 = vld [vmem:[%s771 + $0x11] sm:$0xff]
        %v1615 = vld [vmem:[%s771 + $0x19] sm:$0xff]
        %v1616 = vmul.f32 %v1596, %v1612
        %v1617 = vmul.f32 %v1597, %v1613
        %v1618 = vmul.f32 %v1598, %v1614
        %v1619 = vmul.f32 %v1599, %v1615
        %v1620 = vadd.f32 %v1576, %v1616
        %v1621 = vadd.f32 %v1577, %v1617
        %v1622 = vadd.f32 %v1578, %v1618
        %v1623 = vadd.f32 %v1579, %v1619
        %v1624 = vld [vmem:[%s794 + $0x1] sm:$0xff]
        %v1625 = vld [vmem:[%s794 + $0x9] sm:$0xff]
        %v1626 = vld [vmem:[%s794 + $0x11] sm:$0xff]
        %v1627 = vld [vmem:[%s794 + $0x19] sm:$0xff]
        %v1628 = vmul.f32 %v1596, %v1624
        %v1629 = vmul.f32 %v1597, %v1625
        %v1630 = vmul.f32 %v1598, %v1626
        %v1631 = vmul.f32 %v1599, %v1627
        %v1632 = vadd.f32 %v1588, %v1628
        %v1633 = vadd.f32 %v1589, %v1629
        %v1634 = vadd.f32 %v1590, %v1630
        %v1635 = vadd.f32 %v1591, %v1631
        %v1636 = vld [vmem:[%s516] sm:$0xff]
        %v1637 = vld [vmem:[%s516 + $0x8] sm:$0xff]
        %v1638 = vld [vmem:[%s516 + $0x10] sm:$0xff]
        %v1639 = vld [vmem:[%s516 + $0x18] sm:$0xff]
        %v1640 = vmul.f32 %v1636, %v1544
        %v1641 = vmul.f32 %v1637, %v1545
        %v1642 = vmul.f32 %v1638, %v1546
        %v1643 = vmul.f32 %v1639, %v1547
        %v1644 = vld [vmem:[#allocation5 + $0x2] sm:$0xff]
        %v1645 = vld [vmem:[#allocation5 + $0xa] sm:$0xff]
        %v1646 = vld [vmem:[#allocation5 + $0x12] sm:$0xff]
        %v1647 = vld [vmem:[#allocation5 + $0x1a] sm:$0xff]
        %v1648 = vmul.f32 %v1640, %v1644
        %v1649 = vmul.f32 %v1641, %v1645
        %v1650 = vmul.f32 %v1642, %v1646
        %v1651 = vmul.f32 %v1643, %v1647
        %v1652 = vadd.f32 %v1608, %v1648
        %v1653 = vadd.f32 %v1609, %v1649
        %v1654 = vadd.f32 %v1610, %v1650
        %v1655 = vadd.f32 %v1611, %v1651
        %v1656 = vld [vmem:[%s771 + $0x2] sm:$0xff]
        %v1657 = vld [vmem:[%s771 + $0xa] sm:$0xff]
        %v1658 = vld [vmem:[%s771 + $0x12] sm:$0xff]
        %v1659 = vld [vmem:[%s771 + $0x1a] sm:$0xff]
        %v1660 = vmul.f32 %v1640, %v1656
        %v1661 = vmul.f32 %v1641, %v1657
        %v1662 = vmul.f32 %v1642, %v1658
        %v1663 = vmul.f32 %v1643, %v1659
        %v1664 = vadd.f32 %v1620, %v1660
        %v1665 = vadd.f32 %v1621, %v1661
        %v1666 = vadd.f32 %v1622, %v1662
        %v1667 = vadd.f32 %v1623, %v1663
        %v1668 = vld [vmem:[%s794 + $0x2] sm:$0xff]
        %v1669 = vld [vmem:[%s794 + $0xa] sm:$0xff]
        %v1670 = vld [vmem:[%s794 + $0x12] sm:$0xff]
        %v1671 = vld [vmem:[%s794 + $0x1a] sm:$0xff]
        %v1672 = vmul.f32 %v1640, %v1668
        %v1673 = vmul.f32 %v1641, %v1669
        %v1674 = vmul.f32 %v1642, %v1670
        %v1675 = vmul.f32 %v1643, %v1671
        %v1676 = vadd.f32 %v1632, %v1672
        %v1677 = vadd.f32 %v1633, %v1673
        %v1678 = vadd.f32 %v1634, %v1674
        %v1679 = vadd.f32 %v1635, %v1675
        %v1680 = vld [vmem:[%s554] sm:$0xff]
        %v1681 = vld [vmem:[%s554 + $0x8] sm:$0xff]
        %v1682 = vld [vmem:[%s554 + $0x10] sm:$0xff]
        %v1683 = vld [vmem:[%s554 + $0x18] sm:$0xff]
        %v1684 = vmul.f32 %v1680, %v1544
        %v1685 = vmul.f32 %v1681, %v1545
        %v1686 = vmul.f32 %v1682, %v1546
        %v1687 = vmul.f32 %v1683, %v1547
        %v1688 = vld [vmem:[#allocation5 + $0x3] sm:$0xff]
        %v1689 = vld [vmem:[#allocation5 + $0xb] sm:$0xff]
        %v1690 = vld [vmem:[#allocation5 + $0x13] sm:$0xff]
        %v1691 = vld [vmem:[#allocation5 + $0x1b] sm:$0xff]
        %v1692 = vmul.f32 %v1684, %v1688
        %v1693 = vmul.f32 %v1685, %v1689
        %v1694 = vmul.f32 %v1686, %v1690
        %v1695 = vmul.f32 %v1687, %v1691
        %v1696 = vadd.f32 %v1652, %v1692
        %v1697 = vadd.f32 %v1653, %v1693
        %v1698 = vadd.f32 %v1654, %v1694
        %v1699 = vadd.f32 %v1655, %v1695
        %v1700 = vld [vmem:[%s771 + $0x3] sm:$0xff]
        %v1701 = vld [vmem:[%s771 + $0xb] sm:$0xff]
        %v1702 = vld [vmem:[%s771 + $0x13] sm:$0xff]
        %v1703 = vld [vmem:[%s771 + $0x1b] sm:$0xff]
        %v1704 = vmul.f32 %v1684, %v1700
        %v1705 = vmul.f32 %v1685, %v1701
        %v1706 = vmul.f32 %v1686, %v1702
        %v1707 = vmul.f32 %v1687, %v1703
        %v1708 = vadd.f32 %v1664, %v1704
        %v1709 = vadd.f32 %v1665, %v1705
        %v1710 = vadd.f32 %v1666, %v1706
        %v1711 = vadd.f32 %v1667, %v1707
        %v1712 = vld [vmem:[%s794 + $0x3] sm:$0xff]
        %v1713 = vld [vmem:[%s794 + $0xb] sm:$0xff]
        %v1714 = vld [vmem:[%s794 + $0x13] sm:$0xff]
        %v1715 = vld [vmem:[%s794 + $0x1b] sm:$0xff]
        %v1716 = vmul.f32 %v1684, %v1712
        %v1717 = vmul.f32 %v1685, %v1713
        %v1718 = vmul.f32 %v1686, %v1714
        %v1719 = vmul.f32 %v1687, %v1715
        %v1720 = vadd.f32 %v1676, %v1716
        %v1721 = vadd.f32 %v1677, %v1717
        %v1722 = vadd.f32 %v1678, %v1718
        %v1723 = vadd.f32 %v1679, %v1719
        %v1724 = vld [vmem:[%s592] sm:$0xff]
        %v1725 = vld [vmem:[%s592 + $0x8] sm:$0xff]
        %v1726 = vld [vmem:[%s592 + $0x10] sm:$0xff]
        %v1727 = vld [vmem:[%s592 + $0x18] sm:$0xff]
        %v1728 = vmul.f32 %v1724, %v1544
        %v1729 = vmul.f32 %v1725, %v1545
        %v1730 = vmul.f32 %v1726, %v1546
        %v1731 = vmul.f32 %v1727, %v1547
        %v1732 = vld [vmem:[#allocation5 + $0x4] sm:$0xff]
        %v1733 = vld [vmem:[#allocation5 + $0xc] sm:$0xff]
        %v1734 = vld [vmem:[#allocation5 + $0x14] sm:$0xff]
        %v1735 = vld [vmem:[#allocation5 + $0x1c] sm:$0xff]
        %v1736 = vmul.f32 %v1728, %v1732
        %v1737 = vmul.f32 %v1729, %v1733
        %v1738 = vmul.f32 %v1730, %v1734
        %v1739 = vmul.f32 %v1731, %v1735
        %v1740 = vadd.f32 %v1696, %v1736
        %v1741 = vadd.f32 %v1697, %v1737
        %v1742 = vadd.f32 %v1698, %v1738
        %v1743 = vadd.f32 %v1699, %v1739
        %v1744 = vld [vmem:[%s771 + $0x4] sm:$0xff]
        %v1745 = vld [vmem:[%s771 + $0xc] sm:$0xff]
        %v1746 = vld [vmem:[%s771 + $0x14] sm:$0xff]
        %v1747 = vld [vmem:[%s771 + $0x1c] sm:$0xff]
        %v1748 = vmul.f32 %v1728, %v1744
        %v1749 = vmul.f32 %v1729, %v1745
        %v1750 = vmul.f32 %v1730, %v1746
        %v1751 = vmul.f32 %v1731, %v1747
        %v1752 = vadd.f32 %v1708, %v1748
        %v1753 = vadd.f32 %v1709, %v1749
        %v1754 = vadd.f32 %v1710, %v1750
        %v1755 = vadd.f32 %v1711, %v1751
        %v1756 = vld [vmem:[%s794 + $0x4] sm:$0xff]
        %v1757 = vld [vmem:[%s794 + $0xc] sm:$0xff]
        %v1758 = vld [vmem:[%s794 + $0x14] sm:$0xff]
        %v1759 = vld [vmem:[%s794 + $0x1c] sm:$0xff]
        %v1760 = vmul.f32 %v1728, %v1756
        %v1761 = vmul.f32 %v1729, %v1757
        %v1762 = vmul.f32 %v1730, %v1758
        %v1763 = vmul.f32 %v1731, %v1759
        %v1764 = vadd.f32 %v1720, %v1760
        %v1765 = vadd.f32 %v1721, %v1761
        %v1766 = vadd.f32 %v1722, %v1762
        %v1767 = vadd.f32 %v1723, %v1763
        %v1768 = vld [vmem:[%s634] sm:$0xff]
        %v1769 = vld [vmem:[%s634 + $0x8] sm:$0xff]
        %v1770 = vld [vmem:[%s634 + $0x10] sm:$0xff]
        %v1771 = vld [vmem:[%s634 + $0x18] sm:$0xff]
        %v1772 = vmul.f32 %v1768, %v1544
        %v1773 = vmul.f32 %v1769, %v1545
        %v1774 = vmul.f32 %v1770, %v1546
        %v1775 = vmul.f32 %v1771, %v1547
        %v1776 = vld [vmem:[#allocation5 + $0x5] sm:$0xff]
        %v1777 = vld [vmem:[#allocation5 + $0xd] sm:$0xff]
        %v1778 = vld [vmem:[#allocation5 + $0x15] sm:$0xff]
        %v1779 = vld [vmem:[#allocation5 + $0x1d] sm:$0xff]
        %v1780 = vmul.f32 %v1772, %v1776
        %v1781 = vmul.f32 %v1773, %v1777
        %v1782 = vmul.f32 %v1774, %v1778
        %v1783 = vmul.f32 %v1775, %v1779
        %v1784 = vadd.f32 %v1740, %v1780
        %v1785 = vadd.f32 %v1741, %v1781
        %v1786 = vadd.f32 %v1742, %v1782
        %v1787 = vadd.f32 %v1743, %v1783
        %v1788 = vld [vmem:[%s771 + $0x5] sm:$0xff]
        %v1789 = vld [vmem:[%s771 + $0xd] sm:$0xff]
        %v1790 = vld [vmem:[%s771 + $0x15] sm:$0xff]
        %v1791 = vld [vmem:[%s771 + $0x1d] sm:$0xff]
        %v1792 = vmul.f32 %v1772, %v1788
        %v1793 = vmul.f32 %v1773, %v1789
        %v1794 = vmul.f32 %v1774, %v1790
        %v1795 = vmul.f32 %v1775, %v1791
        %v1796 = vadd.f32 %v1752, %v1792
        %v1797 = vadd.f32 %v1753, %v1793
        %v1798 = vadd.f32 %v1754, %v1794
        %v1799 = vadd.f32 %v1755, %v1795
        %v1800 = vld [vmem:[%s794 + $0x5] sm:$0xff]
        %v1801 = vld [vmem:[%s794 + $0xd] sm:$0xff]
        %v1802 = vld [vmem:[%s794 + $0x15] sm:$0xff]
        %v1803 = vld [vmem:[%s794 + $0x1d] sm:$0xff]
        %v1804 = vmul.f32 %v1772, %v1800
        %v1805 = vmul.f32 %v1773, %v1801
        %v1806 = vmul.f32 %v1774, %v1802
        %v1807 = vmul.f32 %v1775, %v1803
        %v1808 = vadd.f32 %v1764, %v1804
        %v1809 = vadd.f32 %v1765, %v1805
        %v1810 = vadd.f32 %v1766, %v1806
        %v1811 = vadd.f32 %v1767, %v1807
        %v1812 = vld [vmem:[%s676] sm:$0xff]
        %v1813 = vld [vmem:[%s676 + $0x8] sm:$0xff]
        %v1814 = vld [vmem:[%s676 + $0x10] sm:$0xff]
        %v1815 = vld [vmem:[%s676 + $0x18] sm:$0xff]
        %v1816 = vmul.f32 %v1812, %v1544
        %v1817 = vmul.f32 %v1813, %v1545
        %v1818 = vmul.f32 %v1814, %v1546
        %v1819 = vmul.f32 %v1815, %v1547
        %v1820 = vld [vmem:[#allocation5 + $0x6] sm:$0xff]
        %v1821 = vld [vmem:[#allocation5 + $0xe] sm:$0xff]
        %v1822 = vld [vmem:[#allocation5 + $0x16] sm:$0xff]
        %v1823 = vld [vmem:[#allocation5 + $0x1e] sm:$0xff]
        %v1824 = vmul.f32 %v1816, %v1820
        %v1825 = vmul.f32 %v1817, %v1821
        %v1826 = vmul.f32 %v1818, %v1822
        %v1827 = vmul.f32 %v1819, %v1823
        %v1828 = vadd.f32 %v1784, %v1824
        %v1829 = vadd.f32 %v1785, %v1825
        %v1830 = vadd.f32 %v1786, %v1826
        %v1831 = vadd.f32 %v1787, %v1827
        %v1832 = vld [vmem:[%s771 + $0x6] sm:$0xff]
        %v1833 = vld [vmem:[%s771 + $0xe] sm:$0xff]
        %v1834 = vld [vmem:[%s771 + $0x16] sm:$0xff]
        %v1835 = vld [vmem:[%s771 + $0x1e] sm:$0xff]
        %v1836 = vmul.f32 %v1816, %v1832
        %v1837 = vmul.f32 %v1817, %v1833
        %v1838 = vmul.f32 %v1818, %v1834
        %v1839 = vmul.f32 %v1819, %v1835
        %v1840 = vadd.f32 %v1796, %v1836
        %v1841 = vadd.f32 %v1797, %v1837
        %v1842 = vadd.f32 %v1798, %v1838
        %v1843 = vadd.f32 %v1799, %v1839
        %v1844 = vld [vmem:[%s794 + $0x6] sm:$0xff]
        %v1845 = vld [vmem:[%s794 + $0xe] sm:$0xff]
        %v1846 = vld [vmem:[%s794 + $0x16] sm:$0xff]
        %v1847 = vld [vmem:[%s794 + $0x1e] sm:$0xff]
        %v1848 = vmul.f32 %v1816, %v1844
        %v1849 = vmul.f32 %v1817, %v1845
        %v1850 = vmul.f32 %v1818, %v1846
        %v1851 = vmul.f32 %v1819, %v1847
        %v1852 = vadd.f32 %v1808, %v1848
        %v1853 = vadd.f32 %v1809, %v1849
        %v1854 = vadd.f32 %v1810, %v1850
        %v1855 = vadd.f32 %v1811, %v1851
        %v1856 = vld [vmem:[%s571] sm:$0xff]
        %v1857 = vld [vmem:[%s571 + $0x8] sm:$0xff]
        %v1858 = vld [vmem:[%s571 + $0x10] sm:$0xff]
        %v1859 = vld [vmem:[%s571 + $0x18] sm:$0xff]
        %v1860 = vmul.f32 %v1548, %v1856
        %v1861 = vmul.f32 %v1549, %v1857
        %v1862 = vmul.f32 %v1550, %v1858
        %v1863 = vmul.f32 %v1551, %v1859
        %v1864 = vld [vmem:[%s733] sm:$0xff]
        %v1865 = vld [vmem:[%s733 + $0x8] sm:$0xff]
        %v1866 = vld [vmem:[%s733 + $0x10] sm:$0xff]
        %v1867 = vld [vmem:[%s733 + $0x18] sm:$0xff]
        %v1868 = vmul.f32 %v1860, %v1864
        %v1869 = vmul.f32 %v1861, %v1865
        %v1870 = vmul.f32 %v1862, %v1866
        %v1871 = vmul.f32 %v1863, %v1867
        %v1872 = vadd.f32 %v1828, %v1868
        %v1873 = vadd.f32 %v1829, %v1869
        %v1874 = vadd.f32 %v1830, %v1870
        %v1875 = vadd.f32 %v1831, %v1871
        %v1876 = vld [vmem:[%s755] sm:$0xff]
        %v1877 = vld [vmem:[%s755 + $0x8] sm:$0xff]
        %v1878 = vld [vmem:[%s755 + $0x10] sm:$0xff]
        %v1879 = vld [vmem:[%s755 + $0x18] sm:$0xff]
        %v1880 = vmul.f32 %v1860, %v1876
        %v1881 = vmul.f32 %v1861, %v1877
        %v1882 = vmul.f32 %v1862, %v1878
        %v1883 = vmul.f32 %v1863, %v1879
        %v1884 = vadd.f32 %v1840, %v1880
        %v1885 = vadd.f32 %v1841, %v1881
        %v1886 = vadd.f32 %v1842, %v1882
        %v1887 = vadd.f32 %v1843, %v1883
        %v1888 = vld [vmem:[%s778] sm:$0xff]
        %v1889 = vld [vmem:[%s778 + $0x8] sm:$0xff]
        %v1890 = vld [vmem:[%s778 + $0x10] sm:$0xff]
        %v1891 = vld [vmem:[%s778 + $0x18] sm:$0xff]
        %v1892 = vmul.f32 %v1860, %v1888
        %v1893 = vmul.f32 %v1861, %v1889
        %v1894 = vmul.f32 %v1862, %v1890
        %v1895 = vmul.f32 %v1863, %v1891
        %v1896 = vadd.f32 %v1852, %v1892
        %v1897 = vadd.f32 %v1853, %v1893
        %v1898 = vadd.f32 %v1854, %v1894
        %v1899 = vadd.f32 %v1855, %v1895
        %v1900 = vmul.f32 %v1592, %v1856
        %v1901 = vmul.f32 %v1593, %v1857
        %v1902 = vmul.f32 %v1594, %v1858
        %v1903 = vmul.f32 %v1595, %v1859
        %s1904 = sadd.s32 %s282, 6
        %s1905 = scalar_lea.vmem [#allocation4], %s1904
        %v1906 = vld [vmem:[%s1905] sm:$0xff]
        %v1907 = vld [vmem:[%s1905 + $0x8] sm:$0xff]
        %v1908 = vld [vmem:[%s1905 + $0x10] sm:$0xff]
        %v1909 = vld [vmem:[%s1905 + $0x18] sm:$0xff]
        %v1910 = vmul.f32 %v1900, %v1906
        %v1911 = vmul.f32 %v1901, %v1907
        %v1912 = vmul.f32 %v1902, %v1908
        %v1913 = vmul.f32 %v1903, %v1909
        %v1914 = vadd.f32 %v1872, %v1910
        %v1915 = vadd.f32 %v1873, %v1911
        %v1916 = vadd.f32 %v1874, %v1912
        %v1917 = vadd.f32 %v1875, %v1913
        %s1918 = sadd.s32 %s1904, 144
        %s1919 = scalar_lea.vmem [#allocation4], %s1918
        %v1920 = vld [vmem:[%s1919] sm:$0xff]
        %v1921 = vld [vmem:[%s1919 + $0x8] sm:$0xff]
        %v1922 = vld [vmem:[%s1919 + $0x10] sm:$0xff]
        %v1923 = vld [vmem:[%s1919 + $0x18] sm:$0xff]
        %v1924 = vmul.f32 %v1900, %v1920
        %v1925 = vmul.f32 %v1901, %v1921
        %v1926 = vmul.f32 %v1902, %v1922
        %v1927 = vmul.f32 %v1903, %v1923
        %v1928 = vadd.f32 %v1884, %v1924
        %v1929 = vadd.f32 %v1885, %v1925
        %v1930 = vadd.f32 %v1886, %v1926
        %v1931 = vadd.f32 %v1887, %v1927
        %s1932 = sadd.s32 %s1904, 288
        %s1933 = scalar_lea.vmem [#allocation4], %s1932
        %v1934 = vld [vmem:[%s1933] sm:$0xff]
        %v1935 = vld [vmem:[%s1933 + $0x8] sm:$0xff]
        %v1936 = vld [vmem:[%s1933 + $0x10] sm:$0xff]
        %v1937 = vld [vmem:[%s1933 + $0x18] sm:$0xff]
        %v1938 = vmul.f32 %v1900, %v1934
        %v1939 = vmul.f32 %v1901, %v1935
        %v1940 = vmul.f32 %v1902, %v1936
        %v1941 = vmul.f32 %v1903, %v1937
        %v1942 = vadd.f32 %v1896, %v1938
        %v1943 = vadd.f32 %v1897, %v1939
        %v1944 = vadd.f32 %v1898, %v1940
        %v1945 = vadd.f32 %v1899, %v1941
        %v1946 = vmul.f32 %v1636, %v1856
        %v1947 = vmul.f32 %v1637, %v1857
        %v1948 = vmul.f32 %v1638, %v1858
        %v1949 = vmul.f32 %v1639, %v1859
        %s1950 = sadd.s32 %s282, 7
        %s1951 = scalar_lea.vmem [#allocation4], %s1950
        %v1952 = vld [vmem:[%s1951] sm:$0xff]
        %v1953 = vld [vmem:[%s1951 + $0x8] sm:$0xff]
        %v1954 = vld [vmem:[%s1951 + $0x10] sm:$0xff]
        %v1955 = vld [vmem:[%s1951 + $0x18] sm:$0xff]
        %v1956 = vmul.f32 %v1946, %v1952
        %v1957 = vmul.f32 %v1947, %v1953
        %v1958 = vmul.f32 %v1948, %v1954
        %v1959 = vmul.f32 %v1949, %v1955
        %v1960 = vadd.f32 %v1914, %v1956
        %v1961 = vadd.f32 %v1915, %v1957
        %v1962 = vadd.f32 %v1916, %v1958
        %v1963 = vadd.f32 %v1917, %v1959
        %s1964 = sadd.s32 %s1950, 144
        %s1965 = scalar_lea.vmem [#allocation4], %s1964
        %v1966 = vld [vmem:[%s1965] sm:$0xff]
        %v1967 = vld [vmem:[%s1965 + $0x8] sm:$0xff]
        %v1968 = vld [vmem:[%s1965 + $0x10] sm:$0xff]
        %v1969 = vld [vmem:[%s1965 + $0x18] sm:$0xff]
        %v1970 = vmul.f32 %v1946, %v1966
        %v1971 = vmul.f32 %v1947, %v1967
        %v1972 = vmul.f32 %v1948, %v1968
        %v1973 = vmul.f32 %v1949, %v1969
        %v1974 = vadd.f32 %v1928, %v1970
        %v1975 = vadd.f32 %v1929, %v1971
        %v1976 = vadd.f32 %v1930, %v1972
        %v1977 = vadd.f32 %v1931, %v1973
        %s1978 = sadd.s32 %s1950, 288
        %s1979 = scalar_lea.vmem [#allocation4], %s1978
        %v1980 = vld [vmem:[%s1979] sm:$0xff]
        %v1981 = vld [vmem:[%s1979 + $0x8] sm:$0xff]
        %v1982 = vld [vmem:[%s1979 + $0x10] sm:$0xff]
        %v1983 = vld [vmem:[%s1979 + $0x18] sm:$0xff]
        %v1984 = vmul.f32 %v1946, %v1980
        %v1985 = vmul.f32 %v1947, %v1981
        %v1986 = vmul.f32 %v1948, %v1982
        %v1987 = vmul.f32 %v1949, %v1983
        %v1988 = vadd.f32 %v1942, %v1984
        %v1989 = vadd.f32 %v1943, %v1985
        %v1990 = vadd.f32 %v1944, %v1986
        %v1991 = vadd.f32 %v1945, %v1987
        %v1992 = vmul.f32 %v1680, %v1856
        %v1993 = vmul.f32 %v1681, %v1857
        %v1994 = vmul.f32 %v1682, %v1858
        %v1995 = vmul.f32 %v1683, %v1859
        %s1996 = sadd.s32 %s282, 8
        %s1997 = scalar_lea.vmem [#allocation4], %s1996
        %v1998 = vld [vmem:[%s1997] sm:$0xff]
        %v1999 = vld [vmem:[%s1997 + $0x8] sm:$0xff]
        %v2000 = vld [vmem:[%s1997 + $0x10] sm:$0xff]
        %v2001 = vld [vmem:[%s1997 + $0x18] sm:$0xff]
        %v2002 = vmul.f32 %v1992, %v1998
        %v2003 = vmul.f32 %v1993, %v1999
        %v2004 = vmul.f32 %v1994, %v2000
        %v2005 = vmul.f32 %v1995, %v2001
        %v2006 = vadd.f32 %v1960, %v2002
        %v2007 = vadd.f32 %v1961, %v2003
        %v2008 = vadd.f32 %v1962, %v2004
        %v2009 = vadd.f32 %v1963, %v2005
        %s2010 = sadd.s32 %s1996, 144
        %s2011 = scalar_lea.vmem [#allocation4], %s2010
        %v2012 = vld [vmem:[%s2011] sm:$0xff]
        %v2013 = vld [vmem:[%s2011 + $0x8] sm:$0xff]
        %v2014 = vld [vmem:[%s2011 + $0x10] sm:$0xff]
        %v2015 = vld [vmem:[%s2011 + $0x18] sm:$0xff]
        %v2016 = vmul.f32 %v1992, %v2012
        %v2017 = vmul.f32 %v1993, %v2013
        %v2018 = vmul.f32 %v1994, %v2014
        %v2019 = vmul.f32 %v1995, %v2015
        %v2020 = vadd.f32 %v1974, %v2016
        %v2021 = vadd.f32 %v1975, %v2017
        %v2022 = vadd.f32 %v1976, %v2018
        %v2023 = vadd.f32 %v1977, %v2019
        %s2024 = sadd.s32 %s1996, 288
        %s2025 = scalar_lea.vmem [#allocation4], %s2024
        %v2026 = vld [vmem:[%s2025] sm:$0xff]
        %v2027 = vld [vmem:[%s2025 + $0x8] sm:$0xff]
        %v2028 = vld [vmem:[%s2025 + $0x10] sm:$0xff]
        %v2029 = vld [vmem:[%s2025 + $0x18] sm:$0xff]
        %v2030 = vmul.f32 %v1992, %v2026
        %v2031 = vmul.f32 %v1993, %v2027
        %v2032 = vmul.f32 %v1994, %v2028
        %v2033 = vmul.f32 %v1995, %v2029
        %v2034 = vadd.f32 %v1988, %v2030
        %v2035 = vadd.f32 %v1989, %v2031
        %v2036 = vadd.f32 %v1990, %v2032
        %v2037 = vadd.f32 %v1991, %v2033
        %v2038 = vmul.f32 %v1724, %v1856
        %v2039 = vmul.f32 %v1725, %v1857
        %v2040 = vmul.f32 %v1726, %v1858
        %v2041 = vmul.f32 %v1727, %v1859
        %s2042 = sadd.s32 %s282, 9
        %s2043 = scalar_lea.vmem [#allocation4], %s2042
        %v2044 = vld [vmem:[%s2043] sm:$0xff]
        %v2045 = vld [vmem:[%s2043 + $0x8] sm:$0xff]
        %v2046 = vld [vmem:[%s2043 + $0x10] sm:$0xff]
        %v2047 = vld [vmem:[%s2043 + $0x18] sm:$0xff]
        %v2048 = vmul.f32 %v2038, %v2044
        %v2049 = vmul.f32 %v2039, %v2045
        %v2050 = vmul.f32 %v2040, %v2046
        %v2051 = vmul.f32 %v2041, %v2047
        %v2052 = vadd.f32 %v2006, %v2048
        %v2053 = vadd.f32 %v2007, %v2049
        %v2054 = vadd.f32 %v2008, %v2050
        %v2055 = vadd.f32 %v2009, %v2051
        %s2056 = sadd.s32 %s2042, 144
        %s2057 = scalar_lea.vmem [#allocation4], %s2056
        %v2058 = vld [vmem:[%s2057] sm:$0xff]
        %v2059 = vld [vmem:[%s2057 + $0x8] sm:$0xff]
        %v2060 = vld [vmem:[%s2057 + $0x10] sm:$0xff]
        %v2061 = vld [vmem:[%s2057 + $0x18] sm:$0xff]
        %v2062 = vmul.f32 %v2038, %v2058
        %v2063 = vmul.f32 %v2039, %v2059
        %v2064 = vmul.f32 %v2040, %v2060
        %v2065 = vmul.f32 %v2041, %v2061
        %v2066 = vadd.f32 %v2020, %v2062
        %v2067 = vadd.f32 %v2021, %v2063
        %v2068 = vadd.f32 %v2022, %v2064
        %v2069 = vadd.f32 %v2023, %v2065
        %s2070 = sadd.s32 %s2042, 288
        %s2071 = scalar_lea.vmem [#allocation4], %s2070
        %v2072 = vld [vmem:[%s2071] sm:$0xff]
        %v2073 = vld [vmem:[%s2071 + $0x8] sm:$0xff]
        %v2074 = vld [vmem:[%s2071 + $0x10] sm:$0xff]
        %v2075 = vld [vmem:[%s2071 + $0x18] sm:$0xff]
        %v2076 = vmul.f32 %v2038, %v2072
        %v2077 = vmul.f32 %v2039, %v2073
        %v2078 = vmul.f32 %v2040, %v2074
        %v2079 = vmul.f32 %v2041, %v2075
        %v2080 = vadd.f32 %v2034, %v2076
        %v2081 = vadd.f32 %v2035, %v2077
        %v2082 = vadd.f32 %v2036, %v2078
        %v2083 = vadd.f32 %v2037, %v2079
        %v2084 = vmul.f32 %v1768, %v1856
        %v2085 = vmul.f32 %v1769, %v1857
        %v2086 = vmul.f32 %v1770, %v1858
        %v2087 = vmul.f32 %v1771, %v1859
        %s2088 = sadd.s32 %s282, 10
        %s2089 = scalar_lea.vmem [#allocation4], %s2088
        %v2090 = vld [vmem:[%s2089] sm:$0xff]
        %v2091 = vld [vmem:[%s2089 + $0x8] sm:$0xff]
        %v2092 = vld [vmem:[%s2089 + $0x10] sm:$0xff]
        %v2093 = vld [vmem:[%s2089 + $0x18] sm:$0xff]
        %v2094 = vmul.f32 %v2084, %v2090
        %v2095 = vmul.f32 %v2085, %v2091
        %v2096 = vmul.f32 %v2086, %v2092
        %v2097 = vmul.f32 %v2087, %v2093
        %v2098 = vadd.f32 %v2052, %v2094
        %v2099 = vadd.f32 %v2053, %v2095
        %v2100 = vadd.f32 %v2054, %v2096
        %v2101 = vadd.f32 %v2055, %v2097
        %s2102 = sadd.s32 %s2088, 144
        %s2103 = scalar_lea.vmem [#allocation4], %s2102
        %v2104 = vld [vmem:[%s2103] sm:$0xff]
        %v2105 = vld [vmem:[%s2103 + $0x8] sm:$0xff]
        %v2106 = vld [vmem:[%s2103 + $0x10] sm:$0xff]
        %v2107 = vld [vmem:[%s2103 + $0x18] sm:$0xff]
        %v2108 = vmul.f32 %v2084, %v2104
        %v2109 = vmul.f32 %v2085, %v2105
        %v2110 = vmul.f32 %v2086, %v2106
        %v2111 = vmul.f32 %v2087, %v2107
        %v2112 = vadd.f32 %v2066, %v2108
        %v2113 = vadd.f32 %v2067, %v2109
        %v2114 = vadd.f32 %v2068, %v2110
        %v2115 = vadd.f32 %v2069, %v2111
        %s2116 = sadd.s32 %s2088, 288
        %s2117 = scalar_lea.vmem [#allocation4], %s2116
        %v2118 = vld [vmem:[%s2117] sm:$0xff]
        %v2119 = vld [vmem:[%s2117 + $0x8] sm:$0xff]
        %v2120 = vld [vmem:[%s2117 + $0x10] sm:$0xff]
        %v2121 = vld [vmem:[%s2117 + $0x18] sm:$0xff]
        %v2122 = vmul.f32 %v2084, %v2118
        %v2123 = vmul.f32 %v2085, %v2119
        %v2124 = vmul.f32 %v2086, %v2120
        %v2125 = vmul.f32 %v2087, %v2121
        %v2126 = vadd.f32 %v2080, %v2122
        %v2127 = vadd.f32 %v2081, %v2123
        %v2128 = vadd.f32 %v2082, %v2124
        %v2129 = vadd.f32 %v2083, %v2125
        %v2130 = vmul.f32 %v1812, %v1856
        %v2131 = vmul.f32 %v1813, %v1857
        %v2132 = vmul.f32 %v1814, %v1858
        %v2133 = vmul.f32 %v1815, %v1859
        %s2134 = sadd.s32 %s282, 11
        %s2135 = scalar_lea.vmem [#allocation4], %s2134
        %v2136 = vld [vmem:[%s2135] sm:$0xff]
        %v2137 = vld [vmem:[%s2135 + $0x8] sm:$0xff]
        %v2138 = vld [vmem:[%s2135 + $0x10] sm:$0xff]
        %v2139 = vld [vmem:[%s2135 + $0x18] sm:$0xff]
        %v2140 = vmul.f32 %v2130, %v2136
        %v2141 = vmul.f32 %v2131, %v2137
        %v2142 = vmul.f32 %v2132, %v2138
        %v2143 = vmul.f32 %v2133, %v2139
        %v2144 = vadd.f32 %v2098, %v2140
        %v2145 = vadd.f32 %v2099, %v2141
        %v2146 = vadd.f32 %v2100, %v2142
        %v2147 = vadd.f32 %v2101, %v2143
        %s2148 = sadd.s32 %s2134, 144
        %s2149 = scalar_lea.vmem [#allocation4], %s2148
        %v2150 = vld [vmem:[%s2149] sm:$0xff]
        %v2151 = vld [vmem:[%s2149 + $0x8] sm:$0xff]
        %v2152 = vld [vmem:[%s2149 + $0x10] sm:$0xff]
        %v2153 = vld [vmem:[%s2149 + $0x18] sm:$0xff]
        %v2154 = vmul.f32 %v2130, %v2150
        %v2155 = vmul.f32 %v2131, %v2151
        %v2156 = vmul.f32 %v2132, %v2152
        %v2157 = vmul.f32 %v2133, %v2153
        %v2158 = vadd.f32 %v2112, %v2154
        %v2159 = vadd.f32 %v2113, %v2155
        %v2160 = vadd.f32 %v2114, %v2156
        %v2161 = vadd.f32 %v2115, %v2157
        %s2162 = sadd.s32 %s2134, 288
        %s2163 = scalar_lea.vmem [#allocation4], %s2162
        %v2164 = vld [vmem:[%s2163] sm:$0xff]
        %v2165 = vld [vmem:[%s2163 + $0x8] sm:$0xff]
        %v2166 = vld [vmem:[%s2163 + $0x10] sm:$0xff]
        %v2167 = vld [vmem:[%s2163 + $0x18] sm:$0xff]
        %v2168 = vmul.f32 %v2130, %v2164
        %v2169 = vmul.f32 %v2131, %v2165
        %v2170 = vmul.f32 %v2132, %v2166
        %v2171 = vmul.f32 %v2133, %v2167
        %v2172 = vadd.f32 %v2126, %v2168
        %v2173 = vadd.f32 %v2127, %v2169
        %v2174 = vadd.f32 %v2128, %v2170
        %v2175 = vadd.f32 %v2129, %v2171
        %v2176 = vld [vmem:[%s733 + $0x20] sm:$0x3f]
        %2177 = vrot.lane.b32.xlu0 %v1864, 127
        %v2178 = vpop.permute.xlu0 %2177
        %2179 = vrot.lane.b32.xlu0 %v1865, 127
        %v2180 = vpop.permute.xlu0 %2179
        %2181 = vrot.lane.b32.xlu0 %v1866, 127
        %v2182 = vpop.permute.xlu0 %2181
        %2183 = vrot.lane.b32.xlu0 %v1867, 127
        %v2184 = vpop.permute.xlu0 %2183
        %2185 = vrot.lane.b32.xlu0 %v2176, 127
        %v2186 = vpop.permute.xlu0 %2185
        %2187 = vst [vmem:[#allocation5] sm:$0xff] %v2178
        %2188 = vst [vmem:[#allocation5 + $0x8] sm:$0xff] %v2180
        %2189 = vst [vmem:[#allocation5 + $0x10] sm:$0xff] %v2182
        %2190 = vst [vmem:[#allocation5 + $0x18] sm:$0xff] %v2184
        %2191 = vst [vmem:[#allocation5 + $0x20] sm:$0x3f] %v2186
        %v2192 = vld [vmem:[%s755] sm:$0xff]
        %v2193 = vld [vmem:[%s755 + $0x8] sm:$0xff]
        %v2194 = vld [vmem:[%s755 + $0x10] sm:$0xff]
        %v2195 = vld [vmem:[%s755 + $0x18] sm:$0xff]
        %v2196 = vld [vmem:[%s755 + $0x20] sm:$0x3f]
        %2197 = vrot.lane.b32.xlu0 %v2192, 127
        %v2198 = vpop.permute.xlu0 %2197
        %2199 = vrot.lane.b32.xlu0 %v2193, 127
        %v2200 = vpop.permute.xlu0 %2199
        %2201 = vrot.lane.b32.xlu0 %v2194, 127
        %v2202 = vpop.permute.xlu0 %2201
        %2203 = vrot.lane.b32.xlu0 %v2195, 127
        %v2204 = vpop.permute.xlu0 %2203
        %2205 = vrot.lane.b32.xlu0 %v2196, 127
        %v2206 = vpop.permute.xlu0 %2205
        %2207 = vst [vmem:[%s771] sm:$0xff] %v2198
        %2208 = vst [vmem:[%s771 + $0x8] sm:$0xff] %v2200
        %2209 = vst [vmem:[%s771 + $0x10] sm:$0xff] %v2202
        %2210 = vst [vmem:[%s771 + $0x18] sm:$0xff] %v2204
        %2211 = vst [vmem:[%s771 + $0x20] sm:$0x3f] %v2206
        %v2212 = vld [vmem:[%s778] sm:$0xff]
        %v2213 = vld [vmem:[%s778 + $0x8] sm:$0xff]
        %v2214 = vld [vmem:[%s778 + $0x10] sm:$0xff]
        %v2215 = vld [vmem:[%s778 + $0x18] sm:$0xff]
        %v2216 = vld [vmem:[%s778 + $0x20] sm:$0x3f]
        %2217 = vrot.lane.b32.xlu0 %v2212, 127
        %v2218 = vpop.permute.xlu0 %2217
        %2219 = vrot.lane.b32.xlu0 %v2213, 127
        %v2220 = vpop.permute.xlu0 %2219
        %2221 = vrot.lane.b32.xlu0 %v2214, 127
        %v2222 = vpop.permute.xlu0 %2221
        %2223 = vrot.lane.b32.xlu0 %v2215, 127
        %v2224 = vpop.permute.xlu0 %2223
        %2225 = vrot.lane.b32.xlu0 %v2216, 127
        %v2226 = vpop.permute.xlu0 %2225
        %2227 = vst [vmem:[%s794] sm:$0xff] %v2218
        %2228 = vst [vmem:[%s794 + $0x8] sm:$0xff] %v2220
        %2229 = vst [vmem:[%s794 + $0x10] sm:$0xff] %v2222
        %2230 = vst [vmem:[%s794 + $0x18] sm:$0xff] %v2224
        %2231 = vst [vmem:[%s794 + $0x20] sm:$0x3f] %v2226
        %v2232 = vld [vmem:[%s613] sm:$0xff]
        %v2233 = vld [vmem:[%s613 + $0x8] sm:$0xff]
        %v2234 = vld [vmem:[%s613 + $0x10] sm:$0xff]
        %v2235 = vld [vmem:[%s613 + $0x18] sm:$0xff]
        %v2236 = vld [vmem:[#allocation2] sm:$0xff]
        %v2237 = vld [vmem:[#allocation2 + $0x8] sm:$0xff]
        %v2238 = vld [vmem:[#allocation2 + $0x10] sm:$0xff]
        %v2239 = vld [vmem:[#allocation2 + $0x18] sm:$0xff]
        %v2240 = vmul.f32 %v2236, %v2232
        %v2241 = vmul.f32 %v2237, %v2233
        %v2242 = vmul.f32 %v2238, %v2234
        %v2243 = vmul.f32 %v2239, %v2235
        %v2244 = vld [vmem:[#allocation5] sm:$0xff]
        %v2245 = vld [vmem:[#allocation5 + $0x8] sm:$0xff]
        %v2246 = vld [vmem:[#allocation5 + $0x10] sm:$0xff]
        %v2247 = vld [vmem:[#allocation5 + $0x18] sm:$0xff]
        %v2248 = vmul.f32 %v2240, %v2244
        %v2249 = vmul.f32 %v2241, %v2245
        %v2250 = vmul.f32 %v2242, %v2246
        %v2251 = vmul.f32 %v2243, %v2247
        %v2252 = vadd.f32 %v2144, %v2248
        %v2253 = vadd.f32 %v2145, %v2249
        %v2254 = vadd.f32 %v2146, %v2250
        %v2255 = vadd.f32 %v2147, %v2251
        %v2256 = vld [vmem:[%s771] sm:$0xff]
        %v2257 = vld [vmem:[%s771 + $0x8] sm:$0xff]
        %v2258 = vld [vmem:[%s771 + $0x10] sm:$0xff]
        %v2259 = vld [vmem:[%s771 + $0x18] sm:$0xff]
        %v2260 = vmul.f32 %v2240, %v2256
        %v2261 = vmul.f32 %v2241, %v2257
        %v2262 = vmul.f32 %v2242, %v2258
        %v2263 = vmul.f32 %v2243, %v2259
        %v2264 = vadd.f32 %v2158, %v2260
        %v2265 = vadd.f32 %v2159, %v2261
        %v2266 = vadd.f32 %v2160, %v2262
        %v2267 = vadd.f32 %v2161, %v2263
        %v2268 = vld [vmem:[%s794] sm:$0xff]
        %v2269 = vld [vmem:[%s794 + $0x8] sm:$0xff]
        %v2270 = vld [vmem:[%s794 + $0x10] sm:$0xff]
        %v2271 = vld [vmem:[%s794 + $0x18] sm:$0xff]
        %v2272 = vmul.f32 %v2240, %v2268
        %v2273 = vmul.f32 %v2241, %v2269
        %v2274 = vmul.f32 %v2242, %v2270
        %v2275 = vmul.f32 %v2243, %v2271
        %v2276 = vadd.f32 %v2172, %v2272
        %v2277 = vadd.f32 %v2173, %v2273
        %v2278 = vadd.f32 %v2174, %v2274
        %v2279 = vadd.f32 %v2175, %v2275
        %v2280 = vld [vmem:[%s474] sm:$0xff]
        %v2281 = vld [vmem:[%s474 + $0x8] sm:$0xff]
        %v2282 = vld [vmem:[%s474 + $0x10] sm:$0xff]
        %v2283 = vld [vmem:[%s474 + $0x18] sm:$0xff]
        %v2284 = vmul.f32 %v2280, %v2232
        %v2285 = vmul.f32 %v2281, %v2233
        %v2286 = vmul.f32 %v2282, %v2234
        %v2287 = vmul.f32 %v2283, %v2235
        %v2288 = vld [vmem:[#allocation5 + $0x1] sm:$0xff]
        %v2289 = vld [vmem:[#allocation5 + $0x9] sm:$0xff]
        %v2290 = vld [vmem:[#allocation5 + $0x11] sm:$0xff]
        %v2291 = vld [vmem:[#allocation5 + $0x19] sm:$0xff]
        %v2292 = vmul.f32 %v2284, %v2288
        %v2293 = vmul.f32 %v2285, %v2289
        %v2294 = vmul.f32 %v2286, %v2290
        %v2295 = vmul.f32 %v2287, %v2291
        %v2296 = vadd.f32 %v2252, %v2292
        %v2297 = vadd.f32 %v2253, %v2293
        %v2298 = vadd.f32 %v2254, %v2294
        %v2299 = vadd.f32 %v2255, %v2295
        %v2300 = vld [vmem:[%s771 + $0x1] sm:$0xff]
        %v2301 = vld [vmem:[%s771 + $0x9] sm:$0xff]
        %v2302 = vld [vmem:[%s771 + $0x11] sm:$0xff]
        %v2303 = vld [vmem:[%s771 + $0x19] sm:$0xff]
        %v2304 = vmul.f32 %v2284, %v2300
        %v2305 = vmul.f32 %v2285, %v2301
        %v2306 = vmul.f32 %v2286, %v2302
        %v2307 = vmul.f32 %v2287, %v2303
        %v2308 = vadd.f32 %v2264, %v2304
        %v2309 = vadd.f32 %v2265, %v2305
        %v2310 = vadd.f32 %v2266, %v2306
        %v2311 = vadd.f32 %v2267, %v2307
        %v2312 = vld [vmem:[%s794 + $0x1] sm:$0xff]
        %v2313 = vld [vmem:[%s794 + $0x9] sm:$0xff]
        %v2314 = vld [vmem:[%s794 + $0x11] sm:$0xff]
        %v2315 = vld [vmem:[%s794 + $0x19] sm:$0xff]
        %v2316 = vmul.f32 %v2284, %v2312
        %v2317 = vmul.f32 %v2285, %v2313
        %v2318 = vmul.f32 %v2286, %v2314
        %v2319 = vmul.f32 %v2287, %v2315
        %v2320 = vadd.f32 %v2276, %v2316
        %v2321 = vadd.f32 %v2277, %v2317
        %v2322 = vadd.f32 %v2278, %v2318
        %v2323 = vadd.f32 %v2279, %v2319
        %v2324 = vld [vmem:[%s516] sm:$0xff]
        %v2325 = vld [vmem:[%s516 + $0x8] sm:$0xff]
        %v2326 = vld [vmem:[%s516 + $0x10] sm:$0xff]
        %v2327 = vld [vmem:[%s516 + $0x18] sm:$0xff]
        %v2328 = vmul.f32 %v2324, %v2232
        %v2329 = vmul.f32 %v2325, %v2233
        %v2330 = vmul.f32 %v2326, %v2234
        %v2331 = vmul.f32 %v2327, %v2235
        %v2332 = vld [vmem:[#allocation5 + $0x2] sm:$0xff]
        %v2333 = vld [vmem:[#allocation5 + $0xa] sm:$0xff]
        %v2334 = vld [vmem:[#allocation5 + $0x12] sm:$0xff]
        %v2335 = vld [vmem:[#allocation5 + $0x1a] sm:$0xff]
        %v2336 = vmul.f32 %v2328, %v2332
        %v2337 = vmul.f32 %v2329, %v2333
        %v2338 = vmul.f32 %v2330, %v2334
        %v2339 = vmul.f32 %v2331, %v2335
        %v2340 = vadd.f32 %v2296, %v2336
        %v2341 = vadd.f32 %v2297, %v2337
        %v2342 = vadd.f32 %v2298, %v2338
        %v2343 = vadd.f32 %v2299, %v2339
        %v2344 = vld [vmem:[%s771 + $0x2] sm:$0xff]
        %v2345 = vld [vmem:[%s771 + $0xa] sm:$0xff]
        %v2346 = vld [vmem:[%s771 + $0x12] sm:$0xff]
        %v2347 = vld [vmem:[%s771 + $0x1a] sm:$0xff]
        %v2348 = vmul.f32 %v2328, %v2344
        %v2349 = vmul.f32 %v2329, %v2345
        %v2350 = vmul.f32 %v2330, %v2346
        %v2351 = vmul.f32 %v2331, %v2347
        %v2352 = vadd.f32 %v2308, %v2348
        %v2353 = vadd.f32 %v2309, %v2349
        %v2354 = vadd.f32 %v2310, %v2350
        %v2355 = vadd.f32 %v2311, %v2351
        %v2356 = vld [vmem:[%s794 + $0x2] sm:$0xff]
        %v2357 = vld [vmem:[%s794 + $0xa] sm:$0xff]
        %v2358 = vld [vmem:[%s794 + $0x12] sm:$0xff]
        %v2359 = vld [vmem:[%s794 + $0x1a] sm:$0xff]
        %v2360 = vmul.f32 %v2328, %v2356
        %v2361 = vmul.f32 %v2329, %v2357
        %v2362 = vmul.f32 %v2330, %v2358
        %v2363 = vmul.f32 %v2331, %v2359
        %v2364 = vadd.f32 %v2320, %v2360
        %v2365 = vadd.f32 %v2321, %v2361
        %v2366 = vadd.f32 %v2322, %v2362
        %v2367 = vadd.f32 %v2323, %v2363
        %v2368 = vld [vmem:[%s554] sm:$0xff]
        %v2369 = vld [vmem:[%s554 + $0x8] sm:$0xff]
        %v2370 = vld [vmem:[%s554 + $0x10] sm:$0xff]
        %v2371 = vld [vmem:[%s554 + $0x18] sm:$0xff]
        %v2372 = vmul.f32 %v2368, %v2232
        %v2373 = vmul.f32 %v2369, %v2233
        %v2374 = vmul.f32 %v2370, %v2234
        %v2375 = vmul.f32 %v2371, %v2235
        %v2376 = vld [vmem:[#allocation5 + $0x3] sm:$0xff]
        %v2377 = vld [vmem:[#allocation5 + $0xb] sm:$0xff]
        %v2378 = vld [vmem:[#allocation5 + $0x13] sm:$0xff]
        %v2379 = vld [vmem:[#allocation5 + $0x1b] sm:$0xff]
        %v2380 = vmul.f32 %v2372, %v2376
        %v2381 = vmul.f32 %v2373, %v2377
        %v2382 = vmul.f32 %v2374, %v2378
        %v2383 = vmul.f32 %v2375, %v2379
        %v2384 = vadd.f32 %v2340, %v2380
        %v2385 = vadd.f32 %v2341, %v2381
        %v2386 = vadd.f32 %v2342, %v2382
        %v2387 = vadd.f32 %v2343, %v2383
        %v2388 = vld [vmem:[%s771 + $0x3] sm:$0xff]
        %v2389 = vld [vmem:[%s771 + $0xb] sm:$0xff]
        %v2390 = vld [vmem:[%s771 + $0x13] sm:$0xff]
        %v2391 = vld [vmem:[%s771 + $0x1b] sm:$0xff]
        %v2392 = vmul.f32 %v2372, %v2388
        %v2393 = vmul.f32 %v2373, %v2389
        %v2394 = vmul.f32 %v2374, %v2390
        %v2395 = vmul.f32 %v2375, %v2391
        %v2396 = vadd.f32 %v2352, %v2392
        %v2397 = vadd.f32 %v2353, %v2393
        %v2398 = vadd.f32 %v2354, %v2394
        %v2399 = vadd.f32 %v2355, %v2395
        %v2400 = vld [vmem:[%s794 + $0x3] sm:$0xff]
        %v2401 = vld [vmem:[%s794 + $0xb] sm:$0xff]
        %v2402 = vld [vmem:[%s794 + $0x13] sm:$0xff]
        %v2403 = vld [vmem:[%s794 + $0x1b] sm:$0xff]
        %v2404 = vmul.f32 %v2372, %v2400
        %v2405 = vmul.f32 %v2373, %v2401
        %v2406 = vmul.f32 %v2374, %v2402
        %v2407 = vmul.f32 %v2375, %v2403
        %v2408 = vadd.f32 %v2364, %v2404
        %v2409 = vadd.f32 %v2365, %v2405
        %v2410 = vadd.f32 %v2366, %v2406
        %v2411 = vadd.f32 %v2367, %v2407
        %v2412 = vld [vmem:[%s592] sm:$0xff]
        %v2413 = vld [vmem:[%s592 + $0x8] sm:$0xff]
        %v2414 = vld [vmem:[%s592 + $0x10] sm:$0xff]
        %v2415 = vld [vmem:[%s592 + $0x18] sm:$0xff]
        %v2416 = vmul.f32 %v2412, %v2232
        %v2417 = vmul.f32 %v2413, %v2233
        %v2418 = vmul.f32 %v2414, %v2234
        %v2419 = vmul.f32 %v2415, %v2235
        %v2420 = vld [vmem:[#allocation5 + $0x4] sm:$0xff]
        %v2421 = vld [vmem:[#allocation5 + $0xc] sm:$0xff]
        %v2422 = vld [vmem:[#allocation5 + $0x14] sm:$0xff]
        %v2423 = vld [vmem:[#allocation5 + $0x1c] sm:$0xff]
        %v2424 = vmul.f32 %v2416, %v2420
        %v2425 = vmul.f32 %v2417, %v2421
        %v2426 = vmul.f32 %v2418, %v2422
        %v2427 = vmul.f32 %v2419, %v2423
        %v2428 = vadd.f32 %v2384, %v2424
        %v2429 = vadd.f32 %v2385, %v2425
        %v2430 = vadd.f32 %v2386, %v2426
        %v2431 = vadd.f32 %v2387, %v2427
        %v2432 = vld [vmem:[%s771 + $0x4] sm:$0xff]
        %v2433 = vld [vmem:[%s771 + $0xc] sm:$0xff]
        %v2434 = vld [vmem:[%s771 + $0x14] sm:$0xff]
        %v2435 = vld [vmem:[%s771 + $0x1c] sm:$0xff]
        %v2436 = vmul.f32 %v2416, %v2432
        %v2437 = vmul.f32 %v2417, %v2433
        %v2438 = vmul.f32 %v2418, %v2434
        %v2439 = vmul.f32 %v2419, %v2435
        %v2440 = vadd.f32 %v2396, %v2436
        %v2441 = vadd.f32 %v2397, %v2437
        %v2442 = vadd.f32 %v2398, %v2438
        %v2443 = vadd.f32 %v2399, %v2439
        %v2444 = vld [vmem:[%s794 + $0x4] sm:$0xff]
        %v2445 = vld [vmem:[%s794 + $0xc] sm:$0xff]
        %v2446 = vld [vmem:[%s794 + $0x14] sm:$0xff]
        %v2447 = vld [vmem:[%s794 + $0x1c] sm:$0xff]
        %v2448 = vmul.f32 %v2416, %v2444
        %v2449 = vmul.f32 %v2417, %v2445
        %v2450 = vmul.f32 %v2418, %v2446
        %v2451 = vmul.f32 %v2419, %v2447
        %v2452 = vadd.f32 %v2408, %v2448
        %v2453 = vadd.f32 %v2409, %v2449
        %v2454 = vadd.f32 %v2410, %v2450
        %v2455 = vadd.f32 %v2411, %v2451
        %v2456 = vld [vmem:[%s634] sm:$0xff]
        %v2457 = vld [vmem:[%s634 + $0x8] sm:$0xff]
        %v2458 = vld [vmem:[%s634 + $0x10] sm:$0xff]
        %v2459 = vld [vmem:[%s634 + $0x18] sm:$0xff]
        %v2460 = vmul.f32 %v2456, %v2232
        %v2461 = vmul.f32 %v2457, %v2233
        %v2462 = vmul.f32 %v2458, %v2234
        %v2463 = vmul.f32 %v2459, %v2235
        %v2464 = vld [vmem:[#allocation5 + $0x5] sm:$0xff]
        %v2465 = vld [vmem:[#allocation5 + $0xd] sm:$0xff]
        %v2466 = vld [vmem:[#allocation5 + $0x15] sm:$0xff]
        %v2467 = vld [vmem:[#allocation5 + $0x1d] sm:$0xff]
        %v2468 = vmul.f32 %v2460, %v2464
        %v2469 = vmul.f32 %v2461, %v2465
        %v2470 = vmul.f32 %v2462, %v2466
        %v2471 = vmul.f32 %v2463, %v2467
        %v2472 = vadd.f32 %v2428, %v2468
        %v2473 = vadd.f32 %v2429, %v2469
        %v2474 = vadd.f32 %v2430, %v2470
        %v2475 = vadd.f32 %v2431, %v2471
        %v2476 = vld [vmem:[%s771 + $0x5] sm:$0xff]
        %v2477 = vld [vmem:[%s771 + $0xd] sm:$0xff]
        %v2478 = vld [vmem:[%s771 + $0x15] sm:$0xff]
        %v2479 = vld [vmem:[%s771 + $0x1d] sm:$0xff]
        %v2480 = vmul.f32 %v2460, %v2476
        %v2481 = vmul.f32 %v2461, %v2477
        %v2482 = vmul.f32 %v2462, %v2478
        %v2483 = vmul.f32 %v2463, %v2479
        %v2484 = vadd.f32 %v2440, %v2480
        %v2485 = vadd.f32 %v2441, %v2481
        %v2486 = vadd.f32 %v2442, %v2482
        %v2487 = vadd.f32 %v2443, %v2483
        %v2488 = vld [vmem:[%s794 + $0x5] sm:$0xff]
        %v2489 = vld [vmem:[%s794 + $0xd] sm:$0xff]
        %v2490 = vld [vmem:[%s794 + $0x15] sm:$0xff]
        %v2491 = vld [vmem:[%s794 + $0x1d] sm:$0xff]
        %v2492 = vmul.f32 %v2460, %v2488
        %v2493 = vmul.f32 %v2461, %v2489
        %v2494 = vmul.f32 %v2462, %v2490
        %v2495 = vmul.f32 %v2463, %v2491
        %v2496 = vadd.f32 %v2452, %v2492
        %v2497 = vadd.f32 %v2453, %v2493
        %v2498 = vadd.f32 %v2454, %v2494
        %v2499 = vadd.f32 %v2455, %v2495
        %v2500 = vld [vmem:[%s676] sm:$0xff]
        %v2501 = vld [vmem:[%s676 + $0x8] sm:$0xff]
        %v2502 = vld [vmem:[%s676 + $0x10] sm:$0xff]
        %v2503 = vld [vmem:[%s676 + $0x18] sm:$0xff]
        %v2504 = vmul.f32 %v2500, %v2232
        %v2505 = vmul.f32 %v2501, %v2233
        %v2506 = vmul.f32 %v2502, %v2234
        %v2507 = vmul.f32 %v2503, %v2235
        %v2508 = vld [vmem:[#allocation5 + $0x6] sm:$0xff]
        %v2509 = vld [vmem:[#allocation5 + $0xe] sm:$0xff]
        %v2510 = vld [vmem:[#allocation5 + $0x16] sm:$0xff]
        %v2511 = vld [vmem:[#allocation5 + $0x1e] sm:$0xff]
        %v2512 = vmul.f32 %v2504, %v2508
        %v2513 = vmul.f32 %v2505, %v2509
        %v2514 = vmul.f32 %v2506, %v2510
        %v2515 = vmul.f32 %v2507, %v2511
        %v2516 = vadd.f32 %v2472, %v2512
        %v2517 = vadd.f32 %v2473, %v2513
        %v2518 = vadd.f32 %v2474, %v2514
        %v2519 = vadd.f32 %v2475, %v2515
        %v2520 = vld [vmem:[%s771 + $0x6] sm:$0xff]
        %v2521 = vld [vmem:[%s771 + $0xe] sm:$0xff]
        %v2522 = vld [vmem:[%s771 + $0x16] sm:$0xff]
        %v2523 = vld [vmem:[%s771 + $0x1e] sm:$0xff]
        %v2524 = vmul.f32 %v2504, %v2520
        %v2525 = vmul.f32 %v2505, %v2521
        %v2526 = vmul.f32 %v2506, %v2522
        %v2527 = vmul.f32 %v2507, %v2523
        %v2528 = vadd.f32 %v2484, %v2524
        %v2529 = vadd.f32 %v2485, %v2525
        %v2530 = vadd.f32 %v2486, %v2526
        %v2531 = vadd.f32 %v2487, %v2527
        %v2532 = vld [vmem:[%s794 + $0x6] sm:$0xff]
        %v2533 = vld [vmem:[%s794 + $0xe] sm:$0xff]
        %v2534 = vld [vmem:[%s794 + $0x16] sm:$0xff]
        %v2535 = vld [vmem:[%s794 + $0x1e] sm:$0xff]
        %v2536 = vmul.f32 %v2504, %v2532
        %v2537 = vmul.f32 %v2505, %v2533
        %v2538 = vmul.f32 %v2506, %v2534
        %v2539 = vmul.f32 %v2507, %v2535
        %v2540 = vadd.f32 %v2496, %v2536
        %v2541 = vadd.f32 %v2497, %v2537
        %v2542 = vadd.f32 %v2498, %v2538
        %v2543 = vadd.f32 %v2499, %v2539
        %v2544 = vld [vmem:[%s733] sm:$0xff]
        %v2545 = vld [vmem:[%s733 + $0x8] sm:$0xff]
        %v2546 = vld [vmem:[%s733 + $0x10] sm:$0xff]
        %v2547 = vld [vmem:[%s733 + $0x18] sm:$0xff]
        %v2548 = vld [vmem:[%s733 + $0x20] sm:$0x3f]
        %2549 = vrot.lane.b32.xlu0 %v2544, 126
        %v2550 = vpop.permute.xlu0 %2549
        %2551 = vrot.lane.b32.xlu0 %v2545, 126
        %v2552 = vpop.permute.xlu0 %2551
        %2553 = vrot.lane.b32.xlu0 %v2546, 126
        %v2554 = vpop.permute.xlu0 %2553
        %2555 = vrot.lane.b32.xlu0 %v2547, 126
        %v2556 = vpop.permute.xlu0 %2555
        %2557 = vrot.lane.b32.xlu0 %v2548, 126
        %v2558 = vpop.permute.xlu0 %2557
        %2559 = vst [vmem:[#allocation5] sm:$0xff] %v2550
        %2560 = vst [vmem:[#allocation5 + $0x8] sm:$0xff] %v2552
        %2561 = vst [vmem:[#allocation5 + $0x10] sm:$0xff] %v2554
        %2562 = vst [vmem:[#allocation5 + $0x18] sm:$0xff] %v2556
        %2563 = vst [vmem:[#allocation5 + $0x20] sm:$0x3f] %v2558
        %v2564 = vld [vmem:[%s755] sm:$0xff]
        %v2565 = vld [vmem:[%s755 + $0x8] sm:$0xff]
        %v2566 = vld [vmem:[%s755 + $0x10] sm:$0xff]
        %v2567 = vld [vmem:[%s755 + $0x18] sm:$0xff]
        %v2568 = vld [vmem:[%s755 + $0x20] sm:$0x3f]
        %2569 = vrot.lane.b32.xlu0 %v2564, 126
        %v2570 = vpop.permute.xlu0 %2569
        %2571 = vrot.lane.b32.xlu0 %v2565, 126
        %v2572 = vpop.permute.xlu0 %2571
        %2573 = vrot.lane.b32.xlu0 %v2566, 126
        %v2574 = vpop.permute.xlu0 %2573
        %2575 = vrot.lane.b32.xlu0 %v2567, 126
        %v2576 = vpop.permute.xlu0 %2575
        %2577 = vrot.lane.b32.xlu0 %v2568, 126
        %v2578 = vpop.permute.xlu0 %2577
        %2579 = vst [vmem:[%s771] sm:$0xff] %v2570
        %2580 = vst [vmem:[%s771 + $0x8] sm:$0xff] %v2572
        %2581 = vst [vmem:[%s771 + $0x10] sm:$0xff] %v2574
        %2582 = vst [vmem:[%s771 + $0x18] sm:$0xff] %v2576
        %2583 = vst [vmem:[%s771 + $0x20] sm:$0x3f] %v2578
        %v2584 = vld [vmem:[%s778] sm:$0xff]
        %v2585 = vld [vmem:[%s778 + $0x8] sm:$0xff]
        %v2586 = vld [vmem:[%s778 + $0x10] sm:$0xff]
        %v2587 = vld [vmem:[%s778 + $0x18] sm:$0xff]
        %v2588 = vld [vmem:[%s778 + $0x20] sm:$0x3f]
        %2589 = vrot.lane.b32.xlu0 %v2584, 126
        %v2590 = vpop.permute.xlu0 %2589
        %2591 = vrot.lane.b32.xlu0 %v2585, 126
        %v2592 = vpop.permute.xlu0 %2591
        %2593 = vrot.lane.b32.xlu0 %v2586, 126
        %v2594 = vpop.permute.xlu0 %2593
        %2595 = vrot.lane.b32.xlu0 %v2587, 126
        %v2596 = vpop.permute.xlu0 %2595
        %2597 = vrot.lane.b32.xlu0 %v2588, 126
        %v2598 = vpop.permute.xlu0 %2597
        %2599 = vst [vmem:[%s794] sm:$0xff] %v2590
        %2600 = vst [vmem:[%s794 + $0x8] sm:$0xff] %v2592
        %2601 = vst [vmem:[%s794 + $0x10] sm:$0xff] %v2594
        %2602 = vst [vmem:[%s794 + $0x18] sm:$0xff] %v2596
        %2603 = vst [vmem:[%s794 + $0x20] sm:$0x3f] %v2598
        %v2604 = vld [vmem:[%s655] sm:$0xff]
        %v2605 = vld [vmem:[%s655 + $0x8] sm:$0xff]
        %v2606 = vld [vmem:[%s655 + $0x10] sm:$0xff]
        %v2607 = vld [vmem:[%s655 + $0x18] sm:$0xff]
        %v2608 = vld [vmem:[#allocation2] sm:$0xff]
        %v2609 = vld [vmem:[#allocation2 + $0x8] sm:$0xff]
        %v2610 = vld [vmem:[#allocation2 + $0x10] sm:$0xff]
        %v2611 = vld [vmem:[#allocation2 + $0x18] sm:$0xff]
        %v2612 = vmul.f32 %v2608, %v2604
        %v2613 = vmul.f32 %v2609, %v2605
        %v2614 = vmul.f32 %v2610, %v2606
        %v2615 = vmul.f32 %v2611, %v2607
        %v2616 = vld [vmem:[#allocation5] sm:$0xff]
        %v2617 = vld [vmem:[#allocation5 + $0x8] sm:$0xff]
        %v2618 = vld [vmem:[#allocation5 + $0x10] sm:$0xff]
        %v2619 = vld [vmem:[#allocation5 + $0x18] sm:$0xff]
        %v2620 = vmul.f32 %v2612, %v2616
        %v2621 = vmul.f32 %v2613, %v2617
        %v2622 = vmul.f32 %v2614, %v2618
        %v2623 = vmul.f32 %v2615, %v2619
        %v2624 = vadd.f32 %v2516, %v2620
        %v2625 = vadd.f32 %v2517, %v2621
        %v2626 = vadd.f32 %v2518, %v2622
        %v2627 = vadd.f32 %v2519, %v2623
        %v2628 = vld [vmem:[%s771] sm:$0xff]
        %v2629 = vld [vmem:[%s771 + $0x8] sm:$0xff]
        %v2630 = vld [vmem:[%s771 + $0x10] sm:$0xff]
        %v2631 = vld [vmem:[%s771 + $0x18] sm:$0xff]
        %v2632 = vmul.f32 %v2612, %v2628
        %v2633 = vmul.f32 %v2613, %v2629
        %v2634 = vmul.f32 %v2614, %v2630
        %v2635 = vmul.f32 %v2615, %v2631
        %v2636 = vadd.f32 %v2528, %v2632
        %v2637 = vadd.f32 %v2529, %v2633
        %v2638 = vadd.f32 %v2530, %v2634
        %v2639 = vadd.f32 %v2531, %v2635
        %v2640 = vld [vmem:[%s794] sm:$0xff]
        %v2641 = vld [vmem:[%s794 + $0x8] sm:$0xff]
        %v2642 = vld [vmem:[%s794 + $0x10] sm:$0xff]
        %v2643 = vld [vmem:[%s794 + $0x18] sm:$0xff]
        %v2644 = vmul.f32 %v2612, %v2640
        %v2645 = vmul.f32 %v2613, %v2641
        %v2646 = vmul.f32 %v2614, %v2642
        %v2647 = vmul.f32 %v2615, %v2643
        %v2648 = vadd.f32 %v2540, %v2644
        %v2649 = vadd.f32 %v2541, %v2645
        %v2650 = vadd.f32 %v2542, %v2646
        %v2651 = vadd.f32 %v2543, %v2647
        %v2652 = vld [vmem:[%s474] sm:$0xff]
        %v2653 = vld [vmem:[%s474 + $0x8] sm:$0xff]
        %v2654 = vld [vmem:[%s474 + $0x10] sm:$0xff]
        %v2655 = vld [vmem:[%s474 + $0x18] sm:$0xff]
        %v2656 = vmul.f32 %v2652, %v2604
        %v2657 = vmul.f32 %v2653, %v2605
        %v2658 = vmul.f32 %v2654, %v2606
        %v2659 = vmul.f32 %v2655, %v2607
        %v2660 = vld [vmem:[#allocation5 + $0x1] sm:$0xff]
        %v2661 = vld [vmem:[#allocation5 + $0x9] sm:$0xff]
        %v2662 = vld [vmem:[#allocation5 + $0x11] sm:$0xff]
        %v2663 = vld [vmem:[#allocation5 + $0x19] sm:$0xff]
        %v2664 = vmul.f32 %v2656, %v2660
        %v2665 = vmul.f32 %v2657, %v2661
        %v2666 = vmul.f32 %v2658, %v2662
        %v2667 = vmul.f32 %v2659, %v2663
        %v2668 = vadd.f32 %v2624, %v2664
        %v2669 = vadd.f32 %v2625, %v2665
        %v2670 = vadd.f32 %v2626, %v2666
        %v2671 = vadd.f32 %v2627, %v2667
        %v2672 = vld [vmem:[%s771 + $0x1] sm:$0xff]
        %v2673 = vld [vmem:[%s771 + $0x9] sm:$0xff]
        %v2674 = vld [vmem:[%s771 + $0x11] sm:$0xff]
        %v2675 = vld [vmem:[%s771 + $0x19] sm:$0xff]
        %v2676 = vmul.f32 %v2656, %v2672
        %v2677 = vmul.f32 %v2657, %v2673
        %v2678 = vmul.f32 %v2658, %v2674
        %v2679 = vmul.f32 %v2659, %v2675
        %v2680 = vadd.f32 %v2636, %v2676
        %v2681 = vadd.f32 %v2637, %v2677
        %v2682 = vadd.f32 %v2638, %v2678
        %v2683 = vadd.f32 %v2639, %v2679
        %v2684 = vld [vmem:[%s794 + $0x1] sm:$0xff]
        %v2685 = vld [vmem:[%s794 + $0x9] sm:$0xff]
        %v2686 = vld [vmem:[%s794 + $0x11] sm:$0xff]
        %v2687 = vld [vmem:[%s794 + $0x19] sm:$0xff]
        %v2688 = vmul.f32 %v2656, %v2684
        %v2689 = vmul.f32 %v2657, %v2685
        %v2690 = vmul.f32 %v2658, %v2686
        %v2691 = vmul.f32 %v2659, %v2687
        %v2692 = vadd.f32 %v2648, %v2688
        %v2693 = vadd.f32 %v2649, %v2689
        %v2694 = vadd.f32 %v2650, %v2690
        %v2695 = vadd.f32 %v2651, %v2691
        %v2696 = vld [vmem:[%s516] sm:$0xff]
        %v2697 = vld [vmem:[%s516 + $0x8] sm:$0xff]
        %v2698 = vld [vmem:[%s516 + $0x10] sm:$0xff]
        %v2699 = vld [vmem:[%s516 + $0x18] sm:$0xff]
        %v2700 = vmul.f32 %v2696, %v2604
        %v2701 = vmul.f32 %v2697, %v2605
        %v2702 = vmul.f32 %v2698, %v2606
        %v2703 = vmul.f32 %v2699, %v2607
        %v2704 = vld [vmem:[#allocation5 + $0x2] sm:$0xff]
        %v2705 = vld [vmem:[#allocation5 + $0xa] sm:$0xff]
        %v2706 = vld [vmem:[#allocation5 + $0x12] sm:$0xff]
        %v2707 = vld [vmem:[#allocation5 + $0x1a] sm:$0xff]
        %v2708 = vmul.f32 %v2700, %v2704
        %v2709 = vmul.f32 %v2701, %v2705
        %v2710 = vmul.f32 %v2702, %v2706
        %v2711 = vmul.f32 %v2703, %v2707
        %v2712 = vadd.f32 %v2668, %v2708
        %v2713 = vadd.f32 %v2669, %v2709
        %v2714 = vadd.f32 %v2670, %v2710
        %v2715 = vadd.f32 %v2671, %v2711
        %v2716 = vld [vmem:[%s771 + $0x2] sm:$0xff]
        %v2717 = vld [vmem:[%s771 + $0xa] sm:$0xff]
        %v2718 = vld [vmem:[%s771 + $0x12] sm:$0xff]
        %v2719 = vld [vmem:[%s771 + $0x1a] sm:$0xff]
        %v2720 = vmul.f32 %v2700, %v2716
        %v2721 = vmul.f32 %v2701, %v2717
        %v2722 = vmul.f32 %v2702, %v2718
        %v2723 = vmul.f32 %v2703, %v2719
        %v2724 = vadd.f32 %v2680, %v2720
        %v2725 = vadd.f32 %v2681, %v2721
        %v2726 = vadd.f32 %v2682, %v2722
        %v2727 = vadd.f32 %v2683, %v2723
        %v2728 = vld [vmem:[%s794 + $0x2] sm:$0xff]
        %v2729 = vld [vmem:[%s794 + $0xa] sm:$0xff]
        %v2730 = vld [vmem:[%s794 + $0x12] sm:$0xff]
        %v2731 = vld [vmem:[%s794 + $0x1a] sm:$0xff]
        %v2732 = vmul.f32 %v2700, %v2728
        %v2733 = vmul.f32 %v2701, %v2729
        %v2734 = vmul.f32 %v2702, %v2730
        %v2735 = vmul.f32 %v2703, %v2731
        %v2736 = vadd.f32 %v2692, %v2732
        %v2737 = vadd.f32 %v2693, %v2733
        %v2738 = vadd.f32 %v2694, %v2734
        %v2739 = vadd.f32 %v2695, %v2735
        %v2740 = vld [vmem:[%s554] sm:$0xff]
        %v2741 = vld [vmem:[%s554 + $0x8] sm:$0xff]
        %v2742 = vld [vmem:[%s554 + $0x10] sm:$0xff]
        %v2743 = vld [vmem:[%s554 + $0x18] sm:$0xff]
        %v2744 = vmul.f32 %v2740, %v2604
        %v2745 = vmul.f32 %v2741, %v2605
        %v2746 = vmul.f32 %v2742, %v2606
        %v2747 = vmul.f32 %v2743, %v2607
        %v2748 = vld [vmem:[#allocation5 + $0x3] sm:$0xff]
        %v2749 = vld [vmem:[#allocation5 + $0xb] sm:$0xff]
        %v2750 = vld [vmem:[#allocation5 + $0x13] sm:$0xff]
        %v2751 = vld [vmem:[#allocation5 + $0x1b] sm:$0xff]
        %v2752 = vmul.f32 %v2744, %v2748
        %v2753 = vmul.f32 %v2745, %v2749
        %v2754 = vmul.f32 %v2746, %v2750
        %v2755 = vmul.f32 %v2747, %v2751
        %v2756 = vadd.f32 %v2712, %v2752
        %v2757 = vadd.f32 %v2713, %v2753
        %v2758 = vadd.f32 %v2714, %v2754
        %v2759 = vadd.f32 %v2715, %v2755
        %v2760 = vld [vmem:[%s771 + $0x3] sm:$0xff]
        %v2761 = vld [vmem:[%s771 + $0xb] sm:$0xff]
        %v2762 = vld [vmem:[%s771 + $0x13] sm:$0xff]
        %v2763 = vld [vmem:[%s771 + $0x1b] sm:$0xff]
        %v2764 = vmul.f32 %v2744, %v2760
        %v2765 = vmul.f32 %v2745, %v2761
        %v2766 = vmul.f32 %v2746, %v2762
        %v2767 = vmul.f32 %v2747, %v2763
        %v2768 = vadd.f32 %v2724, %v2764
        %v2769 = vadd.f32 %v2725, %v2765
        %v2770 = vadd.f32 %v2726, %v2766
        %v2771 = vadd.f32 %v2727, %v2767
        %v2772 = vld [vmem:[%s794 + $0x3] sm:$0xff]
        %v2773 = vld [vmem:[%s794 + $0xb] sm:$0xff]
        %v2774 = vld [vmem:[%s794 + $0x13] sm:$0xff]
        %v2775 = vld [vmem:[%s794 + $0x1b] sm:$0xff]
        %v2776 = vmul.f32 %v2744, %v2772
        %v2777 = vmul.f32 %v2745, %v2773
        %v2778 = vmul.f32 %v2746, %v2774
        %v2779 = vmul.f32 %v2747, %v2775
        %v2780 = vadd.f32 %v2736, %v2776
        %v2781 = vadd.f32 %v2737, %v2777
        %v2782 = vadd.f32 %v2738, %v2778
        %v2783 = vadd.f32 %v2739, %v2779
        %v2784 = vld [vmem:[%s592] sm:$0xff]
        %v2785 = vld [vmem:[%s592 + $0x8] sm:$0xff]
        %v2786 = vld [vmem:[%s592 + $0x10] sm:$0xff]
        %v2787 = vld [vmem:[%s592 + $0x18] sm:$0xff]
        %v2788 = vmul.f32 %v2784, %v2604
        %v2789 = vmul.f32 %v2785, %v2605
        %v2790 = vmul.f32 %v2786, %v2606
        %v2791 = vmul.f32 %v2787, %v2607
        %v2792 = vld [vmem:[#allocation5 + $0x4] sm:$0xff]
        %v2793 = vld [vmem:[#allocation5 + $0xc] sm:$0xff]
        %v2794 = vld [vmem:[#allocation5 + $0x14] sm:$0xff]
        %v2795 = vld [vmem:[#allocation5 + $0x1c] sm:$0xff]
        %v2796 = vmul.f32 %v2788, %v2792
        %v2797 = vmul.f32 %v2789, %v2793
        %v2798 = vmul.f32 %v2790, %v2794
        %v2799 = vmul.f32 %v2791, %v2795
        %v2800 = vadd.f32 %v2756, %v2796
        %v2801 = vadd.f32 %v2757, %v2797
        %v2802 = vadd.f32 %v2758, %v2798
        %v2803 = vadd.f32 %v2759, %v2799
        %v2804 = vld [vmem:[%s771 + $0x4] sm:$0xff]
        %v2805 = vld [vmem:[%s771 + $0xc] sm:$0xff]
        %v2806 = vld [vmem:[%s771 + $0x14] sm:$0xff]
        %v2807 = vld [vmem:[%s771 + $0x1c] sm:$0xff]
        %v2808 = vmul.f32 %v2788, %v2804
        %v2809 = vmul.f32 %v2789, %v2805
        %v2810 = vmul.f32 %v2790, %v2806
        %v2811 = vmul.f32 %v2791, %v2807
        %v2812 = vadd.f32 %v2768, %v2808
        %v2813 = vadd.f32 %v2769, %v2809
        %v2814 = vadd.f32 %v2770, %v2810
        %v2815 = vadd.f32 %v2771, %v2811
        %v2816 = vld [vmem:[%s794 + $0x4] sm:$0xff]
        %v2817 = vld [vmem:[%s794 + $0xc] sm:$0xff]
        %v2818 = vld [vmem:[%s794 + $0x14] sm:$0xff]
        %v2819 = vld [vmem:[%s794 + $0x1c] sm:$0xff]
        %v2820 = vmul.f32 %v2788, %v2816
        %v2821 = vmul.f32 %v2789, %v2817
        %v2822 = vmul.f32 %v2790, %v2818
        %v2823 = vmul.f32 %v2791, %v2819
        %v2824 = vadd.f32 %v2780, %v2820
        %v2825 = vadd.f32 %v2781, %v2821
        %v2826 = vadd.f32 %v2782, %v2822
        %v2827 = vadd.f32 %v2783, %v2823
        %v2828 = vld [vmem:[%s634] sm:$0xff]
        %v2829 = vld [vmem:[%s634 + $0x8] sm:$0xff]
        %v2830 = vld [vmem:[%s634 + $0x10] sm:$0xff]
        %v2831 = vld [vmem:[%s634 + $0x18] sm:$0xff]
        %v2832 = vmul.f32 %v2828, %v2604
        %v2833 = vmul.f32 %v2829, %v2605
        %v2834 = vmul.f32 %v2830, %v2606
        %v2835 = vmul.f32 %v2831, %v2607
        %v2836 = vld [vmem:[#allocation5 + $0x5] sm:$0xff]
        %v2837 = vld [vmem:[#allocation5 + $0xd] sm:$0xff]
        %v2838 = vld [vmem:[#allocation5 + $0x15] sm:$0xff]
        %v2839 = vld [vmem:[#allocation5 + $0x1d] sm:$0xff]
        %v2840 = vmul.f32 %v2832, %v2836
        %v2841 = vmul.f32 %v2833, %v2837
        %v2842 = vmul.f32 %v2834, %v2838
        %v2843 = vmul.f32 %v2835, %v2839
        %v2844 = vadd.f32 %v2800, %v2840
        %v2845 = vadd.f32 %v2801, %v2841
        %v2846 = vadd.f32 %v2802, %v2842
        %v2847 = vadd.f32 %v2803, %v2843
        %v2848 = vld [vmem:[%s771 + $0x5] sm:$0xff]
        %v2849 = vld [vmem:[%s771 + $0xd] sm:$0xff]
        %v2850 = vld [vmem:[%s771 + $0x15] sm:$0xff]
        %v2851 = vld [vmem:[%s771 + $0x1d] sm:$0xff]
        %v2852 = vmul.f32 %v2832, %v2848
        %v2853 = vmul.f32 %v2833, %v2849
        %v2854 = vmul.f32 %v2834, %v2850
        %v2855 = vmul.f32 %v2835, %v2851
        %v2856 = vadd.f32 %v2812, %v2852
        %v2857 = vadd.f32 %v2813, %v2853
        %v2858 = vadd.f32 %v2814, %v2854
        %v2859 = vadd.f32 %v2815, %v2855
        %v2860 = vld [vmem:[%s794 + $0x5] sm:$0xff]
        %v2861 = vld [vmem:[%s794 + $0xd] sm:$0xff]
        %v2862 = vld [vmem:[%s794 + $0x15] sm:$0xff]
        %v2863 = vld [vmem:[%s794 + $0x1d] sm:$0xff]
        %v2864 = vmul.f32 %v2832, %v2860
        %v2865 = vmul.f32 %v2833, %v2861
        %v2866 = vmul.f32 %v2834, %v2862
        %v2867 = vmul.f32 %v2835, %v2863
        %v2868 = vadd.f32 %v2824, %v2864
        %v2869 = vadd.f32 %v2825, %v2865
        %v2870 = vadd.f32 %v2826, %v2866
        %v2871 = vadd.f32 %v2827, %v2867
        %v2872 = vld [vmem:[%s676] sm:$0xff]
        %v2873 = vld [vmem:[%s676 + $0x8] sm:$0xff]
        %v2874 = vld [vmem:[%s676 + $0x10] sm:$0xff]
        %v2875 = vld [vmem:[%s676 + $0x18] sm:$0xff]
        %v2876 = vmul.f32 %v2872, %v2604
        %v2877 = vmul.f32 %v2873, %v2605
        %v2878 = vmul.f32 %v2874, %v2606
        %v2879 = vmul.f32 %v2875, %v2607
        %v2880 = vld [vmem:[#allocation5 + $0x6] sm:$0xff]
        %v2881 = vld [vmem:[#allocation5 + $0xe] sm:$0xff]
        %v2882 = vld [vmem:[#allocation5 + $0x16] sm:$0xff]
        %v2883 = vld [vmem:[#allocation5 + $0x1e] sm:$0xff]
        %v2884 = vmul.f32 %v2876, %v2880
        %v2885 = vmul.f32 %v2877, %v2881
        %v2886 = vmul.f32 %v2878, %v2882
        %v2887 = vmul.f32 %v2879, %v2883
        %v2888 = vadd.f32 %v2844, %v2884
        %v2889 = vadd.f32 %v2845, %v2885
        %v2890 = vadd.f32 %v2846, %v2886
        %v2891 = vadd.f32 %v2847, %v2887
        %v2892 = vld [vmem:[%s771 + $0x6] sm:$0xff]
        %v2893 = vld [vmem:[%s771 + $0xe] sm:$0xff]
        %v2894 = vld [vmem:[%s771 + $0x16] sm:$0xff]
        %v2895 = vld [vmem:[%s771 + $0x1e] sm:$0xff]
        %v2896 = vmul.f32 %v2876, %v2892
        %v2897 = vmul.f32 %v2877, %v2893
        %v2898 = vmul.f32 %v2878, %v2894
        %v2899 = vmul.f32 %v2879, %v2895
        %v2900 = vadd.f32 %v2856, %v2896
        %v2901 = vadd.f32 %v2857, %v2897
        %v2902 = vadd.f32 %v2858, %v2898
        %v2903 = vadd.f32 %v2859, %v2899
        %v2904 = vld [vmem:[%s794 + $0x6] sm:$0xff]
        %v2905 = vld [vmem:[%s794 + $0xe] sm:$0xff]
        %v2906 = vld [vmem:[%s794 + $0x16] sm:$0xff]
        %v2907 = vld [vmem:[%s794 + $0x1e] sm:$0xff]
        %v2908 = vmul.f32 %v2876, %v2904
        %v2909 = vmul.f32 %v2877, %v2905
        %v2910 = vmul.f32 %v2878, %v2906
        %v2911 = vmul.f32 %v2879, %v2907
        %v2912 = vadd.f32 %v2868, %v2908
        %v2913 = vadd.f32 %v2869, %v2909
        %v2914 = vadd.f32 %v2870, %v2910
        %v2915 = vadd.f32 %v2871, %v2911
        %v2916 = vld [vmem:[%s733] sm:$0xff]
        %v2917 = vld [vmem:[%s733 + $0x8] sm:$0xff]
        %v2918 = vld [vmem:[%s733 + $0x10] sm:$0xff]
        %v2919 = vld [vmem:[%s733 + $0x18] sm:$0xff]
        %v2920 = vld [vmem:[%s733 + $0x20] sm:$0x3f]
        %2921 = vrot.lane.b32.xlu0 %v2916, 125
        %v2922 = vpop.permute.xlu0 %2921
        %2923 = vrot.lane.b32.xlu0 %v2917, 125
        %v2924 = vpop.permute.xlu0 %2923
        %2925 = vrot.lane.b32.xlu0 %v2918, 125
        %v2926 = vpop.permute.xlu0 %2925
        %2927 = vrot.lane.b32.xlu0 %v2919, 125
        %v2928 = vpop.permute.xlu0 %2927
        %2929 = vrot.lane.b32.xlu0 %v2920, 125
        %v2930 = vpop.permute.xlu0 %2929
        %2931 = vst [vmem:[#allocation5] sm:$0xff] %v2922
        %2932 = vst [vmem:[#allocation5 + $0x8] sm:$0xff] %v2924
        %2933 = vst [vmem:[#allocation5 + $0x10] sm:$0xff] %v2926
        %2934 = vst [vmem:[#allocation5 + $0x18] sm:$0xff] %v2928
        %2935 = vst [vmem:[#allocation5 + $0x20] sm:$0x3f] %v2930
        %v2936 = vld [vmem:[%s755] sm:$0xff]
        %v2937 = vld [vmem:[%s755 + $0x8] sm:$0xff]
        %v2938 = vld [vmem:[%s755 + $0x10] sm:$0xff]
        %v2939 = vld [vmem:[%s755 + $0x18] sm:$0xff]
        %v2940 = vld [vmem:[%s755 + $0x20] sm:$0x3f]
        %2941 = vrot.lane.b32.xlu0 %v2936, 125
        %v2942 = vpop.permute.xlu0 %2941
        %2943 = vrot.lane.b32.xlu0 %v2937, 125
        %v2944 = vpop.permute.xlu0 %2943
        %2945 = vrot.lane.b32.xlu0 %v2938, 125
        %v2946 = vpop.permute.xlu0 %2945
        %2947 = vrot.lane.b32.xlu0 %v2939, 125
        %v2948 = vpop.permute.xlu0 %2947
        %2949 = vrot.lane.b32.xlu0 %v2940, 125
        %v2950 = vpop.permute.xlu0 %2949
        %2951 = vst [vmem:[%s771] sm:$0xff] %v2942
        %2952 = vst [vmem:[%s771 + $0x8] sm:$0xff] %v2944
        %2953 = vst [vmem:[%s771 + $0x10] sm:$0xff] %v2946
        %2954 = vst [vmem:[%s771 + $0x18] sm:$0xff] %v2948
        %2955 = vst [vmem:[%s771 + $0x20] sm:$0x3f] %v2950
        %v2956 = vld [vmem:[%s778] sm:$0xff]
        %v2957 = vld [vmem:[%s778 + $0x8] sm:$0xff]
        %v2958 = vld [vmem:[%s778 + $0x10] sm:$0xff]
        %v2959 = vld [vmem:[%s778 + $0x18] sm:$0xff]
        %v2960 = vld [vmem:[%s778 + $0x20] sm:$0x3f]
        %2961 = vrot.lane.b32.xlu0 %v2956, 125
        %v2962 = vpop.permute.xlu0 %2961
        %2963 = vrot.lane.b32.xlu0 %v2957, 125
        %v2964 = vpop.permute.xlu0 %2963
        %2965 = vrot.lane.b32.xlu0 %v2958, 125
        %v2966 = vpop.permute.xlu0 %2965
        %2967 = vrot.lane.b32.xlu0 %v2959, 125
        %v2968 = vpop.permute.xlu0 %2967
        %2969 = vrot.lane.b32.xlu0 %v2960, 125
        %v2970 = vpop.permute.xlu0 %2969
        %2971 = vst [vmem:[%s794] sm:$0xff] %v2962
        %2972 = vst [vmem:[%s794 + $0x8] sm:$0xff] %v2964
        %2973 = vst [vmem:[%s794 + $0x10] sm:$0xff] %v2966
        %2974 = vst [vmem:[%s794 + $0x18] sm:$0xff] %v2968
        %2975 = vst [vmem:[%s794 + $0x20] sm:$0x3f] %v2970
        %v2976 = vld [vmem:[%s697] sm:$0xff]
        %v2977 = vld [vmem:[%s697 + $0x8] sm:$0xff]
        %v2978 = vld [vmem:[%s697 + $0x10] sm:$0xff]
        %v2979 = vld [vmem:[%s697 + $0x18] sm:$0xff]
        %v2980 = vld [vmem:[#allocation2] sm:$0xff]
        %v2981 = vld [vmem:[#allocation2 + $0x8] sm:$0xff]
        %v2982 = vld [vmem:[#allocation2 + $0x10] sm:$0xff]
        %v2983 = vld [vmem:[#allocation2 + $0x18] sm:$0xff]
        %v2984 = vmul.f32 %v2980, %v2976
        %v2985 = vmul.f32 %v2981, %v2977
        %v2986 = vmul.f32 %v2982, %v2978
        %v2987 = vmul.f32 %v2983, %v2979
        %v2988 = vld [vmem:[#allocation5] sm:$0xff]
        %v2989 = vld [vmem:[#allocation5 + $0x8] sm:$0xff]
        %v2990 = vld [vmem:[#allocation5 + $0x10] sm:$0xff]
        %v2991 = vld [vmem:[#allocation5 + $0x18] sm:$0xff]
        %v2992 = vmul.f32 %v2984, %v2988
        %v2993 = vmul.f32 %v2985, %v2989
        %v2994 = vmul.f32 %v2986, %v2990
        %v2995 = vmul.f32 %v2987, %v2991
        %v2996 = vadd.f32 %v2888, %v2992
        %v2997 = vadd.f32 %v2889, %v2993
        %v2998 = vadd.f32 %v2890, %v2994
        %v2999 = vadd.f32 %v2891, %v2995
        %v3000 = vld [vmem:[%s771] sm:$0xff]
        %v3001 = vld [vmem:[%s771 + $0x8] sm:$0xff]
        %v3002 = vld [vmem:[%s771 + $0x10] sm:$0xff]
        %v3003 = vld [vmem:[%s771 + $0x18] sm:$0xff]
        %v3004 = vmul.f32 %v2984, %v3000
        %v3005 = vmul.f32 %v2985, %v3001
        %v3006 = vmul.f32 %v2986, %v3002
        %v3007 = vmul.f32 %v2987, %v3003
        %v3008 = vadd.f32 %v2900, %v3004
        %v3009 = vadd.f32 %v2901, %v3005
        %v3010 = vadd.f32 %v2902, %v3006
        %v3011 = vadd.f32 %v2903, %v3007
        %v3012 = vld [vmem:[%s794] sm:$0xff]
        %v3013 = vld [vmem:[%s794 + $0x8] sm:$0xff]
        %v3014 = vld [vmem:[%s794 + $0x10] sm:$0xff]
        %v3015 = vld [vmem:[%s794 + $0x18] sm:$0xff]
        %v3016 = vmul.f32 %v2984, %v3012
        %v3017 = vmul.f32 %v2985, %v3013
        %v3018 = vmul.f32 %v2986, %v3014
        %v3019 = vmul.f32 %v2987, %v3015
        %v3020 = vadd.f32 %v2912, %v3016
        %v3021 = vadd.f32 %v2913, %v3017
        %v3022 = vadd.f32 %v2914, %v3018
        %v3023 = vadd.f32 %v2915, %v3019
        %v3024 = vld [vmem:[%s474] sm:$0xff]
        %v3025 = vld [vmem:[%s474 + $0x8] sm:$0xff]
        %v3026 = vld [vmem:[%s474 + $0x10] sm:$0xff]
        %v3027 = vld [vmem:[%s474 + $0x18] sm:$0xff]
        %v3028 = vmul.f32 %v3024, %v2976
        %v3029 = vmul.f32 %v3025, %v2977
        %v3030 = vmul.f32 %v3026, %v2978
        %v3031 = vmul.f32 %v3027, %v2979
        %v3032 = vld [vmem:[#allocation5 + $0x1] sm:$0xff]
        %v3033 = vld [vmem:[#allocation5 + $0x9] sm:$0xff]
        %v3034 = vld [vmem:[#allocation5 + $0x11] sm:$0xff]
        %v3035 = vld [vmem:[#allocation5 + $0x19] sm:$0xff]
        %v3036 = vmul.f32 %v3028, %v3032
        %v3037 = vmul.f32 %v3029, %v3033
        %v3038 = vmul.f32 %v3030, %v3034
        %v3039 = vmul.f32 %v3031, %v3035
        %v3040 = vadd.f32 %v2996, %v3036
        %v3041 = vadd.f32 %v2997, %v3037
        %v3042 = vadd.f32 %v2998, %v3038
        %v3043 = vadd.f32 %v2999, %v3039
        %v3044 = vld [vmem:[%s771 + $0x1] sm:$0xff]
        %v3045 = vld [vmem:[%s771 + $0x9] sm:$0xff]
        %v3046 = vld [vmem:[%s771 + $0x11] sm:$0xff]
        %v3047 = vld [vmem:[%s771 + $0x19] sm:$0xff]
        %v3048 = vmul.f32 %v3028, %v3044
        %v3049 = vmul.f32 %v3029, %v3045
        %v3050 = vmul.f32 %v3030, %v3046
        %v3051 = vmul.f32 %v3031, %v3047
        %v3052 = vadd.f32 %v3008, %v3048
        %v3053 = vadd.f32 %v3009, %v3049
        %v3054 = vadd.f32 %v3010, %v3050
        %v3055 = vadd.f32 %v3011, %v3051
        %v3056 = vld [vmem:[%s794 + $0x1] sm:$0xff]
        %v3057 = vld [vmem:[%s794 + $0x9] sm:$0xff]
        %v3058 = vld [vmem:[%s794 + $0x11] sm:$0xff]
        %v3059 = vld [vmem:[%s794 + $0x19] sm:$0xff]
        %v3060 = vmul.f32 %v3028, %v3056
        %v3061 = vmul.f32 %v3029, %v3057
        %v3062 = vmul.f32 %v3030, %v3058
        %v3063 = vmul.f32 %v3031, %v3059
        %v3064 = vadd.f32 %v3020, %v3060
        %v3065 = vadd.f32 %v3021, %v3061
        %v3066 = vadd.f32 %v3022, %v3062
        %v3067 = vadd.f32 %v3023, %v3063
        %v3068 = vld [vmem:[%s516] sm:$0xff]
        %v3069 = vld [vmem:[%s516 + $0x8] sm:$0xff]
        %v3070 = vld [vmem:[%s516 + $0x10] sm:$0xff]
        %v3071 = vld [vmem:[%s516 + $0x18] sm:$0xff]
        %v3072 = vmul.f32 %v3068, %v2976
        %v3073 = vmul.f32 %v3069, %v2977
        %v3074 = vmul.f32 %v3070, %v2978
        %v3075 = vmul.f32 %v3071, %v2979
        %v3076 = vld [vmem:[#allocation5 + $0x2] sm:$0xff]
        %v3077 = vld [vmem:[#allocation5 + $0xa] sm:$0xff]
        %v3078 = vld [vmem:[#allocation5 + $0x12] sm:$0xff]
        %v3079 = vld [vmem:[#allocation5 + $0x1a] sm:$0xff]
        %v3080 = vmul.f32 %v3072, %v3076
        %v3081 = vmul.f32 %v3073, %v3077
        %v3082 = vmul.f32 %v3074, %v3078
        %v3083 = vmul.f32 %v3075, %v3079
        %v3084 = vadd.f32 %v3040, %v3080
        %v3085 = vadd.f32 %v3041, %v3081
        %v3086 = vadd.f32 %v3042, %v3082
        %v3087 = vadd.f32 %v3043, %v3083
        %v3088 = vld [vmem:[%s771 + $0x2] sm:$0xff]
        %v3089 = vld [vmem:[%s771 + $0xa] sm:$0xff]
        %v3090 = vld [vmem:[%s771 + $0x12] sm:$0xff]
        %v3091 = vld [vmem:[%s771 + $0x1a] sm:$0xff]
        %v3092 = vmul.f32 %v3072, %v3088
        %v3093 = vmul.f32 %v3073, %v3089
        %v3094 = vmul.f32 %v3074, %v3090
        %v3095 = vmul.f32 %v3075, %v3091
        %v3096 = vadd.f32 %v3052, %v3092
        %v3097 = vadd.f32 %v3053, %v3093
        %v3098 = vadd.f32 %v3054, %v3094
        %v3099 = vadd.f32 %v3055, %v3095
        %v3100 = vld [vmem:[%s794 + $0x2] sm:$0xff]
        %v3101 = vld [vmem:[%s794 + $0xa] sm:$0xff]
        %v3102 = vld [vmem:[%s794 + $0x12] sm:$0xff]
        %v3103 = vld [vmem:[%s794 + $0x1a] sm:$0xff]
        %v3104 = vmul.f32 %v3072, %v3100
        %v3105 = vmul.f32 %v3073, %v3101
        %v3106 = vmul.f32 %v3074, %v3102
        %v3107 = vmul.f32 %v3075, %v3103
        %v3108 = vadd.f32 %v3064, %v3104
        %v3109 = vadd.f32 %v3065, %v3105
        %v3110 = vadd.f32 %v3066, %v3106
        %v3111 = vadd.f32 %v3067, %v3107
        %v3112 = vld [vmem:[%s554] sm:$0xff]
        %v3113 = vld [vmem:[%s554 + $0x8] sm:$0xff]
        %v3114 = vld [vmem:[%s554 + $0x10] sm:$0xff]
        %v3115 = vld [vmem:[%s554 + $0x18] sm:$0xff]
        %v3116 = vmul.f32 %v3112, %v2976
        %v3117 = vmul.f32 %v3113, %v2977
        %v3118 = vmul.f32 %v3114, %v2978
        %v3119 = vmul.f32 %v3115, %v2979
        %v3120 = vld [vmem:[#allocation5 + $0x3] sm:$0xff]
        %v3121 = vld [vmem:[#allocation5 + $0xb] sm:$0xff]
        %v3122 = vld [vmem:[#allocation5 + $0x13] sm:$0xff]
        %v3123 = vld [vmem:[#allocation5 + $0x1b] sm:$0xff]
        %v3124 = vmul.f32 %v3116, %v3120
        %v3125 = vmul.f32 %v3117, %v3121
        %v3126 = vmul.f32 %v3118, %v3122
        %v3127 = vmul.f32 %v3119, %v3123
        %v3128 = vadd.f32 %v3084, %v3124
        %v3129 = vadd.f32 %v3085, %v3125
        %v3130 = vadd.f32 %v3086, %v3126
        %v3131 = vadd.f32 %v3087, %v3127
        %v3132 = vld [vmem:[%s771 + $0x3] sm:$0xff]
        %v3133 = vld [vmem:[%s771 + $0xb] sm:$0xff]
        %v3134 = vld [vmem:[%s771 + $0x13] sm:$0xff]
        %v3135 = vld [vmem:[%s771 + $0x1b] sm:$0xff]
        %v3136 = vmul.f32 %v3116, %v3132
        %v3137 = vmul.f32 %v3117, %v3133
        %v3138 = vmul.f32 %v3118, %v3134
        %v3139 = vmul.f32 %v3119, %v3135
        %v3140 = vadd.f32 %v3096, %v3136
        %v3141 = vadd.f32 %v3097, %v3137
        %v3142 = vadd.f32 %v3098, %v3138
        %v3143 = vadd.f32 %v3099, %v3139
        %v3144 = vld [vmem:[%s794 + $0x3] sm:$0xff]
        %v3145 = vld [vmem:[%s794 + $0xb] sm:$0xff]
        %v3146 = vld [vmem:[%s794 + $0x13] sm:$0xff]
        %v3147 = vld [vmem:[%s794 + $0x1b] sm:$0xff]
        %v3148 = vmul.f32 %v3116, %v3144
        %v3149 = vmul.f32 %v3117, %v3145
        %v3150 = vmul.f32 %v3118, %v3146
        %v3151 = vmul.f32 %v3119, %v3147
        %v3152 = vadd.f32 %v3108, %v3148
        %v3153 = vadd.f32 %v3109, %v3149
        %v3154 = vadd.f32 %v3110, %v3150
        %v3155 = vadd.f32 %v3111, %v3151
        %v3156 = vld [vmem:[%s592] sm:$0xff]
        %v3157 = vld [vmem:[%s592 + $0x8] sm:$0xff]
        %v3158 = vld [vmem:[%s592 + $0x10] sm:$0xff]
        %v3159 = vld [vmem:[%s592 + $0x18] sm:$0xff]
        %v3160 = vmul.f32 %v3156, %v2976
        %v3161 = vmul.f32 %v3157, %v2977
        %v3162 = vmul.f32 %v3158, %v2978
        %v3163 = vmul.f32 %v3159, %v2979
        %v3164 = vld [vmem:[#allocation5 + $0x4] sm:$0xff]
        %v3165 = vld [vmem:[#allocation5 + $0xc] sm:$0xff]
        %v3166 = vld [vmem:[#allocation5 + $0x14] sm:$0xff]
        %v3167 = vld [vmem:[#allocation5 + $0x1c] sm:$0xff]
        %v3168 = vmul.f32 %v3160, %v3164
        %v3169 = vmul.f32 %v3161, %v3165
        %v3170 = vmul.f32 %v3162, %v3166
        %v3171 = vmul.f32 %v3163, %v3167
        %v3172 = vadd.f32 %v3128, %v3168
        %v3173 = vadd.f32 %v3129, %v3169
        %v3174 = vadd.f32 %v3130, %v3170
        %v3175 = vadd.f32 %v3131, %v3171
        %v3176 = vld [vmem:[%s771 + $0x4] sm:$0xff]
        %v3177 = vld [vmem:[%s771 + $0xc] sm:$0xff]
        %v3178 = vld [vmem:[%s771 + $0x14] sm:$0xff]
        %v3179 = vld [vmem:[%s771 + $0x1c] sm:$0xff]
        %v3180 = vmul.f32 %v3160, %v3176
        %v3181 = vmul.f32 %v3161, %v3177
        %v3182 = vmul.f32 %v3162, %v3178
        %v3183 = vmul.f32 %v3163, %v3179
        %v3184 = vadd.f32 %v3140, %v3180
        %v3185 = vadd.f32 %v3141, %v3181
        %v3186 = vadd.f32 %v3142, %v3182
        %v3187 = vadd.f32 %v3143, %v3183
        %v3188 = vld [vmem:[%s794 + $0x4] sm:$0xff]
        %v3189 = vld [vmem:[%s794 + $0xc] sm:$0xff]
        %v3190 = vld [vmem:[%s794 + $0x14] sm:$0xff]
        %v3191 = vld [vmem:[%s794 + $0x1c] sm:$0xff]
        %v3192 = vmul.f32 %v3160, %v3188
        %v3193 = vmul.f32 %v3161, %v3189
        %v3194 = vmul.f32 %v3162, %v3190
        %v3195 = vmul.f32 %v3163, %v3191
        %v3196 = vadd.f32 %v3152, %v3192
        %v3197 = vadd.f32 %v3153, %v3193
        %v3198 = vadd.f32 %v3154, %v3194
        %v3199 = vadd.f32 %v3155, %v3195
        %v3200 = vld [vmem:[%s634] sm:$0xff]
        %v3201 = vld [vmem:[%s634 + $0x8] sm:$0xff]
        %v3202 = vld [vmem:[%s634 + $0x10] sm:$0xff]
        %v3203 = vld [vmem:[%s634 + $0x18] sm:$0xff]
        %v3204 = vmul.f32 %v3200, %v2976
        %v3205 = vmul.f32 %v3201, %v2977
        %v3206 = vmul.f32 %v3202, %v2978
        %v3207 = vmul.f32 %v3203, %v2979
        %v3208 = vld [vmem:[#allocation5 + $0x5] sm:$0xff]
        %v3209 = vld [vmem:[#allocation5 + $0xd] sm:$0xff]
        %v3210 = vld [vmem:[#allocation5 + $0x15] sm:$0xff]
        %v3211 = vld [vmem:[#allocation5 + $0x1d] sm:$0xff]
        %v3212 = vmul.f32 %v3204, %v3208
        %v3213 = vmul.f32 %v3205, %v3209
        %v3214 = vmul.f32 %v3206, %v3210
        %v3215 = vmul.f32 %v3207, %v3211
        %v3216 = vadd.f32 %v3172, %v3212
        %v3217 = vadd.f32 %v3173, %v3213
        %v3218 = vadd.f32 %v3174, %v3214
        %v3219 = vadd.f32 %v3175, %v3215
        %v3220 = vld [vmem:[%s771 + $0x5] sm:$0xff]
        %v3221 = vld [vmem:[%s771 + $0xd] sm:$0xff]
        %v3222 = vld [vmem:[%s771 + $0x15] sm:$0xff]
        %v3223 = vld [vmem:[%s771 + $0x1d] sm:$0xff]
        %v3224 = vmul.f32 %v3204, %v3220
        %v3225 = vmul.f32 %v3205, %v3221
        %v3226 = vmul.f32 %v3206, %v3222
        %v3227 = vmul.f32 %v3207, %v3223
        %v3228 = vadd.f32 %v3184, %v3224
        %v3229 = vadd.f32 %v3185, %v3225
        %v3230 = vadd.f32 %v3186, %v3226
        %v3231 = vadd.f32 %v3187, %v3227
        %v3232 = vld [vmem:[%s794 + $0x5] sm:$0xff]
        %v3233 = vld [vmem:[%s794 + $0xd] sm:$0xff]
        %v3234 = vld [vmem:[%s794 + $0x15] sm:$0xff]
        %v3235 = vld [vmem:[%s794 + $0x1d] sm:$0xff]
        %v3236 = vmul.f32 %v3204, %v3232
        %v3237 = vmul.f32 %v3205, %v3233
        %v3238 = vmul.f32 %v3206, %v3234
        %v3239 = vmul.f32 %v3207, %v3235
        %v3240 = vadd.f32 %v3196, %v3236
        %v3241 = vadd.f32 %v3197, %v3237
        %v3242 = vadd.f32 %v3198, %v3238
        %v3243 = vadd.f32 %v3199, %v3239
        %v3244 = vld [vmem:[%s676] sm:$0xff]
        %v3245 = vld [vmem:[%s676 + $0x8] sm:$0xff]
        %v3246 = vld [vmem:[%s676 + $0x10] sm:$0xff]
        %v3247 = vld [vmem:[%s676 + $0x18] sm:$0xff]
        %v3248 = vmul.f32 %v3244, %v2976
        %v3249 = vmul.f32 %v3245, %v2977
        %v3250 = vmul.f32 %v3246, %v2978
        %v3251 = vmul.f32 %v3247, %v2979
        %v3252 = vld [vmem:[#allocation5 + $0x6] sm:$0xff]
        %v3253 = vld [vmem:[#allocation5 + $0xe] sm:$0xff]
        %v3254 = vld [vmem:[#allocation5 + $0x16] sm:$0xff]
        %v3255 = vld [vmem:[#allocation5 + $0x1e] sm:$0xff]
        %v3256 = vmul.f32 %v3248, %v3252
        %v3257 = vmul.f32 %v3249, %v3253
        %v3258 = vmul.f32 %v3250, %v3254
        %v3259 = vmul.f32 %v3251, %v3255
        %v3260 = vadd.f32 %v3216, %v3256
        %v3261 = vadd.f32 %v3217, %v3257
        %v3262 = vadd.f32 %v3218, %v3258
        %v3263 = vadd.f32 %v3219, %v3259
        %v3264 = vld [vmem:[%s771 + $0x6] sm:$0xff]
        %v3265 = vld [vmem:[%s771 + $0xe] sm:$0xff]
        %v3266 = vld [vmem:[%s771 + $0x16] sm:$0xff]
        %v3267 = vld [vmem:[%s771 + $0x1e] sm:$0xff]
        %v3268 = vmul.f32 %v3248, %v3264
        %v3269 = vmul.f32 %v3249, %v3265
        %v3270 = vmul.f32 %v3250, %v3266
        %v3271 = vmul.f32 %v3251, %v3267
        %v3272 = vadd.f32 %v3228, %v3268
        %v3273 = vadd.f32 %v3229, %v3269
        %v3274 = vadd.f32 %v3230, %v3270
        %v3275 = vadd.f32 %v3231, %v3271
        %v3276 = vld [vmem:[%s794 + $0x6] sm:$0xff]
        %v3277 = vld [vmem:[%s794 + $0xe] sm:$0xff]
        %v3278 = vld [vmem:[%s794 + $0x16] sm:$0xff]
        %v3279 = vld [vmem:[%s794 + $0x1e] sm:$0xff]
        %v3280 = vmul.f32 %v3248, %v3276
        %v3281 = vmul.f32 %v3249, %v3277
        %v3282 = vmul.f32 %v3250, %v3278
        %v3283 = vmul.f32 %v3251, %v3279
        %v3284 = vadd.f32 %v3240, %v3280
        %v3285 = vadd.f32 %v3241, %v3281
        %v3286 = vadd.f32 %v3242, %v3282
        %v3287 = vadd.f32 %v3243, %v3283
        %s3288 = smul.u32 %s19, 128
        %s3289 = sld [smem:[#allocation6 + %s3288]]
        %v3290 = vstv %s3289
        %v3291 = vmul.f32 %v3290, %v3260
        %v3292 = vmul.f32 %v3290, %v3261
        %v3293 = vmul.f32 %v3290, %v3262
        %v3294 = vmul.f32 %v3290, %v3263
        %s3295 = sadd.s32 %s3288, 3
        %s3296 = sld [smem:[#allocation6 + %s3295]]
        %v3297 = vstv %s3296
        %v3298 = vmul.f32 %v3297, %v3272
        %v3299 = vmul.f32 %v3297, %v3273
        %v3300 = vmul.f32 %v3297, %v3274
        %v3301 = vmul.f32 %v3297, %v3275
        %v3302 = vadd.f32 %v3291, %v3298
        %v3303 = vadd.f32 %v3292, %v3299
        %v3304 = vadd.f32 %v3293, %v3300
        %v3305 = vadd.f32 %v3294, %v3301
        %s3306 = sadd.s32 %s3288, 6
        %s3307 = sld [smem:[#allocation6 + %s3306]]
        %v3308 = vstv %s3307
        %v3309 = vmul.f32 %v3308, %v3284
        %v3310 = vmul.f32 %v3308, %v3285
        %v3311 = vmul.f32 %v3308, %v3286
        %v3312 = vmul.f32 %v3308, %v3287
        %v3313 = vadd.f32 %v3302, %v3309
        %v3314 = vadd.f32 %v3303, %v3310
        %v3315 = vadd.f32 %v3304, %v3311
        %v3316 = vadd.f32 %v3305, %v3312
        %v3317 = vpack.c.bf16 %v3314, %v3313
        %v3318 = vpack.c.bf16 %v3316, %v3315
        %v3321 = vunpack.c.l.b16 %v3317
        %v3322 = vunpack.c.h.b16 %v3317
        %v3323 = vunpack.c.l.b16 %v3318
        %v3324 = vunpack.c.h.b16 %v3318
        %v3325 = vpack.c.b16 %v3321, %v3321
        %v3326 = vpack.c.b16 %v3322, %v3322
        %v3327 = vpack.c.b16 %v3323, %v3323
        %v3328 = vpack.c.b16 %v3324, %v3324
        %3333 = vst [vmem:[%s274] sm:$0xf] %v3325
        %3334 = vst [vmem:[%s274 + $0x4] sm:$0xf] %v3326
        %3335 = vst [vmem:[%s274 + $0x8] sm:$0xf] %v3327
        %3336 = vst [vmem:[%s274 + $0xc] sm:$0xf] %v3328
        %s3337 = sadd.s32 %s3288, 1
        %s3338 = sld [smem:[#allocation6 + %s3337]]
        %v3339 = vstv %s3338
        %v3340 = vmul.f32 %v3339, %v3260
        %v3341 = vmul.f32 %v3339, %v3261
        %v3342 = vmul.f32 %v3339, %v3262
        %v3343 = vmul.f32 %v3339, %v3263
        %s3344 = sadd.s32 %s3288, 4
        %s3345 = sld [smem:[#allocation6 + %s3344]]
        %v3346 = vstv %s3345
        %v3347 = vmul.f32 %v3346, %v3272
        %v3348 = vmul.f32 %v3346, %v3273
        %v3349 = vmul.f32 %v3346, %v3274
        %v3350 = vmul.f32 %v3346, %v3275
        %v3351 = vadd.f32 %v3340, %v3347
        %v3352 = vadd.f32 %v3341, %v3348
        %v3353 = vadd.f32 %v3342, %v3349
        %v3354 = vadd.f32 %v3343, %v3350
        %s3355 = sadd.s32 %s3288, 7
        %s3356 = sld [smem:[#allocation6 + %s3355]]
        %v3357 = vstv %s3356
        %v3358 = vmul.f32 %v3357, %v3284
        %v3359 = vmul.f32 %v3357, %v3285
        %v3360 = vmul.f32 %v3357, %v3286
        %v3361 = vmul.f32 %v3357, %v3287
        %v3362 = vadd.f32 %v3351, %v3358
        %v3363 = vadd.f32 %v3352, %v3359
        %v3364 = vadd.f32 %v3353, %v3360
        %v3365 = vadd.f32 %v3354, %v3361
        %v3366 = vpack.c.bf16 %v3363, %v3362
        %v3367 = vpack.c.bf16 %v3365, %v3364
        %v3370 = vunpack.c.l.b16 %v3366
        %v3371 = vunpack.c.h.b16 %v3366
        %v3372 = vunpack.c.l.b16 %v3367
        %v3373 = vunpack.c.h.b16 %v3367
        %v3374 = vpack.c.b16 %v3370, %v3370
        %v3375 = vpack.c.b16 %v3371, %v3371
        %v3376 = vpack.c.b16 %v3372, %v3372
        %v3377 = vpack.c.b16 %v3373, %v3373
        %s3382 = scalar_lea.vmem %s274, 16 [#allocation9]
        %3383 = vst [vmem:[%s3382] sm:$0xf] %v3374
        %3384 = vst [vmem:[%s3382 + $0x4] sm:$0xf] %v3375
        %3385 = vst [vmem:[%s3382 + $0x8] sm:$0xf] %v3376
        %3386 = vst [vmem:[%s3382 + $0xc] sm:$0xf] %v3377
        %s3387 = sadd.s32 %s3288, 2
        %s3388 = sld [smem:[#allocation6 + %s3387]]
        %v3389 = vstv %s3388
        %v3390 = vmul.f32 %v3389, %v3260
        %v3391 = vmul.f32 %v3389, %v3261
        %v3392 = vmul.f32 %v3389, %v3262
        %v3393 = vmul.f32 %v3389, %v3263
        %s3394 = sadd.s32 %s3288, 5
        %s3395 = sld [smem:[#allocation6 + %s3394]]
        %v3396 = vstv %s3395
        %v3397 = vmul.f32 %v3396, %v3272
        %v3398 = vmul.f32 %v3396, %v3273
        %v3399 = vmul.f32 %v3396, %v3274
        %v3400 = vmul.f32 %v3396, %v3275
        %v3401 = vadd.f32 %v3390, %v3397
        %v3402 = vadd.f32 %v3391, %v3398
        %v3403 = vadd.f32 %v3392, %v3399
        %v3404 = vadd.f32 %v3393, %v3400
        %s3405 = sadd.s32 %s3288, 8
        %s3406 = sld [smem:[#allocation6 + %s3405]]
        %v3407 = vstv %s3406
        %v3408 = vmul.f32 %v3407, %v3284
        %v3409 = vmul.f32 %v3407, %v3285
        %v3410 = vmul.f32 %v3407, %v3286
        %v3411 = vmul.f32 %v3407, %v3287
        %v3412 = vadd.f32 %v3401, %v3408
        %v3413 = vadd.f32 %v3402, %v3409
        %v3414 = vadd.f32 %v3403, %v3410
        %v3415 = vadd.f32 %v3404, %v3411
        %v3416 = vpack.c.bf16 %v3413, %v3412
        %v3417 = vpack.c.bf16 %v3415, %v3414
        %v3420 = vunpack.c.l.b16 %v3416
        %v3421 = vunpack.c.h.b16 %v3416
        %v3422 = vunpack.c.l.b16 %v3417
        %v3423 = vunpack.c.h.b16 %v3417
        %v3424 = vpack.c.b16 %v3420, %v3420
        %v3425 = vpack.c.b16 %v3421, %v3421
        %v3426 = vpack.c.b16 %v3422, %v3422
        %v3427 = vpack.c.b16 %v3423, %v3423
        %s3432 = scalar_lea.vmem %s274, 32 [#allocation9]
        %3433 = vst [vmem:[%s3432] sm:$0xf] %v3424
        %3434 = vst [vmem:[%s3432 + $0x4] sm:$0xf] %v3425
        %3435 = vst [vmem:[%s3432 + $0x8] sm:$0xf] %v3426
        %3436 = vst [vmem:[%s3432 + $0xc] sm:$0xf] %v3427
        %s3437 = sand.u32 %s112, 1
        %s3438 = sand.u32 %s112, 1
        %s3439 = smul.addr %s3438, 48
        %s3440 = scalar_lea.vmem [#allocation9], %s3439
        // Predicated region
        $region79: #{aligned_lpips_forward.1} parent=65 // pred_check
          %p3441 = pneg %p122
        $region80: #{aligned_lpips_forward.1} parent=65 // pred_check_branch
          %3443 = sbr.rel (%p3441) target = $region82
        $region81: #{aligned_lpips_forward.1} parent=65 // pred_region
          %s3444 = smul.u32 4, %s20
          %s3445 = smul.addr %s19, 48
          %s3446 = sadd.s32 %s3444, %s3445
          %s3447 = smul.addr %s3446, 4
          %s3448 = scalar_lea.vmem %s3, %s3447
          // Predicated region
          $region83: #{aligned_lpips_forward.1} parent=81 // pred_check
            _
          $region84: #{aligned_lpips_forward.1} parent=81 // pred_check_branch
            %3450 = sbr.rel (0) target = $region86
          $region85: #{aligned_lpips_forward.1} parent=81 // pred_region
            // Predicated region
            $region87: #{aligned_lpips_forward.1} parent=85 // pred_check
              _
            $region88: #{aligned_lpips_forward.1} parent=85 // pred_check_branch
              %3452 = sbr.rel target = $region90
            $region89: #{aligned_lpips_forward.1} parent=85 // pred_region
              // Predicated region
              $region102: #{aligned_lpips_forward.1} parent=89 // pred_check
                _
              $region103: #{aligned_lpips_forward.1} parent=89 // pred_check_branch
                %3489 = sbr.rel (0) target = $region105
              $region104: #{aligned_lpips_forward.1} parent=89 // pred_region
                loop: start=0, step=1, limit=1
                $region106: #{aligned_lpips_forward.1} parent=104 // loop_pre_header
                  _
                $region107: #{aligned_lpips_forward.1} parent=104 // loop_header
                  %s3491 = sphi 0, %s3495
                  %p3492 = scmp.ge.s32.totalorder %s3491, 1
                  %s3496 = sphi %s3440, %s3440
                  %s3497 = sphi %s3448, %s3448
                $region108: #{aligned_lpips_forward.1} parent=104 // loop_header_branch
                  %3494 = sbr.rel (%p3492) target = $region112
                $region109: #{aligned_lpips_forward.1} parent=104 // loop_body
                  _
                $region110: #{aligned_lpips_forward.1} parent=104 // loop_footer
                  %s3495 = sadd.s32 1, %s3491
                $region111: #{aligned_lpips_forward.1} parent=104 // loop_footer_branch
                  %3490 = sbr.rel target = $region107
                $region112: #{aligned_lpips_forward.1} parent=104 // loop_exit
                  _
                loop: start=0, step=1, limit=1
                $region113: #{aligned_lpips_forward.1} parent=104 // loop_pre_header
                  _
                $region114: #{aligned_lpips_forward.1} parent=104 // loop_header
                  %s3500 = sphi 0, %s3504
                  %p3501 = scmp.ge.s32.totalorder %s3500, 1
                  %s3505 = sphi %s3440, %s3440
                  %s3506 = sphi %s3448, %s3448
                $region115: #{aligned_lpips_forward.1} parent=104 // loop_header_branch
                  %3503 = sbr.rel (%p3501) target = $region119
                $region116: #{aligned_lpips_forward.1} parent=104 // loop_body
                  %v3507 = vld [vmem:[%s3505] sm:$0xf]
                  %3508 = vst [vmem:[%s3506] sm:$0xf] %v3507
                  %v3509 = vld [vmem:[%s3505 + $0x4] sm:$0xf]
                  %3510 = vst [vmem:[%s3506 + $0x4] sm:$0xf] %v3509
                  %v3511 = vld [vmem:[%s3505 + $0x8] sm:$0xf]
                  %3512 = vst [vmem:[%s3506 + $0x8] sm:$0xf] %v3511
                  %v3513 = vld [vmem:[%s3505 + $0xc] sm:$0xf]
                  %3514 = vst [vmem:[%s3506 + $0xc] sm:$0xf] %v3513
                  %v3515 = vld [vmem:[%s3505 + $0x10] sm:$0xf]
                  %3516 = vst [vmem:[%s3506 + $0x40] sm:$0xf] %v3515
                  %v3517 = vld [vmem:[%s3505 + $0x14] sm:$0xf]
                  %3518 = vst [vmem:[%s3506 + $0x44] sm:$0xf] %v3517
                  %v3519 = vld [vmem:[%s3505 + $0x18] sm:$0xf]
                  %3520 = vst [vmem:[%s3506 + $0x48] sm:$0xf] %v3519
                  %v3521 = vld [vmem:[%s3505 + $0x1c] sm:$0xf]
                  %3522 = vst [vmem:[%s3506 + $0x4c] sm:$0xf] %v3521
                  %v3523 = vld [vmem:[%s3505 + $0x20] sm:$0xf]
                  %3524 = vst [vmem:[%s3506 + $0x80] sm:$0xf] %v3523
                  %v3525 = vld [vmem:[%s3505 + $0x24] sm:$0xf]
                  %3526 = vst [vmem:[%s3506 + $0x84] sm:$0xf] %v3525
                  %v3527 = vld [vmem:[%s3505 + $0x28] sm:$0xf]
                  %3528 = vst [vmem:[%s3506 + $0x88] sm:$0xf] %v3527
                  %v3529 = vld [vmem:[%s3505 + $0x2c] sm:$0xf]
                  %3530 = vst [vmem:[%s3506 + $0x8c] sm:$0xf] %v3529
                $region117: #{aligned_lpips_forward.1} parent=104 // loop_footer
                  %s3504 = sadd.s32 1, %s3500
                $region118: #{aligned_lpips_forward.1} parent=104 // loop_footer_branch
                  %3499 = sbr.rel target = $region114
                $region119: #{aligned_lpips_forward.1} parent=104 // loop_exit
                  _
              $region105: #{aligned_lpips_forward.1} parent=89 // pred_fallthru
                _
            $region90: #{aligned_lpips_forward.1} parent=85 // pred_fallthru
              _
            // Predicated region
            $region91: #{aligned_lpips_forward.1} parent=85 // pred_check
              _
            $region92: #{aligned_lpips_forward.1} parent=85 // pred_check_branch
              %3454 = sbr.rel (0) target = $region94
            $region93: #{aligned_lpips_forward.1} parent=85 // pred_region
              loop: start=0, step=1, limit=1
              $region95: #{aligned_lpips_forward.1} parent=93 // loop_pre_header
                _
              $region96: #{aligned_lpips_forward.1} parent=93 // loop_header
                %s3457 = sphi 0, %s3461
                %p3458 = scmp.ge.s32.totalorder %s3457, 1
                %s3462 = sphi %s3440, %s3440
                %s3463 = sphi %s3448, %s3448
              $region97: #{aligned_lpips_forward.1} parent=93 // loop_header_branch
                %3460 = sbr.rel (%p3458) target = $region101
              $region98: #{aligned_lpips_forward.1} parent=93 // loop_body
                %v3464 = vld [vmem:[%s3462] sm:$0xf]
                %3465 = vst [vmem:[%s3463] sm:$0xf] %v3464
                %v3466 = vld [vmem:[%s3462 + $0x4] sm:$0xf]
                %3467 = vst [vmem:[%s3463 + $0x4] sm:$0xf] %v3466
                %v3468 = vld [vmem:[%s3462 + $0x8] sm:$0xf]
                %3469 = vst [vmem:[%s3463 + $0x8] sm:$0xf] %v3468
                %v3470 = vld [vmem:[%s3462 + $0xc] sm:$0xf]
                %3471 = vst [vmem:[%s3463 + $0xc] sm:$0xf] %v3470
                %v3472 = vld [vmem:[%s3462 + $0x10] sm:$0xf]
                %3473 = vst [vmem:[%s3463 + $0x40] sm:$0xf] %v3472
                %v3474 = vld [vmem:[%s3462 + $0x14] sm:$0xf]
                %3475 = vst [vmem:[%s3463 + $0x44] sm:$0xf] %v3474
                %v3476 = vld [vmem:[%s3462 + $0x18] sm:$0xf]
                %3477 = vst [vmem:[%s3463 + $0x48] sm:$0xf] %v3476
                %v3478 = vld [vmem:[%s3462 + $0x1c] sm:$0xf]
                %3479 = vst [vmem:[%s3463 + $0x4c] sm:$0xf] %v3478
                %v3480 = vld [vmem:[%s3462 + $0x20] sm:$0xf]
                %3481 = vst [vmem:[%s3463 + $0x80] sm:$0xf] %v3480
                %v3482 = vld [vmem:[%s3462 + $0x24] sm:$0xf]
                %3483 = vst [vmem:[%s3463 + $0x84] sm:$0xf] %v3482
                %v3484 = vld [vmem:[%s3462 + $0x28] sm:$0xf]
                %3485 = vst [vmem:[%s3463 + $0x88] sm:$0xf] %v3484
                %v3486 = vld [vmem:[%s3462 + $0x2c] sm:$0xf]
                %3487 = vst [vmem:[%s3463 + $0x8c] sm:$0xf] %v3486
              $region99: #{aligned_lpips_forward.1} parent=93 // loop_footer
                %s3461 = sadd.s32 1, %s3457
              $region100: #{aligned_lpips_forward.1} parent=93 // loop_footer_branch
                %3456 = sbr.rel target = $region96
              $region101: #{aligned_lpips_forward.1} parent=93 // loop_exit
                _
            $region94: #{aligned_lpips_forward.1} parent=85 // pred_fallthru
              _
          $region86: #{aligned_lpips_forward.1} parent=81 // pred_fallthru
            _
          %3531 = vnop
        $region82: #{aligned_lpips_forward.1} parent=65 // pred_fallthru
          _
      $region66: #{aligned_lpips_forward.1} parent=5 // pred_fallthru
        _
      %p3532 = scmp.le.s32.totalorder 2, %s10
      // Predicated region
      $region120: #{aligned_lpips_forward.1} parent=5 // pred_check
        %p3533 = pneg %p3532
      $region121: #{aligned_lpips_forward.1} parent=5 // pred_check_branch
        %3535 = sbr.rel (%p3533) target = $region123
      $region122: #{aligned_lpips_forward.1} parent=5 // pred_region
        %s3536 = ssub.s32 %s10, 2
        // Predicated region
        $region124: #{aligned_lpips_forward.1} parent=122 // pred_check
          %p3537 = pneg %p128
        $region125: #{aligned_lpips_forward.1} parent=122 // pred_check_branch
          %3539 = sbr.rel (%p3537) target = $region127
        $region126: #{aligned_lpips_forward.1} parent=122 // pred_region
          %s3540 = sand.u32 %s113, 1
          %s3541 = sand.u32 %s113, 1
          %s3542 = smul.addr %s3541, 48
          %s3543 = scalar_lea.vmem [#allocation9], %s3542
        $region127: #{aligned_lpips_forward.1} parent=122 // pred_fallthru
          _
      $region123: #{aligned_lpips_forward.1} parent=5 // pred_fallthru
        _
    $region6: #{aligned_lpips_forward.1} parent=1 // loop_footer
      %s14 = sadd.s32 1, %s10
    $region7: #{aligned_lpips_forward.1} parent=1 // loop_footer_branch
      %9 = sbr.rel target = $region3
    $region8: #{aligned_lpips_forward.1} parent=1 // loop_exit
      _
    %3544 = vsyncpa [#allocation7], 1
    %s3545 = scalar_lea.sflag [#allocation7], 1
    %3546 = vsyncpa %s3545, 1

</llo_original>
